<compile_context>
chip_gen: v6e
topology: v6e:2x2x1
jax: 0.10.0
libtpu: 0.0.40
codegen_flags: <defaults>
</compile_context>

<pallas_src>
import functools
import math

import jax
import jax.numpy as jnp
from jax.experimental import pallas as pl
from jax.experimental.pallas import tpu as pltpu


# ---------------------------------------------------------------------------
# Pallas GEMM kernels with fused bias + activation epilogue
# ---------------------------------------------------------------------------

def _round_up(x, m):
    return (x + m - 1) // m * m


def _apply_act(r, act, slope):
    if act == "relu":
        return jnp.maximum(r, 0.0)
    if act == "lrelu":
        return jnp.where(r >= 0.0, r, r * slope)
    if act == "sigmoid":
        return jax.nn.sigmoid(r)
    return r


def _mm_kernel_single(a_ref, b_ref, bias_ref, o_ref, *, act, slope):
    # Whole K in one tile: no scratch accumulator, straight dot+bias+act store.
    r = jnp.dot(a_ref[...], b_ref[...], preferred_element_type=jnp.float32)
    r = r + bias_ref[...]
    o_ref[...] = _apply_act(r, act, slope).astype(o_ref.dtype)


def _mm_kernel_multi(a_ref, b_ref, bias_ref, o_ref, acc_ref, *, act, slope, nk):
    k = pl.program_id(2)

    @pl.when(k == 0)
    def _():
        # Initialize accumulator with the broadcast bias (saves the epilogue add).
        acc_ref[...] = jnp.zeros(acc_ref.shape, jnp.float32) + bias_ref[...]

    acc_ref[...] += jnp.dot(a_ref[...], b_ref[...],
                            preferred_element_type=jnp.float32)

    @pl.when(k == nk - 1)
    def _():
        o_ref[...] = _apply_act(acc_ref[...], act, slope).astype(o_ref.dtype)


def matmul_bias_act(a, b, bias, act="none", slope=0.01):
    """out = act(a @ b + bias).  a: (M,K), b: (K,N), bias: (N,)."""
    M, K = a.shape
    K2, N = b.shape
    assert K == K2
    bias = bias.astype(jnp.float32)

    # Small problems: plain XLA f32 dot.  Padding N=2..3 / K<16 / M<128 up to
    # 128-tiles wastes the MXU and a pallas_call dispatch; also keeps the
    # precision-sensitive TPS / GridRefine (1e-4 std) math in f32.
    if M < 128 or N < 16 or K < 16:
        r = jnp.dot(a.astype(jnp.float32), b.astype(jnp.float32),
                    preferred_element_type=jnp.float32) + bias[None, :]
        return _apply_act(r, act, slope)

    tn = 128
    tm = 256 if M <= 1024 else 512          # keep >=2 parallel steps when possible
    tm = min(tm, _round_up(M, 128))
    if K <= 512:
        tk = _round_up(K, 128)              # single K tile -> no-accumulator kernel
    else:
        tk = 256

    Mp, Kp, Np = _round_up(M, tm), _round_up(K, tk), _round_up(N, tn)
    nk = Kp // tk

    # bf16 operands for the MXU; f32 accumulation via preferred_element_type.
    a_p = jnp.pad(a.astype(jnp.bfloat16), ((0, Mp - M), (0, Kp - K)))
    b_p = jnp.pad(b.astype(jnp.bfloat16), ((0, Kp - K), (0, Np - N)))
    bias_p = jnp.pad(bias, (0, Np - N)).reshape(1, Np)

    if nk == 1:
        out = pl.pallas_call(
            functools.partial(_mm_kernel_single, act=act, slope=slope),
            out_shape=jax.ShapeDtypeStruct((Mp, Np), jnp.float32),
            grid_spec=pltpu.PrefetchScalarGridSpec(
                num_scalar_prefetch=0,
                grid=(Mp // tm, Np // tn),
                in_specs=[
                    pl.BlockSpec((tm, Kp), lambda i, j: (i, 0)),
                    pl.BlockSpec((Kp, tn), lambda i, j: (0, j)),
                    pl.BlockSpec((1, tn), lambda i, j: (0, j)),
                ],
                out_specs=pl.BlockSpec((tm, tn), lambda i, j: (i, j)),
            ),
            compiler_params=pltpu.CompilerParams(
                dimension_semantics=("parallel", "parallel")),
        )(a_p, b_p, bias_p)
    else:
        out = pl.pallas_call(
            functools.partial(_mm_kernel_multi, act=act, slope=slope, nk=nk),
            out_shape=jax.ShapeDtypeStruct((Mp, Np), jnp.float32),
            grid_spec=pltpu.PrefetchScalarGridSpec(
                num_scalar_prefetch=0,
                grid=(Mp // tm, Np // tn, nk),
                in_specs=[
                    pl.BlockSpec((tm, tk), lambda i, j, k: (i, k)),
                    pl.BlockSpec((tk, tn), lambda i, j, k: (k, j)),
                    pl.BlockSpec((1, tn), lambda i, j, k: (0, j)),
                ],
                out_specs=pl.BlockSpec((tm, tn), lambda i, j, k: (i, j)),
                scratch_shapes=[pltpu.VMEM((tm, tn), jnp.float32)],
            ),
            compiler_params=pltpu.CompilerParams(
                dimension_semantics=("parallel", "parallel", "arbitrary")),
        )(a_p, b_p, bias_p)
    return out[:M, :N]


# ---------------------------------------------------------------------------
# Conv / ConvTranspose via NHWC im2col + Pallas GEMM
# ---------------------------------------------------------------------------

def conv2d(x, w, b, stride=1, padding=0, act="none", slope=0.01):
    """x: (N,H,W,Cin) NHWC, w: (Cout,Cin,kh,kw) PyTorch layout, b: (Cout,)."""
    N, H, W, Cin = x.shape
    Cout, _, kh, kw = w.shape
    Ho = (H + 2 * padding - kh) // stride + 1
    Wo = (W + 2 * padding - kw) // stride + 1
    if kh == 1 and kw == 1 and stride == 1 and padding == 0:
        patches = x.reshape(N * H * W, Cin)
    else:
        xp = jnp.pad(x, ((0, 0), (padding, padding), (padding, padding), (0, 0)))
        cols = []
        for i in range(kh):
            for j in range(kw):
                cols.append(xp[:, i:i + stride * (Ho - 1) + 1:stride,
                                  j:j + stride * (Wo - 1) + 1:stride, :])
        patches = jnp.concatenate(cols, axis=-1).reshape(N * Ho * Wo, kh * kw * Cin)
    wm = jnp.transpose(w, (2, 3, 1, 0)).reshape(kh * kw * Cin, Cout)
    out = matmul_bias_act(patches, wm, b, act=act, slope=slope)
    return out.reshape(N, Ho, Wo, Cout)


def conv_transpose2d(x, w, b, stride, padding, output_padding=0, act="none", slope=0.01):
    """x: (N,H,W,Cin) NHWC, w: (Cin,Cout,kh,kw).  PyTorch ConvTranspose2d semantics."""
    N, H, W, Cin = x.shape
    _, Cout, kh, kw = w.shape
    Hd, Wd = (H - 1) * stride + 1, (W - 1) * stride + 1
    xd = jnp.zeros((N, Hd, Wd, Cin), x.dtype).at[:, ::stride, ::stride, :].set(x)
    pt = kh - 1 - padding
    pb = kh - 1 - padding + output_padding
    plft = kw - 1 - padding
    prt = kw - 1 - padding + output_padding
    xp = jnp.pad(xd, ((0, 0), (pt, pb), (plft, prt), (0, 0)))
    w_conv = jnp.flip(w, axis=(2, 3)).transpose(1, 0, 2, 3)  # (Cout,Cin,kh,kw)
    return conv2d(xp, w_conv, b, stride=1, padding=0, act=act, slope=slope)


# ---------------------------------------------------------------------------
# Plain-JAX glue: group norm, grid_sample, bilinear upsample, TPS / affine grids
# TODO(synk): gather-style ops (grid_sample, upsample) have no clean Pallas TPU
#             equivalent; they stay in XLA.
# ---------------------------------------------------------------------------

def group_norm(x, num_groups, gamma, beta, eps=1e-5):
    N, H, W, C = x.shape
    xg = x.reshape(N, H, W, num_groups, C // num_groups)
    mean = xg.mean(axis=(1, 2, 4), keepdims=True)
    var = xg.var(axis=(1, 2, 4), keepdims=True)
    xn = ((xg - mean) / jnp.sqrt(var + eps)).reshape(N, H, W, C)
    return xn * gamma[None, None, None, :] + beta[None, None, None, :]


def grid_sample_bilinear(img, grid):
    """F.grid_sample, mode=bilinear, padding=zeros, align_corners=False.
    img: (N,H,W,C) NHWC; grid: (N,Ho,Wo,2) with x=grid[...,0], y=grid[...,1] in [-1,1]."""
    N, H, W, C = img.shape
    _, Ho, Wo, _ = grid.shape
    gx, gy = grid[..., 0], grid[..., 1]
    ix = (gx + 1.0) * (W * 0.5) - 0.5
    iy = (gy + 1.0) * (H * 0.5) - 0.5
    ix0, iy0 = jnp.floor(ix), jnp.floor(iy)
    ix1, iy1 = ix0 + 1.0, iy0 + 1.0
    wx1, wy1 = ix - ix0, iy - iy0
    wx0, wy0 = 1.0 - wx1, 1.0 - wy1
    img_flat = img.reshape(N, H * W, C)

    def gather(xc, yc):
        valid = (xc >= 0) & (xc <= W - 1) & (yc >= 0) & (yc <= H - 1)
        xi = jnp.clip(xc, 0, W - 1).astype(jnp.int32)
        yi = jnp.clip(yc, 0, H - 1).astype(jnp.int32)
        lin = (yi * W + xi).reshape(N, Ho * Wo, 1)
        lin = jnp.broadcast_to(lin, (N, Ho * Wo, C))
        vals = jnp.take_along_axis(img_flat, lin, axis=1).reshape(N, Ho, Wo, C)
        return vals * valid[..., None].astype(img.dtype)

    return (gather(ix0, iy0) * (wx0 * wy0)[..., None]
            + gather(ix1, iy0) * (wx1 * wy0)[..., None]
            + gather(ix0, iy1) * (wx0 * wy1)[..., None]
            + gather(ix1, iy1) * (wx1 * wy1)[..., None])


def upsample_bilinear_2x(x):
    """nn.Upsample(scale_factor=2, mode='bilinear', align_corners=True), NHWC."""
    N, H, W, C = x.shape
    Ho, Wo = 2 * H, 2 * W
    ys = jnp.arange(Ho, dtype=jnp.float32) * ((H - 1) / (Ho - 1))
    xs = jnp.arange(Wo, dtype=jnp.float32) * ((W - 1) / (Wo - 1))
    y0 = jnp.floor(ys).astype(jnp.int32)
    y1 = jnp.minimum(y0 + 1, H - 1)
    x0 = jnp.floor(xs).astype(jnp.int32)
    x1 = jnp.minimum(x0 + 1, W - 1)
    wy = (ys - y0.astype(jnp.float32))[None, :, None, None]
    wx = (xs - x0.astype(jnp.float32))[None, None, :, None]
    v = x[:, y0, :, :] * (1.0 - wy) + x[:, y1, :, :] * wy
    return v[:, :, x0, :] * (1.0 - wx) + v[:, :, x1, :] * wx


def identity_affine_grid(H, W):
    """F.affine_grid with identity theta, align_corners=False. -> (1,H,W,2)."""
    xs = (2.0 * jnp.arange(W, dtype=jnp.float32) + 1.0) / W - 1.0
    ys = (2.0 * jnp.arange(H, dtype=jnp.float32) + 1.0) / H - 1.0
    gx = jnp.broadcast_to(xs[None, :], (H, W))
    gy = jnp.broadcast_to(ys[:, None], (H, W))
    return jnp.stack([gx, gy], axis=-1)[None]


def uniform_grid(gh, gw):
    """pytorch_tps.uniform_grid -> (gh*gw, 2) control points in [0,1]."""
    xs = jnp.linspace(0.0, 1.0, gw)
    ys = jnp.linspace(0.0, 1.0, gh)
    gx = jnp.broadcast_to(xs[None, :], (gh, gw))
    gy = jnp.broadcast_to(ys[:, None], (gh, gw))
    return jnp.stack([gx, gy], axis=-1).reshape(-1, 2)


def tps_grid_jax(theta, ctrl, Hg, Wg):
    """pytorch_tps.tps_grid (reduced parameterization). -> (Hg,Wg,2) in [-1,1]."""
    xs = jnp.linspace(0.0, 1.0, Wg)
    ys = jnp.linspace(0.0, 1.0, Hg)
    gx = jnp.broadcast_to(xs[None, :], (Hg, Wg))
    gy = jnp.broadcast_to(ys[:, None], (Hg, Wg))
    xy = jnp.stack([gx, gy], axis=-1)                          # (Hg,Wg,2)
    T = ctrl.shape[0]
    diff = xy[:, :, None, :] - ctrl[None, None, :, :]          # (Hg,Wg,T,2)
    D = jnp.sqrt(jnp.sum(diff * diff, axis=-1))
    U = (D * D) * jnp.log(D + 1e-6)                            # (Hg,Wg,T)
    w = theta[0, :-3, :]                                       # (T-1,2), reduced
    a = theta[0, -3:, :]                                       # (3,2)
    w_full = jnp.concatenate([-jnp.sum(w, axis=0, keepdims=True), w], axis=0)
    zeros2 = jnp.zeros((2,), jnp.float32)
    b = matmul_bias_act(U.reshape(-1, T), w_full, zeros2)      # (Hg*Wg,2) - tiny, XLA path
    g3 = jnp.stack([jnp.ones_like(gx), gx, gy], axis=-1).reshape(-1, 3)
    z = matmul_bias_act(g3, a, zeros2)                         # (Hg*Wg,2)
    disp = (b + z).reshape(Hg, Wg, 2)
    return (xy + disp) * 2.0 - 1.0


# ---------------------------------------------------------------------------
# Parameter initialization (deterministic, synthetic)
# ---------------------------------------------------------------------------

def init_conv(key, cin, cout, k, std=None):
    kw_, kb = jax.random.split(key)
    fan_in = cin * k * k
    if std is None:                       # kaiming_normal-like
        std = math.sqrt(2.0 / fan_in)
    w = std * jax.random.normal(kw_, (cout, cin, k, k), jnp.float32)
    bound = 1.0 / math.sqrt(fan_in)
    b = jax.random.uniform(kb, (cout,), jnp.float32, -bound, bound)
    return {"w": w, "b": b}


def init_convT(key, cin, cout, k):
    kw_, kb = jax.random.split(key)
    fan_in = cin * k * k
    w = (1.0 / math.sqrt(fan_in)) * jax.random.normal(kw_, (cin, cout, k, k), jnp.float32)
    bound = 1.0 / math.sqrt(fan_in)
    b = jax.random.uniform(kb, (cout,), jnp.float32, -bound, bound)
    return {"w": w, "b": b}


def init_grid_refine(key):
    ks = jax.random.split(key, 10)
    return {
        "conv1": init_conv(ks[0], 2, 32, 7, std=1e-4),
        "conv2": init_conv(ks[1], 32, 64, 3, std=1e-4),
        "conv3": init_conv(ks[2], 64, 32, 3, std=1e-4),
        "conv2f": init_conv(ks[3], 32, 32, 1, std=1e-4),
        "conv31": init_conv(ks[4], 64, 64, 7, std=1e-4),
        "conv32": init_conv(ks[5], 64, 128, 3, std=1e-4),
        "conv33": init_conv(ks[6], 128, 64, 3, std=1e-4),
        "conv3f": init_conv(ks[7], 64, 64, 1, std=1e-4),
        "trans1": init_convT(ks[8], 32, 2, 4),
        "trans2": init_convT(ks[9], 64, 64, 4),
        "norm1_g": jnp.ones((32,), jnp.float32),
        "norm1_b": jnp.zeros((32,), jnp.float32),
    }


def init_punet(key):
    ks = jax.random.split(key, 14)
    return {
        "conv1": init_conv(ks[0], 3, 32, 3),
        "conv2": init_conv(ks[1], 32, 64, 3),
        "conv3": init_conv(ks[2], 64, 128, 3),
        "conv4": init_conv(ks[3], 128, 256, 3),
        "conv5": init_conv(ks[4], 256, 128, 3),
        "transConv1": init_convT(ks[5], 128, 64, 3),
        "transConv2": init_convT(ks[6], 64, 32, 2),
        "skipConv11": init_conv(ks[7], 3, 32, 3),
        "skipConv12": init_conv(ks[8], 32, 32, 3),
        "skipConv21": init_conv(ks[9], 32, 64, 1),
        "skipConv22": init_conv(ks[10], 64, 64, 3),
        "skipConv31": init_conv(ks[11], 64, 64, 3),
        "up_conv1": init_conv(ks[12], 64, 64, 3),
        "up_conv2": init_conv(ks[13], 32, 3, 3),
    }


def init_gdnet(key, grid_shape=(5, 5)):
    gh, gw = grid_shape
    nparam = gh * gw + 2
    return {
        "ctrl": uniform_grid(gh, gw),
        "theta": jnp.ones((1, nparam, 2), jnp.float32) * 0.001,
        "refine": init_grid_refine(key),
    }


# ---------------------------------------------------------------------------
# Forward passes (all NHWC internally)
# ---------------------------------------------------------------------------

def C(pp, x, stride, pad, act="none", slope=0.01):
    return conv2d(x, pp["w"], pp["b"], stride=stride, padding=pad, act=act, slope=slope)


def CT(pp, x, stride, pad, outpad, act="none", slope=0.01):
    return conv_transpose2d(x, pp["w"], pp["b"], stride, pad, outpad, act=act, slope=slope)


def grid_refine_forward(p, x):
    x1 = C(p["conv1"], x, 4, 3, "relu")
    x1 = group_norm(x1, 16, p["norm1_g"], p["norm1_b"])
    x2 = C(p["conv2"], x1, 1, 1, "relu")
    x31 = C(p["conv31"], x2, 4, 3, "relu")
    x32 = C(p["conv32"], x31, 1, 1, "relu")
    x3_f = C(p["conv3f"], x31, 1, 0, "sigmoid")
    x33 = C(p["conv33"], x32, 1, 1, "relu")
    x3_out = CT(p["trans2"], x33 * x3_f, 4, 0, 0, "lrelu")
    x3 = C(p["conv3"], x3_out, 1, 1, "relu")
    x2_f = C(p["conv2f"], x1, 1, 0, "sigmoid")
    out = CT(p["trans1"], x3 * x2_f, 4, 0, 0, "lrelu")
    return x + out


def gdnet_fine_grid(gd, H, W, out_size):
    """Compute the (1,Hg,Wg,2) fine sampling grid once; it is input-independent."""
    Hg, Wg = out_size
    aff = identity_affine_grid(H, W)                             # (1,H,W,2) NHWC (C=2)
    tpsg = tps_grid_jax(gd["theta"], gd["ctrl"], Hg, Wg)[None]   # (1,Hg,Wg,2)
    tps_sampled = grid_sample_bilinear(aff, tpsg)                # (1,Hg,Wg,2)
    fine = grid_refine_forward(gd["refine"], tps_sampled)
    return jnp.clip(fine, -1.0, 1.0)                             # (1,Hg,Wg,2)


def punet_forward(p, xs, B):
    """xs: (2B,H,W,3) NHWC; first B samples = x branch, last B = s (reference) branch.
    Shared-weight prefix runs batched once, matching the PyTorch per-branch math."""
    r1 = C(p["skipConv11"], xs, 1, 1, "relu")
    r1 = C(p["skipConv12"], r1, 1, 1)
    t = C(p["conv1"], xs, 2, 1, "relu")
    r2 = C(p["skipConv21"], t, 1, 0, "relu")
    r2 = C(p["skipConv22"], r2, 1, 1)
    t = C(p["conv2"], t, 2, 1, "relu")
    r3 = C(p["skipConv31"], t, 1, 1)
    t = C(p["conv3"], t, 2, 1, "relu")
    t = C(p["conv4"], t, 1, 1, "relu")

    res1 = r1[:B] - r1[B:]
    res2 = r2[:B] - r2[B:]
    res3 = r3[:B] - r3[B:]
    x = t[:B] - t[B:]                       # relu(conv4(x)) - relu(conv4(s))

    x = C(p["conv5"], x, 1, 1, "relu")
    x = jnp.maximum(CT(p["transConv1"], x, 2, 1, 1) + res3, 0.0)
    x = upsample_bilinear_2x(x)
    x = jnp.maximum(C(p["up_conv1"], x, 1, 1) + res2, 0.0)
    x = jnp.maximum(CT(p["transConv2"], x, 2, 0, 0) + res1, 0.0)
    x = upsample_bilinear_2x(x)
    x = C(p["up_conv2"], x, 1, 1)
    x = jnp.clip(x, None, 1.0)
    x = jnp.clip(x, 0.0, None)
    return x


@functools.partial(jax.jit, static_argnames=("out_size",))
def compen_rt_forward(params, x, s, out_size):
    # Inputs/outputs are NCHW (PyTorch); internals are NHWC.
    x = jnp.transpose(x, (0, 2, 3, 1))
    s = jnp.transpose(s, (0, 2, 3, 1))
    B, H, W, _ = x.shape

    # GDNet: the fine grid depends only on parameters -> compute once, reuse for x & s.
    fine = gdnet_fine_grid(params["gd"], H, W, out_size)         # (1,Hg,Wg,2)
    xs = jnp.concatenate([x, s], axis=0)                         # (2B,H,W,3)
    grid = jnp.broadcast_to(fine, (2 * B,) + fine.shape[1:])
    xs_g = grid_sample_bilinear(xs, grid)                        # (2B,Hg,Wg,3)

    out = punet_forward(params["pu"], xs_g, B)                   # (B,2Hg,2Wg,3)
    return jnp.transpose(out, (0, 3, 1, 2))


# ---------------------------------------------------------------------------

if __name__ == "__main__":
    key = jax.random.PRNGKey(0)
    k_gd, k_pu, k_x, k_s = jax.random.split(key, 4)

    B, Cin, H, W = 2, 3, 32, 32          # small shapes; GDNet out_size = (H, W)
    params = {"gd": init_gdnet(k_gd, grid_shape=(5, 5)), "pu": init_punet(k_pu)}
    x = jax.random.uniform(k_x, (B, Cin, H, W), jnp.float32)
    s = jax.random.uniform(k_s, (B, Cin, H, W), jnp.float32)

    out = compen_rt_forward(params, x, s, out_size=(H, W))
    out = jax.block_until_ready(out)

    assert out.shape == (B, 3, 2 * H, 2 * W), out.shape
    assert bool(jnp.all(jnp.isfinite(out)))
    assert float(out.min()) >= 0.0 and float(out.max()) <= 1.0
    print("KERNEL_OK")
</pallas_src>

<mosaic_0001>
module attributes {stable_mosaic.version = 11 : i64} {
  func.func @_mm_kernel_single(%arg0: i32, %arg1: i32, %arg2: memref<512x128xbf16, #tpu.memory_space<vmem>>, %arg3: memref<128x128xbf16, #tpu.memory_space<vmem>>, %arg4: memref<1x128xf32, #tpu.memory_space<vmem>>, %arg5: memref<512x128xf32, #tpu.memory_space<vmem>>) attributes {dimension_semantics = [#tpu.dimension_semantics<parallel>, #tpu.dimension_semantics<parallel>], iteration_bounds = array<i64: 8, 1>, scalar_prefetch = 0 : i64, scratch_operands = 0 : i64, tpu.core_type = #tpu.core_type<tc>, window_params = [{transform_indices = @transform_0, window_bounds = array<i64: 512, 128>}, {transform_indices = @transform_1, window_bounds = array<i64: 128, 128>}, {transform_indices = @transform_2, window_bounds = array<i64: 1, 128>}, {transform_indices = @transform_3, window_bounds = array<i64: 512, 128>}]} {
    %c0 = arith.constant 0 : index
    %c0_0 = arith.constant 0 : index
    %0 = vector.load %arg2[%c0, %c0_0] : memref<512x128xbf16, #tpu.memory_space<vmem>>, vector<512x128xbf16>
    %c0_1 = arith.constant 0 : index
    %c0_2 = arith.constant 0 : index
    %1 = vector.load %arg3[%c0_1, %c0_2] : memref<128x128xbf16, #tpu.memory_space<vmem>>, vector<128x128xbf16>
    %cst = arith.constant dense<0.000000e+00> : vector<512x128xf32>
    %2 = tpu.matmul %0, %1, %cst {dimension_numbers = #tpu.dot_dimension_numbers<[1], [0], [0], [1], [0, 0, 1, 1], [], []>} : vector<512x128xbf16>, vector<128x128xbf16>, vector<512x128xf32> -> vector<512x128xf32>
    %c0_3 = arith.constant 0 : index
    %c0_4 = arith.constant 0 : index
    %3 = vector.load %arg4[%c0_3, %c0_4] : memref<1x128xf32, #tpu.memory_space<vmem>>, vector<1x128xf32>
    %4 = vector.broadcast %3 : vector<1x128xf32> to vector<512x128xf32>
    %5 = arith.addf %2, %4 : vector<512x128xf32>
    %cst_5 = arith.constant 0.000000e+00 : f32
    %6 = vector.broadcast %cst_5 : f32 to vector<512x128xf32>
    %7 = arith.maximumf %5, %6 : vector<512x128xf32>
    %c0_6 = arith.constant 0 : index
    %c0_7 = arith.constant 0 : index
    %8 = vector.load %arg5[%c0_6, %c0_7] : memref<512x128xf32, #tpu.memory_space<vmem>>, vector<512x128xf32>
    tpu.vector_store %arg5[%c0_6, %c0_7], %7 {strides = array<i32>} : memref<512x128xf32, #tpu.memory_space<vmem>>, vector<512x128xf32>,
    return
  }
  func.func @transform_0(%arg0: i32, %arg1: i32) -> (i32, i32) {
    %c0_i32 = arith.constant 0 : i32
    %c0_i32_0 = arith.constant 0 : i32
    return %arg0, %c0_i32 : i32, i32
  }
  func.func @transform_1(%arg0: i32, %arg1: i32) -> (i32, i32) {
    %c0_i32 = arith.constant 0 : i32
    %c0_i32_0 = arith.constant 0 : i32
    return %c0_i32, %arg1 : i32, i32
  }
  func.func @transform_2(%arg0: i32, %arg1: i32) -> (i32, i32) {
    %c0_i32 = arith.constant 0 : i32
    %c0_i32_0 = arith.constant 0 : i32
    return %c0_i32, %arg1 : i32, i32
  }
  func.func @transform_3(%arg0: i32, %arg1: i32) -> (i32, i32) {
    %c0_i32 = arith.constant 0 : i32
    return %arg0, %arg1 : i32, i32
  }
}

module attributes {stable_mosaic.version = 11 : i64} {
  func.func @_mm_kernel_single(%arg0: i32, %arg1: i32, %arg2: memref<512x384xbf16, #tpu.memory_space<vmem>>, %arg3: memref<384x128xbf16, #tpu.memory_space<vmem>>, %arg4: memref<1x128xf32, #tpu.memory_space<vmem>>, %arg5: memref<512x128xf32, #tpu.memory_space<vmem>>) attributes {dimension_semantics = [#tpu.dimension_semantics<parallel>, #tpu.dimension_semantics<parallel>], iteration_bounds = array<i64: 8, 1>, scalar_prefetch = 0 : i64, scratch_operands = 0 : i64, tpu.core_type = #tpu.core_type<tc>, window_params = [{transform_indices = @transform_0, window_bounds = array<i64: 512, 384>}, {transform_indices = @transform_1, window_bounds = array<i64: 384, 128>}, {transform_indices = @transform_2, window_bounds = array<i64: 1, 128>}, {transform_indices = @transform_3, window_bounds = array<i64: 512, 128>}]} {
    %c0 = arith.constant 0 : index
    %c0_0 = arith.constant 0 : index
    %0 = vector.load %arg2[%c0, %c0_0] : memref<512x384xbf16, #tpu.memory_space<vmem>>, vector<512x384xbf16>
    %c0_1 = arith.constant 0 : index
    %c0_2 = arith.constant 0 : index
    %1 = vector.load %arg3[%c0_1, %c0_2] : memref<384x128xbf16, #tpu.memory_space<vmem>>, vector<384x128xbf16>
    %cst = arith.constant dense<0.000000e+00> : vector<512x128xf32>
    %2 = tpu.matmul %0, %1, %cst {dimension_numbers = #tpu.dot_dimension_numbers<[1], [0], [0], [1], [0, 0, 1, 1], [], []>} : vector<512x384xbf16>, vector<384x128xbf16>, vector<512x128xf32> -> vector<512x128xf32>
    %c0_3 = arith.constant 0 : index
    %c0_4 = arith.constant 0 : index
    %3 = vector.load %arg4[%c0_3, %c0_4] : memref<1x128xf32, #tpu.memory_space<vmem>>, vector<1x128xf32>
    %4 = vector.broadcast %3 : vector<1x128xf32> to vector<512x128xf32>
    %5 = arith.addf %2, %4 : vector<512x128xf32>
    %c0_5 = arith.constant 0 : index
    %c0_6 = arith.constant 0 : index
    %6 = vector.load %arg5[%c0_5, %c0_6] : memref<512x128xf32, #tpu.memory_space<vmem>>, vector<512x128xf32>
    tpu.vector_store %arg5[%c0_5, %c0_6], %5 {strides = array<i32>} : memref<512x128xf32, #tpu.memory_space<vmem>>, vector<512x128xf32>,
    return
  }
  func.func @transform_0(%arg0: i32, %arg1: i32) -> (i32, i32) {
    %c0_i32 = arith.constant 0 : i32
    %c0_i32_0 = arith.constant 0 : i32
    return %arg0, %c0_i32 : i32, i32
  }
  func.func @transform_1(%arg0: i32, %arg1: i32) -> (i32, i32) {
    %c0_i32 = arith.constant 0 : i32
    %c0_i32_0 = arith.constant 0 : i32
    return %c0_i32, %arg1 : i32, i32
  }
  func.func @transform_2(%arg0: i32, %arg1: i32) -> (i32, i32) {
    %c0_i32 = arith.constant 0 : i32
    %c0_i32_0 = arith.constant 0 : i32
    return %c0_i32, %arg1 : i32, i32
  }
  func.func @transform_3(%arg0: i32, %arg1: i32) -> (i32, i32) {
    %c0_i32 = arith.constant 0 : i32
    return %arg0, %arg1 : i32, i32
  }
}

module attributes {stable_mosaic.version = 11 : i64} {
  func.func @_mm_kernel_single(%arg0: i32, %arg1: i32, %arg2: memref<256x128xbf16, #tpu.memory_space<vmem>>, %arg3: memref<128x128xbf16, #tpu.memory_space<vmem>>, %arg4: memref<1x128xf32, #tpu.memory_space<vmem>>, %arg5: memref<256x128xf32, #tpu.memory_space<vmem>>) attributes {dimension_semantics = [#tpu.dimension_semantics<parallel>, #tpu.dimension_semantics<parallel>], iteration_bounds = array<i64: 4, 1>, scalar_prefetch = 0 : i64, scratch_operands = 0 : i64, tpu.core_type = #tpu.core_type<tc>, window_params = [{transform_indices = @transform_0, window_bounds = array<i64: 256, 128>}, {transform_indices = @transform_1, window_bounds = array<i64: 128, 128>}, {transform_indices = @transform_2, window_bounds = array<i64: 1, 128>}, {transform_indices = @transform_3, window_bounds = array<i64: 256, 128>}]} {
    %c0 = arith.constant 0 : index
    %c0_0 = arith.constant 0 : index
    %0 = vector.load %arg2[%c0, %c0_0] : memref<256x128xbf16, #tpu.memory_space<vmem>>, vector<256x128xbf16>
    %c0_1 = arith.constant 0 : index
    %c0_2 = arith.constant 0 : index
    %1 = vector.load %arg3[%c0_1, %c0_2] : memref<128x128xbf16, #tpu.memory_space<vmem>>, vector<128x128xbf16>
    %cst = arith.constant dense<0.000000e+00> : vector<256x128xf32>
    %2 = tpu.matmul %0, %1, %cst {dimension_numbers = #tpu.dot_dimension_numbers<[1], [0], [0], [1], [0, 0, 1, 1], [], []>} : vector<256x128xbf16>, vector<128x128xbf16>, vector<256x128xf32> -> vector<256x128xf32>
    %c0_3 = arith.constant 0 : index
    %c0_4 = arith.constant 0 : index
    %3 = vector.load %arg4[%c0_3, %c0_4] : memref<1x128xf32, #tpu.memory_space<vmem>>, vector<1x128xf32>
    %4 = vector.broadcast %3 : vector<1x128xf32> to vector<256x128xf32>
    %5 = arith.addf %2, %4 : vector<256x128xf32>
    %cst_5 = arith.constant 0.000000e+00 : f32
    %6 = vector.broadcast %cst_5 : f32 to vector<256x128xf32>
    %7 = arith.maximumf %5, %6 : vector<256x128xf32>
    %c0_6 = arith.constant 0 : index
    %c0_7 = arith.constant 0 : index
    %8 = vector.load %arg5[%c0_6, %c0_7] : memref<256x128xf32, #tpu.memory_space<vmem>>, vector<256x128xf32>
    tpu.vector_store %arg5[%c0_6, %c0_7], %7 {strides = array<i32>} : memref<256x128xf32, #tpu.memory_space<vmem>>, vector<256x128xf32>,
    return
  }
  func.func @transform_0(%arg0: i32, %arg1: i32) -> (i32, i32) {
    %c0_i32 = arith.constant 0 : i32
    %c0_i32_0 = arith.constant 0 : i32
    return %arg0, %c0_i32 : i32, i32
  }
  func.func @transform_1(%arg0: i32, %arg1: i32) -> (i32, i32) {
    %c0_i32 = arith.constant 0 : i32
    %c0_i32_0 = arith.constant 0 : i32
    return %c0_i32, %arg1 : i32, i32
  }
  func.func @transform_2(%arg0: i32, %arg1: i32) -> (i32, i32) {
    %c0_i32 = arith.constant 0 : i32
    %c0_i32_0 = arith.constant 0 : i32
    return %c0_i32, %arg1 : i32, i32
  }
  func.func @transform_3(%arg0: i32, %arg1: i32) -> (i32, i32) {
    %c0_i32 = arith.constant 0 : i32
    return %arg0, %arg1 : i32, i32
  }
}

module attributes {stable_mosaic.version = 11 : i64} {
  func.func @_mm_kernel_multi(%arg0: i32, %arg1: i32, %arg2: i32, %arg3: memref<256x256xbf16, #tpu.memory_space<vmem>>, %arg4: memref<256x128xbf16, #tpu.memory_space<vmem>>, %arg5: memref<1x128xf32, #tpu.memory_space<vmem>>, %arg6: memref<256x128xf32, #tpu.memory_space<vmem>>, %arg7: memref<256x128xf32, #tpu.memory_space<vmem>>) attributes {dimension_semantics = [#tpu.dimension_semantics<parallel>, #tpu.dimension_semantics<parallel>, #tpu.dimension_semantics<arbitrary>], iteration_bounds = array<i64: 4, 1, 3>, scalar_prefetch = 0 : i64, scratch_operands = 1 : i64, tpu.core_type = #tpu.core_type<tc>, window_params = [{transform_indices = @transform_0, window_bounds = array<i64: 256, 256>}, {transform_indices = @transform_1, window_bounds = array<i64: 256, 128>}, {transform_indices = @transform_2, window_bounds = array<i64: 1, 128>}, {transform_indices = @transform_3, window_bounds = array<i64: 256, 128>}]} {
    %c0_i32 = arith.constant 0 : i32
    %0 = arith.cmpi eq, %arg2, %c0_i32 : i32
    %1 = arith.extui %0 : i1 to i32
    %c0_i32_0 = arith.constant 0 : i32
    %2 = arith.cmpi ne, %1, %c0_i32_0 : i32
    scf.if %2 {
      %cst_9 = arith.constant 0.000000e+00 : f32
      %12 = vector.broadcast %cst_9 : f32 to vector<256x128xf32>
      %c0_10 = arith.constant 0 : index
      %c0_11 = arith.constant 0 : index
      %13 = vector.load %arg5[%c0_10, %c0_11] : memref<1x128xf32, #tpu.memory_space<vmem>>, vector<1x128xf32>
      %14 = vector.broadcast %13 : vector<1x128xf32> to vector<256x128xf32>
      %15 = arith.addf %12, %14 : vector<256x128xf32>
      %c0_12 = arith.constant 0 : index
      %c0_13 = arith.constant 0 : index
      %16 = vector.load %arg7[%c0_12, %c0_13] : memref<256x128xf32, #tpu.memory_space<vmem>>, vector<256x128xf32>
      tpu.vector_store %arg7[%c0_12, %c0_13], %15 {strides = array<i32>} : memref<256x128xf32, #tpu.memory_space<vmem>>, vector<256x128xf32>,
    } else {
    }
    %c0 = arith.constant 0 : index
    %c0_1 = arith.constant 0 : index
    %3 = vector.load %arg7[%c0, %c0_1] : memref<256x128xf32, #tpu.memory_space<vmem>>, vector<256x128xf32>
    %c0_2 = arith.constant 0 : index
    %c0_3 = arith.constant 0 : index
    %4 = vector.load %arg3[%c0_2, %c0_3] : memref<256x256xbf16, #tpu.memory_space<vmem>>, vector<256x256xbf16>
    %c0_4 = arith.constant 0 : index
    %c0_5 = arith.constant 0 : index
    %5 = vector.load %arg4[%c0_4, %c0_5] : memref<256x128xbf16, #tpu.memory_space<vmem>>, vector<256x128xbf16>
    %cst = arith.constant dense<0.000000e+00> : vector<256x128xf32>
    %6 = tpu.matmul %4, %5, %cst {dimension_numbers = #tpu.dot_dimension_numbers<[1], [0], [0], [1], [0, 0, 1, 1], [], []>} : vector<256x256xbf16>, vector<256x128xbf16>, vector<256x128xf32> -> vector<256x128xf32>
    %7 = arith.addf %3, %6 : vector<256x128xf32>
    %c0_6 = arith.constant 0 : index
    %c0_7 = arith.constant 0 : index
    %8 = vector.load %arg7[%c0_6, %c0_7] : memref<256x128xf32, #tpu.memory_space<vmem>>, vector<256x128xf32>
    tpu.vector_store %arg7[%c0_6, %c0_7], %7 {strides = array<i32>} : memref<256x128xf32, #tpu.memory_space<vmem>>, vector<256x128xf32>,
    %c2_i32 = arith.constant 2 : i32
    %9 = arith.cmpi eq, %arg2, %c2_i32 : i32
    %10 = arith.extui %9 : i1 to i32
    %c0_i32_8 = arith.constant 0 : i32
    %11 = arith.cmpi ne, %10, %c0_i32_8 : i32
    scf.if %11 {
      %c0_9 = arith.constant 0 : index
      %c0_10 = arith.constant 0 : index
      %12 = vector.load %arg7[%c0_9, %c0_10] : memref<256x128xf32, #tpu.memory_space<vmem>>, vector<256x128xf32>
      %c0_11 = arith.constant 0 : index
      %c0_12 = arith.constant 0 : index
      %13 = vector.load %arg6[%c0_11, %c0_12] : memref<256x128xf32, #tpu.memory_space<vmem>>, vector<256x128xf32>
      tpu.vector_store %arg6[%c0_11, %c0_12], %12 {strides = array<i32>} : memref<256x128xf32, #tpu.memory_space<vmem>>, vector<256x128xf32>,
    } else {
    }
    return
  }
  func.func @transform_0(%arg0: i32, %arg1: i32, %arg2: i32) -> (i32, i32) {
    %c0_i32 = arith.constant 0 : i32
    return %arg0, %arg2 : i32, i32
  }
  func.func @transform_1(%arg0: i32, %arg1: i32, %arg2: i32) -> (i32, i32) {
    %c0_i32 = arith.constant 0 : i32
    return %arg2, %arg1 : i32, i32
  }
  func.func @transform_2(%arg0: i32, %arg1: i32, %arg2: i32) -> (i32, i32) {
    %c0_i32 = arith.constant 0 : i32
    %c0_i32_0 = arith.constant 0 : i32
    return %c0_i32, %arg1 : i32, i32
  }
  func.func @transform_3(%arg0: i32, %arg1: i32, %arg2: i32) -> (i32, i32) {
    %c0_i32 = arith.constant 0 : i32
    return %arg0, %arg1 : i32, i32
  }
}

module attributes {stable_mosaic.version = 11 : i64} {
  func.func @_mm_kernel_single(%arg0: i32, %arg1: i32, %arg2: memref<256x384xbf16, #tpu.memory_space<vmem>>, %arg3: memref<384x128xbf16, #tpu.memory_space<vmem>>, %arg4: memref<1x128xf32, #tpu.memory_space<vmem>>, %arg5: memref<256x128xf32, #tpu.memory_space<vmem>>) attributes {dimension_semantics = [#tpu.dimension_semantics<parallel>, #tpu.dimension_semantics<parallel>], iteration_bounds = array<i64: 1, 1>, scalar_prefetch = 0 : i64, scratch_operands = 0 : i64, tpu.core_type = #tpu.core_type<tc>, window_params = [{transform_indices = @transform_0, window_bounds = array<i64: 256, 384>}, {transform_indices = @transform_1, window_bounds = array<i64: 384, 128>}, {transform_indices = @transform_2, window_bounds = array<i64: 1, 128>}, {transform_indices = @transform_3, window_bounds = array<i64: 256, 128>}]} {
    %c0 = arith.constant 0 : index
    %c0_0 = arith.constant 0 : index
    %0 = vector.load %arg2[%c0, %c0_0] : memref<256x384xbf16, #tpu.memory_space<vmem>>, vector<256x384xbf16>
    %c0_1 = arith.constant 0 : index
    %c0_2 = arith.constant 0 : index
    %1 = vector.load %arg3[%c0_1, %c0_2] : memref<384x128xbf16, #tpu.memory_space<vmem>>, vector<384x128xbf16>
    %cst = arith.constant dense<0.000000e+00> : vector<256x128xf32>
    %2 = tpu.matmul %0, %1, %cst {dimension_numbers = #tpu.dot_dimension_numbers<[1], [0], [0], [1], [0, 0, 1, 1], [], []>} : vector<256x384xbf16>, vector<384x128xbf16>, vector<256x128xf32> -> vector<256x128xf32>
    %c0_3 = arith.constant 0 : index
    %c0_4 = arith.constant 0 : index
    %3 = vector.load %arg4[%c0_3, %c0_4] : memref<1x128xf32, #tpu.memory_space<vmem>>, vector<1x128xf32>
    %4 = vector.broadcast %3 : vector<1x128xf32> to vector<256x128xf32>
    %5 = arith.addf %2, %4 : vector<256x128xf32>
    %cst_5 = arith.constant 0.000000e+00 : f32
    %6 = vector.broadcast %cst_5 : f32 to vector<256x128xf32>
    %7 = arith.maximumf %5, %6 : vector<256x128xf32>
    %c0_6 = arith.constant 0 : index
    %c0_7 = arith.constant 0 : index
    %8 = vector.load %arg5[%c0_6, %c0_7] : memref<256x128xf32, #tpu.memory_space<vmem>>, vector<256x128xf32>
    tpu.vector_store %arg5[%c0_6, %c0_7], %7 {strides = array<i32>} : memref<256x128xf32, #tpu.memory_space<vmem>>, vector<256x128xf32>,
    return
  }
  func.func @transform_0(%arg0: i32, %arg1: i32) -> (i32, i32) {
    %c0_i32 = arith.constant 0 : i32
    %c0_i32_0 = arith.constant 0 : i32
    return %arg0, %c0_i32 : i32, i32
  }
  func.func @transform_1(%arg0: i32, %arg1: i32) -> (i32, i32) {
    %c0_i32 = arith.constant 0 : i32
    %c0_i32_0 = arith.constant 0 : i32
    return %c0_i32, %arg1 : i32, i32
  }
  func.func @transform_2(%arg0: i32, %arg1: i32) -> (i32, i32) {
    %c0_i32 = arith.constant 0 : i32
    %c0_i32_0 = arith.constant 0 : i32
    return %c0_i32, %arg1 : i32, i32
  }
  func.func @transform_3(%arg0: i32, %arg1: i32) -> (i32, i32) {
    %c0_i32 = arith.constant 0 : i32
    return %arg0, %arg1 : i32, i32
  }
}

module attributes {stable_mosaic.version = 11 : i64} {
  func.func @_mm_kernel_multi(%arg0: i32, %arg1: i32, %arg2: i32, %arg3: memref<256x256xbf16, #tpu.memory_space<vmem>>, %arg4: memref<256x128xbf16, #tpu.memory_space<vmem>>, %arg5: memref<1x128xf32, #tpu.memory_space<vmem>>, %arg6: memref<256x128xf32, #tpu.memory_space<vmem>>, %arg7: memref<256x128xf32, #tpu.memory_space<vmem>>) attributes {dimension_semantics = [#tpu.dimension_semantics<parallel>, #tpu.dimension_semantics<parallel>, #tpu.dimension_semantics<arbitrary>], iteration_bounds = array<i64: 1, 1, 3>, scalar_prefetch = 0 : i64, scratch_operands = 1 : i64, tpu.core_type = #tpu.core_type<tc>, window_params = [{transform_indices = @transform_0, window_bounds = array<i64: 256, 256>}, {transform_indices = @transform_1, window_bounds = array<i64: 256, 128>}, {transform_indices = @transform_2, window_bounds = array<i64: 1, 128>}, {transform_indices = @transform_3, window_bounds = array<i64: 256, 128>}]} {
    %c0_i32 = arith.constant 0 : i32
    %0 = arith.cmpi eq, %arg2, %c0_i32 : i32
    %1 = arith.extui %0 : i1 to i32
    %c0_i32_0 = arith.constant 0 : i32
    %2 = arith.cmpi ne, %1, %c0_i32_0 : i32
    scf.if %2 {
      %cst_9 = arith.constant 0.000000e+00 : f32
      %12 = vector.broadcast %cst_9 : f32 to vector<256x128xf32>
      %c0_10 = arith.constant 0 : index
      %c0_11 = arith.constant 0 : index
      %13 = vector.load %arg5[%c0_10, %c0_11] : memref<1x128xf32, #tpu.memory_space<vmem>>, vector<1x128xf32>
      %14 = vector.broadcast %13 : vector<1x128xf32> to vector<256x128xf32>
      %15 = arith.addf %12, %14 : vector<256x128xf32>
      %c0_12 = arith.constant 0 : index
      %c0_13 = arith.constant 0 : index
      %16 = vector.load %arg7[%c0_12, %c0_13] : memref<256x128xf32, #tpu.memory_space<vmem>>, vector<256x128xf32>
      tpu.vector_store %arg7[%c0_12, %c0_13], %15 {strides = array<i32>} : memref<256x128xf32, #tpu.memory_space<vmem>>, vector<256x128xf32>,
    } else {
    }
    %c0 = arith.constant 0 : index
    %c0_1 = arith.constant 0 : index
    %3 = vector.load %arg7[%c0, %c0_1] : memref<256x128xf32, #tpu.memory_space<vmem>>, vector<256x128xf32>
    %c0_2 = arith.constant 0 : index
    %c0_3 = arith.constant 0 : index
    %4 = vector.load %arg3[%c0_2, %c0_3] : memref<256x256xbf16, #tpu.memory_space<vmem>>, vector<256x256xbf16>
    %c0_4 = arith.constant 0 : index
    %c0_5 = arith.constant 0 : index
    %5 = vector.load %arg4[%c0_4, %c0_5] : memref<256x128xbf16, #tpu.memory_space<vmem>>, vector<256x128xbf16>
    %cst = arith.constant dense<0.000000e+00> : vector<256x128xf32>
    %6 = tpu.matmul %4, %5, %cst {dimension_numbers = #tpu.dot_dimension_numbers<[1], [0], [0], [1], [0, 0, 1, 1], [], []>} : vector<256x256xbf16>, vector<256x128xbf16>, vector<256x128xf32> -> vector<256x128xf32>
    %7 = arith.addf %3, %6 : vector<256x128xf32>
    %c0_6 = arith.constant 0 : index
    %c0_7 = arith.constant 0 : index
    %8 = vector.load %arg7[%c0_6, %c0_7] : memref<256x128xf32, #tpu.memory_space<vmem>>, vector<256x128xf32>
    tpu.vector_store %arg7[%c0_6, %c0_7], %7 {strides = array<i32>} : memref<256x128xf32, #tpu.memory_space<vmem>>, vector<256x128xf32>,
    %c2_i32 = arith.constant 2 : i32
    %9 = arith.cmpi eq, %arg2, %c2_i32 : i32
    %10 = arith.extui %9 : i1 to i32
    %c0_i32_8 = arith.constant 0 : i32
    %11 = arith.cmpi ne, %10, %c0_i32_8 : i32
    scf.if %11 {
      %c0_9 = arith.constant 0 : index
      %c0_10 = arith.constant 0 : index
      %12 = vector.load %arg7[%c0_9, %c0_10] : memref<256x128xf32, #tpu.memory_space<vmem>>, vector<256x128xf32>
      %c0_11 = arith.constant 0 : index
      %c0_12 = arith.constant 0 : index
      %13 = vector.load %arg6[%c0_11, %c0_12] : memref<256x128xf32, #tpu.memory_space<vmem>>, vector<256x128xf32>
      tpu.vector_store %arg6[%c0_11, %c0_12], %12 {strides = array<i32>} : memref<256x128xf32, #tpu.memory_space<vmem>>, vector<256x128xf32>,
    } else {
    }
    return
  }
  func.func @transform_0(%arg0: i32, %arg1: i32, %arg2: i32) -> (i32, i32) {
    %c0_i32 = arith.constant 0 : i32
    return %arg0, %arg2 : i32, i32
  }
  func.func @transform_1(%arg0: i32, %arg1: i32, %arg2: i32) -> (i32, i32) {
    %c0_i32 = arith.constant 0 : i32
    return %arg2, %arg1 : i32, i32
  }
  func.func @transform_2(%arg0: i32, %arg1: i32, %arg2: i32) -> (i32, i32) {
    %c0_i32 = arith.constant 0 : i32
    %c0_i32_0 = arith.constant 0 : i32
    return %c0_i32, %arg1 : i32, i32
  }
  func.func @transform_3(%arg0: i32, %arg1: i32, %arg2: i32) -> (i32, i32) {
    %c0_i32 = arith.constant 0 : i32
    return %arg0, %arg1 : i32, i32
  }
}

module attributes {stable_mosaic.version = 11 : i64} {
  func.func @_mm_kernel_multi(%arg0: i32, %arg1: i32, %arg2: i32, %arg3: memref<128x256xbf16, #tpu.memory_space<vmem>>, %arg4: memref<256x128xbf16, #tpu.memory_space<vmem>>, %arg5: memref<1x128xf32, #tpu.memory_space<vmem>>, %arg6: memref<128x128xf32, #tpu.memory_space<vmem>>, %arg7: memref<128x128xf32, #tpu.memory_space<vmem>>) attributes {dimension_semantics = [#tpu.dimension_semantics<parallel>, #tpu.dimension_semantics<parallel>, #tpu.dimension_semantics<arbitrary>], iteration_bounds = array<i64: 1, 1, 5>, scalar_prefetch = 0 : i64, scratch_operands = 1 : i64, tpu.core_type = #tpu.core_type<tc>, window_params = [{transform_indices = @transform_0, window_bounds = array<i64: 128, 256>}, {transform_indices = @transform_1, window_bounds = array<i64: 256, 128>}, {transform_indices = @transform_2, window_bounds = array<i64: 1, 128>}, {transform_indices = @transform_3, window_bounds = array<i64: 128, 128>}]} {
    %c0_i32 = arith.constant 0 : i32
    %0 = arith.cmpi eq, %arg2, %c0_i32 : i32
    %1 = arith.extui %0 : i1 to i32
    %c0_i32_0 = arith.constant 0 : i32
    %2 = arith.cmpi ne, %1, %c0_i32_0 : i32
    scf.if %2 {
      %cst_9 = arith.constant 0.000000e+00 : f32
      %12 = vector.broadcast %cst_9 : f32 to vector<128x128xf32>
      %c0_10 = arith.constant 0 : index
      %c0_11 = arith.constant 0 : index
      %13 = vector.load %arg5[%c0_10, %c0_11] : memref<1x128xf32, #tpu.memory_space<vmem>>, vector<1x128xf32>
      %14 = vector.broadcast %13 : vector<1x128xf32> to vector<128x128xf32>
      %15 = arith.addf %12, %14 : vector<128x128xf32>
      %c0_12 = arith.constant 0 : index
      %c0_13 = arith.constant 0 : index
      %16 = vector.load %arg7[%c0_12, %c0_13] : memref<128x128xf32, #tpu.memory_space<vmem>>, vector<128x128xf32>
      tpu.vector_store %arg7[%c0_12, %c0_13], %15 {strides = array<i32>} : memref<128x128xf32, #tpu.memory_space<vmem>>, vector<128x128xf32>,
    } else {
    }
    %c0 = arith.constant 0 : index
    %c0_1 = arith.constant 0 : index
    %3 = vector.load %arg7[%c0, %c0_1] : memref<128x128xf32, #tpu.memory_space<vmem>>, vector<128x128xf32>
    %c0_2 = arith.constant 0 : index
    %c0_3 = arith.constant 0 : index
    %4 = vector.load %arg3[%c0_2, %c0_3] : memref<128x256xbf16, #tpu.memory_space<vmem>>, vector<128x256xbf16>
    %c0_4 = arith.constant 0 : index
    %c0_5 = arith.constant 0 : index
    %5 = vector.load %arg4[%c0_4, %c0_5] : memref<256x128xbf16, #tpu.memory_space<vmem>>, vector<256x128xbf16>
    %cst = arith.constant dense<0.000000e+00> : vector<128x128xf32>
    %6 = tpu.matmul %4, %5, %cst {dimension_numbers = #tpu.dot_dimension_numbers<[1], [0], [0], [1], [0, 0, 1, 1], [], []>} : vector<128x256xbf16>, vector<256x128xbf16>, vector<128x128xf32> -> vector<128x128xf32>
    %7 = arith.addf %3, %6 : vector<128x128xf32>
    %c0_6 = arith.constant 0 : index
    %c0_7 = arith.constant 0 : index
    %8 = vector.load %arg7[%c0_6, %c0_7] : memref<128x128xf32, #tpu.memory_space<vmem>>, vector<128x128xf32>
    tpu.vector_store %arg7[%c0_6, %c0_7], %7 {strides = array<i32>} : memref<128x128xf32, #tpu.memory_space<vmem>>, vector<128x128xf32>,
    %c4_i32 = arith.constant 4 : i32
    %9 = arith.cmpi eq, %arg2, %c4_i32 : i32
    %10 = arith.extui %9 : i1 to i32
    %c0_i32_8 = arith.constant 0 : i32
    %11 = arith.cmpi ne, %10, %c0_i32_8 : i32
    scf.if %11 {
      %c0_9 = arith.constant 0 : index
      %c0_10 = arith.constant 0 : index
      %12 = vector.load %arg7[%c0_9, %c0_10] : memref<128x128xf32, #tpu.memory_space<vmem>>, vector<128x128xf32>
      %c0_11 = arith.constant 0 : index
      %c0_12 = arith.constant 0 : index
      %13 = vector.load %arg6[%c0_11, %c0_12] : memref<128x128xf32, #tpu.memory_space<vmem>>, vector<128x128xf32>
      tpu.vector_store %arg6[%c0_11, %c0_12], %12 {strides = array<i32>} : memref<128x128xf32, #tpu.memory_space<vmem>>, vector<128x128xf32>,
    } else {
    }
    return
  }
  func.func @transform_0(%arg0: i32, %arg1: i32, %arg2: i32) -> (i32, i32) {
    %c0_i32 = arith.constant 0 : i32
    return %arg0, %arg2 : i32, i32
  }
  func.func @transform_1(%arg0: i32, %arg1: i32, %arg2: i32) -> (i32, i32) {
    %c0_i32 = arith.constant 0 : i32
    return %arg2, %arg1 : i32, i32
  }
  func.func @transform_2(%arg0: i32, %arg1: i32, %arg2: i32) -> (i32, i32) {
    %c0_i32 = arith.constant 0 : i32
    %c0_i32_0 = arith.constant 0 : i32
    return %c0_i32, %arg1 : i32, i32
  }
  func.func @transform_3(%arg0: i32, %arg1: i32, %arg2: i32) -> (i32, i32) {
    %c0_i32 = arith.constant 0 : i32
    return %arg0, %arg1 : i32, i32
  }
}

module attributes {stable_mosaic.version = 11 : i64} {
  func.func @_mm_kernel_multi(%arg0: i32, %arg1: i32, %arg2: i32, %arg3: memref<256x256xbf16, #tpu.memory_space<vmem>>, %arg4: memref<256x128xbf16, #tpu.memory_space<vmem>>, %arg5: memref<1x128xf32, #tpu.memory_space<vmem>>, %arg6: memref<256x128xf32, #tpu.memory_space<vmem>>, %arg7: memref<256x128xf32, #tpu.memory_space<vmem>>) attributes {dimension_semantics = [#tpu.dimension_semantics<parallel>, #tpu.dimension_semantics<parallel>, #tpu.dimension_semantics<arbitrary>], iteration_bounds = array<i64: 2, 1, 3>, scalar_prefetch = 0 : i64, scratch_operands = 1 : i64, tpu.core_type = #tpu.core_type<tc>, window_params = [{transform_indices = @transform_0, window_bounds = array<i64: 256, 256>}, {transform_indices = @transform_1, window_bounds = array<i64: 256, 128>}, {transform_indices = @transform_2, window_bounds = array<i64: 1, 128>}, {transform_indices = @transform_3, window_bounds = array<i64: 256, 128>}]} {
    %c0_i32 = arith.constant 0 : i32
    %0 = arith.cmpi eq, %arg2, %c0_i32 : i32
    %1 = arith.extui %0 : i1 to i32
    %c0_i32_0 = arith.constant 0 : i32
    %2 = arith.cmpi ne, %1, %c0_i32_0 : i32
    scf.if %2 {
      %cst_9 = arith.constant 0.000000e+00 : f32
      %12 = vector.broadcast %cst_9 : f32 to vector<256x128xf32>
      %c0_10 = arith.constant 0 : index
      %c0_11 = arith.constant 0 : index
      %13 = vector.load %arg5[%c0_10, %c0_11] : memref<1x128xf32, #tpu.memory_space<vmem>>, vector<1x128xf32>
      %14 = vector.broadcast %13 : vector<1x128xf32> to vector<256x128xf32>
      %15 = arith.addf %12, %14 : vector<256x128xf32>
      %c0_12 = arith.constant 0 : index
      %c0_13 = arith.constant 0 : index
      %16 = vector.load %arg7[%c0_12, %c0_13] : memref<256x128xf32, #tpu.memory_space<vmem>>, vector<256x128xf32>
      tpu.vector_store %arg7[%c0_12, %c0_13], %15 {strides = array<i32>} : memref<256x128xf32, #tpu.memory_space<vmem>>, vector<256x128xf32>,
    } else {
    }
    %c0 = arith.constant 0 : index
    %c0_1 = arith.constant 0 : index
    %3 = vector.load %arg7[%c0, %c0_1] : memref<256x128xf32, #tpu.memory_space<vmem>>, vector<256x128xf32>
    %c0_2 = arith.constant 0 : index
    %c0_3 = arith.constant 0 : index
    %4 = vector.load %arg3[%c0_2, %c0_3] : memref<256x256xbf16, #tpu.memory_space<vmem>>, vector<256x256xbf16>
    %c0_4 = arith.constant 0 : index
    %c0_5 = arith.constant 0 : index
    %5 = vector.load %arg4[%c0_4, %c0_5] : memref<256x128xbf16, #tpu.memory_space<vmem>>, vector<256x128xbf16>
    %cst = arith.constant dense<0.000000e+00> : vector<256x128xf32>
    %6 = tpu.matmul %4, %5, %cst {dimension_numbers = #tpu.dot_dimension_numbers<[1], [0], [0], [1], [0, 0, 1, 1], [], []>} : vector<256x256xbf16>, vector<256x128xbf16>, vector<256x128xf32> -> vector<256x128xf32>
    %7 = arith.addf %3, %6 : vector<256x128xf32>
    %c0_6 = arith.constant 0 : index
    %c0_7 = arith.constant 0 : index
    %8 = vector.load %arg7[%c0_6, %c0_7] : memref<256x128xf32, #tpu.memory_space<vmem>>, vector<256x128xf32>
    tpu.vector_store %arg7[%c0_6, %c0_7], %7 {strides = array<i32>} : memref<256x128xf32, #tpu.memory_space<vmem>>, vector<256x128xf32>,
    %c2_i32 = arith.constant 2 : i32
    %9 = arith.cmpi eq, %arg2, %c2_i32 : i32
    %10 = arith.extui %9 : i1 to i32
    %c0_i32_8 = arith.constant 0 : i32
    %11 = arith.cmpi ne, %10, %c0_i32_8 : i32
    scf.if %11 {
      %c0_9 = arith.constant 0 : index
      %c0_10 = arith.constant 0 : index
      %12 = vector.load %arg7[%c0_9, %c0_10] : memref<256x128xf32, #tpu.memory_space<vmem>>, vector<256x128xf32>
      %c0_11 = arith.constant 0 : index
      %c0_12 = arith.constant 0 : index
      %13 = vector.load %arg6[%c0_11, %c0_12] : memref<256x128xf32, #tpu.memory_space<vmem>>, vector<256x128xf32>
      tpu.vector_store %arg6[%c0_11, %c0_12], %12 {strides = array<i32>} : memref<256x128xf32, #tpu.memory_space<vmem>>, vector<256x128xf32>,
    } else {
    }
    return
  }
  func.func @transform_0(%arg0: i32, %arg1: i32, %arg2: i32) -> (i32, i32) {
    %c0_i32 = arith.constant 0 : i32
    return %arg0, %arg2 : i32, i32
  }
  func.func @transform_1(%arg0: i32, %arg1: i32, %arg2: i32) -> (i32, i32) {
    %c0_i32 = arith.constant 0 : i32
    return %arg2, %arg1 : i32, i32
  }
  func.func @transform_2(%arg0: i32, %arg1: i32, %arg2: i32) -> (i32, i32) {
    %c0_i32 = arith.constant 0 : i32
    %c0_i32_0 = arith.constant 0 : i32
    return %c0_i32, %arg1 : i32, i32
  }
  func.func @transform_3(%arg0: i32, %arg1: i32, %arg2: i32) -> (i32, i32) {
    %c0_i32 = arith.constant 0 : i32
    return %arg0, %arg1 : i32, i32
  }
}

module attributes {stable_mosaic.version = 11 : i64} {
  func.func @_mm_kernel_single(%arg0: i32, %arg1: i32, %arg2: memref<512x256xbf16, #tpu.memory_space<vmem>>, %arg3: memref<256x128xbf16, #tpu.memory_space<vmem>>, %arg4: memref<1x128xf32, #tpu.memory_space<vmem>>, %arg5: memref<512x128xf32, #tpu.memory_space<vmem>>) attributes {dimension_semantics = [#tpu.dimension_semantics<parallel>, #tpu.dimension_semantics<parallel>], iteration_bounds = array<i64: 4, 1>, scalar_prefetch = 0 : i64, scratch_operands = 0 : i64, tpu.core_type = #tpu.core_type<tc>, window_params = [{transform_indices = @transform_0, window_bounds = array<i64: 512, 256>}, {transform_indices = @transform_1, window_bounds = array<i64: 256, 128>}, {transform_indices = @transform_2, window_bounds = array<i64: 1, 128>}, {transform_indices = @transform_3, window_bounds = array<i64: 512, 128>}]} {
    %c0 = arith.constant 0 : index
    %c0_0 = arith.constant 0 : index
    %0 = vector.load %arg2[%c0, %c0_0] : memref<512x256xbf16, #tpu.memory_space<vmem>>, vector<512x256xbf16>
    %c0_1 = arith.constant 0 : index
    %c0_2 = arith.constant 0 : index
    %1 = vector.load %arg3[%c0_1, %c0_2] : memref<256x128xbf16, #tpu.memory_space<vmem>>, vector<256x128xbf16>
    %cst = arith.constant dense<0.000000e+00> : vector<512x128xf32>
    %2 = tpu.matmul %0, %1, %cst {dimension_numbers = #tpu.dot_dimension_numbers<[1], [0], [0], [1], [0, 0, 1, 1], [], []>} : vector<512x256xbf16>, vector<256x128xbf16>, vector<512x128xf32> -> vector<512x128xf32>
    %c0_3 = arith.constant 0 : index
    %c0_4 = arith.constant 0 : index
    %3 = vector.load %arg4[%c0_3, %c0_4] : memref<1x128xf32, #tpu.memory_space<vmem>>, vector<1x128xf32>
    %4 = vector.broadcast %3 : vector<1x128xf32> to vector<512x128xf32>
    %5 = arith.addf %2, %4 : vector<512x128xf32>
    %c0_5 = arith.constant 0 : index
    %c0_6 = arith.constant 0 : index
    %6 = vector.load %arg5[%c0_5, %c0_6] : memref<512x128xf32, #tpu.memory_space<vmem>>, vector<512x128xf32>
    tpu.vector_store %arg5[%c0_5, %c0_6], %5 {strides = array<i32>} : memref<512x128xf32, #tpu.memory_space<vmem>>, vector<512x128xf32>,
    return
  }
  func.func @transform_0(%arg0: i32, %arg1: i32) -> (i32, i32) {
    %c0_i32 = arith.constant 0 : i32
    %c0_i32_0 = arith.constant 0 : i32
    return %arg0, %c0_i32 : i32, i32
  }
  func.func @transform_1(%arg0: i32, %arg1: i32) -> (i32, i32) {
    %c0_i32 = arith.constant 0 : i32
    %c0_i32_0 = arith.constant 0 : i32
    return %c0_i32, %arg1 : i32, i32
  }
  func.func @transform_2(%arg0: i32, %arg1: i32) -> (i32, i32) {
    %c0_i32 = arith.constant 0 : i32
    %c0_i32_0 = arith.constant 0 : i32
    return %c0_i32, %arg1 : i32, i32
  }
  func.func @transform_3(%arg0: i32, %arg1: i32) -> (i32, i32) {
    %c0_i32 = arith.constant 0 : i32
    return %arg0, %arg1 : i32, i32
  }
}

</mosaic_0001>

<llo_original>
// kernel: compen_rt_forward.10
$region0: #{compen_rt_forward.10}
  #allocation0 [shape = 'u32[]', space=smem, size = 0x4, offset = 0x4, fixed_abs, tag = 'smem constant byte address 0x4 - core index']
  #allocation1 [shape = 'u32[144,128]{1,0:T(1,128)}', space=vmem, size = 0x12000, scoped, tag = 'internal scratch']
  %s0 = inlined_call_operand.vmem [shape: bf16[4096,128], index: 0, kind: input, shape index: {}]
  %s1 = inlined_call_operand.vmem [shape: bf16[128,128], index: 1, kind: input, shape index: {}]
  %s2 = inlined_call_operand.vmem [shape: f32[1,128], index: 2, kind: input, shape index: {}]
  %s3 = inlined_call_operand.vmem [shape: f32[4096,128], index: 3, kind: output, shape index: {}]
  %s4 = sld [smem:[#allocation0]]
  $region45: #{compen_rt_forward.10} parent=0
    _
  %s6 = ssub.s32 1, %s4
  %s7 = scalar_select 0, %s6, %s4
  loop: start=0, step=1, limit=10
  $region2: #{compen_rt_forward.10} parent=0 // loop_pre_header
    _
  $region3: #{compen_rt_forward.10} parent=0 // loop_header
    %s9 = sphi 0, %s13
    %p10 = scmp.ge.s32.totalorder %s9, 10
    %s16 = sphi 0, %s28
    %s17 = sphi 0, %s24
    %s18 = sphi 0, %s16
    %s19 = sphi 0, %s17
    %s20 = sphi 0, %s18
    %s21 = sphi 0, %s19
    %s31 = sphi 0, %s33
    %s34 = sphi 0, %s31
    %s35 = sphi 0, %s34
    %s51 = sphi 0, %s35
    %s57 = sphi 0, %s59
    %s60 = sphi 0, %s57
    %s61 = sphi 0, %s60
    %s77 = sphi 0, %s61
    %s83 = sphi 0, %s85
    %s86 = sphi 0, %s83
    %s87 = sphi 0, %s86
    %s103 = sphi 0, %s87
    %s111 = sphi 0, %s113
    %s114 = sphi 0, %s111
    %s115 = sphi 0, %s114
    %s131 = sphi 0, %s115
  $region4: #{compen_rt_forward.10} parent=0 // loop_header_branch
    %12 = sbr.rel (%p10) target = $region8
  $region5: #{compen_rt_forward.10} parent=0 // loop_body
    %s14 = ssub.s32 %s9, 1
    %s15 = ssub.s32 %s9, 2
    %s22 = sadd.s32 1, %s17
    %p23 = scmp.ge.s32.totalorder %s22, 1
    %s24 = scalar_select %p23, 0, %s22
    %s25 = sadd.s32 1, %s16
    %s26 = scalar_select %p23, %s25, %s16
    %p27 = scmp.ge.s32.totalorder %s26, 8
    %s28 = scalar_select %p27, 0, %s26
    %s29 = ssub.s32 %s16, %s28
    %p30 = scmp.eq.s32.totalorder %s29, 0
    %s32 = sadd.s32 %s31, 1
    %s33 = scalar_select %p30, %s31, %s32
    %p36 = pneg %p30
    %p37 = scmp.eq.s32.totalorder %s9, 7
    %p38 = por %p36, %p37
    %p39 = scmp.ne.s32.totalorder %s31, %s34
    %p40 = scmp.eq.s32.totalorder %s9, 0
    %p41 = por %p39, %p40
    %p42 = scmp.ne.s32.totalorder %s31, %s34
    %p43 = scmp.eq.s32.totalorder %s14, 7
    %p44 = por %p42, %p43
    %p45 = scmp.ne.s32.totalorder %s34, %s35
    %p46 = scmp.eq.s32.totalorder %s14, 0
    %p47 = por %p45, %p46
    %p48 = scmp.ne.s32.totalorder %s34, %s35
    %p49 = scmp.eq.s32.totalorder %s15, 7
    %p50 = por %p48, %p49
    %p52 = scmp.ne.s32.totalorder %s35, %s51
    %p53 = scmp.eq.s32.totalorder %s15, 0
    %p54 = por %p52, %p53
    %s55 = ssub.s32 %s17, %s24
    %p56 = scmp.eq.s32.totalorder %s55, 0
    %s58 = sadd.s32 %s57, 1
    %s59 = scalar_select %p56, %s57, %s58
    %p62 = pneg %p56
    %p63 = scmp.eq.s32.totalorder %s9, 7
    %p64 = por %p62, %p63
    %p65 = scmp.ne.s32.totalorder %s57, %s60
    %p66 = scmp.eq.s32.totalorder %s9, 0
    %p67 = por %p65, %p66
    %p68 = scmp.ne.s32.totalorder %s57, %s60
    %p69 = scmp.eq.s32.totalorder %s14, 7
    %p70 = por %p68, %p69
    %p71 = scmp.ne.s32.totalorder %s60, %s61
    %p72 = scmp.eq.s32.totalorder %s14, 0
    %p73 = por %p71, %p72
    %p74 = scmp.ne.s32.totalorder %s60, %s61
    %p75 = scmp.eq.s32.totalorder %s15, 7
    %p76 = por %p74, %p75
    %p78 = scmp.ne.s32.totalorder %s61, %s77
    %p79 = scmp.eq.s32.totalorder %s15, 0
    %p80 = por %p78, %p79
    %s81 = ssub.s32 %s17, %s24
    %p82 = scmp.eq.s32.totalorder %s81, 0
    %s84 = sadd.s32 %s83, 1
    %s85 = scalar_select %p82, %s83, %s84
    %p88 = pneg %p82
    %p89 = scmp.eq.s32.totalorder %s9, 7
    %p90 = por %p88, %p89
    %p91 = scmp.ne.s32.totalorder %s83, %s86
    %p92 = scmp.eq.s32.totalorder %s9, 0
    %p93 = por %p91, %p92
    %p94 = scmp.ne.s32.totalorder %s83, %s86
    %p95 = scmp.eq.s32.totalorder %s14, 7
    %p96 = por %p94, %p95
    %p97 = scmp.ne.s32.totalorder %s86, %s87
    %p98 = scmp.eq.s32.totalorder %s14, 0
    %p99 = por %p97, %p98
    %p100 = scmp.ne.s32.totalorder %s86, %s87
    %p101 = scmp.eq.s32.totalorder %s15, 7
    %p102 = por %p100, %p101
    %p104 = scmp.ne.s32.totalorder %s87, %s103
    %p105 = scmp.eq.s32.totalorder %s15, 0
    %p106 = por %p104, %p105
    %s107 = ssub.s32 %s16, %s28
    %s108 = ssub.s32 %s17, %s24
    %s109 = sor.u32 %s107, %s108
    %p110 = scmp.eq.s32.totalorder %s109, 0
    %s112 = sadd.s32 %s111, 1
    %s113 = scalar_select %p110, %s111, %s112
    %p116 = pneg %p110
    %p117 = scmp.eq.s32.totalorder %s9, 7
    %p118 = por %p116, %p117
    %p119 = scmp.ne.s32.totalorder %s111, %s114
    %p120 = scmp.eq.s32.totalorder %s9, 0
    %p121 = por %p119, %p120
    %p122 = scmp.ne.s32.totalorder %s111, %s114
    %p123 = scmp.eq.s32.totalorder %s14, 7
    %p124 = por %p122, %p123
    %p125 = scmp.ne.s32.totalorder %s114, %s115
    %p126 = scmp.eq.s32.totalorder %s14, 0
    %p127 = por %p125, %p126
    %p128 = scmp.ne.s32.totalorder %s114, %s115
    %p129 = scmp.eq.s32.totalorder %s15, 7
    %p130 = por %p128, %p129
    %p132 = scmp.ne.s32.totalorder %s115, %s131
    %p133 = scmp.eq.s32.totalorder %s15, 0
    %p134 = por %p132, %p133
    %p135 = scmp.le.s32.totalorder 1, %s9
    %p136 = scmp.lt.s32.totalorder %s9, 9
    %p137 = pnand %p135, %p136
    %p138 = pneg %p137
    // Predicated region
    $region9: #{compen_rt_forward.10} parent=5 // pred_check
      _
    $region10: #{compen_rt_forward.10} parent=5 // pred_check_branch
      %140 = sbr.rel (%p137) target = $region12
    $region11: #{compen_rt_forward.10} parent=5 // pred_region
      %s141 = ssub.s32 %s9, 1
      // Predicated region
      $region13: #{compen_rt_forward.10} parent=11 // pred_check
        %p142 = pneg %p73
      $region14: #{compen_rt_forward.10} parent=11 // pred_check_branch
        %144 = sbr.rel (%p142) target = $region16
      $region15: #{compen_rt_forward.10} parent=11 // pred_region
        %p145 = scmp.lt.s32.totalorder %s19, 0
        %s146 = scalar_select %p145, %s19, 0
        %s147 = smul.addr %s146, 4
        %s148 = scalar_lea.vmem %s1, %s147
      $region16: #{compen_rt_forward.10} parent=11 // pred_fallthru
        _
      // Predicated region
      $region17: #{compen_rt_forward.10} parent=11 // pred_check
        %p149 = pneg %p99
      $region18: #{compen_rt_forward.10} parent=11 // pred_check_branch
        %151 = sbr.rel (%p149) target = $region20
      $region19: #{compen_rt_forward.10} parent=11 // pred_region
        %p152 = scmp.lt.s32.totalorder %s19, 0
        %s153 = scalar_select %p152, %s19, 0
        %s154 = scalar_lea.vmem %s2, %s153
      $region20: #{compen_rt_forward.10} parent=11 // pred_fallthru
        _
    $region12: #{compen_rt_forward.10} parent=5 // pred_fallthru
      _
    %p155 = scmp.lt.s32.totalorder %s9, 8
    // Predicated region
    $region21: #{compen_rt_forward.10} parent=5 // pred_check
      %p156 = pneg %p155
    $region22: #{compen_rt_forward.10} parent=5 // pred_check_branch
      %158 = sbr.rel (%p156) target = $region24
    $region23: #{compen_rt_forward.10} parent=5 // pred_region
      // Predicated region
      $region25: #{compen_rt_forward.10} parent=23 // pred_check
        %p159 = pneg %p41
      $region26: #{compen_rt_forward.10} parent=23 // pred_check_branch
        %161 = sbr.rel (%p159) target = $region28
      $region27: #{compen_rt_forward.10} parent=23 // pred_region
        %s162 = smul.u32 64, %s16
        %p163 = scmp.lt.s32.totalorder %s162, 511
        %s164 = scalar_select %p163, %s162, 511
        %s165 = smul.addr %s164, 4
        %s166 = scalar_lea.vmem %s0, %s165
        %s167 = smul.u32 64, %s16
      $region28: #{compen_rt_forward.10} parent=23 // pred_fallthru
        _
    $region24: #{compen_rt_forward.10} parent=5 // pred_fallthru
      _
    %p168 = scmp.le.s32.totalorder 1, %s9
    %p169 = scmp.lt.s32.totalorder %s9, 9
    %p170 = pnand %p168, %p169
    %p171 = pneg %p170
    // Predicated region
    $region29: #{compen_rt_forward.10} parent=5 // pred_check
      _
    $region30: #{compen_rt_forward.10} parent=5 // pred_check_branch
      %173 = sbr.rel (%p170) target = $region32
    $region31: #{compen_rt_forward.10} parent=5 // pred_region
      %s174 = ssub.s32 %s9, 1
      %s175 = smul.u32 64, %s18
      %p176 = scmp.lt.s32.totalorder %s175, 511
      %s177 = scalar_select %p176, %s175, 511
      %s178 = smul.addr %s177, 4
      %s179 = scalar_lea.vmem %s0, %s178
      %p180 = pneg %p47
      %p181 = pneg %p44
      %p182 = scmp.lt.s32.totalorder %s19, 0
      %s183 = scalar_select %p182, %s19, 0
      %s184 = smul.addr %s183, 4
      %s185 = scalar_lea.vmem %s1, %s184
      %p186 = pneg %p73
      %p187 = pneg %p70
      %p188 = scmp.lt.s32.totalorder %s19, 0
      %s189 = scalar_select %p188, %s19, 0
      %s190 = scalar_lea.vmem %s2, %s189
      %p191 = pneg %p99
      %p192 = pneg %p96
      %p193 = pneg %p127
      %p194 = pneg %p124
      %s195 = smul.u32 64, %s18
      %p196 = scmp.lt.s32.totalorder %s195, 511
      %s197 = scalar_select %p196, %s195, 511
      %p198 = scmp.lt.s32.totalorder %s19, 0
      %s199 = scalar_select %p198, %s19, 0
      %s200 = sadd.s32 %s199, %s197
      %s201 = smul.addr %s200, 8
      %s202 = scalar_lea.vmem %s3, %s201
      %s203 = smul.u32 64, %s18
      %p204 = scmp.lt.s32.totalorder %s203, 511
      %s205 = scalar_select %p204, %s203, 511
      %s206 = smul.addr %s205, 4
      %s207 = scalar_lea.vmem %s0, %s206
      %s208 = smul.u32 64, %s18
      %p209 = scmp.lt.s32.totalorder %s19, 0
      %s210 = scalar_select %p209, %s19, 0
      %s211 = smul.addr %s210, 4
      %s212 = scalar_lea.vmem %s1, %s211
      %p213 = scmp.lt.s32.totalorder %s19, 0
      %s214 = scalar_select %p213, %s19, 0
      %s215 = scalar_lea.vmem %s2, %s214
      %s216 = smul.u32 64, %s18
      %p217 = scmp.lt.s32.totalorder %s216, 511
      %s218 = scalar_select %p217, %s216, 511
      %p219 = scmp.lt.s32.totalorder %s19, 0
      %s220 = scalar_select %p219, %s19, 0
      %s221 = sadd.s32 %s220, %s218
      %s222 = smul.addr %s221, 8
      %s223 = scalar_lea.vmem %s3, %s222
      %s224 = smul.u32 64, %s18
      %v226 = vld [vmem:[%s207] sm:$0xf]
      %v227 = vld [vmem:[%s207 + $0x4] sm:$0xf]
      %v228 = vld [vmem:[%s207 + $0x8] sm:$0xf]
      %v229 = vld [vmem:[%s207 + $0xc] sm:$0xf]
      %v230 = vld [vmem:[%s207 + $0x10] sm:$0xf]
      %v231 = vld [vmem:[%s207 + $0x14] sm:$0xf]
      %v232 = vld [vmem:[%s207 + $0x18] sm:$0xf]
      %v233 = vld [vmem:[%s207 + $0x1c] sm:$0xf]
      %v234 = vld [vmem:[%s207 + $0x20] sm:$0xf]
      %v235 = vld [vmem:[%s207 + $0x24] sm:$0xf]
      %v236 = vld [vmem:[%s207 + $0x28] sm:$0xf]
      %v237 = vld [vmem:[%s207 + $0x2c] sm:$0xf]
      %v238 = vld [vmem:[%s207 + $0x30] sm:$0xf]
      %v239 = vld [vmem:[%s207 + $0x34] sm:$0xf]
      %v240 = vld [vmem:[%s207 + $0x38] sm:$0xf]
      %v241 = vld [vmem:[%s207 + $0x3c] sm:$0xf]
      %v242 = vld [vmem:[%s207 + $0x40] sm:$0xf]
      %v243 = vld [vmem:[%s207 + $0x44] sm:$0xf]
      %v244 = vld [vmem:[%s207 + $0x48] sm:$0xf]
      %v245 = vld [vmem:[%s207 + $0x4c] sm:$0xf]
      %v246 = vld [vmem:[%s207 + $0x50] sm:$0xf]
      %v247 = vld [vmem:[%s207 + $0x54] sm:$0xf]
      %v248 = vld [vmem:[%s207 + $0x58] sm:$0xf]
      %v249 = vld [vmem:[%s207 + $0x5c] sm:$0xf]
      %v250 = vld [vmem:[%s207 + $0x60] sm:$0xf]
      %v251 = vld [vmem:[%s207 + $0x64] sm:$0xf]
      %v252 = vld [vmem:[%s207 + $0x68] sm:$0xf]
      %v253 = vld [vmem:[%s207 + $0x6c] sm:$0xf]
      %v254 = vld [vmem:[%s207 + $0x70] sm:$0xf]
      %v255 = vld [vmem:[%s207 + $0x74] sm:$0xf]
      %v256 = vld [vmem:[%s207 + $0x78] sm:$0xf]
      %v257 = vld [vmem:[%s207 + $0x7c] sm:$0xf]
      %v258 = vld [vmem:[%s207 + $0x80] sm:$0xf]
      %v259 = vld [vmem:[%s207 + $0x84] sm:$0xf]
      %v260 = vld [vmem:[%s207 + $0x88] sm:$0xf]
      %v261 = vld [vmem:[%s207 + $0x8c] sm:$0xf]
      %v262 = vld [vmem:[%s207 + $0x90] sm:$0xf]
      %v263 = vld [vmem:[%s207 + $0x94] sm:$0xf]
      %v264 = vld [vmem:[%s207 + $0x98] sm:$0xf]
      %v265 = vld [vmem:[%s207 + $0x9c] sm:$0xf]
      %v266 = vld [vmem:[%s207 + $0xa0] sm:$0xf]
      %v267 = vld [vmem:[%s207 + $0xa4] sm:$0xf]
      %v268 = vld [vmem:[%s207 + $0xa8] sm:$0xf]
      %v269 = vld [vmem:[%s207 + $0xac] sm:$0xf]
      %v270 = vld [vmem:[%s207 + $0xb0] sm:$0xf]
      %v271 = vld [vmem:[%s207 + $0xb4] sm:$0xf]
      %v272 = vld [vmem:[%s207 + $0xb8] sm:$0xf]
      %v273 = vld [vmem:[%s207 + $0xbc] sm:$0xf]
      %v274 = vld [vmem:[%s207 + $0xc0] sm:$0xf]
      %v275 = vld [vmem:[%s207 + $0xc4] sm:$0xf]
      %v276 = vld [vmem:[%s207 + $0xc8] sm:$0xf]
      %v277 = vld [vmem:[%s207 + $0xcc] sm:$0xf]
      %v278 = vld [vmem:[%s207 + $0xd0] sm:$0xf]
      %v279 = vld [vmem:[%s207 + $0xd4] sm:$0xf]
      %v280 = vld [vmem:[%s207 + $0xd8] sm:$0xf]
      %v281 = vld [vmem:[%s207 + $0xdc] sm:$0xf]
      %v282 = vld [vmem:[%s207 + $0xe0] sm:$0xf]
      %v283 = vld [vmem:[%s207 + $0xe4] sm:$0xf]
      %v284 = vld [vmem:[%s207 + $0xe8] sm:$0xf]
      %v285 = vld [vmem:[%s207 + $0xec] sm:$0xf]
      %v286 = vld [vmem:[%s207 + $0xf0] sm:$0xf]
      %v287 = vld [vmem:[%s207 + $0xf4] sm:$0xf]
      %v288 = vld [vmem:[%s207 + $0xf8] sm:$0xf]
      %v289 = vld [vmem:[%s207 + $0xfc] sm:$0xf]
      %v290 = vld [vmem:[%s212] sm:$0xf]
      %v291 = vld [vmem:[%s212 + $0x4] sm:$0xf]
      %v292 = vld [vmem:[%s212 + $0x8] sm:$0xf]
      %v293 = vld [vmem:[%s212 + $0xc] sm:$0xf]
      %v294 = vld [vmem:[%s212 + $0x10] sm:$0xf]
      %v295 = vld [vmem:[%s212 + $0x14] sm:$0xf]
      %v296 = vld [vmem:[%s212 + $0x18] sm:$0xf]
      %v297 = vld [vmem:[%s212 + $0x1c] sm:$0xf]
      %v298 = vld [vmem:[%s212 + $0x20] sm:$0xf]
      %v299 = vld [vmem:[%s212 + $0x24] sm:$0xf]
      %v300 = vld [vmem:[%s212 + $0x28] sm:$0xf]
      %v301 = vld [vmem:[%s212 + $0x2c] sm:$0xf]
      %v302 = vld [vmem:[%s212 + $0x30] sm:$0xf]
      %v303 = vld [vmem:[%s212 + $0x34] sm:$0xf]
      %v304 = vld [vmem:[%s212 + $0x38] sm:$0xf]
      %v305 = vld [vmem:[%s212 + $0x3c] sm:$0xf]
      %v306 = vld [vmem:[%s215] sm:$0x1]
      %v308 = vlaneseq
      %v309 = vshrl.u32 %v308, 7
      %v310 = vsub.s32 0, %v309
      %v311 = vrot.slane %v306, %v310
      %v377 = vunpack.c.l.b16 %v226
      %v378 = vunpack.c.l.b16 %v227
      %v379 = vunpack.c.l.b16 %v228
      %v380 = vunpack.c.l.b16 %v229
      %v381 = vunpack.c.l.b16 %v230
      %v382 = vunpack.c.l.b16 %v231
      %v383 = vunpack.c.l.b16 %v232
      %v384 = vunpack.c.l.b16 %v233
      %v385 = vunpack.c.l.b16 %v234
      %v386 = vunpack.c.l.b16 %v235
      %v387 = vunpack.c.l.b16 %v236
      %v388 = vunpack.c.l.b16 %v237
      %v389 = vunpack.c.l.b16 %v238
      %v390 = vunpack.c.l.b16 %v239
      %v391 = vunpack.c.l.b16 %v240
      %v392 = vunpack.c.l.b16 %v241
      %v393 = vunpack.c.l.b16 %v242
      %v394 = vunpack.c.l.b16 %v243
      %v395 = vunpack.c.l.b16 %v244
      %v396 = vunpack.c.l.b16 %v245
      %v397 = vunpack.c.l.b16 %v246
      %v398 = vunpack.c.l.b16 %v247
      %v399 = vunpack.c.l.b16 %v248
      %v400 = vunpack.c.l.b16 %v249
      %v401 = vunpack.c.l.b16 %v250
      %v402 = vunpack.c.l.b16 %v251
      %v403 = vunpack.c.l.b16 %v252
      %v404 = vunpack.c.l.b16 %v253
      %v405 = vunpack.c.l.b16 %v254
      %v406 = vunpack.c.l.b16 %v255
      %v407 = vunpack.c.l.b16 %v256
      %v408 = vunpack.c.l.b16 %v257
      %v409 = vunpack.c.l.b16 %v258
      %v410 = vunpack.c.l.b16 %v259
      %v411 = vunpack.c.l.b16 %v260
      %v412 = vunpack.c.l.b16 %v261
      %v413 = vunpack.c.l.b16 %v262
      %v414 = vunpack.c.l.b16 %v263
      %v415 = vunpack.c.l.b16 %v264
      %v416 = vunpack.c.l.b16 %v265
      %v417 = vunpack.c.l.b16 %v266
      %v418 = vunpack.c.l.b16 %v267
      %v419 = vunpack.c.l.b16 %v268
      %v420 = vunpack.c.l.b16 %v269
      %v421 = vunpack.c.l.b16 %v270
      %v422 = vunpack.c.l.b16 %v271
      %v423 = vunpack.c.l.b16 %v272
      %v424 = vunpack.c.l.b16 %v273
      %v425 = vunpack.c.l.b16 %v274
      %v426 = vunpack.c.l.b16 %v275
      %v427 = vunpack.c.l.b16 %v276
      %v428 = vunpack.c.l.b16 %v277
      %v429 = vunpack.c.l.b16 %v278
      %v430 = vunpack.c.l.b16 %v279
      %v431 = vunpack.c.l.b16 %v280
      %v432 = vunpack.c.l.b16 %v281
      %v433 = vunpack.c.l.b16 %v282
      %v434 = vunpack.c.l.b16 %v283
      %v435 = vunpack.c.l.b16 %v284
      %v436 = vunpack.c.l.b16 %v285
      %v437 = vunpack.c.l.b16 %v286
      %v438 = vunpack.c.l.b16 %v287
      %v439 = vunpack.c.l.b16 %v288
      %v440 = vunpack.c.l.b16 %v289
      %v441 = vpack.c.b16 %v378, %v377
      %v442 = vpack.c.b16 %v380, %v379
      %v443 = vpack.c.b16 %v382, %v381
      %v444 = vpack.c.b16 %v384, %v383
      %v445 = vpack.c.b16 %v386, %v385
      %v446 = vpack.c.b16 %v388, %v387
      %v447 = vpack.c.b16 %v390, %v389
      %v448 = vpack.c.b16 %v392, %v391
      %v449 = vpack.c.b16 %v394, %v393
      %v450 = vpack.c.b16 %v396, %v395
      %v451 = vpack.c.b16 %v398, %v397
      %v452 = vpack.c.b16 %v400, %v399
      %v453 = vpack.c.b16 %v402, %v401
      %v454 = vpack.c.b16 %v404, %v403
      %v455 = vpack.c.b16 %v406, %v405
      %v456 = vpack.c.b16 %v408, %v407
      %v457 = vpack.c.b16 %v410, %v409
      %v458 = vpack.c.b16 %v412, %v411
      %v459 = vpack.c.b16 %v414, %v413
      %v460 = vpack.c.b16 %v416, %v415
      %v461 = vpack.c.b16 %v418, %v417
      %v462 = vpack.c.b16 %v420, %v419
      %v463 = vpack.c.b16 %v422, %v421
      %v464 = vpack.c.b16 %v424, %v423
      %v465 = vpack.c.b16 %v426, %v425
      %v466 = vpack.c.b16 %v428, %v427
      %v467 = vpack.c.b16 %v430, %v429
      %v468 = vpack.c.b16 %v432, %v431
      %v469 = vpack.c.b16 %v434, %v433
      %v470 = vpack.c.b16 %v436, %v435
      %v471 = vpack.c.b16 %v438, %v437
      %v472 = vpack.c.b16 %v440, %v439
      %v521 = vunpack.c.l.b16 %v290
      %v522 = vunpack.c.l.b16 %v291
      %v523 = vunpack.c.l.b16 %v292
      %v524 = vunpack.c.l.b16 %v293
      %v525 = vunpack.c.l.b16 %v294
      %v526 = vunpack.c.l.b16 %v295
      %v527 = vunpack.c.l.b16 %v296
      %v528 = vunpack.c.l.b16 %v297
      %v529 = vunpack.c.l.b16 %v298
      %v530 = vunpack.c.l.b16 %v299
      %v531 = vunpack.c.l.b16 %v300
      %v532 = vunpack.c.l.b16 %v301
      %v533 = vunpack.c.l.b16 %v302
      %v534 = vunpack.c.l.b16 %v303
      %v535 = vunpack.c.l.b16 %v304
      %v536 = vunpack.c.l.b16 %v305
      %v537 = vpack.c.b16 %v522, %v521
      %v538 = vpack.c.b16 %v524, %v523
      %v539 = vpack.c.b16 %v526, %v525
      %v540 = vpack.c.b16 %v528, %v527
      %v541 = vpack.c.b16 %v530, %v529
      %v542 = vpack.c.b16 %v532, %v531
      %v543 = vpack.c.b16 %v534, %v533
      %v544 = vpack.c.b16 %v536, %v535
      %553 = vmatprep.subr.bf16.mxu0 0
      %554 = vmatpush1.bf16.msra.mxu0 %v544
      %555 = vmatprep.subr.bf16.mxu0 0
      %556 = vmatpush1.bf16.msra.mxu0 %v543
      %557 = vmatprep.subr.bf16.mxu0 0
      %558 = vmatpush1.bf16.msra.mxu0 %v542
      %559 = vmatprep.subr.bf16.mxu0 0
      %560 = vmatpush1.bf16.msra.mxu0 %v541
      %561 = vmatprep.subr.bf16.mxu0 0
      %562 = vmatpush1.bf16.msra.mxu0 %v540
      %563 = vmatprep.subr.bf16.mxu0 0
      %564 = vmatpush1.bf16.msra.mxu0 %v539
      %565 = vmatprep.subr.bf16.mxu0 0
      %566 = vmatpush1.bf16.msra.mxu0 %v538
      %567 = vmatprep.subr.bf16.mxu0 0
      %568 = vmatpush1.bf16.msra.mxu0 %v537
      %569 = vmatprep.subr.bf16.mxu0 0
      %570 = vmatpush2.bf16.msra.mxu0 0
      %571 = vmatprep.subr.bf16.mxu0 0
      %572 = vmatpush2.bf16.msra.mxu0 0
      %573 = vmatprep.subr.bf16.mxu0 0
      %574 = vmatpush2.bf16.msra.mxu0 0
      %575 = vmatprep.subr.bf16.mxu0 0
      %576 = vmatpush2.bf16.msra.mxu0 0
      %577 = vmatprep.subr.bf16.mxu0 0
      %578 = vmatpush2.bf16.msra.mxu0 0
      %579 = vmatprep.subr.bf16.mxu0 0
      %580 = vmatpush2.bf16.msra.mxu0 0
      %581 = vmatprep.subr.bf16.mxu0 0
      %582 = vmatpush2.bf16.msra.mxu0 0
      %583 = vmatprep.subr.bf16.mxu0 0
      %584 = vmatpush2.bf16.msra.mxu0 0
      %585 = vmatprep.mubr.bf16.mxu0 0
      %586 = vmatmul.mubr.bf16.gmra.mxu0 %v441
      %v587 = vpop.f32.mrf.mxu0
      %v588 = vadd.f32 %v311, %v587
      %v589 = vpop.f32.mrf.mxu0
      %v590 = vpop.f32.mrf.mxu0
      %v591 = vadd.f32 %v311, %v590
      %v592 = vpop.f32.mrf.mxu0
      %593 = vmatprep.mubr.bf16.mxu0 0
      %594 = vmatmul.mubr.bf16.gmra.mxu0 %v442
      %v595 = vpop.f32.mrf.mxu0
      %v596 = vadd.f32 %v311, %v595
      %v597 = vpop.f32.mrf.mxu0
      %v598 = vpop.f32.mrf.mxu0
      %v599 = vadd.f32 %v311, %v598
      %v600 = vpop.f32.mrf.mxu0
      %601 = vmatprep.mubr.bf16.mxu0 0
      %602 = vmatmul.mubr.bf16.gmra.mxu0 %v443
      %v603 = vpop.f32.mrf.mxu0
      %v604 = vadd.f32 %v311, %v603
      %v605 = vpop.f32.mrf.mxu0
      %v606 = vpop.f32.mrf.mxu0
      %v607 = vadd.f32 %v311, %v606
      %v608 = vpop.f32.mrf.mxu0
      %609 = vmatprep.mubr.bf16.mxu0 0
      %610 = vmatmul.mubr.bf16.gmra.mxu0 %v444
      %v611 = vpop.f32.mrf.mxu0
      %v612 = vadd.f32 %v311, %v611
      %v613 = vpop.f32.mrf.mxu0
      %v614 = vpop.f32.mrf.mxu0
      %v615 = vadd.f32 %v311, %v614
      %v616 = vpop.f32.mrf.mxu0
      %617 = vmatprep.mubr.bf16.mxu0 0
      %618 = vmatmul.mubr.bf16.gmra.mxu0 %v445
      %v619 = vpop.f32.mrf.mxu0
      %v620 = vadd.f32 %v311, %v619
      %v621 = vpop.f32.mrf.mxu0
      %v622 = vpop.f32.mrf.mxu0
      %v623 = vadd.f32 %v311, %v622
      %v624 = vpop.f32.mrf.mxu0
      %625 = vmatprep.mubr.bf16.mxu0 0
      %626 = vmatmul.mubr.bf16.gmra.mxu0 %v446
      %v627 = vpop.f32.mrf.mxu0
      %v628 = vadd.f32 %v311, %v627
      %v629 = vpop.f32.mrf.mxu0
      %v630 = vpop.f32.mrf.mxu0
      %v631 = vadd.f32 %v311, %v630
      %v632 = vpop.f32.mrf.mxu0
      %633 = vmatprep.mubr.bf16.mxu0 0
      %634 = vmatmul.mubr.bf16.gmra.mxu0 %v447
      %v635 = vpop.f32.mrf.mxu0
      %v636 = vadd.f32 %v311, %v635
      %v637 = vpop.f32.mrf.mxu0
      %v638 = vpop.f32.mrf.mxu0
      %v639 = vadd.f32 %v311, %v638
      %v640 = vpop.f32.mrf.mxu0
      %641 = vmatprep.mubr.bf16.mxu0 0
      %642 = vmatmul.mubr.bf16.gmra.mxu0 %v448
      %v643 = vpop.f32.mrf.mxu0
      %v644 = vadd.f32 %v311, %v643
      %v645 = vpop.f32.mrf.mxu0
      %v646 = vpop.f32.mrf.mxu0
      %v647 = vadd.f32 %v311, %v646
      %v648 = vpop.f32.mrf.mxu0
      %649 = vmatprep.mubr.bf16.mxu0 0
      %650 = vmatmul.mubr.bf16.gmra.mxu0 %v449
      %v651 = vpop.f32.mrf.mxu0
      %v652 = vadd.f32 %v311, %v651
      %v653 = vpop.f32.mrf.mxu0
      %v654 = vpop.f32.mrf.mxu0
      %v655 = vadd.f32 %v311, %v654
      %v656 = vpop.f32.mrf.mxu0
      %657 = vmatprep.mubr.bf16.mxu0 0
      %658 = vmatmul.mubr.bf16.gmra.mxu0 %v450
      %v659 = vpop.f32.mrf.mxu0
      %v660 = vadd.f32 %v311, %v659
      %v661 = vpop.f32.mrf.mxu0
      %v662 = vpop.f32.mrf.mxu0
      %v663 = vadd.f32 %v311, %v662
      %v664 = vpop.f32.mrf.mxu0
      %665 = vmatprep.mubr.bf16.mxu0 0
      %666 = vmatmul.mubr.bf16.gmra.mxu0 %v451
      %v667 = vpop.f32.mrf.mxu0
      %v668 = vadd.f32 %v311, %v667
      %v669 = vpop.f32.mrf.mxu0
      %v670 = vpop.f32.mrf.mxu0
      %v671 = vadd.f32 %v311, %v670
      %v672 = vpop.f32.mrf.mxu0
      %673 = vmatprep.mubr.bf16.mxu0 0
      %674 = vmatmul.mubr.bf16.gmra.mxu0 %v452
      %v675 = vpop.f32.mrf.mxu0
      %v676 = vadd.f32 %v311, %v675
      %v677 = vpop.f32.mrf.mxu0
      %v678 = vpop.f32.mrf.mxu0
      %v679 = vadd.f32 %v311, %v678
      %v680 = vpop.f32.mrf.mxu0
      %681 = vmatprep.mubr.bf16.mxu0 0
      %682 = vmatmul.mubr.bf16.gmra.mxu0 %v453
      %v683 = vpop.f32.mrf.mxu0
      %v684 = vadd.f32 %v311, %v683
      %v685 = vpop.f32.mrf.mxu0
      %v686 = vpop.f32.mrf.mxu0
      %v687 = vadd.f32 %v311, %v686
      %v688 = vpop.f32.mrf.mxu0
      %689 = vmatprep.mubr.bf16.mxu0 0
      %690 = vmatmul.mubr.bf16.gmra.mxu0 %v454
      %v691 = vpop.f32.mrf.mxu0
      %v692 = vadd.f32 %v311, %v691
      %v693 = vpop.f32.mrf.mxu0
      %v694 = vpop.f32.mrf.mxu0
      %v695 = vadd.f32 %v311, %v694
      %v696 = vpop.f32.mrf.mxu0
      %697 = vmatprep.mubr.bf16.mxu0 0
      %698 = vmatmul.mubr.bf16.gmra.mxu0 %v455
      %v699 = vpop.f32.mrf.mxu0
      %v700 = vadd.f32 %v311, %v699
      %v701 = vpop.f32.mrf.mxu0
      %v702 = vpop.f32.mrf.mxu0
      %v703 = vadd.f32 %v311, %v702
      %v704 = vpop.f32.mrf.mxu0
      %705 = vmatprep.mubr.bf16.mxu0 0
      %706 = vmatmul.mubr.bf16.gmra.mxu0 %v456
      %v707 = vpop.f32.mrf.mxu0
      %v708 = vadd.f32 %v311, %v707
      %v709 = vpop.f32.mrf.mxu0
      %v710 = vpop.f32.mrf.mxu0
      %v711 = vadd.f32 %v311, %v710
      %v712 = vpop.f32.mrf.mxu0
      %713 = vmatprep.mubr.bf16.mxu0 0
      %714 = vmatmul.mubr.bf16.gmra.mxu0 %v457
      %v715 = vpop.f32.mrf.mxu0
      %v716 = vadd.f32 %v311, %v715
      %v717 = vpop.f32.mrf.mxu0
      %v718 = vpop.f32.mrf.mxu0
      %v719 = vadd.f32 %v311, %v718
      %v720 = vpop.f32.mrf.mxu0
      %721 = vmatprep.mubr.bf16.mxu0 0
      %722 = vmatmul.mubr.bf16.gmra.mxu0 %v458
      %v723 = vpop.f32.mrf.mxu0
      %v724 = vadd.f32 %v311, %v723
      %v725 = vpop.f32.mrf.mxu0
      %v726 = vpop.f32.mrf.mxu0
      %v727 = vadd.f32 %v311, %v726
      %v728 = vpop.f32.mrf.mxu0
      %729 = vmatprep.mubr.bf16.mxu0 0
      %730 = vmatmul.mubr.bf16.gmra.mxu0 %v459
      %v731 = vpop.f32.mrf.mxu0
      %v732 = vadd.f32 %v311, %v731
      %v733 = vpop.f32.mrf.mxu0
      %v734 = vpop.f32.mrf.mxu0
      %v735 = vadd.f32 %v311, %v734
      %v736 = vpop.f32.mrf.mxu0
      %737 = vmatprep.mubr.bf16.mxu0 0
      %738 = vmatmul.mubr.bf16.gmra.mxu0 %v460
      %v739 = vpop.f32.mrf.mxu0
      %v740 = vadd.f32 %v311, %v739
      %v741 = vpop.f32.mrf.mxu0
      %v742 = vpop.f32.mrf.mxu0
      %v743 = vadd.f32 %v311, %v742
      %v744 = vpop.f32.mrf.mxu0
      %745 = vmatprep.mubr.bf16.mxu0 0
      %746 = vmatmul.mubr.bf16.gmra.mxu0 %v461
      %v747 = vpop.f32.mrf.mxu0
      %v748 = vadd.f32 %v311, %v747
      %v749 = vpop.f32.mrf.mxu0
      %v750 = vpop.f32.mrf.mxu0
      %v751 = vadd.f32 %v311, %v750
      %v752 = vpop.f32.mrf.mxu0
      %753 = vmatprep.mubr.bf16.mxu0 0
      %754 = vmatmul.mubr.bf16.gmra.mxu0 %v462
      %v755 = vpop.f32.mrf.mxu0
      %v756 = vadd.f32 %v311, %v755
      %v757 = vpop.f32.mrf.mxu0
      %v758 = vpop.f32.mrf.mxu0
      %v759 = vadd.f32 %v311, %v758
      %v760 = vpop.f32.mrf.mxu0
      %761 = vmatprep.mubr.bf16.mxu0 0
      %762 = vmatmul.mubr.bf16.gmra.mxu0 %v463
      %v763 = vpop.f32.mrf.mxu0
      %v764 = vadd.f32 %v311, %v763
      %v765 = vpop.f32.mrf.mxu0
      %v766 = vpop.f32.mrf.mxu0
      %v767 = vadd.f32 %v311, %v766
      %v768 = vpop.f32.mrf.mxu0
      %769 = vmatprep.mubr.bf16.mxu0 0
      %770 = vmatmul.mubr.bf16.gmra.mxu0 %v464
      %v771 = vpop.f32.mrf.mxu0
      %v772 = vadd.f32 %v311, %v771
      %v773 = vpop.f32.mrf.mxu0
      %v774 = vpop.f32.mrf.mxu0
      %v775 = vadd.f32 %v311, %v774
      %v776 = vpop.f32.mrf.mxu0
      %777 = vmatprep.mubr.bf16.mxu0 0
      %778 = vmatmul.mubr.bf16.gmra.mxu0 %v465
      %v779 = vpop.f32.mrf.mxu0
      %v780 = vadd.f32 %v311, %v779
      %v781 = vpop.f32.mrf.mxu0
      %v782 = vpop.f32.mrf.mxu0
      %v783 = vadd.f32 %v311, %v782
      %v784 = vpop.f32.mrf.mxu0
      %785 = vmatprep.mubr.bf16.mxu0 0
      %786 = vmatmul.mubr.bf16.gmra.mxu0 %v466
      %v787 = vpop.f32.mrf.mxu0
      %v788 = vadd.f32 %v311, %v787
      %v789 = vpop.f32.mrf.mxu0
      %v790 = vpop.f32.mrf.mxu0
      %v791 = vadd.f32 %v311, %v790
      %v792 = vpop.f32.mrf.mxu0
      %793 = vmatprep.mubr.bf16.mxu0 0
      %794 = vmatmul.mubr.bf16.gmra.mxu0 %v467
      %v795 = vpop.f32.mrf.mxu0
      %v796 = vadd.f32 %v311, %v795
      %v797 = vpop.f32.mrf.mxu0
      %v798 = vpop.f32.mrf.mxu0
      %v799 = vadd.f32 %v311, %v798
      %v800 = vpop.f32.mrf.mxu0
      %801 = vmatprep.mubr.bf16.mxu0 0
      %802 = vmatmul.mubr.bf16.gmra.mxu0 %v468
      %v803 = vpop.f32.mrf.mxu0
      %v804 = vadd.f32 %v311, %v803
      %v805 = vpop.f32.mrf.mxu0
      %v806 = vpop.f32.mrf.mxu0
      %v807 = vadd.f32 %v311, %v806
      %v808 = vpop.f32.mrf.mxu0
      %809 = vmatprep.mubr.bf16.mxu0 0
      %810 = vmatmul.mubr.bf16.gmra.mxu0 %v469
      %v811 = vpop.f32.mrf.mxu0
      %v812 = vadd.f32 %v311, %v811
      %v813 = vpop.f32.mrf.mxu0
      %v814 = vpop.f32.mrf.mxu0
      %v815 = vadd.f32 %v311, %v814
      %v816 = vpop.f32.mrf.mxu0
      %817 = vmatprep.mubr.bf16.mxu0 0
      %818 = vmatmul.mubr.bf16.gmra.mxu0 %v470
      %v819 = vpop.f32.mrf.mxu0
      %v820 = vadd.f32 %v311, %v819
      %v821 = vpop.f32.mrf.mxu0
      %v822 = vpop.f32.mrf.mxu0
      %v823 = vadd.f32 %v311, %v822
      %v824 = vpop.f32.mrf.mxu0
      %825 = vmatprep.mubr.bf16.mxu0 0
      %826 = vmatmul.mubr.bf16.gmra.mxu0 %v471
      %v827 = vpop.f32.mrf.mxu0
      %v828 = vadd.f32 %v311, %v827
      %v829 = vpop.f32.mrf.mxu0
      %v830 = vpop.f32.mrf.mxu0
      %v831 = vadd.f32 %v311, %v830
      %v832 = vpop.f32.mrf.mxu0
      %833 = vmatprep.mubr.bf16.mxu0 0
      %834 = vmatmul.mubr.bf16.gmra.mxu0 %v472
      %v835 = vpop.f32.mrf.mxu0
      %v836 = vadd.f32 %v311, %v835
      %v837 = vpop.f32.mrf.mxu0
      %v838 = vpop.f32.mrf.mxu0
      %v839 = vadd.f32 %v311, %v838
      %v840 = vpop.f32.mrf.mxu0
      %841 = vdwg.mxu0
      %v842 = vmax.f32 %v588, 0.0
      %v843 = vmax.f32 %v591, 0.0
      %v844 = vmax.f32 %v596, 0.0
      %v845 = vmax.f32 %v599, 0.0
      %v846 = vmax.f32 %v604, 0.0
      %v847 = vmax.f32 %v607, 0.0
      %v848 = vmax.f32 %v612, 0.0
      %v849 = vmax.f32 %v615, 0.0
      %v850 = vmax.f32 %v620, 0.0
      %v851 = vmax.f32 %v623, 0.0
      %v852 = vmax.f32 %v628, 0.0
      %v853 = vmax.f32 %v631, 0.0
      %v854 = vmax.f32 %v636, 0.0
      %v855 = vmax.f32 %v639, 0.0
      %v856 = vmax.f32 %v644, 0.0
      %v857 = vmax.f32 %v647, 0.0
      %v858 = vmax.f32 %v652, 0.0
      %v859 = vmax.f32 %v655, 0.0
      %v860 = vmax.f32 %v660, 0.0
      %v861 = vmax.f32 %v663, 0.0
      %v862 = vmax.f32 %v668, 0.0
      %v863 = vmax.f32 %v671, 0.0
      %v864 = vmax.f32 %v676, 0.0
      %v865 = vmax.f32 %v679, 0.0
      %v866 = vmax.f32 %v684, 0.0
      %v867 = vmax.f32 %v687, 0.0
      %v868 = vmax.f32 %v692, 0.0
      %v869 = vmax.f32 %v695, 0.0
      %v870 = vmax.f32 %v700, 0.0
      %v871 = vmax.f32 %v703, 0.0
      %v872 = vmax.f32 %v708, 0.0
      %v873 = vmax.f32 %v711, 0.0
      %v874 = vmax.f32 %v716, 0.0
      %v875 = vmax.f32 %v719, 0.0
      %v876 = vmax.f32 %v724, 0.0
      %v877 = vmax.f32 %v727, 0.0
      %v878 = vmax.f32 %v732, 0.0
      %v879 = vmax.f32 %v735, 0.0
      %v880 = vmax.f32 %v740, 0.0
      %v881 = vmax.f32 %v743, 0.0
      %v882 = vmax.f32 %v748, 0.0
      %v883 = vmax.f32 %v751, 0.0
      %v884 = vmax.f32 %v756, 0.0
      %v885 = vmax.f32 %v759, 0.0
      %v886 = vmax.f32 %v764, 0.0
      %v887 = vmax.f32 %v767, 0.0
      %v888 = vmax.f32 %v772, 0.0
      %v889 = vmax.f32 %v775, 0.0
      %v890 = vmax.f32 %v780, 0.0
      %v891 = vmax.f32 %v783, 0.0
      %v892 = vmax.f32 %v788, 0.0
      %v893 = vmax.f32 %v791, 0.0
      %v894 = vmax.f32 %v796, 0.0
      %v895 = vmax.f32 %v799, 0.0
      %v896 = vmax.f32 %v804, 0.0
      %v897 = vmax.f32 %v807, 0.0
      %v898 = vmax.f32 %v812, 0.0
      %v899 = vmax.f32 %v815, 0.0
      %v900 = vmax.f32 %v820, 0.0
      %v901 = vmax.f32 %v823, 0.0
      %v902 = vmax.f32 %v828, 0.0
      %v903 = vmax.f32 %v831, 0.0
      %v904 = vmax.f32 %v836, 0.0
      %v905 = vmax.f32 %v839, 0.0
      %906 = vst [vmem:[%s223] sm:$0xff] %v842
      %907 = vst [vmem:[%s223 + $0x8] sm:$0xff] %v843
      %908 = vst [vmem:[%s223 + $0x10] sm:$0xff] %v844
      %909 = vst [vmem:[%s223 + $0x18] sm:$0xff] %v845
      %910 = vst [vmem:[%s223 + $0x20] sm:$0xff] %v846
      %911 = vst [vmem:[%s223 + $0x28] sm:$0xff] %v847
      %912 = vst [vmem:[%s223 + $0x30] sm:$0xff] %v848
      %913 = vst [vmem:[%s223 + $0x38] sm:$0xff] %v849
      %914 = vst [vmem:[%s223 + $0x40] sm:$0xff] %v850
      %915 = vst [vmem:[%s223 + $0x48] sm:$0xff] %v851
      %916 = vst [vmem:[%s223 + $0x50] sm:$0xff] %v852
      %917 = vst [vmem:[%s223 + $0x58] sm:$0xff] %v853
      %918 = vst [vmem:[%s223 + $0x60] sm:$0xff] %v854
      %919 = vst [vmem:[%s223 + $0x68] sm:$0xff] %v855
      %920 = vst [vmem:[%s223 + $0x70] sm:$0xff] %v856
      %921 = vst [vmem:[%s223 + $0x78] sm:$0xff] %v857
      %922 = vst [vmem:[%s223 + $0x80] sm:$0xff] %v858
      %923 = vst [vmem:[%s223 + $0x88] sm:$0xff] %v859
      %924 = vst [vmem:[%s223 + $0x90] sm:$0xff] %v860
      %925 = vst [vmem:[%s223 + $0x98] sm:$0xff] %v861
      %926 = vst [vmem:[%s223 + $0xa0] sm:$0xff] %v862
      %927 = vst [vmem:[%s223 + $0xa8] sm:$0xff] %v863
      %928 = vst [vmem:[%s223 + $0xb0] sm:$0xff] %v864
      %929 = vst [vmem:[%s223 + $0xb8] sm:$0xff] %v865
      %930 = vst [vmem:[%s223 + $0xc0] sm:$0xff] %v866
      %931 = vst [vmem:[%s223 + $0xc8] sm:$0xff] %v867
      %932 = vst [vmem:[%s223 + $0xd0] sm:$0xff] %v868
      %933 = vst [vmem:[%s223 + $0xd8] sm:$0xff] %v869
      %934 = vst [vmem:[%s223 + $0xe0] sm:$0xff] %v870
      %935 = vst [vmem:[%s223 + $0xe8] sm:$0xff] %v871
      %936 = vst [vmem:[%s223 + $0xf0] sm:$0xff] %v872
      %937 = vst [vmem:[%s223 + $0xf8] sm:$0xff] %v873
      %938 = vst [vmem:[%s223 + $0x100] sm:$0xff] %v874
      %939 = vst [vmem:[%s223 + $0x108] sm:$0xff] %v875
      %940 = vst [vmem:[%s223 + $0x110] sm:$0xff] %v876
      %941 = vst [vmem:[%s223 + $0x118] sm:$0xff] %v877
      %942 = vst [vmem:[%s223 + $0x120] sm:$0xff] %v878
      %943 = vst [vmem:[%s223 + $0x128] sm:$0xff] %v879
      %944 = vst [vmem:[%s223 + $0x130] sm:$0xff] %v880
      %945 = vst [vmem:[%s223 + $0x138] sm:$0xff] %v881
      %946 = vst [vmem:[%s223 + $0x140] sm:$0xff] %v882
      %947 = vst [vmem:[%s223 + $0x148] sm:$0xff] %v883
      %948 = vst [vmem:[%s223 + $0x150] sm:$0xff] %v884
      %949 = vst [vmem:[%s223 + $0x158] sm:$0xff] %v885
      %950 = vst [vmem:[%s223 + $0x160] sm:$0xff] %v886
      %951 = vst [vmem:[%s223 + $0x168] sm:$0xff] %v887
      %952 = vst [vmem:[%s223 + $0x170] sm:$0xff] %v888
      %953 = vst [vmem:[%s223 + $0x178] sm:$0xff] %v889
      %954 = vst [vmem:[%s223 + $0x180] sm:$0xff] %v890
      %955 = vst [vmem:[%s223 + $0x188] sm:$0xff] %v891
      %956 = vst [vmem:[%s223 + $0x190] sm:$0xff] %v892
      %957 = vst [vmem:[%s223 + $0x198] sm:$0xff] %v893
      %958 = vst [vmem:[%s223 + $0x1a0] sm:$0xff] %v894
      %959 = vst [vmem:[%s223 + $0x1a8] sm:$0xff] %v895
      %960 = vst [vmem:[%s223 + $0x1b0] sm:$0xff] %v896
      %961 = vst [vmem:[%s223 + $0x1b8] sm:$0xff] %v897
      %962 = vst [vmem:[%s223 + $0x1c0] sm:$0xff] %v898
      %963 = vst [vmem:[%s223 + $0x1c8] sm:$0xff] %v899
      %964 = vst [vmem:[%s223 + $0x1d0] sm:$0xff] %v900
      %965 = vst [vmem:[%s223 + $0x1d8] sm:$0xff] %v901
      %966 = vst [vmem:[%s223 + $0x1e0] sm:$0xff] %v902
      %967 = vst [vmem:[%s223 + $0x1e8] sm:$0xff] %v903
      %968 = vst [vmem:[%s223 + $0x1f0] sm:$0xff] %v904
      %969 = vst [vmem:[%s223 + $0x1f8] sm:$0xff] %v905
      %s970 = smul.u32 64, %s18
      %p971 = scmp.lt.s32.totalorder %s970, 511
      %s972 = scalar_select %p971, %s970, 511
      %p973 = scmp.lt.s32.totalorder %s19, 0
      %s974 = scalar_select %p973, %s19, 0
      %s975 = sadd.s32 %s974, %s972
      %s976 = smul.addr %s975, 8
      %s977 = scalar_lea.vmem %s3, %s976
      // Predicated region
      $region33: #{compen_rt_forward.10} parent=31 // pred_check
        %p978 = pneg %p124
      $region34: #{compen_rt_forward.10} parent=31 // pred_check_branch
        %980 = sbr.rel (%p978) target = $region36
      $region35: #{compen_rt_forward.10} parent=31 // pred_region
        %s981 = smul.u32 64, %s18
      $region36: #{compen_rt_forward.10} parent=31 // pred_fallthru
        _
    $region32: #{compen_rt_forward.10} parent=5 // pred_fallthru
      _
    %p982 = scmp.le.s32.totalorder 2, %s9
    // Predicated region
    $region37: #{compen_rt_forward.10} parent=5 // pred_check
      %p983 = pneg %p982
    $region38: #{compen_rt_forward.10} parent=5 // pred_check_branch
      %985 = sbr.rel (%p983) target = $region40
    $region39: #{compen_rt_forward.10} parent=5 // pred_region
      %s986 = ssub.s32 %s9, 2
      // Predicated region
      $region41: #{compen_rt_forward.10} parent=39 // pred_check
        %p987 = pneg %p130
      $region42: #{compen_rt_forward.10} parent=39 // pred_check_branch
        %989 = sbr.rel (%p987) target = $region44
      $region43: #{compen_rt_forward.10} parent=39 // pred_region
        %s990 = smul.u32 64, %s20
        %p991 = scmp.lt.s32.totalorder %s990, 511
        %s992 = scalar_select %p991, %s990, 511
        %p993 = scmp.lt.s32.totalorder %s21, 0
        %s994 = scalar_select %p993, %s21, 0
        %s995 = sadd.s32 %s994, %s992
        %s996 = smul.addr %s995, 8
        %s997 = scalar_lea.vmem %s3, %s996
      $region44: #{compen_rt_forward.10} parent=39 // pred_fallthru
        _
    $region40: #{compen_rt_forward.10} parent=5 // pred_fallthru
      _
  $region6: #{compen_rt_forward.10} parent=0 // loop_footer
    %s13 = sadd.s32 1, %s9
  $region7: #{compen_rt_forward.10} parent=0 // loop_footer_branch
    %8 = sbr.rel target = $region3
  $region8: #{compen_rt_forward.10} parent=0 // loop_exit
    _

// kernel: compen_rt_forward.11
$region0: #{compen_rt_forward.11}
  #allocation0 [shape = 'u32[]', space=smem, size = 0x4, offset = 0x4, fixed_abs, tag = 'smem constant byte address 0x4 - core index']
  #allocation1 [shape = 'u32[144,128]{1,0:T(1,128)}', space=vmem, size = 0x12000, scoped, tag = 'internal scratch']
  %s0 = inlined_call_operand.vmem [shape: bf16[4096,384], index: 0, kind: input, shape index: {}]
  %s1 = inlined_call_operand.vmem [shape: bf16[384,128], index: 1, kind: input, shape index: {}]
  %s2 = inlined_call_operand.vmem [shape: f32[1,128], index: 2, kind: input, shape index: {}]
  %s3 = inlined_call_operand.vmem [shape: f32[4096,128], index: 3, kind: output, shape index: {}]
  %s4 = sld [smem:[#allocation0]]
  $region45: #{compen_rt_forward.11} parent=0
    _
  %s6 = ssub.s32 1, %s4
  %s7 = scalar_select 0, %s6, %s4
  loop: start=0, step=1, limit=10
  $region2: #{compen_rt_forward.11} parent=0 // loop_pre_header
    _
  $region3: #{compen_rt_forward.11} parent=0 // loop_header
    %s9 = sphi 0, %s13
    %p10 = scmp.ge.s32.totalorder %s9, 10
    %s16 = sphi 0, %s28
    %s17 = sphi 0, %s24
    %s18 = sphi 0, %s16
    %s19 = sphi 0, %s17
    %s20 = sphi 0, %s18
    %s21 = sphi 0, %s19
    %s31 = sphi 0, %s33
    %s34 = sphi 0, %s31
    %s35 = sphi 0, %s34
    %s51 = sphi 0, %s35
    %s57 = sphi 0, %s59
    %s60 = sphi 0, %s57
    %s61 = sphi 0, %s60
    %s77 = sphi 0, %s61
    %s83 = sphi 0, %s85
    %s86 = sphi 0, %s83
    %s87 = sphi 0, %s86
    %s103 = sphi 0, %s87
    %s111 = sphi 0, %s113
    %s114 = sphi 0, %s111
    %s115 = sphi 0, %s114
    %s131 = sphi 0, %s115
  $region4: #{compen_rt_forward.11} parent=0 // loop_header_branch
    %12 = sbr.rel (%p10) target = $region8
  $region5: #{compen_rt_forward.11} parent=0 // loop_body
    %s14 = ssub.s32 %s9, 1
    %s15 = ssub.s32 %s9, 2
    %s22 = sadd.s32 1, %s17
    %p23 = scmp.ge.s32.totalorder %s22, 1
    %s24 = scalar_select %p23, 0, %s22
    %s25 = sadd.s32 1, %s16
    %s26 = scalar_select %p23, %s25, %s16
    %p27 = scmp.ge.s32.totalorder %s26, 8
    %s28 = scalar_select %p27, 0, %s26
    %s29 = ssub.s32 %s16, %s28
    %p30 = scmp.eq.s32.totalorder %s29, 0
    %s32 = sadd.s32 %s31, 1
    %s33 = scalar_select %p30, %s31, %s32
    %p36 = pneg %p30
    %p37 = scmp.eq.s32.totalorder %s9, 7
    %p38 = por %p36, %p37
    %p39 = scmp.ne.s32.totalorder %s31, %s34
    %p40 = scmp.eq.s32.totalorder %s9, 0
    %p41 = por %p39, %p40
    %p42 = scmp.ne.s32.totalorder %s31, %s34
    %p43 = scmp.eq.s32.totalorder %s14, 7
    %p44 = por %p42, %p43
    %p45 = scmp.ne.s32.totalorder %s34, %s35
    %p46 = scmp.eq.s32.totalorder %s14, 0
    %p47 = por %p45, %p46
    %p48 = scmp.ne.s32.totalorder %s34, %s35
    %p49 = scmp.eq.s32.totalorder %s15, 7
    %p50 = por %p48, %p49
    %p52 = scmp.ne.s32.totalorder %s35, %s51
    %p53 = scmp.eq.s32.totalorder %s15, 0
    %p54 = por %p52, %p53
    %s55 = ssub.s32 %s17, %s24
    %p56 = scmp.eq.s32.totalorder %s55, 0
    %s58 = sadd.s32 %s57, 1
    %s59 = scalar_select %p56, %s57, %s58
    %p62 = pneg %p56
    %p63 = scmp.eq.s32.totalorder %s9, 7
    %p64 = por %p62, %p63
    %p65 = scmp.ne.s32.totalorder %s57, %s60
    %p66 = scmp.eq.s32.totalorder %s9, 0
    %p67 = por %p65, %p66
    %p68 = scmp.ne.s32.totalorder %s57, %s60
    %p69 = scmp.eq.s32.totalorder %s14, 7
    %p70 = por %p68, %p69
    %p71 = scmp.ne.s32.totalorder %s60, %s61
    %p72 = scmp.eq.s32.totalorder %s14, 0
    %p73 = por %p71, %p72
    %p74 = scmp.ne.s32.totalorder %s60, %s61
    %p75 = scmp.eq.s32.totalorder %s15, 7
    %p76 = por %p74, %p75
    %p78 = scmp.ne.s32.totalorder %s61, %s77
    %p79 = scmp.eq.s32.totalorder %s15, 0
    %p80 = por %p78, %p79
    %s81 = ssub.s32 %s17, %s24
    %p82 = scmp.eq.s32.totalorder %s81, 0
    %s84 = sadd.s32 %s83, 1
    %s85 = scalar_select %p82, %s83, %s84
    %p88 = pneg %p82
    %p89 = scmp.eq.s32.totalorder %s9, 7
    %p90 = por %p88, %p89
    %p91 = scmp.ne.s32.totalorder %s83, %s86
    %p92 = scmp.eq.s32.totalorder %s9, 0
    %p93 = por %p91, %p92
    %p94 = scmp.ne.s32.totalorder %s83, %s86
    %p95 = scmp.eq.s32.totalorder %s14, 7
    %p96 = por %p94, %p95
    %p97 = scmp.ne.s32.totalorder %s86, %s87
    %p98 = scmp.eq.s32.totalorder %s14, 0
    %p99 = por %p97, %p98
    %p100 = scmp.ne.s32.totalorder %s86, %s87
    %p101 = scmp.eq.s32.totalorder %s15, 7
    %p102 = por %p100, %p101
    %p104 = scmp.ne.s32.totalorder %s87, %s103
    %p105 = scmp.eq.s32.totalorder %s15, 0
    %p106 = por %p104, %p105
    %s107 = ssub.s32 %s16, %s28
    %s108 = ssub.s32 %s17, %s24
    %s109 = sor.u32 %s107, %s108
    %p110 = scmp.eq.s32.totalorder %s109, 0
    %s112 = sadd.s32 %s111, 1
    %s113 = scalar_select %p110, %s111, %s112
    %p116 = pneg %p110
    %p117 = scmp.eq.s32.totalorder %s9, 7
    %p118 = por %p116, %p117
    %p119 = scmp.ne.s32.totalorder %s111, %s114
    %p120 = scmp.eq.s32.totalorder %s9, 0
    %p121 = por %p119, %p120
    %p122 = scmp.ne.s32.totalorder %s111, %s114
    %p123 = scmp.eq.s32.totalorder %s14, 7
    %p124 = por %p122, %p123
    %p125 = scmp.ne.s32.totalorder %s114, %s115
    %p126 = scmp.eq.s32.totalorder %s14, 0
    %p127 = por %p125, %p126
    %p128 = scmp.ne.s32.totalorder %s114, %s115
    %p129 = scmp.eq.s32.totalorder %s15, 7
    %p130 = por %p128, %p129
    %p132 = scmp.ne.s32.totalorder %s115, %s131
    %p133 = scmp.eq.s32.totalorder %s15, 0
    %p134 = por %p132, %p133
    %p135 = scmp.le.s32.totalorder 1, %s9
    %p136 = scmp.lt.s32.totalorder %s9, 9
    %p137 = pnand %p135, %p136
    %p138 = pneg %p137
    // Predicated region
    $region9: #{compen_rt_forward.11} parent=5 // pred_check
      _
    $region10: #{compen_rt_forward.11} parent=5 // pred_check_branch
      %140 = sbr.rel (%p137) target = $region12
    $region11: #{compen_rt_forward.11} parent=5 // pred_region
      %s141 = ssub.s32 %s9, 1
      // Predicated region
      $region13: #{compen_rt_forward.11} parent=11 // pred_check
        %p142 = pneg %p73
      $region14: #{compen_rt_forward.11} parent=11 // pred_check_branch
        %144 = sbr.rel (%p142) target = $region16
      $region15: #{compen_rt_forward.11} parent=11 // pred_region
        %p145 = scmp.lt.s32.totalorder %s19, 0
        %s146 = scalar_select %p145, %s19, 0
        %s147 = smul.addr %s146, 4
        %s148 = scalar_lea.vmem %s1, %s147
      $region16: #{compen_rt_forward.11} parent=11 // pred_fallthru
        _
      // Predicated region
      $region17: #{compen_rt_forward.11} parent=11 // pred_check
        %p149 = pneg %p99
      $region18: #{compen_rt_forward.11} parent=11 // pred_check_branch
        %151 = sbr.rel (%p149) target = $region20
      $region19: #{compen_rt_forward.11} parent=11 // pred_region
        %p152 = scmp.lt.s32.totalorder %s19, 0
        %s153 = scalar_select %p152, %s19, 0
        %s154 = scalar_lea.vmem %s2, %s153
      $region20: #{compen_rt_forward.11} parent=11 // pred_fallthru
        _
    $region12: #{compen_rt_forward.11} parent=5 // pred_fallthru
      _
    %p155 = scmp.lt.s32.totalorder %s9, 8
    // Predicated region
    $region21: #{compen_rt_forward.11} parent=5 // pred_check
      %p156 = pneg %p155
    $region22: #{compen_rt_forward.11} parent=5 // pred_check_branch
      %158 = sbr.rel (%p156) target = $region24
    $region23: #{compen_rt_forward.11} parent=5 // pred_region
      // Predicated region
      $region25: #{compen_rt_forward.11} parent=23 // pred_check
        %p159 = pneg %p41
      $region26: #{compen_rt_forward.11} parent=23 // pred_check_branch
        %161 = sbr.rel (%p159) target = $region28
      $region27: #{compen_rt_forward.11} parent=23 // pred_region
        %s162 = smul.u32 64, %s16
        %p163 = scmp.lt.s32.totalorder %s162, 511
        %s164 = scalar_select %p163, %s162, 511
        %s165 = smul.addr %s164, 3
        %s166 = smul.addr %s165, 4
        %s167 = scalar_lea.vmem %s0, %s166
        %s168 = smul.u32 64, %s16
      $region28: #{compen_rt_forward.11} parent=23 // pred_fallthru
        _
    $region24: #{compen_rt_forward.11} parent=5 // pred_fallthru
      _
    %p169 = scmp.le.s32.totalorder 1, %s9
    %p170 = scmp.lt.s32.totalorder %s9, 9
    %p171 = pnand %p169, %p170
    %p172 = pneg %p171
    // Predicated region
    $region29: #{compen_rt_forward.11} parent=5 // pred_check
      _
    $region30: #{compen_rt_forward.11} parent=5 // pred_check_branch
      %174 = sbr.rel (%p171) target = $region32
    $region31: #{compen_rt_forward.11} parent=5 // pred_region
      %s175 = ssub.s32 %s9, 1
      %s176 = smul.u32 64, %s18
      %p177 = scmp.lt.s32.totalorder %s176, 511
      %s178 = scalar_select %p177, %s176, 511
      %s179 = smul.addr %s178, 3
      %s180 = smul.addr %s179, 4
      %s181 = scalar_lea.vmem %s0, %s180
      %p182 = pneg %p47
      %p183 = pneg %p44
      %p184 = scmp.lt.s32.totalorder %s19, 0
      %s185 = scalar_select %p184, %s19, 0
      %s186 = smul.addr %s185, 4
      %s187 = scalar_lea.vmem %s1, %s186
      %p188 = pneg %p73
      %p189 = pneg %p70
      %p190 = scmp.lt.s32.totalorder %s19, 0
      %s191 = scalar_select %p190, %s19, 0
      %s192 = scalar_lea.vmem %s2, %s191
      %p193 = pneg %p99
      %p194 = pneg %p96
      %p195 = pneg %p127
      %p196 = pneg %p124
      %s197 = smul.u32 64, %s18
      %p198 = scmp.lt.s32.totalorder %s197, 511
      %s199 = scalar_select %p198, %s197, 511
      %p200 = scmp.lt.s32.totalorder %s19, 0
      %s201 = scalar_select %p200, %s19, 0
      %s202 = sadd.s32 %s201, %s199
      %s203 = smul.addr %s202, 8
      %s204 = scalar_lea.vmem %s3, %s203
      %s205 = smul.u32 64, %s18
      %p206 = scmp.lt.s32.totalorder %s205, 511
      %s207 = scalar_select %p206, %s205, 511
      %s208 = smul.addr %s207, 3
      %s209 = smul.addr %s208, 4
      %s210 = scalar_lea.vmem %s0, %s209
      %s211 = smul.u32 64, %s18
      %p212 = scmp.lt.s32.totalorder %s19, 0
      %s213 = scalar_select %p212, %s19, 0
      %s214 = smul.addr %s213, 4
      %s215 = scalar_lea.vmem %s1, %s214
      %p216 = scmp.lt.s32.totalorder %s19, 0
      %s217 = scalar_select %p216, %s19, 0
      %s218 = scalar_lea.vmem %s2, %s217
      %s219 = smul.u32 64, %s18
      %p220 = scmp.lt.s32.totalorder %s219, 511
      %s221 = scalar_select %p220, %s219, 511
      %p222 = scmp.lt.s32.totalorder %s19, 0
      %s223 = scalar_select %p222, %s19, 0
      %s224 = sadd.s32 %s223, %s221
      %s225 = smul.addr %s224, 8
      %s226 = scalar_lea.vmem %s3, %s225
      %s227 = smul.u32 64, %s18
      %v229 = vld [vmem:[%s210] sm:$0xff]
      %v230 = vld [vmem:[%s210 + $0x8] sm:$0xf]
      %v231 = vld [vmem:[%s210 + $0xc] sm:$0xff]
      %v232 = vld [vmem:[%s210 + $0x14] sm:$0xf]
      %v233 = vld [vmem:[%s210 + $0x18] sm:$0xff]
      %v234 = vld [vmem:[%s210 + $0x20] sm:$0xf]
      %v235 = vld [vmem:[%s210 + $0x24] sm:$0xff]
      %v236 = vld [vmem:[%s210 + $0x2c] sm:$0xf]
      %v237 = vld [vmem:[%s210 + $0x30] sm:$0xff]
      %v238 = vld [vmem:[%s210 + $0x38] sm:$0xf]
      %v239 = vld [vmem:[%s210 + $0x3c] sm:$0xff]
      %v240 = vld [vmem:[%s210 + $0x44] sm:$0xf]
      %v241 = vld [vmem:[%s210 + $0x48] sm:$0xff]
      %v242 = vld [vmem:[%s210 + $0x50] sm:$0xf]
      %v243 = vld [vmem:[%s210 + $0x54] sm:$0xff]
      %v244 = vld [vmem:[%s210 + $0x5c] sm:$0xf]
      %v245 = vld [vmem:[%s210 + $0x60] sm:$0xff]
      %v246 = vld [vmem:[%s210 + $0x68] sm:$0xf]
      %v247 = vld [vmem:[%s210 + $0x6c] sm:$0xff]
      %v248 = vld [vmem:[%s210 + $0x74] sm:$0xf]
      %v249 = vld [vmem:[%s210 + $0x78] sm:$0xff]
      %v250 = vld [vmem:[%s210 + $0x80] sm:$0xf]
      %v251 = vld [vmem:[%s210 + $0x84] sm:$0xff]
      %v252 = vld [vmem:[%s210 + $0x8c] sm:$0xf]
      %v253 = vld [vmem:[%s210 + $0x90] sm:$0xff]
      %v254 = vld [vmem:[%s210 + $0x98] sm:$0xf]
      %v255 = vld [vmem:[%s210 + $0x9c] sm:$0xff]
      %v256 = vld [vmem:[%s210 + $0xa4] sm:$0xf]
      %v257 = vld [vmem:[%s210 + $0xa8] sm:$0xff]
      %v258 = vld [vmem:[%s210 + $0xb0] sm:$0xf]
      %v259 = vld [vmem:[%s210 + $0xb4] sm:$0xff]
      %v260 = vld [vmem:[%s210 + $0xbc] sm:$0xf]
      %v261 = vld [vmem:[%s210 + $0xc0] sm:$0xff]
      %v262 = vld [vmem:[%s210 + $0xc8] sm:$0xf]
      %v263 = vld [vmem:[%s210 + $0xcc] sm:$0xff]
      %v264 = vld [vmem:[%s210 + $0xd4] sm:$0xf]
      %v265 = vld [vmem:[%s210 + $0xd8] sm:$0xff]
      %v266 = vld [vmem:[%s210 + $0xe0] sm:$0xf]
      %v267 = vld [vmem:[%s210 + $0xe4] sm:$0xff]
      %v268 = vld [vmem:[%s210 + $0xec] sm:$0xf]
      %v269 = vld [vmem:[%s210 + $0xf0] sm:$0xff]
      %v270 = vld [vmem:[%s210 + $0xf8] sm:$0xf]
      %v271 = vld [vmem:[%s210 + $0xfc] sm:$0xff]
      %v272 = vld [vmem:[%s210 + $0x104] sm:$0xf]
      %v273 = vld [vmem:[%s210 + $0x108] sm:$0xff]
      %v274 = vld [vmem:[%s210 + $0x110] sm:$0xf]
      %v275 = vld [vmem:[%s210 + $0x114] sm:$0xff]
      %v276 = vld [vmem:[%s210 + $0x11c] sm:$0xf]
      %v277 = vld [vmem:[%s210 + $0x120] sm:$0xff]
      %v278 = vld [vmem:[%s210 + $0x128] sm:$0xf]
      %v279 = vld [vmem:[%s210 + $0x12c] sm:$0xff]
      %v280 = vld [vmem:[%s210 + $0x134] sm:$0xf]
      %v281 = vld [vmem:[%s210 + $0x138] sm:$0xff]
      %v282 = vld [vmem:[%s210 + $0x140] sm:$0xf]
      %v283 = vld [vmem:[%s210 + $0x144] sm:$0xff]
      %v284 = vld [vmem:[%s210 + $0x14c] sm:$0xf]
      %v285 = vld [vmem:[%s210 + $0x150] sm:$0xff]
      %v286 = vld [vmem:[%s210 + $0x158] sm:$0xf]
      %v287 = vld [vmem:[%s210 + $0x15c] sm:$0xff]
      %v288 = vld [vmem:[%s210 + $0x164] sm:$0xf]
      %v289 = vld [vmem:[%s210 + $0x168] sm:$0xff]
      %v290 = vld [vmem:[%s210 + $0x170] sm:$0xf]
      %v291 = vld [vmem:[%s210 + $0x174] sm:$0xff]
      %v292 = vld [vmem:[%s210 + $0x17c] sm:$0xf]
      %v293 = vld [vmem:[%s210 + $0x180] sm:$0xff]
      %v294 = vld [vmem:[%s210 + $0x188] sm:$0xf]
      %v295 = vld [vmem:[%s210 + $0x18c] sm:$0xff]
      %v296 = vld [vmem:[%s210 + $0x194] sm:$0xf]
      %v297 = vld [vmem:[%s210 + $0x198] sm:$0xff]
      %v298 = vld [vmem:[%s210 + $0x1a0] sm:$0xf]
      %v299 = vld [vmem:[%s210 + $0x1a4] sm:$0xff]
      %v300 = vld [vmem:[%s210 + $0x1ac] sm:$0xf]
      %v301 = vld [vmem:[%s210 + $0x1b0] sm:$0xff]
      %v302 = vld [vmem:[%s210 + $0x1b8] sm:$0xf]
      %v303 = vld [vmem:[%s210 + $0x1bc] sm:$0xff]
      %v304 = vld [vmem:[%s210 + $0x1c4] sm:$0xf]
      %v305 = vld [vmem:[%s210 + $0x1c8] sm:$0xff]
      %v306 = vld [vmem:[%s210 + $0x1d0] sm:$0xf]
      %v307 = vld [vmem:[%s210 + $0x1d4] sm:$0xff]
      %v308 = vld [vmem:[%s210 + $0x1dc] sm:$0xf]
      %v309 = vld [vmem:[%s210 + $0x1e0] sm:$0xff]
      %v310 = vld [vmem:[%s210 + $0x1e8] sm:$0xf]
      %v311 = vld [vmem:[%s210 + $0x1ec] sm:$0xff]
      %v312 = vld [vmem:[%s210 + $0x1f4] sm:$0xf]
      %v313 = vld [vmem:[%s210 + $0x1f8] sm:$0xff]
      %v314 = vld [vmem:[%s210 + $0x200] sm:$0xf]
      %v315 = vld [vmem:[%s210 + $0x204] sm:$0xff]
      %v316 = vld [vmem:[%s210 + $0x20c] sm:$0xf]
      %v317 = vld [vmem:[%s210 + $0x210] sm:$0xff]
      %v318 = vld [vmem:[%s210 + $0x218] sm:$0xf]
      %v319 = vld [vmem:[%s210 + $0x21c] sm:$0xff]
      %v320 = vld [vmem:[%s210 + $0x224] sm:$0xf]
      %v321 = vld [vmem:[%s210 + $0x228] sm:$0xff]
      %v322 = vld [vmem:[%s210 + $0x230] sm:$0xf]
      %v323 = vld [vmem:[%s210 + $0x234] sm:$0xff]
      %v324 = vld [vmem:[%s210 + $0x23c] sm:$0xf]
      %v325 = vld [vmem:[%s210 + $0x240] sm:$0xff]
      %v326 = vld [vmem:[%s210 + $0x248] sm:$0xf]
      %v327 = vld [vmem:[%s210 + $0x24c] sm:$0xff]
      %v328 = vld [vmem:[%s210 + $0x254] sm:$0xf]
      %v329 = vld [vmem:[%s210 + $0x258] sm:$0xff]
      %v330 = vld [vmem:[%s210 + $0x260] sm:$0xf]
      %v331 = vld [vmem:[%s210 + $0x264] sm:$0xff]
      %v332 = vld [vmem:[%s210 + $0x26c] sm:$0xf]
      %v333 = vld [vmem:[%s210 + $0x270] sm:$0xff]
      %v334 = vld [vmem:[%s210 + $0x278] sm:$0xf]
      %v335 = vld [vmem:[%s210 + $0x27c] sm:$0xff]
      %v336 = vld [vmem:[%s210 + $0x284] sm:$0xf]
      %v337 = vld [vmem:[%s210 + $0x288] sm:$0xff]
      %v338 = vld [vmem:[%s210 + $0x290] sm:$0xf]
      %v339 = vld [vmem:[%s210 + $0x294] sm:$0xff]
      %v340 = vld [vmem:[%s210 + $0x29c] sm:$0xf]
      %v341 = vld [vmem:[%s210 + $0x2a0] sm:$0xff]
      %v342 = vld [vmem:[%s210 + $0x2a8] sm:$0xf]
      %v343 = vld [vmem:[%s210 + $0x2ac] sm:$0xff]
      %v344 = vld [vmem:[%s210 + $0x2b4] sm:$0xf]
      %v345 = vld [vmem:[%s210 + $0x2b8] sm:$0xff]
      %v346 = vld [vmem:[%s210 + $0x2c0] sm:$0xf]
      %v347 = vld [vmem:[%s210 + $0x2c4] sm:$0xff]
      %v348 = vld [vmem:[%s210 + $0x2cc] sm:$0xf]
      %v349 = vld [vmem:[%s210 + $0x2d0] sm:$0xff]
      %v350 = vld [vmem:[%s210 + $0x2d8] sm:$0xf]
      %v351 = vld [vmem:[%s210 + $0x2dc] sm:$0xff]
      %v352 = vld [vmem:[%s210 + $0x2e4] sm:$0xf]
      %v353 = vld [vmem:[%s210 + $0x2e8] sm:$0xff]
      %v354 = vld [vmem:[%s210 + $0x2f0] sm:$0xf]
      %v355 = vld [vmem:[%s210 + $0x2f4] sm:$0xff]
      %v356 = vld [vmem:[%s210 + $0x2fc] sm:$0xf]
      %v357 = vld [vmem:[%s215] sm:$0xf]
      %v358 = vld [vmem:[%s215 + $0x4] sm:$0xf]
      %v359 = vld [vmem:[%s215 + $0x8] sm:$0xf]
      %v360 = vld [vmem:[%s215 + $0xc] sm:$0xf]
      %v361 = vld [vmem:[%s215 + $0x10] sm:$0xf]
      %v362 = vld [vmem:[%s215 + $0x14] sm:$0xf]
      %v363 = vld [vmem:[%s215 + $0x18] sm:$0xf]
      %v364 = vld [vmem:[%s215 + $0x1c] sm:$0xf]
      %v365 = vld [vmem:[%s215 + $0x20] sm:$0xf]
      %v366 = vld [vmem:[%s215 + $0x24] sm:$0xf]
      %v367 = vld [vmem:[%s215 + $0x28] sm:$0xf]
      %v368 = vld [vmem:[%s215 + $0x2c] sm:$0xf]
      %v369 = vld [vmem:[%s215 + $0x30] sm:$0xf]
      %v370 = vld [vmem:[%s215 + $0x34] sm:$0xf]
      %v371 = vld [vmem:[%s215 + $0x38] sm:$0xf]
      %v372 = vld [vmem:[%s215 + $0x3c] sm:$0xf]
      %v373 = vld [vmem:[%s215 + $0x40] sm:$0xf]
      %v374 = vld [vmem:[%s215 + $0x44] sm:$0xf]
      %v375 = vld [vmem:[%s215 + $0x48] sm:$0xf]
      %v376 = vld [vmem:[%s215 + $0x4c] sm:$0xf]
      %v377 = vld [vmem:[%s215 + $0x50] sm:$0xf]
      %v378 = vld [vmem:[%s215 + $0x54] sm:$0xf]
      %v379 = vld [vmem:[%s215 + $0x58] sm:$0xf]
      %v380 = vld [vmem:[%s215 + $0x5c] sm:$0xf]
      %v381 = vld [vmem:[%s215 + $0x60] sm:$0xf]
      %v382 = vld [vmem:[%s215 + $0x64] sm:$0xf]
      %v383 = vld [vmem:[%s215 + $0x68] sm:$0xf]
      %v384 = vld [vmem:[%s215 + $0x6c] sm:$0xf]
      %v385 = vld [vmem:[%s215 + $0x70] sm:$0xf]
      %v386 = vld [vmem:[%s215 + $0x74] sm:$0xf]
      %v387 = vld [vmem:[%s215 + $0x78] sm:$0xf]
      %v388 = vld [vmem:[%s215 + $0x7c] sm:$0xf]
      %v389 = vld [vmem:[%s215 + $0x80] sm:$0xf]
      %v390 = vld [vmem:[%s215 + $0x84] sm:$0xf]
      %v391 = vld [vmem:[%s215 + $0x88] sm:$0xf]
      %v392 = vld [vmem:[%s215 + $0x8c] sm:$0xf]
      %v393 = vld [vmem:[%s215 + $0x90] sm:$0xf]
      %v394 = vld [vmem:[%s215 + $0x94] sm:$0xf]
      %v395 = vld [vmem:[%s215 + $0x98] sm:$0xf]
      %v396 = vld [vmem:[%s215 + $0x9c] sm:$0xf]
      %v397 = vld [vmem:[%s215 + $0xa0] sm:$0xf]
      %v398 = vld [vmem:[%s215 + $0xa4] sm:$0xf]
      %v399 = vld [vmem:[%s215 + $0xa8] sm:$0xf]
      %v400 = vld [vmem:[%s215 + $0xac] sm:$0xf]
      %v401 = vld [vmem:[%s215 + $0xb0] sm:$0xf]
      %v402 = vld [vmem:[%s215 + $0xb4] sm:$0xf]
      %v403 = vld [vmem:[%s215 + $0xb8] sm:$0xf]
      %v404 = vld [vmem:[%s215 + $0xbc] sm:$0xf]
      %v405 = vld [vmem:[%s218] sm:$0x1]
      %v407 = vlaneseq
      %v408 = vshrl.u32 %v407, 7
      %v409 = vsub.s32 0, %v408
      %v410 = vrot.slane %v405, %v409
      %v540 = vunpack.c.l.b16 %v229
      %v541 = vunpack.c.h.b16 %v229
      %v542 = vunpack.c.l.b16 %v230
      %v543 = vunpack.c.l.b16 %v231
      %v544 = vunpack.c.h.b16 %v231
      %v545 = vunpack.c.l.b16 %v232
      %v546 = vunpack.c.l.b16 %v233
      %v547 = vunpack.c.h.b16 %v233
      %v548 = vunpack.c.l.b16 %v234
      %v549 = vunpack.c.l.b16 %v235
      %v550 = vunpack.c.h.b16 %v235
      %v551 = vunpack.c.l.b16 %v236
      %v552 = vunpack.c.l.b16 %v237
      %v553 = vunpack.c.h.b16 %v237
      %v554 = vunpack.c.l.b16 %v238
      %v555 = vunpack.c.l.b16 %v239
      %v556 = vunpack.c.h.b16 %v239
      %v557 = vunpack.c.l.b16 %v240
      %v558 = vunpack.c.l.b16 %v241
      %v559 = vunpack.c.h.b16 %v241
      %v560 = vunpack.c.l.b16 %v242
      %v561 = vunpack.c.l.b16 %v243
      %v562 = vunpack.c.h.b16 %v243
      %v563 = vunpack.c.l.b16 %v244
      %v564 = vunpack.c.l.b16 %v245
      %v565 = vunpack.c.h.b16 %v245
      %v566 = vunpack.c.l.b16 %v246
      %v567 = vunpack.c.l.b16 %v247
      %v568 = vunpack.c.h.b16 %v247
      %v569 = vunpack.c.l.b16 %v248
      %v570 = vunpack.c.l.b16 %v249
      %v571 = vunpack.c.h.b16 %v249
      %v572 = vunpack.c.l.b16 %v250
      %v573 = vunpack.c.l.b16 %v251
      %v574 = vunpack.c.h.b16 %v251
      %v575 = vunpack.c.l.b16 %v252
      %v576 = vunpack.c.l.b16 %v253
      %v577 = vunpack.c.h.b16 %v253
      %v578 = vunpack.c.l.b16 %v254
      %v579 = vunpack.c.l.b16 %v255
      %v580 = vunpack.c.h.b16 %v255
      %v581 = vunpack.c.l.b16 %v256
      %v582 = vunpack.c.l.b16 %v257
      %v583 = vunpack.c.h.b16 %v257
      %v584 = vunpack.c.l.b16 %v258
      %v585 = vunpack.c.l.b16 %v259
      %v586 = vunpack.c.h.b16 %v259
      %v587 = vunpack.c.l.b16 %v260
      %v588 = vunpack.c.l.b16 %v261
      %v589 = vunpack.c.h.b16 %v261
      %v590 = vunpack.c.l.b16 %v262
      %v591 = vunpack.c.l.b16 %v263
      %v592 = vunpack.c.h.b16 %v263
      %v593 = vunpack.c.l.b16 %v264
      %v594 = vunpack.c.l.b16 %v265
      %v595 = vunpack.c.h.b16 %v265
      %v596 = vunpack.c.l.b16 %v266
      %v597 = vunpack.c.l.b16 %v267
      %v598 = vunpack.c.h.b16 %v267
      %v599 = vunpack.c.l.b16 %v268
      %v600 = vunpack.c.l.b16 %v269
      %v601 = vunpack.c.h.b16 %v269
      %v602 = vunpack.c.l.b16 %v270
      %v603 = vunpack.c.l.b16 %v271
      %v604 = vunpack.c.h.b16 %v271
      %v605 = vunpack.c.l.b16 %v272
      %v606 = vunpack.c.l.b16 %v273
      %v607 = vunpack.c.h.b16 %v273
      %v608 = vunpack.c.l.b16 %v274
      %v609 = vunpack.c.l.b16 %v275
      %v610 = vunpack.c.h.b16 %v275
      %v611 = vunpack.c.l.b16 %v276
      %v612 = vunpack.c.l.b16 %v277
      %v613 = vunpack.c.h.b16 %v277
      %v614 = vunpack.c.l.b16 %v278
      %v615 = vunpack.c.l.b16 %v279
      %v616 = vunpack.c.h.b16 %v279
      %v617 = vunpack.c.l.b16 %v280
      %v618 = vunpack.c.l.b16 %v281
      %v619 = vunpack.c.h.b16 %v281
      %v620 = vunpack.c.l.b16 %v282
      %v621 = vunpack.c.l.b16 %v283
      %v622 = vunpack.c.h.b16 %v283
      %v623 = vunpack.c.l.b16 %v284
      %v624 = vunpack.c.l.b16 %v285
      %v625 = vunpack.c.h.b16 %v285
      %v626 = vunpack.c.l.b16 %v286
      %v627 = vunpack.c.l.b16 %v287
      %v628 = vunpack.c.h.b16 %v287
      %v629 = vunpack.c.l.b16 %v288
      %v630 = vunpack.c.l.b16 %v289
      %v631 = vunpack.c.h.b16 %v289
      %v632 = vunpack.c.l.b16 %v290
      %v633 = vunpack.c.l.b16 %v291
      %v634 = vunpack.c.h.b16 %v291
      %v635 = vunpack.c.l.b16 %v292
      %v636 = vunpack.c.l.b16 %v293
      %v637 = vunpack.c.h.b16 %v293
      %v638 = vunpack.c.l.b16 %v294
      %v639 = vunpack.c.l.b16 %v295
      %v640 = vunpack.c.h.b16 %v295
      %v641 = vunpack.c.l.b16 %v296
      %v642 = vunpack.c.l.b16 %v297
      %v643 = vunpack.c.h.b16 %v297
      %v644 = vunpack.c.l.b16 %v298
      %v645 = vunpack.c.l.b16 %v299
      %v646 = vunpack.c.h.b16 %v299
      %v647 = vunpack.c.l.b16 %v300
      %v648 = vunpack.c.l.b16 %v301
      %v649 = vunpack.c.h.b16 %v301
      %v650 = vunpack.c.l.b16 %v302
      %v651 = vunpack.c.l.b16 %v303
      %v652 = vunpack.c.h.b16 %v303
      %v653 = vunpack.c.l.b16 %v304
      %v654 = vunpack.c.l.b16 %v305
      %v655 = vunpack.c.h.b16 %v305
      %v656 = vunpack.c.l.b16 %v306
      %v657 = vunpack.c.l.b16 %v307
      %v658 = vunpack.c.h.b16 %v307
      %v659 = vunpack.c.l.b16 %v308
      %v660 = vunpack.c.l.b16 %v309
      %v661 = vunpack.c.h.b16 %v309
      %v662 = vunpack.c.l.b16 %v310
      %v663 = vunpack.c.l.b16 %v311
      %v664 = vunpack.c.h.b16 %v311
      %v665 = vunpack.c.l.b16 %v312
      %v666 = vunpack.c.l.b16 %v313
      %v667 = vunpack.c.h.b16 %v313
      %v668 = vunpack.c.l.b16 %v314
      %v669 = vunpack.c.l.b16 %v315
      %v670 = vunpack.c.h.b16 %v315
      %v671 = vunpack.c.l.b16 %v316
      %v672 = vunpack.c.l.b16 %v317
      %v673 = vunpack.c.h.b16 %v317
      %v674 = vunpack.c.l.b16 %v318
      %v675 = vunpack.c.l.b16 %v319
      %v676 = vunpack.c.h.b16 %v319
      %v677 = vunpack.c.l.b16 %v320
      %v678 = vunpack.c.l.b16 %v321
      %v679 = vunpack.c.h.b16 %v321
      %v680 = vunpack.c.l.b16 %v322
      %v681 = vunpack.c.l.b16 %v323
      %v682 = vunpack.c.h.b16 %v323
      %v683 = vunpack.c.l.b16 %v324
      %v684 = vunpack.c.l.b16 %v325
      %v685 = vunpack.c.h.b16 %v325
      %v686 = vunpack.c.l.b16 %v326
      %v687 = vunpack.c.l.b16 %v327
      %v688 = vunpack.c.h.b16 %v327
      %v689 = vunpack.c.l.b16 %v328
      %v690 = vunpack.c.l.b16 %v329
      %v691 = vunpack.c.h.b16 %v329
      %v692 = vunpack.c.l.b16 %v330
      %v693 = vunpack.c.l.b16 %v331
      %v694 = vunpack.c.h.b16 %v331
      %v695 = vunpack.c.l.b16 %v332
      %v696 = vunpack.c.l.b16 %v333
      %v697 = vunpack.c.h.b16 %v333
      %v698 = vunpack.c.l.b16 %v334
      %v699 = vunpack.c.l.b16 %v335
      %v700 = vunpack.c.h.b16 %v335
      %v701 = vunpack.c.l.b16 %v336
      %v702 = vunpack.c.l.b16 %v337
      %v703 = vunpack.c.h.b16 %v337
      %v704 = vunpack.c.l.b16 %v338
      %v705 = vunpack.c.l.b16 %v339
      %v706 = vunpack.c.h.b16 %v339
      %v707 = vunpack.c.l.b16 %v340
      %v708 = vunpack.c.l.b16 %v341
      %v709 = vunpack.c.h.b16 %v341
      %v710 = vunpack.c.l.b16 %v342
      %v711 = vunpack.c.l.b16 %v343
      %v712 = vunpack.c.h.b16 %v343
      %v713 = vunpack.c.l.b16 %v344
      %v714 = vunpack.c.l.b16 %v345
      %v715 = vunpack.c.h.b16 %v345
      %v716 = vunpack.c.l.b16 %v346
      %v717 = vunpack.c.l.b16 %v347
      %v718 = vunpack.c.h.b16 %v347
      %v719 = vunpack.c.l.b16 %v348
      %v720 = vunpack.c.l.b16 %v349
      %v721 = vunpack.c.h.b16 %v349
      %v722 = vunpack.c.l.b16 %v350
      %v723 = vunpack.c.l.b16 %v351
      %v724 = vunpack.c.h.b16 %v351
      %v725 = vunpack.c.l.b16 %v352
      %v726 = vunpack.c.l.b16 %v353
      %v727 = vunpack.c.h.b16 %v353
      %v728 = vunpack.c.l.b16 %v354
      %v729 = vunpack.c.l.b16 %v355
      %v730 = vunpack.c.h.b16 %v355
      %v731 = vunpack.c.l.b16 %v356
      %v732 = vpack.c.b16 %v543, %v540
      %v733 = vpack.c.b16 %v544, %v541
      %v734 = vpack.c.b16 %v545, %v542
      %v735 = vpack.c.b16 %v549, %v546
      %v736 = vpack.c.b16 %v550, %v547
      %v737 = vpack.c.b16 %v551, %v548
      %v738 = vpack.c.b16 %v555, %v552
      %v739 = vpack.c.b16 %v556, %v553
      %v740 = vpack.c.b16 %v557, %v554
      %v741 = vpack.c.b16 %v561, %v558
      %v742 = vpack.c.b16 %v562, %v559
      %v743 = vpack.c.b16 %v563, %v560
      %v744 = vpack.c.b16 %v567, %v564
      %v745 = vpack.c.b16 %v568, %v565
      %v746 = vpack.c.b16 %v569, %v566
      %v747 = vpack.c.b16 %v573, %v570
      %v748 = vpack.c.b16 %v574, %v571
      %v749 = vpack.c.b16 %v575, %v572
      %v750 = vpack.c.b16 %v579, %v576
      %v751 = vpack.c.b16 %v580, %v577
      %v752 = vpack.c.b16 %v581, %v578
      %v753 = vpack.c.b16 %v585, %v582
      %v754 = vpack.c.b16 %v586, %v583
      %v755 = vpack.c.b16 %v587, %v584
      %v756 = vpack.c.b16 %v591, %v588
      %v757 = vpack.c.b16 %v592, %v589
      %v758 = vpack.c.b16 %v593, %v590
      %v759 = vpack.c.b16 %v597, %v594
      %v760 = vpack.c.b16 %v598, %v595
      %v761 = vpack.c.b16 %v599, %v596
      %v762 = vpack.c.b16 %v603, %v600
      %v763 = vpack.c.b16 %v604, %v601
      %v764 = vpack.c.b16 %v605, %v602
      %v765 = vpack.c.b16 %v609, %v606
      %v766 = vpack.c.b16 %v610, %v607
      %v767 = vpack.c.b16 %v611, %v608
      %v768 = vpack.c.b16 %v615, %v612
      %v769 = vpack.c.b16 %v616, %v613
      %v770 = vpack.c.b16 %v617, %v614
      %v771 = vpack.c.b16 %v621, %v618
      %v772 = vpack.c.b16 %v622, %v619
      %v773 = vpack.c.b16 %v623, %v620
      %v774 = vpack.c.b16 %v627, %v624
      %v775 = vpack.c.b16 %v628, %v625
      %v776 = vpack.c.b16 %v629, %v626
      %v777 = vpack.c.b16 %v633, %v630
      %v778 = vpack.c.b16 %v634, %v631
      %v779 = vpack.c.b16 %v635, %v632
      %v780 = vpack.c.b16 %v639, %v636
      %v781 = vpack.c.b16 %v640, %v637
      %v782 = vpack.c.b16 %v641, %v638
      %v783 = vpack.c.b16 %v645, %v642
      %v784 = vpack.c.b16 %v646, %v643
      %v785 = vpack.c.b16 %v647, %v644
      %v786 = vpack.c.b16 %v651, %v648
      %v787 = vpack.c.b16 %v652, %v649
      %v788 = vpack.c.b16 %v653, %v650
      %v789 = vpack.c.b16 %v657, %v654
      %v790 = vpack.c.b16 %v658, %v655
      %v791 = vpack.c.b16 %v659, %v656
      %v792 = vpack.c.b16 %v663, %v660
      %v793 = vpack.c.b16 %v664, %v661
      %v794 = vpack.c.b16 %v665, %v662
      %v795 = vpack.c.b16 %v669, %v666
      %v796 = vpack.c.b16 %v670, %v667
      %v797 = vpack.c.b16 %v671, %v668
      %v798 = vpack.c.b16 %v675, %v672
      %v799 = vpack.c.b16 %v676, %v673
      %v800 = vpack.c.b16 %v677, %v674
      %v801 = vpack.c.b16 %v681, %v678
      %v802 = vpack.c.b16 %v682, %v679
      %v803 = vpack.c.b16 %v683, %v680
      %v804 = vpack.c.b16 %v687, %v684
      %v805 = vpack.c.b16 %v688, %v685
      %v806 = vpack.c.b16 %v689, %v686
      %v807 = vpack.c.b16 %v693, %v690
      %v808 = vpack.c.b16 %v694, %v691
      %v809 = vpack.c.b16 %v695, %v692
      %v810 = vpack.c.b16 %v699, %v696
      %v811 = vpack.c.b16 %v700, %v697
      %v812 = vpack.c.b16 %v701, %v698
      %v813 = vpack.c.b16 %v705, %v702
      %v814 = vpack.c.b16 %v706, %v703
      %v815 = vpack.c.b16 %v707, %v704
      %v816 = vpack.c.b16 %v711, %v708
      %v817 = vpack.c.b16 %v712, %v709
      %v818 = vpack.c.b16 %v713, %v710
      %v819 = vpack.c.b16 %v717, %v714
      %v820 = vpack.c.b16 %v718, %v715
      %v821 = vpack.c.b16 %v719, %v716
      %v822 = vpack.c.b16 %v723, %v720
      %v823 = vpack.c.b16 %v724, %v721
      %v824 = vpack.c.b16 %v725, %v722
      %v825 = vpack.c.b16 %v729, %v726
      %v826 = vpack.c.b16 %v730, %v727
      %v827 = vpack.c.b16 %v731, %v728
      %v972 = vunpack.c.l.b16 %v357
      %v973 = vunpack.c.l.b16 %v358
      %v974 = vunpack.c.l.b16 %v359
      %v975 = vunpack.c.l.b16 %v360
      %v976 = vunpack.c.l.b16 %v361
      %v977 = vunpack.c.l.b16 %v362
      %v978 = vunpack.c.l.b16 %v363
      %v979 = vunpack.c.l.b16 %v364
      %v980 = vunpack.c.l.b16 %v365
      %v981 = vunpack.c.l.b16 %v366
      %v982 = vunpack.c.l.b16 %v367
      %v983 = vunpack.c.l.b16 %v368
      %v984 = vunpack.c.l.b16 %v369
      %v985 = vunpack.c.l.b16 %v370
      %v986 = vunpack.c.l.b16 %v371
      %v987 = vunpack.c.l.b16 %v372
      %v988 = vunpack.c.l.b16 %v373
      %v989 = vunpack.c.l.b16 %v374
      %v990 = vunpack.c.l.b16 %v375
      %v991 = vunpack.c.l.b16 %v376
      %v992 = vunpack.c.l.b16 %v377
      %v993 = vunpack.c.l.b16 %v378
      %v994 = vunpack.c.l.b16 %v379
      %v995 = vunpack.c.l.b16 %v380
      %v996 = vunpack.c.l.b16 %v381
      %v997 = vunpack.c.l.b16 %v382
      %v998 = vunpack.c.l.b16 %v383
      %v999 = vunpack.c.l.b16 %v384
      %v1000 = vunpack.c.l.b16 %v385
      %v1001 = vunpack.c.l.b16 %v386
      %v1002 = vunpack.c.l.b16 %v387
      %v1003 = vunpack.c.l.b16 %v388
      %v1004 = vunpack.c.l.b16 %v389
      %v1005 = vunpack.c.l.b16 %v390
      %v1006 = vunpack.c.l.b16 %v391
      %v1007 = vunpack.c.l.b16 %v392
      %v1008 = vunpack.c.l.b16 %v393
      %v1009 = vunpack.c.l.b16 %v394
      %v1010 = vunpack.c.l.b16 %v395
      %v1011 = vunpack.c.l.b16 %v396
      %v1012 = vunpack.c.l.b16 %v397
      %v1013 = vunpack.c.l.b16 %v398
      %v1014 = vunpack.c.l.b16 %v399
      %v1015 = vunpack.c.l.b16 %v400
      %v1016 = vunpack.c.l.b16 %v401
      %v1017 = vunpack.c.l.b16 %v402
      %v1018 = vunpack.c.l.b16 %v403
      %v1019 = vunpack.c.l.b16 %v404
      %v1020 = vpack.c.b16 %v973, %v972
      %v1021 = vpack.c.b16 %v975, %v974
      %v1022 = vpack.c.b16 %v977, %v976
      %v1023 = vpack.c.b16 %v979, %v978
      %v1024 = vpack.c.b16 %v981, %v980
      %v1025 = vpack.c.b16 %v983, %v982
      %v1026 = vpack.c.b16 %v985, %v984
      %v1027 = vpack.c.b16 %v987, %v986
      %v1028 = vpack.c.b16 %v989, %v988
      %v1029 = vpack.c.b16 %v991, %v990
      %v1030 = vpack.c.b16 %v993, %v992
      %v1031 = vpack.c.b16 %v995, %v994
      %v1032 = vpack.c.b16 %v997, %v996
      %v1033 = vpack.c.b16 %v999, %v998
      %v1034 = vpack.c.b16 %v1001, %v1000
      %v1035 = vpack.c.b16 %v1003, %v1002
      %v1036 = vpack.c.b16 %v1005, %v1004
      %v1037 = vpack.c.b16 %v1007, %v1006
      %v1038 = vpack.c.b16 %v1009, %v1008
      %v1039 = vpack.c.b16 %v1011, %v1010
      %v1040 = vpack.c.b16 %v1013, %v1012
      %v1041 = vpack.c.b16 %v1015, %v1014
      %v1042 = vpack.c.b16 %v1017, %v1016
      %v1043 = vpack.c.b16 %v1019, %v1018
      %1068 = vmatprep.subr.bf16.mxu0 0
      %1069 = vmatpush1.bf16.msra.mxu0 %v1027
      %1070 = vmatprep.subr.bf16.mxu0 0
      %1071 = vmatpush1.bf16.msra.mxu0 %v1026
      %1072 = vmatprep.subr.bf16.mxu0 0
      %1073 = vmatpush1.bf16.msra.mxu0 %v1025
      %1074 = vmatprep.subr.bf16.mxu0 0
      %1075 = vmatpush1.bf16.msra.mxu0 %v1024
      %1076 = vmatprep.subr.bf16.mxu0 0
      %1077 = vmatpush1.bf16.msra.mxu0 %v1023
      %1078 = vmatprep.subr.bf16.mxu0 0
      %1079 = vmatpush1.bf16.msra.mxu0 %v1022
      %1080 = vmatprep.subr.bf16.mxu0 0
      %1081 = vmatpush1.bf16.msra.mxu0 %v1021
      %1082 = vmatprep.subr.bf16.mxu0 0
      %1083 = vmatpush1.bf16.msra.mxu0 %v1020
      %1084 = vmatprep.subr.bf16.mxu0 0
      %1085 = vmatpush2.bf16.msra.mxu0 %v1035
      %1086 = vmatprep.subr.bf16.mxu0 0
      %1087 = vmatpush2.bf16.msra.mxu0 %v1034
      %1088 = vmatprep.subr.bf16.mxu0 0
      %1089 = vmatpush2.bf16.msra.mxu0 %v1033
      %1090 = vmatprep.subr.bf16.mxu0 0
      %1091 = vmatpush2.bf16.msra.mxu0 %v1032
      %1092 = vmatprep.subr.bf16.mxu0 0
      %1093 = vmatpush2.bf16.msra.mxu0 %v1031
      %1094 = vmatprep.subr.bf16.mxu0 0
      %1095 = vmatpush2.bf16.msra.mxu0 %v1030
      %1096 = vmatprep.subr.bf16.mxu0 0
      %1097 = vmatpush2.bf16.msra.mxu0 %v1029
      %1098 = vmatprep.subr.bf16.mxu0 0
      %1099 = vmatpush2.bf16.msra.mxu0 %v1028
      %1100 = vmatprep.mubr.bf16.mxu0 %v733
      %1101 = vmatmul.mubr.bf16.gmra.mxu0 %v732
      %v1102 = vpop.f32.mrf.mxu0
      %v1103 = vadd.f32 %v410, %v1102
      %v1104 = vpop.f32.mrf.mxu0
      %v1105 = vpop.f32.mrf.mxu0
      %v1106 = vadd.f32 %v410, %v1105
      %v1107 = vpop.f32.mrf.mxu0
      %1108 = vmatprep.mubr.bf16.mxu0 %v736
      %1109 = vmatmul.mubr.bf16.gmra.mxu0 %v735
      %v1110 = vpop.f32.mrf.mxu0
      %v1111 = vadd.f32 %v410, %v1110
      %v1112 = vpop.f32.mrf.mxu0
      %v1113 = vpop.f32.mrf.mxu0
      %v1114 = vadd.f32 %v410, %v1113
      %v1115 = vpop.f32.mrf.mxu0
      %1116 = vmatprep.mubr.bf16.mxu0 %v739
      %1117 = vmatmul.mubr.bf16.gmra.mxu0 %v738
      %v1118 = vpop.f32.mrf.mxu0
      %v1119 = vadd.f32 %v410, %v1118
      %v1120 = vpop.f32.mrf.mxu0
      %v1121 = vpop.f32.mrf.mxu0
      %v1122 = vadd.f32 %v410, %v1121
      %v1123 = vpop.f32.mrf.mxu0
      %1124 = vmatprep.mubr.bf16.mxu0 %v742
      %1125 = vmatmul.mubr.bf16.gmra.mxu0 %v741
      %v1126 = vpop.f32.mrf.mxu0
      %v1127 = vadd.f32 %v410, %v1126
      %v1128 = vpop.f32.mrf.mxu0
      %v1129 = vpop.f32.mrf.mxu0
      %v1130 = vadd.f32 %v410, %v1129
      %v1131 = vpop.f32.mrf.mxu0
      %1132 = vmatprep.mubr.bf16.mxu0 %v745
      %1133 = vmatmul.mubr.bf16.gmra.mxu0 %v744
      %v1134 = vpop.f32.mrf.mxu0
      %v1135 = vadd.f32 %v410, %v1134
      %v1136 = vpop.f32.mrf.mxu0
      %v1137 = vpop.f32.mrf.mxu0
      %v1138 = vadd.f32 %v410, %v1137
      %v1139 = vpop.f32.mrf.mxu0
      %1140 = vmatprep.mubr.bf16.mxu0 %v748
      %1141 = vmatmul.mubr.bf16.gmra.mxu0 %v747
      %v1142 = vpop.f32.mrf.mxu0
      %v1143 = vadd.f32 %v410, %v1142
      %v1144 = vpop.f32.mrf.mxu0
      %v1145 = vpop.f32.mrf.mxu0
      %v1146 = vadd.f32 %v410, %v1145
      %v1147 = vpop.f32.mrf.mxu0
      %1148 = vmatprep.mubr.bf16.mxu0 %v751
      %1149 = vmatmul.mubr.bf16.gmra.mxu0 %v750
      %v1150 = vpop.f32.mrf.mxu0
      %v1151 = vadd.f32 %v410, %v1150
      %v1152 = vpop.f32.mrf.mxu0
      %v1153 = vpop.f32.mrf.mxu0
      %v1154 = vadd.f32 %v410, %v1153
      %v1155 = vpop.f32.mrf.mxu0
      %1156 = vmatprep.mubr.bf16.mxu0 %v754
      %1157 = vmatmul.mubr.bf16.gmra.mxu0 %v753
      %v1158 = vpop.f32.mrf.mxu0
      %v1159 = vadd.f32 %v410, %v1158
      %v1160 = vpop.f32.mrf.mxu0
      %v1161 = vpop.f32.mrf.mxu0
      %v1162 = vadd.f32 %v410, %v1161
      %v1163 = vpop.f32.mrf.mxu0
      %1164 = vmatprep.mubr.bf16.mxu0 %v757
      %1165 = vmatmul.mubr.bf16.gmra.mxu0 %v756
      %v1166 = vpop.f32.mrf.mxu0
      %v1167 = vadd.f32 %v410, %v1166
      %v1168 = vpop.f32.mrf.mxu0
      %v1169 = vpop.f32.mrf.mxu0
      %v1170 = vadd.f32 %v410, %v1169
      %v1171 = vpop.f32.mrf.mxu0
      %1172 = vmatprep.mubr.bf16.mxu0 %v760
      %1173 = vmatmul.mubr.bf16.gmra.mxu0 %v759
      %v1174 = vpop.f32.mrf.mxu0
      %v1175 = vadd.f32 %v410, %v1174
      %v1176 = vpop.f32.mrf.mxu0
      %v1177 = vpop.f32.mrf.mxu0
      %v1178 = vadd.f32 %v410, %v1177
      %v1179 = vpop.f32.mrf.mxu0
      %1180 = vmatprep.mubr.bf16.mxu0 %v763
      %1181 = vmatmul.mubr.bf16.gmra.mxu0 %v762
      %v1182 = vpop.f32.mrf.mxu0
      %v1183 = vadd.f32 %v410, %v1182
      %v1184 = vpop.f32.mrf.mxu0
      %v1185 = vpop.f32.mrf.mxu0
      %v1186 = vadd.f32 %v410, %v1185
      %v1187 = vpop.f32.mrf.mxu0
      %1188 = vmatprep.mubr.bf16.mxu0 %v766
      %1189 = vmatmul.mubr.bf16.gmra.mxu0 %v765
      %v1190 = vpop.f32.mrf.mxu0
      %v1191 = vadd.f32 %v410, %v1190
      %v1192 = vpop.f32.mrf.mxu0
      %v1193 = vpop.f32.mrf.mxu0
      %v1194 = vadd.f32 %v410, %v1193
      %v1195 = vpop.f32.mrf.mxu0
      %1196 = vmatprep.mubr.bf16.mxu0 %v769
      %1197 = vmatmul.mubr.bf16.gmra.mxu0 %v768
      %v1198 = vpop.f32.mrf.mxu0
      %v1199 = vadd.f32 %v410, %v1198
      %v1200 = vpop.f32.mrf.mxu0
      %v1201 = vpop.f32.mrf.mxu0
      %v1202 = vadd.f32 %v410, %v1201
      %v1203 = vpop.f32.mrf.mxu0
      %1204 = vmatprep.mubr.bf16.mxu0 %v772
      %1205 = vmatmul.mubr.bf16.gmra.mxu0 %v771
      %v1206 = vpop.f32.mrf.mxu0
      %v1207 = vadd.f32 %v410, %v1206
      %v1208 = vpop.f32.mrf.mxu0
      %v1209 = vpop.f32.mrf.mxu0
      %v1210 = vadd.f32 %v410, %v1209
      %v1211 = vpop.f32.mrf.mxu0
      %1212 = vmatprep.mubr.bf16.mxu0 %v775
      %1213 = vmatmul.mubr.bf16.gmra.mxu0 %v774
      %v1214 = vpop.f32.mrf.mxu0
      %v1215 = vadd.f32 %v410, %v1214
      %v1216 = vpop.f32.mrf.mxu0
      %v1217 = vpop.f32.mrf.mxu0
      %v1218 = vadd.f32 %v410, %v1217
      %v1219 = vpop.f32.mrf.mxu0
      %1220 = vmatprep.mubr.bf16.mxu0 %v778
      %1221 = vmatmul.mubr.bf16.gmra.mxu0 %v777
      %v1222 = vpop.f32.mrf.mxu0
      %v1223 = vadd.f32 %v410, %v1222
      %v1224 = vpop.f32.mrf.mxu0
      %v1225 = vpop.f32.mrf.mxu0
      %v1226 = vadd.f32 %v410, %v1225
      %v1227 = vpop.f32.mrf.mxu0
      %1228 = vmatprep.mubr.bf16.mxu0 %v781
      %1229 = vmatmul.mubr.bf16.gmra.mxu0 %v780
      %v1230 = vpop.f32.mrf.mxu0
      %v1231 = vadd.f32 %v410, %v1230
      %v1232 = vpop.f32.mrf.mxu0
      %v1233 = vpop.f32.mrf.mxu0
      %v1234 = vadd.f32 %v410, %v1233
      %v1235 = vpop.f32.mrf.mxu0
      %1236 = vmatprep.mubr.bf16.mxu0 %v784
      %1237 = vmatmul.mubr.bf16.gmra.mxu0 %v783
      %v1238 = vpop.f32.mrf.mxu0
      %v1239 = vadd.f32 %v410, %v1238
      %v1240 = vpop.f32.mrf.mxu0
      %v1241 = vpop.f32.mrf.mxu0
      %v1242 = vadd.f32 %v410, %v1241
      %v1243 = vpop.f32.mrf.mxu0
      %1244 = vmatprep.mubr.bf16.mxu0 %v787
      %1245 = vmatmul.mubr.bf16.gmra.mxu0 %v786
      %v1246 = vpop.f32.mrf.mxu0
      %v1247 = vadd.f32 %v410, %v1246
      %v1248 = vpop.f32.mrf.mxu0
      %v1249 = vpop.f32.mrf.mxu0
      %v1250 = vadd.f32 %v410, %v1249
      %v1251 = vpop.f32.mrf.mxu0
      %1252 = vmatprep.mubr.bf16.mxu0 %v790
      %1253 = vmatmul.mubr.bf16.gmra.mxu0 %v789
      %v1254 = vpop.f32.mrf.mxu0
      %v1255 = vadd.f32 %v410, %v1254
      %v1256 = vpop.f32.mrf.mxu0
      %v1257 = vpop.f32.mrf.mxu0
      %v1258 = vadd.f32 %v410, %v1257
      %v1259 = vpop.f32.mrf.mxu0
      %1260 = vmatprep.mubr.bf16.mxu0 %v793
      %1261 = vmatmul.mubr.bf16.gmra.mxu0 %v792
      %v1262 = vpop.f32.mrf.mxu0
      %v1263 = vadd.f32 %v410, %v1262
      %v1264 = vpop.f32.mrf.mxu0
      %v1265 = vpop.f32.mrf.mxu0
      %v1266 = vadd.f32 %v410, %v1265
      %v1267 = vpop.f32.mrf.mxu0
      %1268 = vmatprep.mubr.bf16.mxu0 %v796
      %1269 = vmatmul.mubr.bf16.gmra.mxu0 %v795
      %v1270 = vpop.f32.mrf.mxu0
      %v1271 = vadd.f32 %v410, %v1270
      %v1272 = vpop.f32.mrf.mxu0
      %v1273 = vpop.f32.mrf.mxu0
      %v1274 = vadd.f32 %v410, %v1273
      %v1275 = vpop.f32.mrf.mxu0
      %1276 = vmatprep.mubr.bf16.mxu0 %v799
      %1277 = vmatmul.mubr.bf16.gmra.mxu0 %v798
      %v1278 = vpop.f32.mrf.mxu0
      %v1279 = vadd.f32 %v410, %v1278
      %v1280 = vpop.f32.mrf.mxu0
      %v1281 = vpop.f32.mrf.mxu0
      %v1282 = vadd.f32 %v410, %v1281
      %v1283 = vpop.f32.mrf.mxu0
      %1284 = vmatprep.mubr.bf16.mxu0 %v802
      %1285 = vmatmul.mubr.bf16.gmra.mxu0 %v801
      %v1286 = vpop.f32.mrf.mxu0
      %v1287 = vadd.f32 %v410, %v1286
      %v1288 = vpop.f32.mrf.mxu0
      %v1289 = vpop.f32.mrf.mxu0
      %v1290 = vadd.f32 %v410, %v1289
      %v1291 = vpop.f32.mrf.mxu0
      %1292 = vmatprep.mubr.bf16.mxu0 %v805
      %1293 = vmatmul.mubr.bf16.gmra.mxu0 %v804
      %v1294 = vpop.f32.mrf.mxu0
      %v1295 = vadd.f32 %v410, %v1294
      %v1296 = vpop.f32.mrf.mxu0
      %v1297 = vpop.f32.mrf.mxu0
      %v1298 = vadd.f32 %v410, %v1297
      %v1299 = vpop.f32.mrf.mxu0
      %1300 = vmatprep.mubr.bf16.mxu0 %v808
      %1301 = vmatmul.mubr.bf16.gmra.mxu0 %v807
      %v1302 = vpop.f32.mrf.mxu0
      %v1303 = vadd.f32 %v410, %v1302
      %v1304 = vpop.f32.mrf.mxu0
      %v1305 = vpop.f32.mrf.mxu0
      %v1306 = vadd.f32 %v410, %v1305
      %v1307 = vpop.f32.mrf.mxu0
      %1308 = vmatprep.mubr.bf16.mxu0 %v811
      %1309 = vmatmul.mubr.bf16.gmra.mxu0 %v810
      %v1310 = vpop.f32.mrf.mxu0
      %v1311 = vadd.f32 %v410, %v1310
      %v1312 = vpop.f32.mrf.mxu0
      %v1313 = vpop.f32.mrf.mxu0
      %v1314 = vadd.f32 %v410, %v1313
      %v1315 = vpop.f32.mrf.mxu0
      %1316 = vmatprep.mubr.bf16.mxu0 %v814
      %1317 = vmatmul.mubr.bf16.gmra.mxu0 %v813
      %v1318 = vpop.f32.mrf.mxu0
      %v1319 = vadd.f32 %v410, %v1318
      %v1320 = vpop.f32.mrf.mxu0
      %v1321 = vpop.f32.mrf.mxu0
      %v1322 = vadd.f32 %v410, %v1321
      %v1323 = vpop.f32.mrf.mxu0
      %1324 = vmatprep.mubr.bf16.mxu0 %v817
      %1325 = vmatmul.mubr.bf16.gmra.mxu0 %v816
      %v1326 = vpop.f32.mrf.mxu0
      %v1327 = vadd.f32 %v410, %v1326
      %v1328 = vpop.f32.mrf.mxu0
      %v1329 = vpop.f32.mrf.mxu0
      %v1330 = vadd.f32 %v410, %v1329
      %v1331 = vpop.f32.mrf.mxu0
      %1332 = vmatprep.mubr.bf16.mxu0 %v820
      %1333 = vmatmul.mubr.bf16.gmra.mxu0 %v819
      %v1334 = vpop.f32.mrf.mxu0
      %v1335 = vadd.f32 %v410, %v1334
      %v1336 = vpop.f32.mrf.mxu0
      %v1337 = vpop.f32.mrf.mxu0
      %v1338 = vadd.f32 %v410, %v1337
      %v1339 = vpop.f32.mrf.mxu0
      %1340 = vmatprep.mubr.bf16.mxu0 %v823
      %1341 = vmatmul.mubr.bf16.gmra.mxu0 %v822
      %v1342 = vpop.f32.mrf.mxu0
      %v1343 = vadd.f32 %v410, %v1342
      %v1344 = vpop.f32.mrf.mxu0
      %v1345 = vpop.f32.mrf.mxu0
      %v1346 = vadd.f32 %v410, %v1345
      %v1347 = vpop.f32.mrf.mxu0
      %1348 = vmatprep.mubr.bf16.mxu0 %v826
      %1349 = vmatmul.mubr.bf16.gmra.mxu0 %v825
      %v1350 = vpop.f32.mrf.mxu0
      %v1351 = vadd.f32 %v410, %v1350
      %v1352 = vpop.f32.mrf.mxu0
      %v1353 = vpop.f32.mrf.mxu0
      %v1354 = vadd.f32 %v410, %v1353
      %v1355 = vpop.f32.mrf.mxu0
      %1356 = vdwg.mxu0
      %1357 = vmatprep.subr.bf16.mxu0 0
      %1358 = vmatpush1.bf16.msra.mxu0 %v1043
      %1359 = vmatprep.subr.bf16.mxu0 0
      %1360 = vmatpush1.bf16.msra.mxu0 %v1042
      %1361 = vmatprep.subr.bf16.mxu0 0
      %1362 = vmatpush1.bf16.msra.mxu0 %v1041
      %1363 = vmatprep.subr.bf16.mxu0 0
      %1364 = vmatpush1.bf16.msra.mxu0 %v1040
      %1365 = vmatprep.subr.bf16.mxu0 0
      %1366 = vmatpush1.bf16.msra.mxu0 %v1039
      %1367 = vmatprep.subr.bf16.mxu0 0
      %1368 = vmatpush1.bf16.msra.mxu0 %v1038
      %1369 = vmatprep.subr.bf16.mxu0 0
      %1370 = vmatpush1.bf16.msra.mxu0 %v1037
      %1371 = vmatprep.subr.bf16.mxu0 0
      %1372 = vmatpush1.bf16.msra.mxu0 %v1036
      %1373 = vmatprep.subr.bf16.mxu0 0
      %1374 = vmatpush2.bf16.msra.mxu0 0
      %1375 = vmatprep.subr.bf16.mxu0 0
      %1376 = vmatpush2.bf16.msra.mxu0 0
      %1377 = vmatprep.subr.bf16.mxu0 0
      %1378 = vmatpush2.bf16.msra.mxu0 0
      %1379 = vmatprep.subr.bf16.mxu0 0
      %1380 = vmatpush2.bf16.msra.mxu0 0
      %1381 = vmatprep.subr.bf16.mxu0 0
      %1382 = vmatpush2.bf16.msra.mxu0 0
      %1383 = vmatprep.subr.bf16.mxu0 0
      %1384 = vmatpush2.bf16.msra.mxu0 0
      %1385 = vmatprep.subr.bf16.mxu0 0
      %1386 = vmatpush2.bf16.msra.mxu0 0
      %1387 = vmatprep.subr.bf16.mxu0 0
      %1388 = vmatpush2.bf16.msra.mxu0 0
      %1389 = vmatprep.mubr.bf16.mxu0 0
      %1390 = vmatmul.mubr.bf16.gmra.mxu0 %v734
      %v1391 = vpop.f32.mrf.mxu0
      %v1392 = vadd.f32 %v1103, %v1391
      %v1393 = vpop.f32.mrf.mxu0
      %v1394 = vpop.f32.mrf.mxu0
      %v1395 = vadd.f32 %v1106, %v1394
      %v1396 = vpop.f32.mrf.mxu0
      %1397 = vmatprep.mubr.bf16.mxu0 0
      %1398 = vmatmul.mubr.bf16.gmra.mxu0 %v737
      %v1399 = vpop.f32.mrf.mxu0
      %v1400 = vadd.f32 %v1111, %v1399
      %v1401 = vpop.f32.mrf.mxu0
      %v1402 = vpop.f32.mrf.mxu0
      %v1403 = vadd.f32 %v1114, %v1402
      %v1404 = vpop.f32.mrf.mxu0
      %1405 = vmatprep.mubr.bf16.mxu0 0
      %1406 = vmatmul.mubr.bf16.gmra.mxu0 %v740
      %v1407 = vpop.f32.mrf.mxu0
      %v1408 = vadd.f32 %v1119, %v1407
      %v1409 = vpop.f32.mrf.mxu0
      %v1410 = vpop.f32.mrf.mxu0
      %v1411 = vadd.f32 %v1122, %v1410
      %v1412 = vpop.f32.mrf.mxu0
      %1413 = vmatprep.mubr.bf16.mxu0 0
      %1414 = vmatmul.mubr.bf16.gmra.mxu0 %v743
      %v1415 = vpop.f32.mrf.mxu0
      %v1416 = vadd.f32 %v1127, %v1415
      %v1417 = vpop.f32.mrf.mxu0
      %v1418 = vpop.f32.mrf.mxu0
      %v1419 = vadd.f32 %v1130, %v1418
      %v1420 = vpop.f32.mrf.mxu0
      %1421 = vmatprep.mubr.bf16.mxu0 0
      %1422 = vmatmul.mubr.bf16.gmra.mxu0 %v746
      %v1423 = vpop.f32.mrf.mxu0
      %v1424 = vadd.f32 %v1135, %v1423
      %v1425 = vpop.f32.mrf.mxu0
      %v1426 = vpop.f32.mrf.mxu0
      %v1427 = vadd.f32 %v1138, %v1426
      %v1428 = vpop.f32.mrf.mxu0
      %1429 = vmatprep.mubr.bf16.mxu0 0
      %1430 = vmatmul.mubr.bf16.gmra.mxu0 %v749
      %v1431 = vpop.f32.mrf.mxu0
      %v1432 = vadd.f32 %v1143, %v1431
      %v1433 = vpop.f32.mrf.mxu0
      %v1434 = vpop.f32.mrf.mxu0
      %v1435 = vadd.f32 %v1146, %v1434
      %v1436 = vpop.f32.mrf.mxu0
      %1437 = vmatprep.mubr.bf16.mxu0 0
      %1438 = vmatmul.mubr.bf16.gmra.mxu0 %v752
      %v1439 = vpop.f32.mrf.mxu0
      %v1440 = vadd.f32 %v1151, %v1439
      %v1441 = vpop.f32.mrf.mxu0
      %v1442 = vpop.f32.mrf.mxu0
      %v1443 = vadd.f32 %v1154, %v1442
      %v1444 = vpop.f32.mrf.mxu0
      %1445 = vmatprep.mubr.bf16.mxu0 0
      %1446 = vmatmul.mubr.bf16.gmra.mxu0 %v755
      %v1447 = vpop.f32.mrf.mxu0
      %v1448 = vadd.f32 %v1159, %v1447
      %v1449 = vpop.f32.mrf.mxu0
      %v1450 = vpop.f32.mrf.mxu0
      %v1451 = vadd.f32 %v1162, %v1450
      %v1452 = vpop.f32.mrf.mxu0
      %1453 = vmatprep.mubr.bf16.mxu0 0
      %1454 = vmatmul.mubr.bf16.gmra.mxu0 %v758
      %v1455 = vpop.f32.mrf.mxu0
      %v1456 = vadd.f32 %v1167, %v1455
      %v1457 = vpop.f32.mrf.mxu0
      %v1458 = vpop.f32.mrf.mxu0
      %v1459 = vadd.f32 %v1170, %v1458
      %v1460 = vpop.f32.mrf.mxu0
      %1461 = vmatprep.mubr.bf16.mxu0 0
      %1462 = vmatmul.mubr.bf16.gmra.mxu0 %v761
      %v1463 = vpop.f32.mrf.mxu0
      %v1464 = vadd.f32 %v1175, %v1463
      %v1465 = vpop.f32.mrf.mxu0
      %v1466 = vpop.f32.mrf.mxu0
      %v1467 = vadd.f32 %v1178, %v1466
      %v1468 = vpop.f32.mrf.mxu0
      %1469 = vmatprep.mubr.bf16.mxu0 0
      %1470 = vmatmul.mubr.bf16.gmra.mxu0 %v764
      %v1471 = vpop.f32.mrf.mxu0
      %v1472 = vadd.f32 %v1183, %v1471
      %v1473 = vpop.f32.mrf.mxu0
      %v1474 = vpop.f32.mrf.mxu0
      %v1475 = vadd.f32 %v1186, %v1474
      %v1476 = vpop.f32.mrf.mxu0
      %1477 = vmatprep.mubr.bf16.mxu0 0
      %1478 = vmatmul.mubr.bf16.gmra.mxu0 %v767
      %v1479 = vpop.f32.mrf.mxu0
      %v1480 = vadd.f32 %v1191, %v1479
      %v1481 = vpop.f32.mrf.mxu0
      %v1482 = vpop.f32.mrf.mxu0
      %v1483 = vadd.f32 %v1194, %v1482
      %v1484 = vpop.f32.mrf.mxu0
      %1485 = vmatprep.mubr.bf16.mxu0 0
      %1486 = vmatmul.mubr.bf16.gmra.mxu0 %v770
      %v1487 = vpop.f32.mrf.mxu0
      %v1488 = vadd.f32 %v1199, %v1487
      %v1489 = vpop.f32.mrf.mxu0
      %v1490 = vpop.f32.mrf.mxu0
      %v1491 = vadd.f32 %v1202, %v1490
      %v1492 = vpop.f32.mrf.mxu0
      %1493 = vmatprep.mubr.bf16.mxu0 0
      %1494 = vmatmul.mubr.bf16.gmra.mxu0 %v773
      %v1495 = vpop.f32.mrf.mxu0
      %v1496 = vadd.f32 %v1207, %v1495
      %v1497 = vpop.f32.mrf.mxu0
      %v1498 = vpop.f32.mrf.mxu0
      %v1499 = vadd.f32 %v1210, %v1498
      %v1500 = vpop.f32.mrf.mxu0
      %1501 = vmatprep.mubr.bf16.mxu0 0
      %1502 = vmatmul.mubr.bf16.gmra.mxu0 %v776
      %v1503 = vpop.f32.mrf.mxu0
      %v1504 = vadd.f32 %v1215, %v1503
      %v1505 = vpop.f32.mrf.mxu0
      %v1506 = vpop.f32.mrf.mxu0
      %v1507 = vadd.f32 %v1218, %v1506
      %v1508 = vpop.f32.mrf.mxu0
      %1509 = vmatprep.mubr.bf16.mxu0 0
      %1510 = vmatmul.mubr.bf16.gmra.mxu0 %v779
      %v1511 = vpop.f32.mrf.mxu0
      %v1512 = vadd.f32 %v1223, %v1511
      %v1513 = vpop.f32.mrf.mxu0
      %v1514 = vpop.f32.mrf.mxu0
      %v1515 = vadd.f32 %v1226, %v1514
      %v1516 = vpop.f32.mrf.mxu0
      %1517 = vmatprep.mubr.bf16.mxu0 0
      %1518 = vmatmul.mubr.bf16.gmra.mxu0 %v782
      %v1519 = vpop.f32.mrf.mxu0
      %v1520 = vadd.f32 %v1231, %v1519
      %v1521 = vpop.f32.mrf.mxu0
      %v1522 = vpop.f32.mrf.mxu0
      %v1523 = vadd.f32 %v1234, %v1522
      %v1524 = vpop.f32.mrf.mxu0
      %1525 = vmatprep.mubr.bf16.mxu0 0
      %1526 = vmatmul.mubr.bf16.gmra.mxu0 %v785
      %v1527 = vpop.f32.mrf.mxu0
      %v1528 = vadd.f32 %v1239, %v1527
      %v1529 = vpop.f32.mrf.mxu0
      %v1530 = vpop.f32.mrf.mxu0
      %v1531 = vadd.f32 %v1242, %v1530
      %v1532 = vpop.f32.mrf.mxu0
      %1533 = vmatprep.mubr.bf16.mxu0 0
      %1534 = vmatmul.mubr.bf16.gmra.mxu0 %v788
      %v1535 = vpop.f32.mrf.mxu0
      %v1536 = vadd.f32 %v1247, %v1535
      %v1537 = vpop.f32.mrf.mxu0
      %v1538 = vpop.f32.mrf.mxu0
      %v1539 = vadd.f32 %v1250, %v1538
      %v1540 = vpop.f32.mrf.mxu0
      %1541 = vmatprep.mubr.bf16.mxu0 0
      %1542 = vmatmul.mubr.bf16.gmra.mxu0 %v791
      %v1543 = vpop.f32.mrf.mxu0
      %v1544 = vadd.f32 %v1255, %v1543
      %v1545 = vpop.f32.mrf.mxu0
      %v1546 = vpop.f32.mrf.mxu0
      %v1547 = vadd.f32 %v1258, %v1546
      %v1548 = vpop.f32.mrf.mxu0
      %1549 = vmatprep.mubr.bf16.mxu0 0
      %1550 = vmatmul.mubr.bf16.gmra.mxu0 %v794
      %v1551 = vpop.f32.mrf.mxu0
      %v1552 = vadd.f32 %v1263, %v1551
      %v1553 = vpop.f32.mrf.mxu0
      %v1554 = vpop.f32.mrf.mxu0
      %v1555 = vadd.f32 %v1266, %v1554
      %v1556 = vpop.f32.mrf.mxu0
      %1557 = vmatprep.mubr.bf16.mxu0 0
      %1558 = vmatmul.mubr.bf16.gmra.mxu0 %v797
      %v1559 = vpop.f32.mrf.mxu0
      %v1560 = vadd.f32 %v1271, %v1559
      %v1561 = vpop.f32.mrf.mxu0
      %v1562 = vpop.f32.mrf.mxu0
      %v1563 = vadd.f32 %v1274, %v1562
      %v1564 = vpop.f32.mrf.mxu0
      %1565 = vmatprep.mubr.bf16.mxu0 0
      %1566 = vmatmul.mubr.bf16.gmra.mxu0 %v800
      %v1567 = vpop.f32.mrf.mxu0
      %v1568 = vadd.f32 %v1279, %v1567
      %v1569 = vpop.f32.mrf.mxu0
      %v1570 = vpop.f32.mrf.mxu0
      %v1571 = vadd.f32 %v1282, %v1570
      %v1572 = vpop.f32.mrf.mxu0
      %1573 = vmatprep.mubr.bf16.mxu0 0
      %1574 = vmatmul.mubr.bf16.gmra.mxu0 %v803
      %v1575 = vpop.f32.mrf.mxu0
      %v1576 = vadd.f32 %v1287, %v1575
      %v1577 = vpop.f32.mrf.mxu0
      %v1578 = vpop.f32.mrf.mxu0
      %v1579 = vadd.f32 %v1290, %v1578
      %v1580 = vpop.f32.mrf.mxu0
      %1581 = vmatprep.mubr.bf16.mxu0 0
      %1582 = vmatmul.mubr.bf16.gmra.mxu0 %v806
      %v1583 = vpop.f32.mrf.mxu0
      %v1584 = vadd.f32 %v1295, %v1583
      %v1585 = vpop.f32.mrf.mxu0
      %v1586 = vpop.f32.mrf.mxu0
      %v1587 = vadd.f32 %v1298, %v1586
      %v1588 = vpop.f32.mrf.mxu0
      %1589 = vmatprep.mubr.bf16.mxu0 0
      %1590 = vmatmul.mubr.bf16.gmra.mxu0 %v809
      %v1591 = vpop.f32.mrf.mxu0
      %v1592 = vadd.f32 %v1303, %v1591
      %v1593 = vpop.f32.mrf.mxu0
      %v1594 = vpop.f32.mrf.mxu0
      %v1595 = vadd.f32 %v1306, %v1594
      %v1596 = vpop.f32.mrf.mxu0
      %1597 = vmatprep.mubr.bf16.mxu0 0
      %1598 = vmatmul.mubr.bf16.gmra.mxu0 %v812
      %v1599 = vpop.f32.mrf.mxu0
      %v1600 = vadd.f32 %v1311, %v1599
      %v1601 = vpop.f32.mrf.mxu0
      %v1602 = vpop.f32.mrf.mxu0
      %v1603 = vadd.f32 %v1314, %v1602
      %v1604 = vpop.f32.mrf.mxu0
      %1605 = vmatprep.mubr.bf16.mxu0 0
      %1606 = vmatmul.mubr.bf16.gmra.mxu0 %v815
      %v1607 = vpop.f32.mrf.mxu0
      %v1608 = vadd.f32 %v1319, %v1607
      %v1609 = vpop.f32.mrf.mxu0
      %v1610 = vpop.f32.mrf.mxu0
      %v1611 = vadd.f32 %v1322, %v1610
      %v1612 = vpop.f32.mrf.mxu0
      %1613 = vmatprep.mubr.bf16.mxu0 0
      %1614 = vmatmul.mubr.bf16.gmra.mxu0 %v818
      %v1615 = vpop.f32.mrf.mxu0
      %v1616 = vadd.f32 %v1327, %v1615
      %v1617 = vpop.f32.mrf.mxu0
      %v1618 = vpop.f32.mrf.mxu0
      %v1619 = vadd.f32 %v1330, %v1618
      %v1620 = vpop.f32.mrf.mxu0
      %1621 = vmatprep.mubr.bf16.mxu0 0
      %1622 = vmatmul.mubr.bf16.gmra.mxu0 %v821
      %v1623 = vpop.f32.mrf.mxu0
      %v1624 = vadd.f32 %v1335, %v1623
      %v1625 = vpop.f32.mrf.mxu0
      %v1626 = vpop.f32.mrf.mxu0
      %v1627 = vadd.f32 %v1338, %v1626
      %v1628 = vpop.f32.mrf.mxu0
      %1629 = vmatprep.mubr.bf16.mxu0 0
      %1630 = vmatmul.mubr.bf16.gmra.mxu0 %v824
      %v1631 = vpop.f32.mrf.mxu0
      %v1632 = vadd.f32 %v1343, %v1631
      %v1633 = vpop.f32.mrf.mxu0
      %v1634 = vpop.f32.mrf.mxu0
      %v1635 = vadd.f32 %v1346, %v1634
      %v1636 = vpop.f32.mrf.mxu0
      %1637 = vmatprep.mubr.bf16.mxu0 0
      %1638 = vmatmul.mubr.bf16.gmra.mxu0 %v827
      %v1639 = vpop.f32.mrf.mxu0
      %v1640 = vadd.f32 %v1351, %v1639
      %v1641 = vpop.f32.mrf.mxu0
      %v1642 = vpop.f32.mrf.mxu0
      %v1643 = vadd.f32 %v1354, %v1642
      %v1644 = vpop.f32.mrf.mxu0
      %1645 = vdwg.mxu0
      %1646 = vst [vmem:[%s226] sm:$0xff] %v1392
      %1647 = vst [vmem:[%s226 + $0x8] sm:$0xff] %v1395
      %1648 = vst [vmem:[%s226 + $0x10] sm:$0xff] %v1400
      %1649 = vst [vmem:[%s226 + $0x18] sm:$0xff] %v1403
      %1650 = vst [vmem:[%s226 + $0x20] sm:$0xff] %v1408
      %1651 = vst [vmem:[%s226 + $0x28] sm:$0xff] %v1411
      %1652 = vst [vmem:[%s226 + $0x30] sm:$0xff] %v1416
      %1653 = vst [vmem:[%s226 + $0x38] sm:$0xff] %v1419
      %1654 = vst [vmem:[%s226 + $0x40] sm:$0xff] %v1424
      %1655 = vst [vmem:[%s226 + $0x48] sm:$0xff] %v1427
      %1656 = vst [vmem:[%s226 + $0x50] sm:$0xff] %v1432
      %1657 = vst [vmem:[%s226 + $0x58] sm:$0xff] %v1435
      %1658 = vst [vmem:[%s226 + $0x60] sm:$0xff] %v1440
      %1659 = vst [vmem:[%s226 + $0x68] sm:$0xff] %v1443
      %1660 = vst [vmem:[%s226 + $0x70] sm:$0xff] %v1448
      %1661 = vst [vmem:[%s226 + $0x78] sm:$0xff] %v1451
      %1662 = vst [vmem:[%s226 + $0x80] sm:$0xff] %v1456
      %1663 = vst [vmem:[%s226 + $0x88] sm:$0xff] %v1459
      %1664 = vst [vmem:[%s226 + $0x90] sm:$0xff] %v1464
      %1665 = vst [vmem:[%s226 + $0x98] sm:$0xff] %v1467
      %1666 = vst [vmem:[%s226 + $0xa0] sm:$0xff] %v1472
      %1667 = vst [vmem:[%s226 + $0xa8] sm:$0xff] %v1475
      %1668 = vst [vmem:[%s226 + $0xb0] sm:$0xff] %v1480
      %1669 = vst [vmem:[%s226 + $0xb8] sm:$0xff] %v1483
      %1670 = vst [vmem:[%s226 + $0xc0] sm:$0xff] %v1488
      %1671 = vst [vmem:[%s226 + $0xc8] sm:$0xff] %v1491
      %1672 = vst [vmem:[%s226 + $0xd0] sm:$0xff] %v1496
      %1673 = vst [vmem:[%s226 + $0xd8] sm:$0xff] %v1499
      %1674 = vst [vmem:[%s226 + $0xe0] sm:$0xff] %v1504
      %1675 = vst [vmem:[%s226 + $0xe8] sm:$0xff] %v1507
      %1676 = vst [vmem:[%s226 + $0xf0] sm:$0xff] %v1512
      %1677 = vst [vmem:[%s226 + $0xf8] sm:$0xff] %v1515
      %1678 = vst [vmem:[%s226 + $0x100] sm:$0xff] %v1520
      %1679 = vst [vmem:[%s226 + $0x108] sm:$0xff] %v1523
      %1680 = vst [vmem:[%s226 + $0x110] sm:$0xff] %v1528
      %1681 = vst [vmem:[%s226 + $0x118] sm:$0xff] %v1531
      %1682 = vst [vmem:[%s226 + $0x120] sm:$0xff] %v1536
      %1683 = vst [vmem:[%s226 + $0x128] sm:$0xff] %v1539
      %1684 = vst [vmem:[%s226 + $0x130] sm:$0xff] %v1544
      %1685 = vst [vmem:[%s226 + $0x138] sm:$0xff] %v1547
      %1686 = vst [vmem:[%s226 + $0x140] sm:$0xff] %v1552
      %1687 = vst [vmem:[%s226 + $0x148] sm:$0xff] %v1555
      %1688 = vst [vmem:[%s226 + $0x150] sm:$0xff] %v1560
      %1689 = vst [vmem:[%s226 + $0x158] sm:$0xff] %v1563
      %1690 = vst [vmem:[%s226 + $0x160] sm:$0xff] %v1568
      %1691 = vst [vmem:[%s226 + $0x168] sm:$0xff] %v1571
      %1692 = vst [vmem:[%s226 + $0x170] sm:$0xff] %v1576
      %1693 = vst [vmem:[%s226 + $0x178] sm:$0xff] %v1579
      %1694 = vst [vmem:[%s226 + $0x180] sm:$0xff] %v1584
      %1695 = vst [vmem:[%s226 + $0x188] sm:$0xff] %v1587
      %1696 = vst [vmem:[%s226 + $0x190] sm:$0xff] %v1592
      %1697 = vst [vmem:[%s226 + $0x198] sm:$0xff] %v1595
      %1698 = vst [vmem:[%s226 + $0x1a0] sm:$0xff] %v1600
      %1699 = vst [vmem:[%s226 + $0x1a8] sm:$0xff] %v1603
      %1700 = vst [vmem:[%s226 + $0x1b0] sm:$0xff] %v1608
      %1701 = vst [vmem:[%s226 + $0x1b8] sm:$0xff] %v1611
      %1702 = vst [vmem:[%s226 + $0x1c0] sm:$0xff] %v1616
      %1703 = vst [vmem:[%s226 + $0x1c8] sm:$0xff] %v1619
      %1704 = vst [vmem:[%s226 + $0x1d0] sm:$0xff] %v1624
      %1705 = vst [vmem:[%s226 + $0x1d8] sm:$0xff] %v1627
      %1706 = vst [vmem:[%s226 + $0x1e0] sm:$0xff] %v1632
      %1707 = vst [vmem:[%s226 + $0x1e8] sm:$0xff] %v1635
      %1708 = vst [vmem:[%s226 + $0x1f0] sm:$0xff] %v1640
      %1709 = vst [vmem:[%s226 + $0x1f8] sm:$0xff] %v1643
      %s1710 = smul.u32 64, %s18
      %p1711 = scmp.lt.s32.totalorder %s1710, 511
      %s1712 = scalar_select %p1711, %s1710, 511
      %p1713 = scmp.lt.s32.totalorder %s19, 0
      %s1714 = scalar_select %p1713, %s19, 0
      %s1715 = sadd.s32 %s1714, %s1712
      %s1716 = smul.addr %s1715, 8
      %s1717 = scalar_lea.vmem %s3, %s1716
      // Predicated region
      $region33: #{compen_rt_forward.11} parent=31 // pred_check
        %p1718 = pneg %p124
      $region34: #{compen_rt_forward.11} parent=31 // pred_check_branch
        %1720 = sbr.rel (%p1718) target = $region36
      $region35: #{compen_rt_forward.11} parent=31 // pred_region
        %s1721 = smul.u32 64, %s18
      $region36: #{compen_rt_forward.11} parent=31 // pred_fallthru
        _
    $region32: #{compen_rt_forward.11} parent=5 // pred_fallthru
      _
    %p1722 = scmp.le.s32.totalorder 2, %s9
    // Predicated region
    $region37: #{compen_rt_forward.11} parent=5 // pred_check
      %p1723 = pneg %p1722
    $region38: #{compen_rt_forward.11} parent=5 // pred_check_branch
      %1725 = sbr.rel (%p1723) target = $region40
    $region39: #{compen_rt_forward.11} parent=5 // pred_region
      %s1726 = ssub.s32 %s9, 2
      // Predicated region
      $region41: #{compen_rt_forward.11} parent=39 // pred_check
        %p1727 = pneg %p130
      $region42: #{compen_rt_forward.11} parent=39 // pred_check_branch
        %1729 = sbr.rel (%p1727) target = $region44
      $region43: #{compen_rt_forward.11} parent=39 // pred_region
        %s1730 = smul.u32 64, %s20
        %p1731 = scmp.lt.s32.totalorder %s1730, 511
        %s1732 = scalar_select %p1731, %s1730, 511
        %p1733 = scmp.lt.s32.totalorder %s21, 0
        %s1734 = scalar_select %p1733, %s21, 0
        %s1735 = sadd.s32 %s1734, %s1732
        %s1736 = smul.addr %s1735, 8
        %s1737 = scalar_lea.vmem %s3, %s1736
      $region44: #{compen_rt_forward.11} parent=39 // pred_fallthru
        _
    $region40: #{compen_rt_forward.11} parent=5 // pred_fallthru
      _
  $region6: #{compen_rt_forward.11} parent=0 // loop_footer
    %s13 = sadd.s32 1, %s9
  $region7: #{compen_rt_forward.11} parent=0 // loop_footer_branch
    %8 = sbr.rel target = $region3
  $region8: #{compen_rt_forward.11} parent=0 // loop_exit
    _

// kernel: compen_rt_forward.12
$region0: #{compen_rt_forward.12}
  #allocation0 [shape = 'u32[]', space=smem, size = 0x4, offset = 0x4, fixed_abs, tag = 'smem constant byte address 0x4 - core index']
  #allocation1 [shape = 'u32[144,128]{1,0:T(1,128)}', space=vmem, size = 0x12000, scoped, tag = 'internal scratch']
  %s0 = inlined_call_operand.vmem [shape: bf16[1024,128], index: 0, kind: input, shape index: {}]
  %s1 = inlined_call_operand.vmem [shape: bf16[128,128], index: 1, kind: input, shape index: {}]
  %s2 = inlined_call_operand.vmem [shape: f32[1,128], index: 2, kind: input, shape index: {}]
  %s3 = inlined_call_operand.vmem [shape: f32[1024,128], index: 3, kind: output, shape index: {}]
  %s4 = sld [smem:[#allocation0]]
  $region45: #{compen_rt_forward.12} parent=0
    _
  %s6 = ssub.s32 1, %s4
  %s7 = scalar_select 0, %s6, %s4
  loop: start=0, step=1, limit=6
  $region2: #{compen_rt_forward.12} parent=0 // loop_pre_header
    _
  $region3: #{compen_rt_forward.12} parent=0 // loop_header
    %s9 = sphi 0, %s13
    %p10 = scmp.ge.s32.totalorder %s9, 6
    %s16 = sphi 0, %s28
    %s17 = sphi 0, %s24
    %s18 = sphi 0, %s16
    %s19 = sphi 0, %s17
    %s20 = sphi 0, %s18
    %s21 = sphi 0, %s19
    %s31 = sphi 0, %s33
    %s34 = sphi 0, %s31
    %s35 = sphi 0, %s34
    %s51 = sphi 0, %s35
    %s57 = sphi 0, %s59
    %s60 = sphi 0, %s57
    %s61 = sphi 0, %s60
    %s77 = sphi 0, %s61
    %s83 = sphi 0, %s85
    %s86 = sphi 0, %s83
    %s87 = sphi 0, %s86
    %s103 = sphi 0, %s87
    %s111 = sphi 0, %s113
    %s114 = sphi 0, %s111
    %s115 = sphi 0, %s114
    %s131 = sphi 0, %s115
  $region4: #{compen_rt_forward.12} parent=0 // loop_header_branch
    %12 = sbr.rel (%p10) target = $region8
  $region5: #{compen_rt_forward.12} parent=0 // loop_body
    %s14 = ssub.s32 %s9, 1
    %s15 = ssub.s32 %s9, 2
    %s22 = sadd.s32 1, %s17
    %p23 = scmp.ge.s32.totalorder %s22, 1
    %s24 = scalar_select %p23, 0, %s22
    %s25 = sadd.s32 1, %s16
    %s26 = scalar_select %p23, %s25, %s16
    %p27 = scmp.ge.s32.totalorder %s26, 4
    %s28 = scalar_select %p27, 0, %s26
    %s29 = ssub.s32 %s16, %s28
    %p30 = scmp.eq.s32.totalorder %s29, 0
    %s32 = sadd.s32 %s31, 1
    %s33 = scalar_select %p30, %s31, %s32
    %p36 = pneg %p30
    %p37 = scmp.eq.s32.totalorder %s9, 3
    %p38 = por %p36, %p37
    %p39 = scmp.ne.s32.totalorder %s31, %s34
    %p40 = scmp.eq.s32.totalorder %s9, 0
    %p41 = por %p39, %p40
    %p42 = scmp.ne.s32.totalorder %s31, %s34
    %p43 = scmp.eq.s32.totalorder %s14, 3
    %p44 = por %p42, %p43
    %p45 = scmp.ne.s32.totalorder %s34, %s35
    %p46 = scmp.eq.s32.totalorder %s14, 0
    %p47 = por %p45, %p46
    %p48 = scmp.ne.s32.totalorder %s34, %s35
    %p49 = scmp.eq.s32.totalorder %s15, 3
    %p50 = por %p48, %p49
    %p52 = scmp.ne.s32.totalorder %s35, %s51
    %p53 = scmp.eq.s32.totalorder %s15, 0
    %p54 = por %p52, %p53
    %s55 = ssub.s32 %s17, %s24
    %p56 = scmp.eq.s32.totalorder %s55, 0
    %s58 = sadd.s32 %s57, 1
    %s59 = scalar_select %p56, %s57, %s58
    %p62 = pneg %p56
    %p63 = scmp.eq.s32.totalorder %s9, 3
    %p64 = por %p62, %p63
    %p65 = scmp.ne.s32.totalorder %s57, %s60
    %p66 = scmp.eq.s32.totalorder %s9, 0
    %p67 = por %p65, %p66
    %p68 = scmp.ne.s32.totalorder %s57, %s60
    %p69 = scmp.eq.s32.totalorder %s14, 3
    %p70 = por %p68, %p69
    %p71 = scmp.ne.s32.totalorder %s60, %s61
    %p72 = scmp.eq.s32.totalorder %s14, 0
    %p73 = por %p71, %p72
    %p74 = scmp.ne.s32.totalorder %s60, %s61
    %p75 = scmp.eq.s32.totalorder %s15, 3
    %p76 = por %p74, %p75
    %p78 = scmp.ne.s32.totalorder %s61, %s77
    %p79 = scmp.eq.s32.totalorder %s15, 0
    %p80 = por %p78, %p79
    %s81 = ssub.s32 %s17, %s24
    %p82 = scmp.eq.s32.totalorder %s81, 0
    %s84 = sadd.s32 %s83, 1
    %s85 = scalar_select %p82, %s83, %s84
    %p88 = pneg %p82
    %p89 = scmp.eq.s32.totalorder %s9, 3
    %p90 = por %p88, %p89
    %p91 = scmp.ne.s32.totalorder %s83, %s86
    %p92 = scmp.eq.s32.totalorder %s9, 0
    %p93 = por %p91, %p92
    %p94 = scmp.ne.s32.totalorder %s83, %s86
    %p95 = scmp.eq.s32.totalorder %s14, 3
    %p96 = por %p94, %p95
    %p97 = scmp.ne.s32.totalorder %s86, %s87
    %p98 = scmp.eq.s32.totalorder %s14, 0
    %p99 = por %p97, %p98
    %p100 = scmp.ne.s32.totalorder %s86, %s87
    %p101 = scmp.eq.s32.totalorder %s15, 3
    %p102 = por %p100, %p101
    %p104 = scmp.ne.s32.totalorder %s87, %s103
    %p105 = scmp.eq.s32.totalorder %s15, 0
    %p106 = por %p104, %p105
    %s107 = ssub.s32 %s16, %s28
    %s108 = ssub.s32 %s17, %s24
    %s109 = sor.u32 %s107, %s108
    %p110 = scmp.eq.s32.totalorder %s109, 0
    %s112 = sadd.s32 %s111, 1
    %s113 = scalar_select %p110, %s111, %s112
    %p116 = pneg %p110
    %p117 = scmp.eq.s32.totalorder %s9, 3
    %p118 = por %p116, %p117
    %p119 = scmp.ne.s32.totalorder %s111, %s114
    %p120 = scmp.eq.s32.totalorder %s9, 0
    %p121 = por %p119, %p120
    %p122 = scmp.ne.s32.totalorder %s111, %s114
    %p123 = scmp.eq.s32.totalorder %s14, 3
    %p124 = por %p122, %p123
    %p125 = scmp.ne.s32.totalorder %s114, %s115
    %p126 = scmp.eq.s32.totalorder %s14, 0
    %p127 = por %p125, %p126
    %p128 = scmp.ne.s32.totalorder %s114, %s115
    %p129 = scmp.eq.s32.totalorder %s15, 3
    %p130 = por %p128, %p129
    %p132 = scmp.ne.s32.totalorder %s115, %s131
    %p133 = scmp.eq.s32.totalorder %s15, 0
    %p134 = por %p132, %p133
    %p135 = scmp.le.s32.totalorder 1, %s9
    %p136 = scmp.lt.s32.totalorder %s9, 5
    %p137 = pnand %p135, %p136
    %p138 = pneg %p137
    // Predicated region
    $region9: #{compen_rt_forward.12} parent=5 // pred_check
      _
    $region10: #{compen_rt_forward.12} parent=5 // pred_check_branch
      %140 = sbr.rel (%p137) target = $region12
    $region11: #{compen_rt_forward.12} parent=5 // pred_region
      %s141 = ssub.s32 %s9, 1
      // Predicated region
      $region13: #{compen_rt_forward.12} parent=11 // pred_check
        %p142 = pneg %p73
      $region14: #{compen_rt_forward.12} parent=11 // pred_check_branch
        %144 = sbr.rel (%p142) target = $region16
      $region15: #{compen_rt_forward.12} parent=11 // pred_region
        %p145 = scmp.lt.s32.totalorder %s19, 0
        %s146 = scalar_select %p145, %s19, 0
        %s147 = smul.addr %s146, 4
        %s148 = scalar_lea.vmem %s1, %s147
      $region16: #{compen_rt_forward.12} parent=11 // pred_fallthru
        _
      // Predicated region
      $region17: #{compen_rt_forward.12} parent=11 // pred_check
        %p149 = pneg %p99
      $region18: #{compen_rt_forward.12} parent=11 // pred_check_branch
        %151 = sbr.rel (%p149) target = $region20
      $region19: #{compen_rt_forward.12} parent=11 // pred_region
        %p152 = scmp.lt.s32.totalorder %s19, 0
        %s153 = scalar_select %p152, %s19, 0
        %s154 = scalar_lea.vmem %s2, %s153
      $region20: #{compen_rt_forward.12} parent=11 // pred_fallthru
        _
    $region12: #{compen_rt_forward.12} parent=5 // pred_fallthru
      _
    %p155 = scmp.lt.s32.totalorder %s9, 4
    // Predicated region
    $region21: #{compen_rt_forward.12} parent=5 // pred_check
      %p156 = pneg %p155
    $region22: #{compen_rt_forward.12} parent=5 // pred_check_branch
      %158 = sbr.rel (%p156) target = $region24
    $region23: #{compen_rt_forward.12} parent=5 // pred_region
      // Predicated region
      $region25: #{compen_rt_forward.12} parent=23 // pred_check
        %p159 = pneg %p41
      $region26: #{compen_rt_forward.12} parent=23 // pred_check_branch
        %161 = sbr.rel (%p159) target = $region28
      $region27: #{compen_rt_forward.12} parent=23 // pred_region
        %s162 = smul.u32 32, %s16
        %p163 = scmp.lt.s32.totalorder %s162, 127
        %s164 = scalar_select %p163, %s162, 127
        %s165 = smul.addr %s164, 4
        %s166 = scalar_lea.vmem %s0, %s165
        %s167 = smul.u32 32, %s16
      $region28: #{compen_rt_forward.12} parent=23 // pred_fallthru
        _
    $region24: #{compen_rt_forward.12} parent=5 // pred_fallthru
      _
    %p168 = scmp.le.s32.totalorder 1, %s9
    %p169 = scmp.lt.s32.totalorder %s9, 5
    %p170 = pnand %p168, %p169
    %p171 = pneg %p170
    // Predicated region
    $region29: #{compen_rt_forward.12} parent=5 // pred_check
      _
    $region30: #{compen_rt_forward.12} parent=5 // pred_check_branch
      %173 = sbr.rel (%p170) target = $region32
    $region31: #{compen_rt_forward.12} parent=5 // pred_region
      %s174 = ssub.s32 %s9, 1
      %s175 = smul.u32 32, %s18
      %p176 = scmp.lt.s32.totalorder %s175, 127
      %s177 = scalar_select %p176, %s175, 127
      %s178 = smul.addr %s177, 4
      %s179 = scalar_lea.vmem %s0, %s178
      %p180 = pneg %p47
      %p181 = pneg %p44
      %p182 = scmp.lt.s32.totalorder %s19, 0
      %s183 = scalar_select %p182, %s19, 0
      %s184 = smul.addr %s183, 4
      %s185 = scalar_lea.vmem %s1, %s184
      %p186 = pneg %p73
      %p187 = pneg %p70
      %p188 = scmp.lt.s32.totalorder %s19, 0
      %s189 = scalar_select %p188, %s19, 0
      %s190 = scalar_lea.vmem %s2, %s189
      %p191 = pneg %p99
      %p192 = pneg %p96
      %p193 = pneg %p127
      %p194 = pneg %p124
      %s195 = smul.u32 32, %s18
      %p196 = scmp.lt.s32.totalorder %s195, 127
      %s197 = scalar_select %p196, %s195, 127
      %p198 = scmp.lt.s32.totalorder %s19, 0
      %s199 = scalar_select %p198, %s19, 0
      %s200 = sadd.s32 %s199, %s197
      %s201 = smul.addr %s200, 8
      %s202 = scalar_lea.vmem %s3, %s201
      %s203 = smul.u32 32, %s18
      %p204 = scmp.lt.s32.totalorder %s203, 127
      %s205 = scalar_select %p204, %s203, 127
      %s206 = smul.addr %s205, 4
      %s207 = scalar_lea.vmem %s0, %s206
      %s208 = smul.u32 32, %s18
      %p209 = scmp.lt.s32.totalorder %s19, 0
      %s210 = scalar_select %p209, %s19, 0
      %s211 = smul.addr %s210, 4
      %s212 = scalar_lea.vmem %s1, %s211
      %p213 = scmp.lt.s32.totalorder %s19, 0
      %s214 = scalar_select %p213, %s19, 0
      %s215 = scalar_lea.vmem %s2, %s214
      %s216 = smul.u32 32, %s18
      %p217 = scmp.lt.s32.totalorder %s216, 127
      %s218 = scalar_select %p217, %s216, 127
      %p219 = scmp.lt.s32.totalorder %s19, 0
      %s220 = scalar_select %p219, %s19, 0
      %s221 = sadd.s32 %s220, %s218
      %s222 = smul.addr %s221, 8
      %s223 = scalar_lea.vmem %s3, %s222
      %s224 = smul.u32 32, %s18
      %v226 = vld [vmem:[%s207] sm:$0xf]
      %v227 = vld [vmem:[%s207 + $0x4] sm:$0xf]
      %v228 = vld [vmem:[%s207 + $0x8] sm:$0xf]
      %v229 = vld [vmem:[%s207 + $0xc] sm:$0xf]
      %v230 = vld [vmem:[%s207 + $0x10] sm:$0xf]
      %v231 = vld [vmem:[%s207 + $0x14] sm:$0xf]
      %v232 = vld [vmem:[%s207 + $0x18] sm:$0xf]
      %v233 = vld [vmem:[%s207 + $0x1c] sm:$0xf]
      %v234 = vld [vmem:[%s207 + $0x20] sm:$0xf]
      %v235 = vld [vmem:[%s207 + $0x24] sm:$0xf]
      %v236 = vld [vmem:[%s207 + $0x28] sm:$0xf]
      %v237 = vld [vmem:[%s207 + $0x2c] sm:$0xf]
      %v238 = vld [vmem:[%s207 + $0x30] sm:$0xf]
      %v239 = vld [vmem:[%s207 + $0x34] sm:$0xf]
      %v240 = vld [vmem:[%s207 + $0x38] sm:$0xf]
      %v241 = vld [vmem:[%s207 + $0x3c] sm:$0xf]
      %v242 = vld [vmem:[%s207 + $0x40] sm:$0xf]
      %v243 = vld [vmem:[%s207 + $0x44] sm:$0xf]
      %v244 = vld [vmem:[%s207 + $0x48] sm:$0xf]
      %v245 = vld [vmem:[%s207 + $0x4c] sm:$0xf]
      %v246 = vld [vmem:[%s207 + $0x50] sm:$0xf]
      %v247 = vld [vmem:[%s207 + $0x54] sm:$0xf]
      %v248 = vld [vmem:[%s207 + $0x58] sm:$0xf]
      %v249 = vld [vmem:[%s207 + $0x5c] sm:$0xf]
      %v250 = vld [vmem:[%s207 + $0x60] sm:$0xf]
      %v251 = vld [vmem:[%s207 + $0x64] sm:$0xf]
      %v252 = vld [vmem:[%s207 + $0x68] sm:$0xf]
      %v253 = vld [vmem:[%s207 + $0x6c] sm:$0xf]
      %v254 = vld [vmem:[%s207 + $0x70] sm:$0xf]
      %v255 = vld [vmem:[%s207 + $0x74] sm:$0xf]
      %v256 = vld [vmem:[%s207 + $0x78] sm:$0xf]
      %v257 = vld [vmem:[%s207 + $0x7c] sm:$0xf]
      %v258 = vld [vmem:[%s212] sm:$0xf]
      %v259 = vld [vmem:[%s212 + $0x4] sm:$0xf]
      %v260 = vld [vmem:[%s212 + $0x8] sm:$0xf]
      %v261 = vld [vmem:[%s212 + $0xc] sm:$0xf]
      %v262 = vld [vmem:[%s212 + $0x10] sm:$0xf]
      %v263 = vld [vmem:[%s212 + $0x14] sm:$0xf]
      %v264 = vld [vmem:[%s212 + $0x18] sm:$0xf]
      %v265 = vld [vmem:[%s212 + $0x1c] sm:$0xf]
      %v266 = vld [vmem:[%s212 + $0x20] sm:$0xf]
      %v267 = vld [vmem:[%s212 + $0x24] sm:$0xf]
      %v268 = vld [vmem:[%s212 + $0x28] sm:$0xf]
      %v269 = vld [vmem:[%s212 + $0x2c] sm:$0xf]
      %v270 = vld [vmem:[%s212 + $0x30] sm:$0xf]
      %v271 = vld [vmem:[%s212 + $0x34] sm:$0xf]
      %v272 = vld [vmem:[%s212 + $0x38] sm:$0xf]
      %v273 = vld [vmem:[%s212 + $0x3c] sm:$0xf]
      %v274 = vld [vmem:[%s215] sm:$0x1]
      %v276 = vlaneseq
      %v277 = vshrl.u32 %v276, 7
      %v278 = vsub.s32 0, %v277
      %v279 = vrot.slane %v274, %v278
      %v313 = vunpack.c.l.b16 %v226
      %v314 = vunpack.c.l.b16 %v227
      %v315 = vunpack.c.l.b16 %v228
      %v316 = vunpack.c.l.b16 %v229
      %v317 = vunpack.c.l.b16 %v230
      %v318 = vunpack.c.l.b16 %v231
      %v319 = vunpack.c.l.b16 %v232
      %v320 = vunpack.c.l.b16 %v233
      %v321 = vunpack.c.l.b16 %v234
      %v322 = vunpack.c.l.b16 %v235
      %v323 = vunpack.c.l.b16 %v236
      %v324 = vunpack.c.l.b16 %v237
      %v325 = vunpack.c.l.b16 %v238
      %v326 = vunpack.c.l.b16 %v239
      %v327 = vunpack.c.l.b16 %v240
      %v328 = vunpack.c.l.b16 %v241
      %v329 = vunpack.c.l.b16 %v242
      %v330 = vunpack.c.l.b16 %v243
      %v331 = vunpack.c.l.b16 %v244
      %v332 = vunpack.c.l.b16 %v245
      %v333 = vunpack.c.l.b16 %v246
      %v334 = vunpack.c.l.b16 %v247
      %v335 = vunpack.c.l.b16 %v248
      %v336 = vunpack.c.l.b16 %v249
      %v337 = vunpack.c.l.b16 %v250
      %v338 = vunpack.c.l.b16 %v251
      %v339 = vunpack.c.l.b16 %v252
      %v340 = vunpack.c.l.b16 %v253
      %v341 = vunpack.c.l.b16 %v254
      %v342 = vunpack.c.l.b16 %v255
      %v343 = vunpack.c.l.b16 %v256
      %v344 = vunpack.c.l.b16 %v257
      %v345 = vpack.c.b16 %v314, %v313
      %v346 = vpack.c.b16 %v316, %v315
      %v347 = vpack.c.b16 %v318, %v317
      %v348 = vpack.c.b16 %v320, %v319
      %v349 = vpack.c.b16 %v322, %v321
      %v350 = vpack.c.b16 %v324, %v323
      %v351 = vpack.c.b16 %v326, %v325
      %v352 = vpack.c.b16 %v328, %v327
      %v353 = vpack.c.b16 %v330, %v329
      %v354 = vpack.c.b16 %v332, %v331
      %v355 = vpack.c.b16 %v334, %v333
      %v356 = vpack.c.b16 %v336, %v335
      %v357 = vpack.c.b16 %v338, %v337
      %v358 = vpack.c.b16 %v340, %v339
      %v359 = vpack.c.b16 %v342, %v341
      %v360 = vpack.c.b16 %v344, %v343
      %v393 = vunpack.c.l.b16 %v258
      %v394 = vunpack.c.l.b16 %v259
      %v395 = vunpack.c.l.b16 %v260
      %v396 = vunpack.c.l.b16 %v261
      %v397 = vunpack.c.l.b16 %v262
      %v398 = vunpack.c.l.b16 %v263
      %v399 = vunpack.c.l.b16 %v264
      %v400 = vunpack.c.l.b16 %v265
      %v401 = vunpack.c.l.b16 %v266
      %v402 = vunpack.c.l.b16 %v267
      %v403 = vunpack.c.l.b16 %v268
      %v404 = vunpack.c.l.b16 %v269
      %v405 = vunpack.c.l.b16 %v270
      %v406 = vunpack.c.l.b16 %v271
      %v407 = vunpack.c.l.b16 %v272
      %v408 = vunpack.c.l.b16 %v273
      %v409 = vpack.c.b16 %v394, %v393
      %v410 = vpack.c.b16 %v396, %v395
      %v411 = vpack.c.b16 %v398, %v397
      %v412 = vpack.c.b16 %v400, %v399
      %v413 = vpack.c.b16 %v402, %v401
      %v414 = vpack.c.b16 %v404, %v403
      %v415 = vpack.c.b16 %v406, %v405
      %v416 = vpack.c.b16 %v408, %v407
      %425 = vmatprep.subr.bf16.mxu0 0
      %426 = vmatpush1.bf16.msra.mxu0 %v416
      %427 = vmatprep.subr.bf16.mxu0 0
      %428 = vmatpush1.bf16.msra.mxu0 %v415
      %429 = vmatprep.subr.bf16.mxu0 0
      %430 = vmatpush1.bf16.msra.mxu0 %v414
      %431 = vmatprep.subr.bf16.mxu0 0
      %432 = vmatpush1.bf16.msra.mxu0 %v413
      %433 = vmatprep.subr.bf16.mxu0 0
      %434 = vmatpush1.bf16.msra.mxu0 %v412
      %435 = vmatprep.subr.bf16.mxu0 0
      %436 = vmatpush1.bf16.msra.mxu0 %v411
      %437 = vmatprep.subr.bf16.mxu0 0
      %438 = vmatpush1.bf16.msra.mxu0 %v410
      %439 = vmatprep.subr.bf16.mxu0 0
      %440 = vmatpush1.bf16.msra.mxu0 %v409
      %441 = vmatprep.subr.bf16.mxu0 0
      %442 = vmatpush2.bf16.msra.mxu0 0
      %443 = vmatprep.subr.bf16.mxu0 0
      %444 = vmatpush2.bf16.msra.mxu0 0
      %445 = vmatprep.subr.bf16.mxu0 0
      %446 = vmatpush2.bf16.msra.mxu0 0
      %447 = vmatprep.subr.bf16.mxu0 0
      %448 = vmatpush2.bf16.msra.mxu0 0
      %449 = vmatprep.subr.bf16.mxu0 0
      %450 = vmatpush2.bf16.msra.mxu0 0
      %451 = vmatprep.subr.bf16.mxu0 0
      %452 = vmatpush2.bf16.msra.mxu0 0
      %453 = vmatprep.subr.bf16.mxu0 0
      %454 = vmatpush2.bf16.msra.mxu0 0
      %455 = vmatprep.subr.bf16.mxu0 0
      %456 = vmatpush2.bf16.msra.mxu0 0
      %457 = vmatprep.mubr.bf16.mxu0 0
      %458 = vmatmul.mubr.bf16.gmra.mxu0 %v345
      %v459 = vpop.f32.mrf.mxu0
      %v460 = vadd.f32 %v279, %v459
      %v461 = vpop.f32.mrf.mxu0
      %v462 = vpop.f32.mrf.mxu0
      %v463 = vadd.f32 %v279, %v462
      %v464 = vpop.f32.mrf.mxu0
      %465 = vmatprep.mubr.bf16.mxu0 0
      %466 = vmatmul.mubr.bf16.gmra.mxu0 %v346
      %v467 = vpop.f32.mrf.mxu0
      %v468 = vadd.f32 %v279, %v467
      %v469 = vpop.f32.mrf.mxu0
      %v470 = vpop.f32.mrf.mxu0
      %v471 = vadd.f32 %v279, %v470
      %v472 = vpop.f32.mrf.mxu0
      %473 = vmatprep.mubr.bf16.mxu0 0
      %474 = vmatmul.mubr.bf16.gmra.mxu0 %v347
      %v475 = vpop.f32.mrf.mxu0
      %v476 = vadd.f32 %v279, %v475
      %v477 = vpop.f32.mrf.mxu0
      %v478 = vpop.f32.mrf.mxu0
      %v479 = vadd.f32 %v279, %v478
      %v480 = vpop.f32.mrf.mxu0
      %481 = vmatprep.mubr.bf16.mxu0 0
      %482 = vmatmul.mubr.bf16.gmra.mxu0 %v348
      %v483 = vpop.f32.mrf.mxu0
      %v484 = vadd.f32 %v279, %v483
      %v485 = vpop.f32.mrf.mxu0
      %v486 = vpop.f32.mrf.mxu0
      %v487 = vadd.f32 %v279, %v486
      %v488 = vpop.f32.mrf.mxu0
      %489 = vmatprep.mubr.bf16.mxu0 0
      %490 = vmatmul.mubr.bf16.gmra.mxu0 %v349
      %v491 = vpop.f32.mrf.mxu0
      %v492 = vadd.f32 %v279, %v491
      %v493 = vpop.f32.mrf.mxu0
      %v494 = vpop.f32.mrf.mxu0
      %v495 = vadd.f32 %v279, %v494
      %v496 = vpop.f32.mrf.mxu0
      %497 = vmatprep.mubr.bf16.mxu0 0
      %498 = vmatmul.mubr.bf16.gmra.mxu0 %v350
      %v499 = vpop.f32.mrf.mxu0
      %v500 = vadd.f32 %v279, %v499
      %v501 = vpop.f32.mrf.mxu0
      %v502 = vpop.f32.mrf.mxu0
      %v503 = vadd.f32 %v279, %v502
      %v504 = vpop.f32.mrf.mxu0
      %505 = vmatprep.mubr.bf16.mxu0 0
      %506 = vmatmul.mubr.bf16.gmra.mxu0 %v351
      %v507 = vpop.f32.mrf.mxu0
      %v508 = vadd.f32 %v279, %v507
      %v509 = vpop.f32.mrf.mxu0
      %v510 = vpop.f32.mrf.mxu0
      %v511 = vadd.f32 %v279, %v510
      %v512 = vpop.f32.mrf.mxu0
      %513 = vmatprep.mubr.bf16.mxu0 0
      %514 = vmatmul.mubr.bf16.gmra.mxu0 %v352
      %v515 = vpop.f32.mrf.mxu0
      %v516 = vadd.f32 %v279, %v515
      %v517 = vpop.f32.mrf.mxu0
      %v518 = vpop.f32.mrf.mxu0
      %v519 = vadd.f32 %v279, %v518
      %v520 = vpop.f32.mrf.mxu0
      %521 = vmatprep.mubr.bf16.mxu0 0
      %522 = vmatmul.mubr.bf16.gmra.mxu0 %v353
      %v523 = vpop.f32.mrf.mxu0
      %v524 = vadd.f32 %v279, %v523
      %v525 = vpop.f32.mrf.mxu0
      %v526 = vpop.f32.mrf.mxu0
      %v527 = vadd.f32 %v279, %v526
      %v528 = vpop.f32.mrf.mxu0
      %529 = vmatprep.mubr.bf16.mxu0 0
      %530 = vmatmul.mubr.bf16.gmra.mxu0 %v354
      %v531 = vpop.f32.mrf.mxu0
      %v532 = vadd.f32 %v279, %v531
      %v533 = vpop.f32.mrf.mxu0
      %v534 = vpop.f32.mrf.mxu0
      %v535 = vadd.f32 %v279, %v534
      %v536 = vpop.f32.mrf.mxu0
      %537 = vmatprep.mubr.bf16.mxu0 0
      %538 = vmatmul.mubr.bf16.gmra.mxu0 %v355
      %v539 = vpop.f32.mrf.mxu0
      %v540 = vadd.f32 %v279, %v539
      %v541 = vpop.f32.mrf.mxu0
      %v542 = vpop.f32.mrf.mxu0
      %v543 = vadd.f32 %v279, %v542
      %v544 = vpop.f32.mrf.mxu0
      %545 = vmatprep.mubr.bf16.mxu0 0
      %546 = vmatmul.mubr.bf16.gmra.mxu0 %v356
      %v547 = vpop.f32.mrf.mxu0
      %v548 = vadd.f32 %v279, %v547
      %v549 = vpop.f32.mrf.mxu0
      %v550 = vpop.f32.mrf.mxu0
      %v551 = vadd.f32 %v279, %v550
      %v552 = vpop.f32.mrf.mxu0
      %553 = vmatprep.mubr.bf16.mxu0 0
      %554 = vmatmul.mubr.bf16.gmra.mxu0 %v357
      %v555 = vpop.f32.mrf.mxu0
      %v556 = vadd.f32 %v279, %v555
      %v557 = vpop.f32.mrf.mxu0
      %v558 = vpop.f32.mrf.mxu0
      %v559 = vadd.f32 %v279, %v558
      %v560 = vpop.f32.mrf.mxu0
      %561 = vmatprep.mubr.bf16.mxu0 0
      %562 = vmatmul.mubr.bf16.gmra.mxu0 %v358
      %v563 = vpop.f32.mrf.mxu0
      %v564 = vadd.f32 %v279, %v563
      %v565 = vpop.f32.mrf.mxu0
      %v566 = vpop.f32.mrf.mxu0
      %v567 = vadd.f32 %v279, %v566
      %v568 = vpop.f32.mrf.mxu0
      %569 = vmatprep.mubr.bf16.mxu0 0
      %570 = vmatmul.mubr.bf16.gmra.mxu0 %v359
      %v571 = vpop.f32.mrf.mxu0
      %v572 = vadd.f32 %v279, %v571
      %v573 = vpop.f32.mrf.mxu0
      %v574 = vpop.f32.mrf.mxu0
      %v575 = vadd.f32 %v279, %v574
      %v576 = vpop.f32.mrf.mxu0
      %577 = vmatprep.mubr.bf16.mxu0 0
      %578 = vmatmul.mubr.bf16.gmra.mxu0 %v360
      %v579 = vpop.f32.mrf.mxu0
      %v580 = vadd.f32 %v279, %v579
      %v581 = vpop.f32.mrf.mxu0
      %v582 = vpop.f32.mrf.mxu0
      %v583 = vadd.f32 %v279, %v582
      %v584 = vpop.f32.mrf.mxu0
      %585 = vdwg.mxu0
      %v586 = vmax.f32 %v460, 0.0
      %v587 = vmax.f32 %v463, 0.0
      %v588 = vmax.f32 %v468, 0.0
      %v589 = vmax.f32 %v471, 0.0
      %v590 = vmax.f32 %v476, 0.0
      %v591 = vmax.f32 %v479, 0.0
      %v592 = vmax.f32 %v484, 0.0
      %v593 = vmax.f32 %v487, 0.0
      %v594 = vmax.f32 %v492, 0.0
      %v595 = vmax.f32 %v495, 0.0
      %v596 = vmax.f32 %v500, 0.0
      %v597 = vmax.f32 %v503, 0.0
      %v598 = vmax.f32 %v508, 0.0
      %v599 = vmax.f32 %v511, 0.0
      %v600 = vmax.f32 %v516, 0.0
      %v601 = vmax.f32 %v519, 0.0
      %v602 = vmax.f32 %v524, 0.0
      %v603 = vmax.f32 %v527, 0.0
      %v604 = vmax.f32 %v532, 0.0
      %v605 = vmax.f32 %v535, 0.0
      %v606 = vmax.f32 %v540, 0.0
      %v607 = vmax.f32 %v543, 0.0
      %v608 = vmax.f32 %v548, 0.0
      %v609 = vmax.f32 %v551, 0.0
      %v610 = vmax.f32 %v556, 0.0
      %v611 = vmax.f32 %v559, 0.0
      %v612 = vmax.f32 %v564, 0.0
      %v613 = vmax.f32 %v567, 0.0
      %v614 = vmax.f32 %v572, 0.0
      %v615 = vmax.f32 %v575, 0.0
      %v616 = vmax.f32 %v580, 0.0
      %v617 = vmax.f32 %v583, 0.0
      %618 = vst [vmem:[%s223] sm:$0xff] %v586
      %619 = vst [vmem:[%s223 + $0x8] sm:$0xff] %v587
      %620 = vst [vmem:[%s223 + $0x10] sm:$0xff] %v588
      %621 = vst [vmem:[%s223 + $0x18] sm:$0xff] %v589
      %622 = vst [vmem:[%s223 + $0x20] sm:$0xff] %v590
      %623 = vst [vmem:[%s223 + $0x28] sm:$0xff] %v591
      %624 = vst [vmem:[%s223 + $0x30] sm:$0xff] %v592
      %625 = vst [vmem:[%s223 + $0x38] sm:$0xff] %v593
      %626 = vst [vmem:[%s223 + $0x40] sm:$0xff] %v594
      %627 = vst [vmem:[%s223 + $0x48] sm:$0xff] %v595
      %628 = vst [vmem:[%s223 + $0x50] sm:$0xff] %v596
      %629 = vst [vmem:[%s223 + $0x58] sm:$0xff] %v597
      %630 = vst [vmem:[%s223 + $0x60] sm:$0xff] %v598
      %631 = vst [vmem:[%s223 + $0x68] sm:$0xff] %v599
      %632 = vst [vmem:[%s223 + $0x70] sm:$0xff] %v600
      %633 = vst [vmem:[%s223 + $0x78] sm:$0xff] %v601
      %634 = vst [vmem:[%s223 + $0x80] sm:$0xff] %v602
      %635 = vst [vmem:[%s223 + $0x88] sm:$0xff] %v603
      %636 = vst [vmem:[%s223 + $0x90] sm:$0xff] %v604
      %637 = vst [vmem:[%s223 + $0x98] sm:$0xff] %v605
      %638 = vst [vmem:[%s223 + $0xa0] sm:$0xff] %v606
      %639 = vst [vmem:[%s223 + $0xa8] sm:$0xff] %v607
      %640 = vst [vmem:[%s223 + $0xb0] sm:$0xff] %v608
      %641 = vst [vmem:[%s223 + $0xb8] sm:$0xff] %v609
      %642 = vst [vmem:[%s223 + $0xc0] sm:$0xff] %v610
      %643 = vst [vmem:[%s223 + $0xc8] sm:$0xff] %v611
      %644 = vst [vmem:[%s223 + $0xd0] sm:$0xff] %v612
      %645 = vst [vmem:[%s223 + $0xd8] sm:$0xff] %v613
      %646 = vst [vmem:[%s223 + $0xe0] sm:$0xff] %v614
      %647 = vst [vmem:[%s223 + $0xe8] sm:$0xff] %v615
      %648 = vst [vmem:[%s223 + $0xf0] sm:$0xff] %v616
      %649 = vst [vmem:[%s223 + $0xf8] sm:$0xff] %v617
      %s650 = smul.u32 32, %s18
      %p651 = scmp.lt.s32.totalorder %s650, 127
      %s652 = scalar_select %p651, %s650, 127
      %p653 = scmp.lt.s32.totalorder %s19, 0
      %s654 = scalar_select %p653, %s19, 0
      %s655 = sadd.s32 %s654, %s652
      %s656 = smul.addr %s655, 8
      %s657 = scalar_lea.vmem %s3, %s656
      // Predicated region
      $region33: #{compen_rt_forward.12} parent=31 // pred_check
        %p658 = pneg %p124
      $region34: #{compen_rt_forward.12} parent=31 // pred_check_branch
        %660 = sbr.rel (%p658) target = $region36
      $region35: #{compen_rt_forward.12} parent=31 // pred_region
        %s661 = smul.u32 32, %s18
      $region36: #{compen_rt_forward.12} parent=31 // pred_fallthru
        _
    $region32: #{compen_rt_forward.12} parent=5 // pred_fallthru
      _
    %p662 = scmp.le.s32.totalorder 2, %s9
    // Predicated region
    $region37: #{compen_rt_forward.12} parent=5 // pred_check
      %p663 = pneg %p662
    $region38: #{compen_rt_forward.12} parent=5 // pred_check_branch
      %665 = sbr.rel (%p663) target = $region40
    $region39: #{compen_rt_forward.12} parent=5 // pred_region
      %s666 = ssub.s32 %s9, 2
      // Predicated region
      $region41: #{compen_rt_forward.12} parent=39 // pred_check
        %p667 = pneg %p130
      $region42: #{compen_rt_forward.12} parent=39 // pred_check_branch
        %669 = sbr.rel (%p667) target = $region44
      $region43: #{compen_rt_forward.12} parent=39 // pred_region
        %s670 = smul.u32 32, %s20
        %p671 = scmp.lt.s32.totalorder %s670, 127
        %s672 = scalar_select %p671, %s670, 127
        %p673 = scmp.lt.s32.totalorder %s21, 0
        %s674 = scalar_select %p673, %s21, 0
        %s675 = sadd.s32 %s674, %s672
        %s676 = smul.addr %s675, 8
        %s677 = scalar_lea.vmem %s3, %s676
      $region44: #{compen_rt_forward.12} parent=39 // pred_fallthru
        _
    $region40: #{compen_rt_forward.12} parent=5 // pred_fallthru
      _
  $region6: #{compen_rt_forward.12} parent=0 // loop_footer
    %s13 = sadd.s32 1, %s9
  $region7: #{compen_rt_forward.12} parent=0 // loop_footer_branch
    %8 = sbr.rel target = $region3
  $region8: #{compen_rt_forward.12} parent=0 // loop_exit
    _

// kernel: compen_rt_forward.14
$region0: #{compen_rt_forward.14}
  #allocation0 [shape = 'u32[]', space=smem, size = 0x4, offset = 0x4, fixed_abs, tag = 'smem constant byte address 0x4 - core index']
  #allocation1 [shape = 'u32[144,128]{1,0:T(1,128)}', space=vmem, size = 0x12000, scoped, tag = 'internal scratch']
  #allocation2 [shape = 'f32[256,128]{1,0:T(8,128)}', space=vmem, size = 0x20000, scoped, tag = 'scratch operand']
  %s0 = inlined_call_operand.vmem [shape: bf16[1024,768], index: 0, kind: input, shape index: {}]
  %s1 = inlined_call_operand.vmem [shape: bf16[768,128], index: 1, kind: input, shape index: {}]
  %s2 = inlined_call_operand.vmem [shape: f32[1,128], index: 2, kind: input, shape index: {}]
  %s3 = inlined_call_operand.vmem [shape: f32[1024,128], index: 3, kind: output, shape index: {}]
  %s4 = sld [smem:[#allocation0]]
  $region91: #{compen_rt_forward.14} parent=0
    _
  %s6 = ssub.s32 1, %s4
  %s7 = scalar_select 0, %s6, %s4
  $region1: #{compen_rt_forward.14} parent=0
    #allocation3 [shape = 'u8[262144]{0}', space=vmem, size = 0x40000, scoped, tag = 'input window, operand 0']
    loop: start=0, step=1, limit=14
    $region2: #{compen_rt_forward.14} parent=1 // loop_pre_header
      _
    $region3: #{compen_rt_forward.14} parent=1 // loop_header
      %s9 = sphi 0, %s13
      %p10 = scmp.ge.s32.totalorder %s9, 14
      %s16 = sphi 0, %s35
      %s17 = sphi 0, %s31
      %s18 = sphi 0, %s27
      %s19 = sphi 0, %s16
      %s20 = sphi 0, %s17
      %s21 = sphi 0, %s18
      %s22 = sphi 0, %s19
      %s23 = sphi 0, %s20
      %s24 = sphi 0, %s21
      %s40 = sphi 0, %s42
      %s43 = sphi 0, %s40
      %s44 = sphi 0, %s43
      %s60 = sphi 0, %s44
      %s68 = sphi 0, %s70
      %s71 = sphi 0, %s68
      %s72 = sphi 0, %s71
      %s88 = sphi 0, %s72
      %s94 = sphi 0, %s96
      %s97 = sphi 0, %s94
      %s98 = sphi 0, %s97
      %s114 = sphi 0, %s98
      %s122 = sphi 0, %s124
      %s125 = sphi 0, %s122
      %s126 = sphi 0, %s125
      %s142 = sphi 0, %s126
    $region4: #{compen_rt_forward.14} parent=1 // loop_header_branch
      %12 = sbr.rel (%p10) target = $region8
    $region5: #{compen_rt_forward.14} parent=1 // loop_body
      %s14 = ssub.s32 %s9, 1
      %s15 = ssub.s32 %s9, 2
      %s25 = sadd.s32 1, %s18
      %p26 = scmp.ge.s32.totalorder %s25, 3
      %s27 = scalar_select %p26, 0, %s25
      %s28 = sadd.s32 1, %s17
      %s29 = scalar_select %p26, %s28, %s17
      %p30 = scmp.ge.s32.totalorder %s29, 1
      %s31 = scalar_select %p30, 0, %s29
      %s32 = sadd.s32 1, %s16
      %s33 = scalar_select %p30, %s32, %s16
      %p34 = scmp.ge.s32.totalorder %s33, 4
      %s35 = scalar_select %p34, 0, %s33
      %s36 = ssub.s32 %s16, %s35
      %s37 = ssub.s32 %s18, %s27
      %s38 = sor.u32 %s36, %s37
      %p39 = scmp.eq.s32.totalorder %s38, 0
      %s41 = sadd.s32 %s40, 1
      %s42 = scalar_select %p39, %s40, %s41
      %p45 = pneg %p39
      %p46 = scmp.eq.s32.totalorder %s9, 11
      %p47 = por %p45, %p46
      %p48 = scmp.ne.s32.totalorder %s40, %s43
      %p49 = scmp.eq.s32.totalorder %s9, 0
      %p50 = por %p48, %p49
      %p51 = scmp.ne.s32.totalorder %s40, %s43
      %p52 = scmp.eq.s32.totalorder %s14, 11
      %p53 = por %p51, %p52
      %p54 = scmp.ne.s32.totalorder %s43, %s44
      %p55 = scmp.eq.s32.totalorder %s14, 0
      %p56 = por %p54, %p55
      %p57 = scmp.ne.s32.totalorder %s43, %s44
      %p58 = scmp.eq.s32.totalorder %s15, 11
      %p59 = por %p57, %p58
      %p61 = scmp.ne.s32.totalorder %s44, %s60
      %p62 = scmp.eq.s32.totalorder %s15, 0
      %p63 = por %p61, %p62
      %s64 = ssub.s32 %s18, %s27
      %s65 = ssub.s32 %s17, %s31
      %s66 = sor.u32 %s64, %s65
      %p67 = scmp.eq.s32.totalorder %s66, 0
      %s69 = sadd.s32 %s68, 1
      %s70 = scalar_select %p67, %s68, %s69
      %p73 = pneg %p67
      %p74 = scmp.eq.s32.totalorder %s9, 11
      %p75 = por %p73, %p74
      %p76 = scmp.ne.s32.totalorder %s68, %s71
      %p77 = scmp.eq.s32.totalorder %s9, 0
      %p78 = por %p76, %p77
      %p79 = scmp.ne.s32.totalorder %s68, %s71
      %p80 = scmp.eq.s32.totalorder %s14, 11
      %p81 = por %p79, %p80
      %p82 = scmp.ne.s32.totalorder %s71, %s72
      %p83 = scmp.eq.s32.totalorder %s14, 0
      %p84 = por %p82, %p83
      %p85 = scmp.ne.s32.totalorder %s71, %s72
      %p86 = scmp.eq.s32.totalorder %s15, 11
      %p87 = por %p85, %p86
      %p89 = scmp.ne.s32.totalorder %s72, %s88
      %p90 = scmp.eq.s32.totalorder %s15, 0
      %p91 = por %p89, %p90
      %s92 = ssub.s32 %s17, %s31
      %p93 = scmp.eq.s32.totalorder %s92, 0
      %s95 = sadd.s32 %s94, 1
      %s96 = scalar_select %p93, %s94, %s95
      %p99 = pneg %p93
      %p100 = scmp.eq.s32.totalorder %s9, 11
      %p101 = por %p99, %p100
      %p102 = scmp.ne.s32.totalorder %s94, %s97
      %p103 = scmp.eq.s32.totalorder %s9, 0
      %p104 = por %p102, %p103
      %p105 = scmp.ne.s32.totalorder %s94, %s97
      %p106 = scmp.eq.s32.totalorder %s14, 11
      %p107 = por %p105, %p106
      %p108 = scmp.ne.s32.totalorder %s97, %s98
      %p109 = scmp.eq.s32.totalorder %s14, 0
      %p110 = por %p108, %p109
      %p111 = scmp.ne.s32.totalorder %s97, %s98
      %p112 = scmp.eq.s32.totalorder %s15, 11
      %p113 = por %p111, %p112
      %p115 = scmp.ne.s32.totalorder %s98, %s114
      %p116 = scmp.eq.s32.totalorder %s15, 0
      %p117 = por %p115, %p116
      %s118 = ssub.s32 %s16, %s35
      %s119 = ssub.s32 %s17, %s31
      %s120 = sor.u32 %s118, %s119
      %p121 = scmp.eq.s32.totalorder %s120, 0
      %s123 = sadd.s32 %s122, 1
      %s124 = scalar_select %p121, %s122, %s123
      %p127 = pneg %p121
      %p128 = scmp.eq.s32.totalorder %s9, 11
      %p129 = por %p127, %p128
      %p130 = scmp.ne.s32.totalorder %s122, %s125
      %p131 = scmp.eq.s32.totalorder %s9, 0
      %p132 = por %p130, %p131
      %p133 = scmp.ne.s32.totalorder %s122, %s125
      %p134 = scmp.eq.s32.totalorder %s14, 11
      %p135 = por %p133, %p134
      %p136 = scmp.ne.s32.totalorder %s125, %s126
      %p137 = scmp.eq.s32.totalorder %s14, 0
      %p138 = por %p136, %p137
      %p139 = scmp.ne.s32.totalorder %s125, %s126
      %p140 = scmp.eq.s32.totalorder %s15, 11
      %p141 = por %p139, %p140
      %p143 = scmp.ne.s32.totalorder %s126, %s142
      %p144 = scmp.eq.s32.totalorder %s15, 0
      %p145 = por %p143, %p144
      %p146 = scmp.le.s32.totalorder 1, %s9
      %p147 = scmp.lt.s32.totalorder %s9, 13
      %p148 = pnand %p146, %p147
      %p149 = pneg %p148
      // Predicated region
      $region9: #{compen_rt_forward.14} parent=5 // pred_check
        _
      $region10: #{compen_rt_forward.14} parent=5 // pred_check_branch
        %151 = sbr.rel (%p148) target = $region12
      $region11: #{compen_rt_forward.14} parent=5 // pred_region
        %s152 = ssub.s32 %s9, 1
        // Predicated region
        $region13: #{compen_rt_forward.14} parent=11 // pred_check
          %p153 = pneg %p110
        $region14: #{compen_rt_forward.14} parent=11 // pred_check_branch
          %155 = sbr.rel (%p153) target = $region16
        $region15: #{compen_rt_forward.14} parent=11 // pred_region
          %p156 = scmp.lt.s32.totalorder %s20, 0
          %s157 = scalar_select %p156, %s20, 0
          %s158 = scalar_lea.vmem %s2, %s157
        $region16: #{compen_rt_forward.14} parent=11 // pred_fallthru
          _
      $region12: #{compen_rt_forward.14} parent=5 // pred_fallthru
        _
      %p159 = scmp.lt.s32.totalorder %s9, 12
      // Predicated region
      $region17: #{compen_rt_forward.14} parent=5 // pred_check
        %p160 = pneg %p159
      $region18: #{compen_rt_forward.14} parent=5 // pred_check_branch
        %162 = sbr.rel (%p160) target = $region20
      $region19: #{compen_rt_forward.14} parent=5 // pred_region
        // Predicated region
        $region21: #{compen_rt_forward.14} parent=19 // pred_check
          %p163 = pneg %p50
        $region22: #{compen_rt_forward.14} parent=19 // pred_check_branch
          %165 = sbr.rel (%p163) target = $region24
        $region23: #{compen_rt_forward.14} parent=19 // pred_region
          %s166 = sand.u32 %s40, 1
          %s167 = sand.u32 %s40, 1
          %s168 = smul.addr %s167, 256
          %s169 = scalar_lea.vmem [#allocation3], %s168
          %s170 = smul.u32 32, %s16
          %s171 = smul.u32 2, %s18
          %s172 = smul.addr %s170, 6
          %s173 = sadd.s32 %s171, %s172
          %s174 = smul.addr %s173, 4
          %s175 = scalar_lea.vmem %s0, %s174
          // Predicated region
          $region25: #{compen_rt_forward.14} parent=23 // pred_check
            _
          $region26: #{compen_rt_forward.14} parent=23 // pred_check_branch
            %177 = sbr.rel (0) target = $region28
          $region27: #{compen_rt_forward.14} parent=23 // pred_region
            // Predicated region
            $region29: #{compen_rt_forward.14} parent=27 // pred_check
              _
            $region30: #{compen_rt_forward.14} parent=27 // pred_check_branch
              %179 = sbr.rel (0) target = $region32
            $region31: #{compen_rt_forward.14} parent=27 // pred_region
              // Predicated region
              $region44: #{compen_rt_forward.14} parent=31 // pred_check
                _
              $region45: #{compen_rt_forward.14} parent=31 // pred_check_branch
                %257 = sbr.rel (0) target = $region47
              $region46: #{compen_rt_forward.14} parent=31 // pred_region
                loop: start=0, step=1, limit=1
                $region48: #{compen_rt_forward.14} parent=46 // loop_pre_header
                  _
                $region49: #{compen_rt_forward.14} parent=46 // loop_header
                  %s259 = sphi 0, %s263
                  %p260 = scmp.ge.s32.totalorder %s259, 1
                  %s264 = sphi %s175, %s175
                  %s265 = sphi %s169, %s169
                $region50: #{compen_rt_forward.14} parent=46 // loop_header_branch
                  %262 = sbr.rel (%p260) target = $region54
                $region51: #{compen_rt_forward.14} parent=46 // loop_body
                  %v266 = vld [vmem:[%s264] sm:$0xff]
                  %267 = vst [vmem:[%s265] sm:$0xff] %v266
                  %v268 = vld [vmem:[%s264 + $0x18] sm:$0xff]
                  %269 = vst [vmem:[%s265 + $0x8] sm:$0xff] %v268
                  %v270 = vld [vmem:[%s264 + $0x30] sm:$0xff]
                  %271 = vst [vmem:[%s265 + $0x10] sm:$0xff] %v270
                  %v272 = vld [vmem:[%s264 + $0x48] sm:$0xff]
                  %273 = vst [vmem:[%s265 + $0x18] sm:$0xff] %v272
                  %v274 = vld [vmem:[%s264 + $0x60] sm:$0xff]
                  %275 = vst [vmem:[%s265 + $0x20] sm:$0xff] %v274
                  %v276 = vld [vmem:[%s264 + $0x78] sm:$0xff]
                  %277 = vst [vmem:[%s265 + $0x28] sm:$0xff] %v276
                  %v278 = vld [vmem:[%s264 + $0x90] sm:$0xff]
                  %279 = vst [vmem:[%s265 + $0x30] sm:$0xff] %v278
                  %v280 = vld [vmem:[%s264 + $0xa8] sm:$0xff]
                  %281 = vst [vmem:[%s265 + $0x38] sm:$0xff] %v280
                  %v282 = vld [vmem:[%s264 + $0xc0] sm:$0xff]
                  %283 = vst [vmem:[%s265 + $0x40] sm:$0xff] %v282
                  %v284 = vld [vmem:[%s264 + $0xd8] sm:$0xff]
                  %285 = vst [vmem:[%s265 + $0x48] sm:$0xff] %v284
                  %v286 = vld [vmem:[%s264 + $0xf0] sm:$0xff]
                  %287 = vst [vmem:[%s265 + $0x50] sm:$0xff] %v286
                  %v288 = vld [vmem:[%s264 + $0x108] sm:$0xff]
                  %289 = vst [vmem:[%s265 + $0x58] sm:$0xff] %v288
                  %v290 = vld [vmem:[%s264 + $0x120] sm:$0xff]
                  %291 = vst [vmem:[%s265 + $0x60] sm:$0xff] %v290
                  %v292 = vld [vmem:[%s264 + $0x138] sm:$0xff]
                  %293 = vst [vmem:[%s265 + $0x68] sm:$0xff] %v292
                  %v294 = vld [vmem:[%s264 + $0x150] sm:$0xff]
                  %295 = vst [vmem:[%s265 + $0x70] sm:$0xff] %v294
                  %v296 = vld [vmem:[%s264 + $0x168] sm:$0xff]
                  %297 = vst [vmem:[%s265 + $0x78] sm:$0xff] %v296
                  %v298 = vld [vmem:[%s264 + $0x180] sm:$0xff]
                  %299 = vst [vmem:[%s265 + $0x80] sm:$0xff] %v298
                  %v300 = vld [vmem:[%s264 + $0x198] sm:$0xff]
                  %301 = vst [vmem:[%s265 + $0x88] sm:$0xff] %v300
                  %v302 = vld [vmem:[%s264 + $0x1b0] sm:$0xff]
                  %303 = vst [vmem:[%s265 + $0x90] sm:$0xff] %v302
                  %v304 = vld [vmem:[%s264 + $0x1c8] sm:$0xff]
                  %305 = vst [vmem:[%s265 + $0x98] sm:$0xff] %v304
                  %v306 = vld [vmem:[%s264 + $0x1e0] sm:$0xff]
                  %307 = vst [vmem:[%s265 + $0xa0] sm:$0xff] %v306
                  %v308 = vld [vmem:[%s264 + $0x1f8] sm:$0xff]
                  %309 = vst [vmem:[%s265 + $0xa8] sm:$0xff] %v308
                  %v310 = vld [vmem:[%s264 + $0x210] sm:$0xff]
                  %311 = vst [vmem:[%s265 + $0xb0] sm:$0xff] %v310
                  %v312 = vld [vmem:[%s264 + $0x228] sm:$0xff]
                  %313 = vst [vmem:[%s265 + $0xb8] sm:$0xff] %v312
                  %v314 = vld [vmem:[%s264 + $0x240] sm:$0xff]
                  %315 = vst [vmem:[%s265 + $0xc0] sm:$0xff] %v314
                  %v316 = vld [vmem:[%s264 + $0x258] sm:$0xff]
                  %317 = vst [vmem:[%s265 + $0xc8] sm:$0xff] %v316
                  %v318 = vld [vmem:[%s264 + $0x270] sm:$0xff]
                  %319 = vst [vmem:[%s265 + $0xd0] sm:$0xff] %v318
                  %v320 = vld [vmem:[%s264 + $0x288] sm:$0xff]
                  %321 = vst [vmem:[%s265 + $0xd8] sm:$0xff] %v320
                  %v322 = vld [vmem:[%s264 + $0x2a0] sm:$0xff]
                  %323 = vst [vmem:[%s265 + $0xe0] sm:$0xff] %v322
                  %v324 = vld [vmem:[%s264 + $0x2b8] sm:$0xff]
                  %325 = vst [vmem:[%s265 + $0xe8] sm:$0xff] %v324
                  %v326 = vld [vmem:[%s264 + $0x2d0] sm:$0xff]
                  %327 = vst [vmem:[%s265 + $0xf0] sm:$0xff] %v326
                  %v328 = vld [vmem:[%s264 + $0x2e8] sm:$0xff]
                  %329 = vst [vmem:[%s265 + $0xf8] sm:$0xff] %v328
                $region52: #{compen_rt_forward.14} parent=46 // loop_footer
                  %s263 = sadd.s32 1, %s259
                $region53: #{compen_rt_forward.14} parent=46 // loop_footer_branch
                  %258 = sbr.rel target = $region49
                $region54: #{compen_rt_forward.14} parent=46 // loop_exit
                  _
              $region47: #{compen_rt_forward.14} parent=31 // pred_fallthru
                _
              // Predicated region
              $region55: #{compen_rt_forward.14} parent=31 // pred_check
                _
              $region56: #{compen_rt_forward.14} parent=31 // pred_check_branch
                %331 = sbr.rel target = $region58
              $region57: #{compen_rt_forward.14} parent=31 // pred_region
                _
              $region58: #{compen_rt_forward.14} parent=31 // pred_fallthru
                _
            $region32: #{compen_rt_forward.14} parent=27 // pred_fallthru
              _
            // Predicated region
            $region33: #{compen_rt_forward.14} parent=27 // pred_check
              _
            $region34: #{compen_rt_forward.14} parent=27 // pred_check_branch
              %181 = sbr.rel target = $region36
            $region35: #{compen_rt_forward.14} parent=27 // pred_region
              %s183 = ssub.s32 256, 1
              loop: start=0, step=1, limit=1
              $region37: #{compen_rt_forward.14} parent=35 // loop_pre_header
                _
              $region38: #{compen_rt_forward.14} parent=35 // loop_header
                %s185 = sphi 0, %s189
                %p186 = scmp.ge.s32.totalorder %s185, 1
                %s190 = sphi %s175, %s175
                %s191 = sphi %s169, %s169
              $region39: #{compen_rt_forward.14} parent=35 // loop_header_branch
                %188 = sbr.rel (%p186) target = $region43
              $region40: #{compen_rt_forward.14} parent=35 // loop_body
                %v192 = vld [vmem:[%s190] sm:%s183]
                %193 = vst [vmem:[%s191] sm:%s183] %v192
                %v194 = vld [vmem:[%s190 + $0x18] sm:%s183]
                %195 = vst [vmem:[%s191 + $0x8] sm:%s183] %v194
                %v196 = vld [vmem:[%s190 + $0x30] sm:%s183]
                %197 = vst [vmem:[%s191 + $0x10] sm:%s183] %v196
                %v198 = vld [vmem:[%s190 + $0x48] sm:%s183]
                %199 = vst [vmem:[%s191 + $0x18] sm:%s183] %v198
                %v200 = vld [vmem:[%s190 + $0x60] sm:%s183]
                %201 = vst [vmem:[%s191 + $0x20] sm:%s183] %v200
                %v202 = vld [vmem:[%s190 + $0x78] sm:%s183]
                %203 = vst [vmem:[%s191 + $0x28] sm:%s183] %v202
                %v204 = vld [vmem:[%s190 + $0x90] sm:%s183]
                %205 = vst [vmem:[%s191 + $0x30] sm:%s183] %v204
                %v206 = vld [vmem:[%s190 + $0xa8] sm:%s183]
                %207 = vst [vmem:[%s191 + $0x38] sm:%s183] %v206
                %v208 = vld [vmem:[%s190 + $0xc0] sm:%s183]
                %209 = vst [vmem:[%s191 + $0x40] sm:%s183] %v208
                %v210 = vld [vmem:[%s190 + $0xd8] sm:%s183]
                %211 = vst [vmem:[%s191 + $0x48] sm:%s183] %v210
                %v212 = vld [vmem:[%s190 + $0xf0] sm:%s183]
                %213 = vst [vmem:[%s191 + $0x50] sm:%s183] %v212
                %v214 = vld [vmem:[%s190 + $0x108] sm:%s183]
                %215 = vst [vmem:[%s191 + $0x58] sm:%s183] %v214
                %v216 = vld [vmem:[%s190 + $0x120] sm:%s183]
                %217 = vst [vmem:[%s191 + $0x60] sm:%s183] %v216
                %v218 = vld [vmem:[%s190 + $0x138] sm:%s183]
                %219 = vst [vmem:[%s191 + $0x68] sm:%s183] %v218
                %v220 = vld [vmem:[%s190 + $0x150] sm:%s183]
                %221 = vst [vmem:[%s191 + $0x70] sm:%s183] %v220
                %v222 = vld [vmem:[%s190 + $0x168] sm:%s183]
                %223 = vst [vmem:[%s191 + $0x78] sm:%s183] %v222
                %v224 = vld [vmem:[%s190 + $0x180] sm:%s183]
                %225 = vst [vmem:[%s191 + $0x80] sm:%s183] %v224
                %v226 = vld [vmem:[%s190 + $0x198] sm:%s183]
                %227 = vst [vmem:[%s191 + $0x88] sm:%s183] %v226
                %v228 = vld [vmem:[%s190 + $0x1b0] sm:%s183]
                %229 = vst [vmem:[%s191 + $0x90] sm:%s183] %v228
                %v230 = vld [vmem:[%s190 + $0x1c8] sm:%s183]
                %231 = vst [vmem:[%s191 + $0x98] sm:%s183] %v230
                %v232 = vld [vmem:[%s190 + $0x1e0] sm:%s183]
                %233 = vst [vmem:[%s191 + $0xa0] sm:%s183] %v232
                %v234 = vld [vmem:[%s190 + $0x1f8] sm:%s183]
                %235 = vst [vmem:[%s191 + $0xa8] sm:%s183] %v234
                %v236 = vld [vmem:[%s190 + $0x210] sm:%s183]
                %237 = vst [vmem:[%s191 + $0xb0] sm:%s183] %v236
                %v238 = vld [vmem:[%s190 + $0x228] sm:%s183]
                %239 = vst [vmem:[%s191 + $0xb8] sm:%s183] %v238
                %v240 = vld [vmem:[%s190 + $0x240] sm:%s183]
                %241 = vst [vmem:[%s191 + $0xc0] sm:%s183] %v240
                %v242 = vld [vmem:[%s190 + $0x258] sm:%s183]
                %243 = vst [vmem:[%s191 + $0xc8] sm:%s183] %v242
                %v244 = vld [vmem:[%s190 + $0x270] sm:%s183]
                %245 = vst [vmem:[%s191 + $0xd0] sm:%s183] %v244
                %v246 = vld [vmem:[%s190 + $0x288] sm:%s183]
                %247 = vst [vmem:[%s191 + $0xd8] sm:%s183] %v246
                %v248 = vld [vmem:[%s190 + $0x2a0] sm:%s183]
                %249 = vst [vmem:[%s191 + $0xe0] sm:%s183] %v248
                %v250 = vld [vmem:[%s190 + $0x2b8] sm:%s183]
                %251 = vst [vmem:[%s191 + $0xe8] sm:%s183] %v250
                %v252 = vld [vmem:[%s190 + $0x2d0] sm:%s183]
                %253 = vst [vmem:[%s191 + $0xf0] sm:%s183] %v252
                %v254 = vld [vmem:[%s190 + $0x2e8] sm:%s183]
                %255 = vst [vmem:[%s191 + $0xf8] sm:%s183] %v254
              $region41: #{compen_rt_forward.14} parent=35 // loop_footer
                %s189 = sadd.s32 1, %s185
              $region42: #{compen_rt_forward.14} parent=35 // loop_footer_branch
                %184 = sbr.rel target = $region38
              $region43: #{compen_rt_forward.14} parent=35 // loop_exit
                _
            $region36: #{compen_rt_forward.14} parent=27 // pred_fallthru
              _
          $region28: #{compen_rt_forward.14} parent=23 // pred_fallthru
            _
          %332 = vnop
        $region24: #{compen_rt_forward.14} parent=19 // pred_fallthru
          _
        // Predicated region
        $region59: #{compen_rt_forward.14} parent=19 // pred_check
          %p333 = pneg %p78
        $region60: #{compen_rt_forward.14} parent=19 // pred_check_branch
          %335 = sbr.rel (%p333) target = $region62
        $region61: #{compen_rt_forward.14} parent=19 // pred_region
          %s336 = smul.u32 32, %s18
          %p337 = scmp.lt.s32.totalorder %s336, 95
          %s338 = scalar_select %p337, %s336, 95
          %p339 = scmp.lt.s32.totalorder %s17, 0
          %s340 = scalar_select %p339, %s17, 0
          %s341 = sadd.s32 %s340, %s338
          %s342 = smul.addr %s341, 4
          %s343 = scalar_lea.vmem %s1, %s342
          %s344 = smul.u32 32, %s18
        $region62: #{compen_rt_forward.14} parent=19 // pred_fallthru
          _
      $region20: #{compen_rt_forward.14} parent=5 // pred_fallthru
        _
      %p345 = scmp.le.s32.totalorder 1, %s9
      %p346 = scmp.lt.s32.totalorder %s9, 13
      %p347 = pnand %p345, %p346
      %p348 = pneg %p347
      // Predicated region
      $region63: #{compen_rt_forward.14} parent=5 // pred_check
        _
      $region64: #{compen_rt_forward.14} parent=5 // pred_check_branch
        %350 = sbr.rel (%p347) target = $region66
      $region65: #{compen_rt_forward.14} parent=5 // pred_region
        %s351 = ssub.s32 %s9, 1
        %s352 = sand.u32 %s43, 1
        %s353 = sand.u32 %s43, 1
        %s354 = smul.addr %s353, 256
        %s355 = scalar_lea.vmem [#allocation3], %s354
        // Predicated region
        $region67: #{compen_rt_forward.14} parent=65 // pred_check
          %p356 = pneg %p56
        $region68: #{compen_rt_forward.14} parent=65 // pred_check_branch
          %358 = sbr.rel (%p356) target = $region70
        $region69: #{compen_rt_forward.14} parent=65 // pred_region
          _
        $region70: #{compen_rt_forward.14} parent=65 // pred_fallthru
          _
        %s359 = sand.u32 %s43, 1
        %s360 = sand.u32 %s43, 1
        %s361 = smul.addr %s360, 256
        %s362 = scalar_lea.vmem [#allocation3], %s361
        %p363 = pneg %p56
        %p364 = pneg %p53
        %s365 = smul.u32 32, %s21
        %p366 = scmp.lt.s32.totalorder %s365, 95
        %s367 = scalar_select %p366, %s365, 95
        %p368 = scmp.lt.s32.totalorder %s20, 0
        %s369 = scalar_select %p368, %s20, 0
        %s370 = sadd.s32 %s369, %s367
        %s371 = smul.addr %s370, 4
        %s372 = scalar_lea.vmem %s1, %s371
        %p373 = pneg %p84
        %p374 = pneg %p81
        %p375 = scmp.lt.s32.totalorder %s20, 0
        %s376 = scalar_select %p375, %s20, 0
        %s377 = scalar_lea.vmem %s2, %s376
        %p378 = pneg %p110
        %p379 = pneg %p107
        %p380 = pneg %p138
        %p381 = pneg %p135
        %s382 = smul.u32 32, %s19
        %p383 = scmp.lt.s32.totalorder %s382, 127
        %s384 = scalar_select %p383, %s382, 127
        %p385 = scmp.lt.s32.totalorder %s20, 0
        %s386 = scalar_select %p385, %s20, 0
        %s387 = sadd.s32 %s386, %s384
        %s388 = smul.addr %s387, 8
        %s389 = scalar_lea.vmem %s3, %s388
        %s390 = smul.u32 32, %s19
        %s391 = smul.u32 2, %s21
        %s392 = smul.u32 32, %s21
        %p393 = scmp.lt.s32.totalorder %s392, 95
        %s394 = scalar_select %p393, %s392, 95
        %p395 = scmp.lt.s32.totalorder %s20, 0
        %s396 = scalar_select %p395, %s20, 0
        %s397 = sadd.s32 %s396, %s394
        %s398 = smul.addr %s397, 4
        %s399 = scalar_lea.vmem %s1, %s398
        %s400 = smul.u32 32, %s21
        %p401 = scmp.lt.s32.totalorder %s20, 0
        %s402 = scalar_select %p401, %s20, 0
        %s403 = scalar_lea.vmem %s2, %s402
        %s404 = smul.u32 32, %s19
        %p405 = scmp.lt.s32.totalorder %s404, 127
        %s406 = scalar_select %p405, %s404, 127
        %p407 = scmp.lt.s32.totalorder %s20, 0
        %s408 = scalar_select %p407, %s20, 0
        %s409 = sadd.s32 %s408, %s406
        %s410 = smul.addr %s409, 8
        %s411 = scalar_lea.vmem %s3, %s410
        %s412 = smul.u32 32, %s19
        %p414 = scmp.eq.s32.totalorder %s21, 0
        // Predicated region
        $region71: #{compen_rt_forward.14} parent=65 // pred_check
          %p415 = pneg %p414
        $region72: #{compen_rt_forward.14} parent=65 // pred_check_branch
          %417 = sbr.rel (%p415) target = $region74
        $region73: #{compen_rt_forward.14} parent=65 // pred_region
          %v418 = vld [vmem:[%s403] sm:$0x1]
          %v420 = vlaneseq
          %v421 = vshrl.u32 %v420, 7
          %v422 = vsub.s32 0, %v421
          %v423 = vrot.slane %v418, %v422
          %v425 = vadd.f32 %v423, 0.0
          %426 = vst [vmem:[#allocation2] sm:$0xff] %v425
          %427 = vst [vmem:[#allocation2 + $0x8] sm:$0xff] %v425
          %428 = vst [vmem:[#allocation2 + $0x10] sm:$0xff] %v425
          %429 = vst [vmem:[#allocation2 + $0x18] sm:$0xff] %v425
          %430 = vst [vmem:[#allocation2 + $0x20] sm:$0xff] %v425
          %431 = vst [vmem:[#allocation2 + $0x28] sm:$0xff] %v425
          %432 = vst [vmem:[#allocation2 + $0x30] sm:$0xff] %v425
          %433 = vst [vmem:[#allocation2 + $0x38] sm:$0xff] %v425
          %434 = vst [vmem:[#allocation2 + $0x40] sm:$0xff] %v425
          %435 = vst [vmem:[#allocation2 + $0x48] sm:$0xff] %v425
          %436 = vst [vmem:[#allocation2 + $0x50] sm:$0xff] %v425
          %437 = vst [vmem:[#allocation2 + $0x58] sm:$0xff] %v425
          %438 = vst [vmem:[#allocation2 + $0x60] sm:$0xff] %v425
          %439 = vst [vmem:[#allocation2 + $0x68] sm:$0xff] %v425
          %440 = vst [vmem:[#allocation2 + $0x70] sm:$0xff] %v425
          %441 = vst [vmem:[#allocation2 + $0x78] sm:$0xff] %v425
          %442 = vst [vmem:[#allocation2 + $0x80] sm:$0xff] %v425
          %443 = vst [vmem:[#allocation2 + $0x88] sm:$0xff] %v425
          %444 = vst [vmem:[#allocation2 + $0x90] sm:$0xff] %v425
          %445 = vst [vmem:[#allocation2 + $0x98] sm:$0xff] %v425
          %446 = vst [vmem:[#allocation2 + $0xa0] sm:$0xff] %v425
          %447 = vst [vmem:[#allocation2 + $0xa8] sm:$0xff] %v425
          %448 = vst [vmem:[#allocation2 + $0xb0] sm:$0xff] %v425
          %449 = vst [vmem:[#allocation2 + $0xb8] sm:$0xff] %v425
          %450 = vst [vmem:[#allocation2 + $0xc0] sm:$0xff] %v425
          %451 = vst [vmem:[#allocation2 + $0xc8] sm:$0xff] %v425
          %452 = vst [vmem:[#allocation2 + $0xd0] sm:$0xff] %v425
          %453 = vst [vmem:[#allocation2 + $0xd8] sm:$0xff] %v425
          %454 = vst [vmem:[#allocation2 + $0xe0] sm:$0xff] %v425
          %455 = vst [vmem:[#allocation2 + $0xe8] sm:$0xff] %v425
          %456 = vst [vmem:[#allocation2 + $0xf0] sm:$0xff] %v425
          %457 = vst [vmem:[#allocation2 + $0xf8] sm:$0xff] %v425
        $region74: #{compen_rt_forward.14} parent=65 // pred_fallthru
          _
        %v458 = vld [vmem:[#allocation2] sm:$0xff]
        %v459 = vld [vmem:[#allocation2 + $0x8] sm:$0xff]
        %v460 = vld [vmem:[#allocation2 + $0x10] sm:$0xff]
        %v461 = vld [vmem:[#allocation2 + $0x18] sm:$0xff]
        %v462 = vld [vmem:[#allocation2 + $0x20] sm:$0xff]
        %v463 = vld [vmem:[#allocation2 + $0x28] sm:$0xff]
        %v464 = vld [vmem:[#allocation2 + $0x30] sm:$0xff]
        %v465 = vld [vmem:[#allocation2 + $0x38] sm:$0xff]
        %v466 = vld [vmem:[#allocation2 + $0x40] sm:$0xff]
        %v467 = vld [vmem:[#allocation2 + $0x48] sm:$0xff]
        %v468 = vld [vmem:[#allocation2 + $0x50] sm:$0xff]
        %v469 = vld [vmem:[#allocation2 + $0x58] sm:$0xff]
        %v470 = vld [vmem:[#allocation2 + $0x60] sm:$0xff]
        %v471 = vld [vmem:[#allocation2 + $0x68] sm:$0xff]
        %v472 = vld [vmem:[#allocation2 + $0x70] sm:$0xff]
        %v473 = vld [vmem:[#allocation2 + $0x78] sm:$0xff]
        %v474 = vld [vmem:[#allocation2 + $0x80] sm:$0xff]
        %v475 = vld [vmem:[#allocation2 + $0x88] sm:$0xff]
        %v476 = vld [vmem:[#allocation2 + $0x90] sm:$0xff]
        %v477 = vld [vmem:[#allocation2 + $0x98] sm:$0xff]
        %v478 = vld [vmem:[#allocation2 + $0xa0] sm:$0xff]
        %v479 = vld [vmem:[#allocation2 + $0xa8] sm:$0xff]
        %v480 = vld [vmem:[#allocation2 + $0xb0] sm:$0xff]
        %v481 = vld [vmem:[#allocation2 + $0xb8] sm:$0xff]
        %v482 = vld [vmem:[#allocation2 + $0xc0] sm:$0xff]
        %v483 = vld [vmem:[#allocation2 + $0xc8] sm:$0xff]
        %v484 = vld [vmem:[#allocation2 + $0xd0] sm:$0xff]
        %v485 = vld [vmem:[#allocation2 + $0xd8] sm:$0xff]
        %v486 = vld [vmem:[#allocation2 + $0xe0] sm:$0xff]
        %v487 = vld [vmem:[#allocation2 + $0xe8] sm:$0xff]
        %v488 = vld [vmem:[#allocation2 + $0xf0] sm:$0xff]
        %v489 = vld [vmem:[#allocation2 + $0xf8] sm:$0xff]
        %v490 = vld [vmem:[%s355] sm:$0xff]
        %v491 = vld [vmem:[%s355 + $0x8] sm:$0xff]
        %v492 = vld [vmem:[%s355 + $0x10] sm:$0xff]
        %v493 = vld [vmem:[%s355 + $0x18] sm:$0xff]
        %v494 = vld [vmem:[%s355 + $0x20] sm:$0xff]
        %v495 = vld [vmem:[%s355 + $0x28] sm:$0xff]
        %v496 = vld [vmem:[%s355 + $0x30] sm:$0xff]
        %v497 = vld [vmem:[%s355 + $0x38] sm:$0xff]
        %v498 = vld [vmem:[%s355 + $0x40] sm:$0xff]
        %v499 = vld [vmem:[%s355 + $0x48] sm:$0xff]
        %v500 = vld [vmem:[%s355 + $0x50] sm:$0xff]
        %v501 = vld [vmem:[%s355 + $0x58] sm:$0xff]
        %v502 = vld [vmem:[%s355 + $0x60] sm:$0xff]
        %v503 = vld [vmem:[%s355 + $0x68] sm:$0xff]
        %v504 = vld [vmem:[%s355 + $0x70] sm:$0xff]
        %v505 = vld [vmem:[%s355 + $0x78] sm:$0xff]
        %v506 = vld [vmem:[%s355 + $0x80] sm:$0xff]
        %v507 = vld [vmem:[%s355 + $0x88] sm:$0xff]
        %v508 = vld [vmem:[%s355 + $0x90] sm:$0xff]
        %v509 = vld [vmem:[%s355 + $0x98] sm:$0xff]
        %v510 = vld [vmem:[%s355 + $0xa0] sm:$0xff]
        %v511 = vld [vmem:[%s355 + $0xa8] sm:$0xff]
        %v512 = vld [vmem:[%s355 + $0xb0] sm:$0xff]
        %v513 = vld [vmem:[%s355 + $0xb8] sm:$0xff]
        %v514 = vld [vmem:[%s355 + $0xc0] sm:$0xff]
        %v515 = vld [vmem:[%s355 + $0xc8] sm:$0xff]
        %v516 = vld [vmem:[%s355 + $0xd0] sm:$0xff]
        %v517 = vld [vmem:[%s355 + $0xd8] sm:$0xff]
        %v518 = vld [vmem:[%s355 + $0xe0] sm:$0xff]
        %v519 = vld [vmem:[%s355 + $0xe8] sm:$0xff]
        %v520 = vld [vmem:[%s355 + $0xf0] sm:$0xff]
        %v521 = vld [vmem:[%s355 + $0xf8] sm:$0xff]
        %v522 = vld [vmem:[%s399] sm:$0xf]
        %v523 = vld [vmem:[%s399 + $0x4] sm:$0xf]
        %v524 = vld [vmem:[%s399 + $0x8] sm:$0xf]
        %v525 = vld [vmem:[%s399 + $0xc] sm:$0xf]
        %v526 = vld [vmem:[%s399 + $0x10] sm:$0xf]
        %v527 = vld [vmem:[%s399 + $0x14] sm:$0xf]
        %v528 = vld [vmem:[%s399 + $0x18] sm:$0xf]
        %v529 = vld [vmem:[%s399 + $0x1c] sm:$0xf]
        %v530 = vld [vmem:[%s399 + $0x20] sm:$0xf]
        %v531 = vld [vmem:[%s399 + $0x24] sm:$0xf]
        %v532 = vld [vmem:[%s399 + $0x28] sm:$0xf]
        %v533 = vld [vmem:[%s399 + $0x2c] sm:$0xf]
        %v534 = vld [vmem:[%s399 + $0x30] sm:$0xf]
        %v535 = vld [vmem:[%s399 + $0x34] sm:$0xf]
        %v536 = vld [vmem:[%s399 + $0x38] sm:$0xf]
        %v537 = vld [vmem:[%s399 + $0x3c] sm:$0xf]
        %v538 = vld [vmem:[%s399 + $0x40] sm:$0xf]
        %v539 = vld [vmem:[%s399 + $0x44] sm:$0xf]
        %v540 = vld [vmem:[%s399 + $0x48] sm:$0xf]
        %v541 = vld [vmem:[%s399 + $0x4c] sm:$0xf]
        %v542 = vld [vmem:[%s399 + $0x50] sm:$0xf]
        %v543 = vld [vmem:[%s399 + $0x54] sm:$0xf]
        %v544 = vld [vmem:[%s399 + $0x58] sm:$0xf]
        %v545 = vld [vmem:[%s399 + $0x5c] sm:$0xf]
        %v546 = vld [vmem:[%s399 + $0x60] sm:$0xf]
        %v547 = vld [vmem:[%s399 + $0x64] sm:$0xf]
        %v548 = vld [vmem:[%s399 + $0x68] sm:$0xf]
        %v549 = vld [vmem:[%s399 + $0x6c] sm:$0xf]
        %v550 = vld [vmem:[%s399 + $0x70] sm:$0xf]
        %v551 = vld [vmem:[%s399 + $0x74] sm:$0xf]
        %v552 = vld [vmem:[%s399 + $0x78] sm:$0xf]
        %v553 = vld [vmem:[%s399 + $0x7c] sm:$0xf]
        %v586 = vunpack.c.l.b16 %v490
        %v587 = vunpack.c.h.b16 %v490
        %v588 = vunpack.c.l.b16 %v491
        %v589 = vunpack.c.h.b16 %v491
        %v590 = vunpack.c.l.b16 %v492
        %v591 = vunpack.c.h.b16 %v492
        %v592 = vunpack.c.l.b16 %v493
        %v593 = vunpack.c.h.b16 %v493
        %v594 = vunpack.c.l.b16 %v494
        %v595 = vunpack.c.h.b16 %v494
        %v596 = vunpack.c.l.b16 %v495
        %v597 = vunpack.c.h.b16 %v495
        %v598 = vunpack.c.l.b16 %v496
        %v599 = vunpack.c.h.b16 %v496
        %v600 = vunpack.c.l.b16 %v497
        %v601 = vunpack.c.h.b16 %v497
        %v602 = vunpack.c.l.b16 %v498
        %v603 = vunpack.c.h.b16 %v498
        %v604 = vunpack.c.l.b16 %v499
        %v605 = vunpack.c.h.b16 %v499
        %v606 = vunpack.c.l.b16 %v500
        %v607 = vunpack.c.h.b16 %v500
        %v608 = vunpack.c.l.b16 %v501
        %v609 = vunpack.c.h.b16 %v501
        %v610 = vunpack.c.l.b16 %v502
        %v611 = vunpack.c.h.b16 %v502
        %v612 = vunpack.c.l.b16 %v503
        %v613 = vunpack.c.h.b16 %v503
        %v614 = vunpack.c.l.b16 %v504
        %v615 = vunpack.c.h.b16 %v504
        %v616 = vunpack.c.l.b16 %v505
        %v617 = vunpack.c.h.b16 %v505
        %v618 = vunpack.c.l.b16 %v506
        %v619 = vunpack.c.h.b16 %v506
        %v620 = vunpack.c.l.b16 %v507
        %v621 = vunpack.c.h.b16 %v507
        %v622 = vunpack.c.l.b16 %v508
        %v623 = vunpack.c.h.b16 %v508
        %v624 = vunpack.c.l.b16 %v509
        %v625 = vunpack.c.h.b16 %v509
        %v626 = vunpack.c.l.b16 %v510
        %v627 = vunpack.c.h.b16 %v510
        %v628 = vunpack.c.l.b16 %v511
        %v629 = vunpack.c.h.b16 %v511
        %v630 = vunpack.c.l.b16 %v512
        %v631 = vunpack.c.h.b16 %v512
        %v632 = vunpack.c.l.b16 %v513
        %v633 = vunpack.c.h.b16 %v513
        %v634 = vunpack.c.l.b16 %v514
        %v635 = vunpack.c.h.b16 %v514
        %v636 = vunpack.c.l.b16 %v515
        %v637 = vunpack.c.h.b16 %v515
        %v638 = vunpack.c.l.b16 %v516
        %v639 = vunpack.c.h.b16 %v516
        %v640 = vunpack.c.l.b16 %v517
        %v641 = vunpack.c.h.b16 %v517
        %v642 = vunpack.c.l.b16 %v518
        %v643 = vunpack.c.h.b16 %v518
        %v644 = vunpack.c.l.b16 %v519
        %v645 = vunpack.c.h.b16 %v519
        %v646 = vunpack.c.l.b16 %v520
        %v647 = vunpack.c.h.b16 %v520
        %v648 = vunpack.c.l.b16 %v521
        %v649 = vunpack.c.h.b16 %v521
        %v650 = vpack.c.b16 %v588, %v586
        %v651 = vpack.c.b16 %v589, %v587
        %v652 = vpack.c.b16 %v592, %v590
        %v653 = vpack.c.b16 %v593, %v591
        %v654 = vpack.c.b16 %v596, %v594
        %v655 = vpack.c.b16 %v597, %v595
        %v656 = vpack.c.b16 %v600, %v598
        %v657 = vpack.c.b16 %v601, %v599
        %v658 = vpack.c.b16 %v604, %v602
        %v659 = vpack.c.b16 %v605, %v603
        %v660 = vpack.c.b16 %v608, %v606
        %v661 = vpack.c.b16 %v609, %v607
        %v662 = vpack.c.b16 %v612, %v610
        %v663 = vpack.c.b16 %v613, %v611
        %v664 = vpack.c.b16 %v616, %v614
        %v665 = vpack.c.b16 %v617, %v615
        %v666 = vpack.c.b16 %v620, %v618
        %v667 = vpack.c.b16 %v621, %v619
        %v668 = vpack.c.b16 %v624, %v622
        %v669 = vpack.c.b16 %v625, %v623
        %v670 = vpack.c.b16 %v628, %v626
        %v671 = vpack.c.b16 %v629, %v627
        %v672 = vpack.c.b16 %v632, %v630
        %v673 = vpack.c.b16 %v633, %v631
        %v674 = vpack.c.b16 %v636, %v634
        %v675 = vpack.c.b16 %v637, %v635
        %v676 = vpack.c.b16 %v640, %v638
        %v677 = vpack.c.b16 %v641, %v639
        %v678 = vpack.c.b16 %v644, %v642
        %v679 = vpack.c.b16 %v645, %v643
        %v680 = vpack.c.b16 %v648, %v646
        %v681 = vpack.c.b16 %v649, %v647
        %v746 = vunpack.c.l.b16 %v522
        %v747 = vunpack.c.l.b16 %v523
        %v748 = vunpack.c.l.b16 %v524
        %v749 = vunpack.c.l.b16 %v525
        %v750 = vunpack.c.l.b16 %v526
        %v751 = vunpack.c.l.b16 %v527
        %v752 = vunpack.c.l.b16 %v528
        %v753 = vunpack.c.l.b16 %v529
        %v754 = vunpack.c.l.b16 %v530
        %v755 = vunpack.c.l.b16 %v531
        %v756 = vunpack.c.l.b16 %v532
        %v757 = vunpack.c.l.b16 %v533
        %v758 = vunpack.c.l.b16 %v534
        %v759 = vunpack.c.l.b16 %v535
        %v760 = vunpack.c.l.b16 %v536
        %v761 = vunpack.c.l.b16 %v537
        %v762 = vunpack.c.l.b16 %v538
        %v763 = vunpack.c.l.b16 %v539
        %v764 = vunpack.c.l.b16 %v540
        %v765 = vunpack.c.l.b16 %v541
        %v766 = vunpack.c.l.b16 %v542
        %v767 = vunpack.c.l.b16 %v543
        %v768 = vunpack.c.l.b16 %v544
        %v769 = vunpack.c.l.b16 %v545
        %v770 = vunpack.c.l.b16 %v546
        %v771 = vunpack.c.l.b16 %v547
        %v772 = vunpack.c.l.b16 %v548
        %v773 = vunpack.c.l.b16 %v549
        %v774 = vunpack.c.l.b16 %v550
        %v775 = vunpack.c.l.b16 %v551
        %v776 = vunpack.c.l.b16 %v552
        %v777 = vunpack.c.l.b16 %v553
        %v778 = vpack.c.b16 %v747, %v746
        %v779 = vpack.c.b16 %v749, %v748
        %v780 = vpack.c.b16 %v751, %v750
        %v781 = vpack.c.b16 %v753, %v752
        %v782 = vpack.c.b16 %v755, %v754
        %v783 = vpack.c.b16 %v757, %v756
        %v784 = vpack.c.b16 %v759, %v758
        %v785 = vpack.c.b16 %v761, %v760
        %v786 = vpack.c.b16 %v763, %v762
        %v787 = vpack.c.b16 %v765, %v764
        %v788 = vpack.c.b16 %v767, %v766
        %v789 = vpack.c.b16 %v769, %v768
        %v790 = vpack.c.b16 %v771, %v770
        %v791 = vpack.c.b16 %v773, %v772
        %v792 = vpack.c.b16 %v775, %v774
        %v793 = vpack.c.b16 %v777, %v776
        %810 = vmatprep.subr.bf16.mxu0 0
        %811 = vmatpush1.bf16.msra.mxu0 %v785
        %812 = vmatprep.subr.bf16.mxu0 0
        %813 = vmatpush1.bf16.msra.mxu0 %v784
        %814 = vmatprep.subr.bf16.mxu0 0
        %815 = vmatpush1.bf16.msra.mxu0 %v783
        %816 = vmatprep.subr.bf16.mxu0 0
        %817 = vmatpush1.bf16.msra.mxu0 %v782
        %818 = vmatprep.subr.bf16.mxu0 0
        %819 = vmatpush1.bf16.msra.mxu0 %v781
        %820 = vmatprep.subr.bf16.mxu0 0
        %821 = vmatpush1.bf16.msra.mxu0 %v780
        %822 = vmatprep.subr.bf16.mxu0 0
        %823 = vmatpush1.bf16.msra.mxu0 %v779
        %824 = vmatprep.subr.bf16.mxu0 0
        %825 = vmatpush1.bf16.msra.mxu0 %v778
        %826 = vmatprep.subr.bf16.mxu0 0
        %827 = vmatpush2.bf16.msra.mxu0 %v793
        %828 = vmatprep.subr.bf16.mxu0 0
        %829 = vmatpush2.bf16.msra.mxu0 %v792
        %830 = vmatprep.subr.bf16.mxu0 0
        %831 = vmatpush2.bf16.msra.mxu0 %v791
        %832 = vmatprep.subr.bf16.mxu0 0
        %833 = vmatpush2.bf16.msra.mxu0 %v790
        %834 = vmatprep.subr.bf16.mxu0 0
        %835 = vmatpush2.bf16.msra.mxu0 %v789
        %836 = vmatprep.subr.bf16.mxu0 0
        %837 = vmatpush2.bf16.msra.mxu0 %v788
        %838 = vmatprep.subr.bf16.mxu0 0
        %839 = vmatpush2.bf16.msra.mxu0 %v787
        %840 = vmatprep.subr.bf16.mxu0 0
        %841 = vmatpush2.bf16.msra.mxu0 %v786
        %842 = vmatprep.mubr.bf16.mxu0 %v651
        %843 = vmatmul.mubr.bf16.gmra.mxu0 %v650
        %v844 = vpop.f32.mrf.mxu0
        %v845 = vadd.f32 0.0, %v844
        %v846 = vpop.f32.mrf.mxu0
        %v847 = vpop.f32.mrf.mxu0
        %v848 = vadd.f32 0.0, %v847
        %v849 = vpop.f32.mrf.mxu0
        %850 = vmatprep.mubr.bf16.mxu0 %v653
        %851 = vmatmul.mubr.bf16.gmra.mxu0 %v652
        %v852 = vpop.f32.mrf.mxu0
        %v853 = vadd.f32 0.0, %v852
        %v854 = vpop.f32.mrf.mxu0
        %v855 = vpop.f32.mrf.mxu0
        %v856 = vadd.f32 0.0, %v855
        %v857 = vpop.f32.mrf.mxu0
        %858 = vmatprep.mubr.bf16.mxu0 %v655
        %859 = vmatmul.mubr.bf16.gmra.mxu0 %v654
        %v860 = vpop.f32.mrf.mxu0
        %v861 = vadd.f32 0.0, %v860
        %v862 = vpop.f32.mrf.mxu0
        %v863 = vpop.f32.mrf.mxu0
        %v864 = vadd.f32 0.0, %v863
        %v865 = vpop.f32.mrf.mxu0
        %866 = vmatprep.mubr.bf16.mxu0 %v657
        %867 = vmatmul.mubr.bf16.gmra.mxu0 %v656
        %v868 = vpop.f32.mrf.mxu0
        %v869 = vadd.f32 0.0, %v868
        %v870 = vpop.f32.mrf.mxu0
        %v871 = vpop.f32.mrf.mxu0
        %v872 = vadd.f32 0.0, %v871
        %v873 = vpop.f32.mrf.mxu0
        %874 = vmatprep.mubr.bf16.mxu0 %v659
        %875 = vmatmul.mubr.bf16.gmra.mxu0 %v658
        %v876 = vpop.f32.mrf.mxu0
        %v877 = vadd.f32 0.0, %v876
        %v878 = vpop.f32.mrf.mxu0
        %v879 = vpop.f32.mrf.mxu0
        %v880 = vadd.f32 0.0, %v879
        %v881 = vpop.f32.mrf.mxu0
        %882 = vmatprep.mubr.bf16.mxu0 %v661
        %883 = vmatmul.mubr.bf16.gmra.mxu0 %v660
        %v884 = vpop.f32.mrf.mxu0
        %v885 = vadd.f32 0.0, %v884
        %v886 = vpop.f32.mrf.mxu0
        %v887 = vpop.f32.mrf.mxu0
        %v888 = vadd.f32 0.0, %v887
        %v889 = vpop.f32.mrf.mxu0
        %890 = vmatprep.mubr.bf16.mxu0 %v663
        %891 = vmatmul.mubr.bf16.gmra.mxu0 %v662
        %v892 = vpop.f32.mrf.mxu0
        %v893 = vadd.f32 0.0, %v892
        %v894 = vpop.f32.mrf.mxu0
        %v895 = vpop.f32.mrf.mxu0
        %v896 = vadd.f32 0.0, %v895
        %v897 = vpop.f32.mrf.mxu0
        %898 = vmatprep.mubr.bf16.mxu0 %v665
        %899 = vmatmul.mubr.bf16.gmra.mxu0 %v664
        %v900 = vpop.f32.mrf.mxu0
        %v901 = vadd.f32 0.0, %v900
        %v902 = vpop.f32.mrf.mxu0
        %v903 = vpop.f32.mrf.mxu0
        %v904 = vadd.f32 0.0, %v903
        %v905 = vpop.f32.mrf.mxu0
        %906 = vmatprep.mubr.bf16.mxu0 %v667
        %907 = vmatmul.mubr.bf16.gmra.mxu0 %v666
        %v908 = vpop.f32.mrf.mxu0
        %v909 = vadd.f32 0.0, %v908
        %v910 = vpop.f32.mrf.mxu0
        %v911 = vpop.f32.mrf.mxu0
        %v912 = vadd.f32 0.0, %v911
        %v913 = vpop.f32.mrf.mxu0
        %914 = vmatprep.mubr.bf16.mxu0 %v669
        %915 = vmatmul.mubr.bf16.gmra.mxu0 %v668
        %v916 = vpop.f32.mrf.mxu0
        %v917 = vadd.f32 0.0, %v916
        %v918 = vpop.f32.mrf.mxu0
        %v919 = vpop.f32.mrf.mxu0
        %v920 = vadd.f32 0.0, %v919
        %v921 = vpop.f32.mrf.mxu0
        %922 = vmatprep.mubr.bf16.mxu0 %v671
        %923 = vmatmul.mubr.bf16.gmra.mxu0 %v670
        %v924 = vpop.f32.mrf.mxu0
        %v925 = vadd.f32 0.0, %v924
        %v926 = vpop.f32.mrf.mxu0
        %v927 = vpop.f32.mrf.mxu0
        %v928 = vadd.f32 0.0, %v927
        %v929 = vpop.f32.mrf.mxu0
        %930 = vmatprep.mubr.bf16.mxu0 %v673
        %931 = vmatmul.mubr.bf16.gmra.mxu0 %v672
        %v932 = vpop.f32.mrf.mxu0
        %v933 = vadd.f32 0.0, %v932
        %v934 = vpop.f32.mrf.mxu0
        %v935 = vpop.f32.mrf.mxu0
        %v936 = vadd.f32 0.0, %v935
        %v937 = vpop.f32.mrf.mxu0
        %938 = vmatprep.mubr.bf16.mxu0 %v675
        %939 = vmatmul.mubr.bf16.gmra.mxu0 %v674
        %v940 = vpop.f32.mrf.mxu0
        %v941 = vadd.f32 0.0, %v940
        %v942 = vpop.f32.mrf.mxu0
        %v943 = vpop.f32.mrf.mxu0
        %v944 = vadd.f32 0.0, %v943
        %v945 = vpop.f32.mrf.mxu0
        %946 = vmatprep.mubr.bf16.mxu0 %v677
        %947 = vmatmul.mubr.bf16.gmra.mxu0 %v676
        %v948 = vpop.f32.mrf.mxu0
        %v949 = vadd.f32 0.0, %v948
        %v950 = vpop.f32.mrf.mxu0
        %v951 = vpop.f32.mrf.mxu0
        %v952 = vadd.f32 0.0, %v951
        %v953 = vpop.f32.mrf.mxu0
        %954 = vmatprep.mubr.bf16.mxu0 %v679
        %955 = vmatmul.mubr.bf16.gmra.mxu0 %v678
        %v956 = vpop.f32.mrf.mxu0
        %v957 = vadd.f32 0.0, %v956
        %v958 = vpop.f32.mrf.mxu0
        %v959 = vpop.f32.mrf.mxu0
        %v960 = vadd.f32 0.0, %v959
        %v961 = vpop.f32.mrf.mxu0
        %962 = vmatprep.mubr.bf16.mxu0 %v681
        %963 = vmatmul.mubr.bf16.gmra.mxu0 %v680
        %v964 = vpop.f32.mrf.mxu0
        %v965 = vadd.f32 0.0, %v964
        %v966 = vpop.f32.mrf.mxu0
        %v967 = vpop.f32.mrf.mxu0
        %v968 = vadd.f32 0.0, %v967
        %v969 = vpop.f32.mrf.mxu0
        %970 = vdwg.mxu0
        %v971 = vadd.f32 %v458, %v845
        %v972 = vadd.f32 %v459, %v848
        %v973 = vadd.f32 %v460, %v853
        %v974 = vadd.f32 %v461, %v856
        %v975 = vadd.f32 %v462, %v861
        %v976 = vadd.f32 %v463, %v864
        %v977 = vadd.f32 %v464, %v869
        %v978 = vadd.f32 %v465, %v872
        %v979 = vadd.f32 %v466, %v877
        %v980 = vadd.f32 %v467, %v880
        %v981 = vadd.f32 %v468, %v885
        %v982 = vadd.f32 %v469, %v888
        %v983 = vadd.f32 %v470, %v893
        %v984 = vadd.f32 %v471, %v896
        %v985 = vadd.f32 %v472, %v901
        %v986 = vadd.f32 %v473, %v904
        %v987 = vadd.f32 %v474, %v909
        %v988 = vadd.f32 %v475, %v912
        %v989 = vadd.f32 %v476, %v917
        %v990 = vadd.f32 %v477, %v920
        %v991 = vadd.f32 %v478, %v925
        %v992 = vadd.f32 %v479, %v928
        %v993 = vadd.f32 %v480, %v933
        %v994 = vadd.f32 %v481, %v936
        %v995 = vadd.f32 %v482, %v941
        %v996 = vadd.f32 %v483, %v944
        %v997 = vadd.f32 %v484, %v949
        %v998 = vadd.f32 %v485, %v952
        %v999 = vadd.f32 %v486, %v957
        %v1000 = vadd.f32 %v487, %v960
        %v1001 = vadd.f32 %v488, %v965
        %v1002 = vadd.f32 %v489, %v968
        %1003 = vst [vmem:[#allocation2] sm:$0xff] %v971
        %1004 = vst [vmem:[#allocation2 + $0x8] sm:$0xff] %v972
        %1005 = vst [vmem:[#allocation2 + $0x10] sm:$0xff] %v973
        %1006 = vst [vmem:[#allocation2 + $0x18] sm:$0xff] %v974
        %1007 = vst [vmem:[#allocation2 + $0x20] sm:$0xff] %v975
        %1008 = vst [vmem:[#allocation2 + $0x28] sm:$0xff] %v976
        %1009 = vst [vmem:[#allocation2 + $0x30] sm:$0xff] %v977
        %1010 = vst [vmem:[#allocation2 + $0x38] sm:$0xff] %v978
        %1011 = vst [vmem:[#allocation2 + $0x40] sm:$0xff] %v979
        %1012 = vst [vmem:[#allocation2 + $0x48] sm:$0xff] %v980
        %1013 = vst [vmem:[#allocation2 + $0x50] sm:$0xff] %v981
        %1014 = vst [vmem:[#allocation2 + $0x58] sm:$0xff] %v982
        %1015 = vst [vmem:[#allocation2 + $0x60] sm:$0xff] %v983
        %1016 = vst [vmem:[#allocation2 + $0x68] sm:$0xff] %v984
        %1017 = vst [vmem:[#allocation2 + $0x70] sm:$0xff] %v985
        %1018 = vst [vmem:[#allocation2 + $0x78] sm:$0xff] %v986
        %1019 = vst [vmem:[#allocation2 + $0x80] sm:$0xff] %v987
        %1020 = vst [vmem:[#allocation2 + $0x88] sm:$0xff] %v988
        %1021 = vst [vmem:[#allocation2 + $0x90] sm:$0xff] %v989
        %1022 = vst [vmem:[#allocation2 + $0x98] sm:$0xff] %v990
        %1023 = vst [vmem:[#allocation2 + $0xa0] sm:$0xff] %v991
        %1024 = vst [vmem:[#allocation2 + $0xa8] sm:$0xff] %v992
        %1025 = vst [vmem:[#allocation2 + $0xb0] sm:$0xff] %v993
        %1026 = vst [vmem:[#allocation2 + $0xb8] sm:$0xff] %v994
        %1027 = vst [vmem:[#allocation2 + $0xc0] sm:$0xff] %v995
        %1028 = vst [vmem:[#allocation2 + $0xc8] sm:$0xff] %v996
        %1029 = vst [vmem:[#allocation2 + $0xd0] sm:$0xff] %v997
        %1030 = vst [vmem:[#allocation2 + $0xd8] sm:$0xff] %v998
        %1031 = vst [vmem:[#allocation2 + $0xe0] sm:$0xff] %v999
        %1032 = vst [vmem:[#allocation2 + $0xe8] sm:$0xff] %v1000
        %1033 = vst [vmem:[#allocation2 + $0xf0] sm:$0xff] %v1001
        %1034 = vst [vmem:[#allocation2 + $0xf8] sm:$0xff] %v1002
        %p1035 = scmp.eq.s32.totalorder %s21, 2
        // Predicated region
        $region75: #{compen_rt_forward.14} parent=65 // pred_check
          %p1036 = pneg %p1035
        $region76: #{compen_rt_forward.14} parent=65 // pred_check_branch
          %1038 = sbr.rel (%p1036) target = $region78
        $region77: #{compen_rt_forward.14} parent=65 // pred_region
          %v1039 = vld [vmem:[#allocation2] sm:$0xff]
          %v1040 = vld [vmem:[#allocation2 + $0x8] sm:$0xff]
          %v1041 = vld [vmem:[#allocation2 + $0x10] sm:$0xff]
          %v1042 = vld [vmem:[#allocation2 + $0x18] sm:$0xff]
          %v1043 = vld [vmem:[#allocation2 + $0x20] sm:$0xff]
          %v1044 = vld [vmem:[#allocation2 + $0x28] sm:$0xff]
          %v1045 = vld [vmem:[#allocation2 + $0x30] sm:$0xff]
          %v1046 = vld [vmem:[#allocation2 + $0x38] sm:$0xff]
          %v1047 = vld [vmem:[#allocation2 + $0x40] sm:$0xff]
          %v1048 = vld [vmem:[#allocation2 + $0x48] sm:$0xff]
          %v1049 = vld [vmem:[#allocation2 + $0x50] sm:$0xff]
          %v1050 = vld [vmem:[#allocation2 + $0x58] sm:$0xff]
          %v1051 = vld [vmem:[#allocation2 + $0x60] sm:$0xff]
          %v1052 = vld [vmem:[#allocation2 + $0x68] sm:$0xff]
          %v1053 = vld [vmem:[#allocation2 + $0x70] sm:$0xff]
          %v1054 = vld [vmem:[#allocation2 + $0x78] sm:$0xff]
          %v1055 = vld [vmem:[#allocation2 + $0x80] sm:$0xff]
          %v1056 = vld [vmem:[#allocation2 + $0x88] sm:$0xff]
          %v1057 = vld [vmem:[#allocation2 + $0x90] sm:$0xff]
          %v1058 = vld [vmem:[#allocation2 + $0x98] sm:$0xff]
          %v1059 = vld [vmem:[#allocation2 + $0xa0] sm:$0xff]
          %v1060 = vld [vmem:[#allocation2 + $0xa8] sm:$0xff]
          %v1061 = vld [vmem:[#allocation2 + $0xb0] sm:$0xff]
          %v1062 = vld [vmem:[#allocation2 + $0xb8] sm:$0xff]
          %v1063 = vld [vmem:[#allocation2 + $0xc0] sm:$0xff]
          %v1064 = vld [vmem:[#allocation2 + $0xc8] sm:$0xff]
          %v1065 = vld [vmem:[#allocation2 + $0xd0] sm:$0xff]
          %v1066 = vld [vmem:[#allocation2 + $0xd8] sm:$0xff]
          %v1067 = vld [vmem:[#allocation2 + $0xe0] sm:$0xff]
          %v1068 = vld [vmem:[#allocation2 + $0xe8] sm:$0xff]
          %v1069 = vld [vmem:[#allocation2 + $0xf0] sm:$0xff]
          %v1070 = vld [vmem:[#allocation2 + $0xf8] sm:$0xff]
          %1071 = vst [vmem:[%s411] sm:$0xff] %v1039
          %1072 = vst [vmem:[%s411 + $0x8] sm:$0xff] %v1040
          %1073 = vst [vmem:[%s411 + $0x10] sm:$0xff] %v1041
          %1074 = vst [vmem:[%s411 + $0x18] sm:$0xff] %v1042
          %1075 = vst [vmem:[%s411 + $0x20] sm:$0xff] %v1043
          %1076 = vst [vmem:[%s411 + $0x28] sm:$0xff] %v1044
          %1077 = vst [vmem:[%s411 + $0x30] sm:$0xff] %v1045
          %1078 = vst [vmem:[%s411 + $0x38] sm:$0xff] %v1046
          %1079 = vst [vmem:[%s411 + $0x40] sm:$0xff] %v1047
          %1080 = vst [vmem:[%s411 + $0x48] sm:$0xff] %v1048
          %1081 = vst [vmem:[%s411 + $0x50] sm:$0xff] %v1049
          %1082 = vst [vmem:[%s411 + $0x58] sm:$0xff] %v1050
          %1083 = vst [vmem:[%s411 + $0x60] sm:$0xff] %v1051
          %1084 = vst [vmem:[%s411 + $0x68] sm:$0xff] %v1052
          %1085 = vst [vmem:[%s411 + $0x70] sm:$0xff] %v1053
          %1086 = vst [vmem:[%s411 + $0x78] sm:$0xff] %v1054
          %1087 = vst [vmem:[%s411 + $0x80] sm:$0xff] %v1055
          %1088 = vst [vmem:[%s411 + $0x88] sm:$0xff] %v1056
          %1089 = vst [vmem:[%s411 + $0x90] sm:$0xff] %v1057
          %1090 = vst [vmem:[%s411 + $0x98] sm:$0xff] %v1058
          %1091 = vst [vmem:[%s411 + $0xa0] sm:$0xff] %v1059
          %1092 = vst [vmem:[%s411 + $0xa8] sm:$0xff] %v1060
          %1093 = vst [vmem:[%s411 + $0xb0] sm:$0xff] %v1061
          %1094 = vst [vmem:[%s411 + $0xb8] sm:$0xff] %v1062
          %1095 = vst [vmem:[%s411 + $0xc0] sm:$0xff] %v1063
          %1096 = vst [vmem:[%s411 + $0xc8] sm:$0xff] %v1064
          %1097 = vst [vmem:[%s411 + $0xd0] sm:$0xff] %v1065
          %1098 = vst [vmem:[%s411 + $0xd8] sm:$0xff] %v1066
          %1099 = vst [vmem:[%s411 + $0xe0] sm:$0xff] %v1067
          %1100 = vst [vmem:[%s411 + $0xe8] sm:$0xff] %v1068
          %1101 = vst [vmem:[%s411 + $0xf0] sm:$0xff] %v1069
          %1102 = vst [vmem:[%s411 + $0xf8] sm:$0xff] %v1070
        $region78: #{compen_rt_forward.14} parent=65 // pred_fallthru
          _
        %s1103 = smul.u32 32, %s19
        %p1104 = scmp.lt.s32.totalorder %s1103, 127
        %s1105 = scalar_select %p1104, %s1103, 127
        %p1106 = scmp.lt.s32.totalorder %s20, 0
        %s1107 = scalar_select %p1106, %s20, 0
        %s1108 = sadd.s32 %s1107, %s1105
        %s1109 = smul.addr %s1108, 8
        %s1110 = scalar_lea.vmem %s3, %s1109
        // Predicated region
        $region79: #{compen_rt_forward.14} parent=65 // pred_check
          %p1111 = pneg %p135
        $region80: #{compen_rt_forward.14} parent=65 // pred_check_branch
          %1113 = sbr.rel (%p1111) target = $region82
        $region81: #{compen_rt_forward.14} parent=65 // pred_region
          %s1114 = smul.u32 32, %s19
        $region82: #{compen_rt_forward.14} parent=65 // pred_fallthru
          _
      $region66: #{compen_rt_forward.14} parent=5 // pred_fallthru
        _
      %p1115 = scmp.le.s32.totalorder 2, %s9
      // Predicated region
      $region83: #{compen_rt_forward.14} parent=5 // pred_check
        %p1116 = pneg %p1115
      $region84: #{compen_rt_forward.14} parent=5 // pred_check_branch
        %1118 = sbr.rel (%p1116) target = $region86
      $region85: #{compen_rt_forward.14} parent=5 // pred_region
        %s1119 = ssub.s32 %s9, 2
        // Predicated region
        $region87: #{compen_rt_forward.14} parent=85 // pred_check
          %p1120 = pneg %p141
        $region88: #{compen_rt_forward.14} parent=85 // pred_check_branch
          %1122 = sbr.rel (%p1120) target = $region90
        $region89: #{compen_rt_forward.14} parent=85 // pred_region
          %s1123 = smul.u32 32, %s22
          %p1124 = scmp.lt.s32.totalorder %s1123, 127
          %s1125 = scalar_select %p1124, %s1123, 127
          %p1126 = scmp.lt.s32.totalorder %s23, 0
          %s1127 = scalar_select %p1126, %s23, 0
          %s1128 = sadd.s32 %s1127, %s1125
          %s1129 = smul.addr %s1128, 8
          %s1130 = scalar_lea.vmem %s3, %s1129
        $region90: #{compen_rt_forward.14} parent=85 // pred_fallthru
          _
      $region86: #{compen_rt_forward.14} parent=5 // pred_fallthru
        _
    $region6: #{compen_rt_forward.14} parent=1 // loop_footer
      %s13 = sadd.s32 1, %s9
    $region7: #{compen_rt_forward.14} parent=1 // loop_footer_branch
      %8 = sbr.rel target = $region3
    $region8: #{compen_rt_forward.14} parent=1 // loop_exit
      _

// kernel: compen_rt_forward.15
$region0: #{compen_rt_forward.15}
  #allocation0 [shape = 'u32[]', space=smem, size = 0x4, offset = 0x4, fixed_abs, tag = 'smem constant byte address 0x4 - core index']
  #allocation1 [shape = 'u32[144,128]{1,0:T(1,128)}', space=vmem, size = 0x12000, scoped, tag = 'internal scratch']
  %s0 = inlined_call_operand.vmem [shape: bf16[256,384], index: 0, kind: input, shape index: {}]
  %s1 = inlined_call_operand.vmem [shape: bf16[384,128], index: 1, kind: input, shape index: {}]
  %s2 = inlined_call_operand.vmem [shape: f32[1,128], index: 2, kind: input, shape index: {}]
  %s3 = inlined_call_operand.vmem [shape: f32[256,128], index: 3, kind: output, shape index: {}]
  %s4 = sld [smem:[#allocation0]]
  $region22: #{compen_rt_forward.15} parent=0
    _
  %s6 = ssub.s32 1, %s4
  %s7 = scalar_select 0, %s6, %s4
  // Predicated region
  $region2: #{compen_rt_forward.15} parent=0 // pred_check
    _
  $region3: #{compen_rt_forward.15} parent=0 // pred_check_branch
    %9 = sbr.rel (0) target = $region5
  $region4: #{compen_rt_forward.15} parent=0 // pred_region
    _
  $region5: #{compen_rt_forward.15} parent=0 // pred_fallthru
    _
  // Predicated region
  $region6: #{compen_rt_forward.15} parent=0 // pred_check
    _
  $region7: #{compen_rt_forward.15} parent=0 // pred_check_branch
    %11 = sbr.rel (0) target = $region9
  $region8: #{compen_rt_forward.15} parent=0 // pred_region
    _
  $region9: #{compen_rt_forward.15} parent=0 // pred_fallthru
    _
  // Predicated region
  $region10: #{compen_rt_forward.15} parent=0 // pred_check
    _
  $region11: #{compen_rt_forward.15} parent=0 // pred_check_branch
    %13 = sbr.rel (0) target = $region13
  $region12: #{compen_rt_forward.15} parent=0 // pred_region
    _
  $region13: #{compen_rt_forward.15} parent=0 // pred_fallthru
    _
  %v15 = vld [vmem:[%s0] sm:$0xff]
  %v16 = vld [vmem:[%s0 + $0x8] sm:$0xf]
  %v17 = vld [vmem:[%s0 + $0xc] sm:$0xff]
  %v18 = vld [vmem:[%s0 + $0x14] sm:$0xf]
  %v19 = vld [vmem:[%s0 + $0x18] sm:$0xff]
  %v20 = vld [vmem:[%s0 + $0x20] sm:$0xf]
  %v21 = vld [vmem:[%s0 + $0x24] sm:$0xff]
  %v22 = vld [vmem:[%s0 + $0x2c] sm:$0xf]
  %v23 = vld [vmem:[%s0 + $0x30] sm:$0xff]
  %v24 = vld [vmem:[%s0 + $0x38] sm:$0xf]
  %v25 = vld [vmem:[%s0 + $0x3c] sm:$0xff]
  %v26 = vld [vmem:[%s0 + $0x44] sm:$0xf]
  %v27 = vld [vmem:[%s0 + $0x48] sm:$0xff]
  %v28 = vld [vmem:[%s0 + $0x50] sm:$0xf]
  %v29 = vld [vmem:[%s0 + $0x54] sm:$0xff]
  %v30 = vld [vmem:[%s0 + $0x5c] sm:$0xf]
  %v31 = vld [vmem:[%s0 + $0x60] sm:$0xff]
  %v32 = vld [vmem:[%s0 + $0x68] sm:$0xf]
  %v33 = vld [vmem:[%s0 + $0x6c] sm:$0xff]
  %v34 = vld [vmem:[%s0 + $0x74] sm:$0xf]
  %v35 = vld [vmem:[%s0 + $0x78] sm:$0xff]
  %v36 = vld [vmem:[%s0 + $0x80] sm:$0xf]
  %v37 = vld [vmem:[%s0 + $0x84] sm:$0xff]
  %v38 = vld [vmem:[%s0 + $0x8c] sm:$0xf]
  %v39 = vld [vmem:[%s0 + $0x90] sm:$0xff]
  %v40 = vld [vmem:[%s0 + $0x98] sm:$0xf]
  %v41 = vld [vmem:[%s0 + $0x9c] sm:$0xff]
  %v42 = vld [vmem:[%s0 + $0xa4] sm:$0xf]
  %v43 = vld [vmem:[%s0 + $0xa8] sm:$0xff]
  %v44 = vld [vmem:[%s0 + $0xb0] sm:$0xf]
  %v45 = vld [vmem:[%s0 + $0xb4] sm:$0xff]
  %v46 = vld [vmem:[%s0 + $0xbc] sm:$0xf]
  %v47 = vld [vmem:[%s0 + $0xc0] sm:$0xff]
  %v48 = vld [vmem:[%s0 + $0xc8] sm:$0xf]
  %v49 = vld [vmem:[%s0 + $0xcc] sm:$0xff]
  %v50 = vld [vmem:[%s0 + $0xd4] sm:$0xf]
  %v51 = vld [vmem:[%s0 + $0xd8] sm:$0xff]
  %v52 = vld [vmem:[%s0 + $0xe0] sm:$0xf]
  %v53 = vld [vmem:[%s0 + $0xe4] sm:$0xff]
  %v54 = vld [vmem:[%s0 + $0xec] sm:$0xf]
  %v55 = vld [vmem:[%s0 + $0xf0] sm:$0xff]
  %v56 = vld [vmem:[%s0 + $0xf8] sm:$0xf]
  %v57 = vld [vmem:[%s0 + $0xfc] sm:$0xff]
  %v58 = vld [vmem:[%s0 + $0x104] sm:$0xf]
  %v59 = vld [vmem:[%s0 + $0x108] sm:$0xff]
  %v60 = vld [vmem:[%s0 + $0x110] sm:$0xf]
  %v61 = vld [vmem:[%s0 + $0x114] sm:$0xff]
  %v62 = vld [vmem:[%s0 + $0x11c] sm:$0xf]
  %v63 = vld [vmem:[%s0 + $0x120] sm:$0xff]
  %v64 = vld [vmem:[%s0 + $0x128] sm:$0xf]
  %v65 = vld [vmem:[%s0 + $0x12c] sm:$0xff]
  %v66 = vld [vmem:[%s0 + $0x134] sm:$0xf]
  %v67 = vld [vmem:[%s0 + $0x138] sm:$0xff]
  %v68 = vld [vmem:[%s0 + $0x140] sm:$0xf]
  %v69 = vld [vmem:[%s0 + $0x144] sm:$0xff]
  %v70 = vld [vmem:[%s0 + $0x14c] sm:$0xf]
  %v71 = vld [vmem:[%s0 + $0x150] sm:$0xff]
  %v72 = vld [vmem:[%s0 + $0x158] sm:$0xf]
  %v73 = vld [vmem:[%s0 + $0x15c] sm:$0xff]
  %v74 = vld [vmem:[%s0 + $0x164] sm:$0xf]
  %v75 = vld [vmem:[%s0 + $0x168] sm:$0xff]
  %v76 = vld [vmem:[%s0 + $0x170] sm:$0xf]
  %v77 = vld [vmem:[%s0 + $0x174] sm:$0xff]
  %v78 = vld [vmem:[%s0 + $0x17c] sm:$0xf]
  %v79 = vld [vmem:[%s1] sm:$0xf]
  %v80 = vld [vmem:[%s1 + $0x4] sm:$0xf]
  %v81 = vld [vmem:[%s1 + $0x8] sm:$0xf]
  %v82 = vld [vmem:[%s1 + $0xc] sm:$0xf]
  %v83 = vld [vmem:[%s1 + $0x10] sm:$0xf]
  %v84 = vld [vmem:[%s1 + $0x14] sm:$0xf]
  %v85 = vld [vmem:[%s1 + $0x18] sm:$0xf]
  %v86 = vld [vmem:[%s1 + $0x1c] sm:$0xf]
  %v87 = vld [vmem:[%s1 + $0x20] sm:$0xf]
  %v88 = vld [vmem:[%s1 + $0x24] sm:$0xf]
  %v89 = vld [vmem:[%s1 + $0x28] sm:$0xf]
  %v90 = vld [vmem:[%s1 + $0x2c] sm:$0xf]
  %v91 = vld [vmem:[%s1 + $0x30] sm:$0xf]
  %v92 = vld [vmem:[%s1 + $0x34] sm:$0xf]
  %v93 = vld [vmem:[%s1 + $0x38] sm:$0xf]
  %v94 = vld [vmem:[%s1 + $0x3c] sm:$0xf]
  %v95 = vld [vmem:[%s1 + $0x40] sm:$0xf]
  %v96 = vld [vmem:[%s1 + $0x44] sm:$0xf]
  %v97 = vld [vmem:[%s1 + $0x48] sm:$0xf]
  %v98 = vld [vmem:[%s1 + $0x4c] sm:$0xf]
  %v99 = vld [vmem:[%s1 + $0x50] sm:$0xf]
  %v100 = vld [vmem:[%s1 + $0x54] sm:$0xf]
  %v101 = vld [vmem:[%s1 + $0x58] sm:$0xf]
  %v102 = vld [vmem:[%s1 + $0x5c] sm:$0xf]
  %v103 = vld [vmem:[%s1 + $0x60] sm:$0xf]
  %v104 = vld [vmem:[%s1 + $0x64] sm:$0xf]
  %v105 = vld [vmem:[%s1 + $0x68] sm:$0xf]
  %v106 = vld [vmem:[%s1 + $0x6c] sm:$0xf]
  %v107 = vld [vmem:[%s1 + $0x70] sm:$0xf]
  %v108 = vld [vmem:[%s1 + $0x74] sm:$0xf]
  %v109 = vld [vmem:[%s1 + $0x78] sm:$0xf]
  %v110 = vld [vmem:[%s1 + $0x7c] sm:$0xf]
  %v111 = vld [vmem:[%s1 + $0x80] sm:$0xf]
  %v112 = vld [vmem:[%s1 + $0x84] sm:$0xf]
  %v113 = vld [vmem:[%s1 + $0x88] sm:$0xf]
  %v114 = vld [vmem:[%s1 + $0x8c] sm:$0xf]
  %v115 = vld [vmem:[%s1 + $0x90] sm:$0xf]
  %v116 = vld [vmem:[%s1 + $0x94] sm:$0xf]
  %v117 = vld [vmem:[%s1 + $0x98] sm:$0xf]
  %v118 = vld [vmem:[%s1 + $0x9c] sm:$0xf]
  %v119 = vld [vmem:[%s1 + $0xa0] sm:$0xf]
  %v120 = vld [vmem:[%s1 + $0xa4] sm:$0xf]
  %v121 = vld [vmem:[%s1 + $0xa8] sm:$0xf]
  %v122 = vld [vmem:[%s1 + $0xac] sm:$0xf]
  %v123 = vld [vmem:[%s1 + $0xb0] sm:$0xf]
  %v124 = vld [vmem:[%s1 + $0xb4] sm:$0xf]
  %v125 = vld [vmem:[%s1 + $0xb8] sm:$0xf]
  %v126 = vld [vmem:[%s1 + $0xbc] sm:$0xf]
  %v127 = vld [vmem:[%s2] sm:$0x1]
  %v129 = vlaneseq
  %v130 = vshrl.u32 %v129, 7
  %v131 = vsub.s32 0, %v130
  %v132 = vrot.slane %v127, %v131
  %v198 = vunpack.c.l.b16 %v15
  %v199 = vunpack.c.h.b16 %v15
  %v200 = vunpack.c.l.b16 %v16
  %v201 = vunpack.c.l.b16 %v17
  %v202 = vunpack.c.h.b16 %v17
  %v203 = vunpack.c.l.b16 %v18
  %v204 = vunpack.c.l.b16 %v19
  %v205 = vunpack.c.h.b16 %v19
  %v206 = vunpack.c.l.b16 %v20
  %v207 = vunpack.c.l.b16 %v21
  %v208 = vunpack.c.h.b16 %v21
  %v209 = vunpack.c.l.b16 %v22
  %v210 = vunpack.c.l.b16 %v23
  %v211 = vunpack.c.h.b16 %v23
  %v212 = vunpack.c.l.b16 %v24
  %v213 = vunpack.c.l.b16 %v25
  %v214 = vunpack.c.h.b16 %v25
  %v215 = vunpack.c.l.b16 %v26
  %v216 = vunpack.c.l.b16 %v27
  %v217 = vunpack.c.h.b16 %v27
  %v218 = vunpack.c.l.b16 %v28
  %v219 = vunpack.c.l.b16 %v29
  %v220 = vunpack.c.h.b16 %v29
  %v221 = vunpack.c.l.b16 %v30
  %v222 = vunpack.c.l.b16 %v31
  %v223 = vunpack.c.h.b16 %v31
  %v224 = vunpack.c.l.b16 %v32
  %v225 = vunpack.c.l.b16 %v33
  %v226 = vunpack.c.h.b16 %v33
  %v227 = vunpack.c.l.b16 %v34
  %v228 = vunpack.c.l.b16 %v35
  %v229 = vunpack.c.h.b16 %v35
  %v230 = vunpack.c.l.b16 %v36
  %v231 = vunpack.c.l.b16 %v37
  %v232 = vunpack.c.h.b16 %v37
  %v233 = vunpack.c.l.b16 %v38
  %v234 = vunpack.c.l.b16 %v39
  %v235 = vunpack.c.h.b16 %v39
  %v236 = vunpack.c.l.b16 %v40
  %v237 = vunpack.c.l.b16 %v41
  %v238 = vunpack.c.h.b16 %v41
  %v239 = vunpack.c.l.b16 %v42
  %v240 = vunpack.c.l.b16 %v43
  %v241 = vunpack.c.h.b16 %v43
  %v242 = vunpack.c.l.b16 %v44
  %v243 = vunpack.c.l.b16 %v45
  %v244 = vunpack.c.h.b16 %v45
  %v245 = vunpack.c.l.b16 %v46
  %v246 = vunpack.c.l.b16 %v47
  %v247 = vunpack.c.h.b16 %v47
  %v248 = vunpack.c.l.b16 %v48
  %v249 = vunpack.c.l.b16 %v49
  %v250 = vunpack.c.h.b16 %v49
  %v251 = vunpack.c.l.b16 %v50
  %v252 = vunpack.c.l.b16 %v51
  %v253 = vunpack.c.h.b16 %v51
  %v254 = vunpack.c.l.b16 %v52
  %v255 = vunpack.c.l.b16 %v53
  %v256 = vunpack.c.h.b16 %v53
  %v257 = vunpack.c.l.b16 %v54
  %v258 = vunpack.c.l.b16 %v55
  %v259 = vunpack.c.h.b16 %v55
  %v260 = vunpack.c.l.b16 %v56
  %v261 = vunpack.c.l.b16 %v57
  %v262 = vunpack.c.h.b16 %v57
  %v263 = vunpack.c.l.b16 %v58
  %v264 = vunpack.c.l.b16 %v59
  %v265 = vunpack.c.h.b16 %v59
  %v266 = vunpack.c.l.b16 %v60
  %v267 = vunpack.c.l.b16 %v61
  %v268 = vunpack.c.h.b16 %v61
  %v269 = vunpack.c.l.b16 %v62
  %v270 = vunpack.c.l.b16 %v63
  %v271 = vunpack.c.h.b16 %v63
  %v272 = vunpack.c.l.b16 %v64
  %v273 = vunpack.c.l.b16 %v65
  %v274 = vunpack.c.h.b16 %v65
  %v275 = vunpack.c.l.b16 %v66
  %v276 = vunpack.c.l.b16 %v67
  %v277 = vunpack.c.h.b16 %v67
  %v278 = vunpack.c.l.b16 %v68
  %v279 = vunpack.c.l.b16 %v69
  %v280 = vunpack.c.h.b16 %v69
  %v281 = vunpack.c.l.b16 %v70
  %v282 = vunpack.c.l.b16 %v71
  %v283 = vunpack.c.h.b16 %v71
  %v284 = vunpack.c.l.b16 %v72
  %v285 = vunpack.c.l.b16 %v73
  %v286 = vunpack.c.h.b16 %v73
  %v287 = vunpack.c.l.b16 %v74
  %v288 = vunpack.c.l.b16 %v75
  %v289 = vunpack.c.h.b16 %v75
  %v290 = vunpack.c.l.b16 %v76
  %v291 = vunpack.c.l.b16 %v77
  %v292 = vunpack.c.h.b16 %v77
  %v293 = vunpack.c.l.b16 %v78
  %v294 = vpack.c.b16 %v201, %v198
  %v295 = vpack.c.b16 %v202, %v199
  %v296 = vpack.c.b16 %v203, %v200
  %v297 = vpack.c.b16 %v207, %v204
  %v298 = vpack.c.b16 %v208, %v205
  %v299 = vpack.c.b16 %v209, %v206
  %v300 = vpack.c.b16 %v213, %v210
  %v301 = vpack.c.b16 %v214, %v211
  %v302 = vpack.c.b16 %v215, %v212
  %v303 = vpack.c.b16 %v219, %v216
  %v304 = vpack.c.b16 %v220, %v217
  %v305 = vpack.c.b16 %v221, %v218
  %v306 = vpack.c.b16 %v225, %v222
  %v307 = vpack.c.b16 %v226, %v223
  %v308 = vpack.c.b16 %v227, %v224
  %v309 = vpack.c.b16 %v231, %v228
  %v310 = vpack.c.b16 %v232, %v229
  %v311 = vpack.c.b16 %v233, %v230
  %v312 = vpack.c.b16 %v237, %v234
  %v313 = vpack.c.b16 %v238, %v235
  %v314 = vpack.c.b16 %v239, %v236
  %v315 = vpack.c.b16 %v243, %v240
  %v316 = vpack.c.b16 %v244, %v241
  %v317 = vpack.c.b16 %v245, %v242
  %v318 = vpack.c.b16 %v249, %v246
  %v319 = vpack.c.b16 %v250, %v247
  %v320 = vpack.c.b16 %v251, %v248
  %v321 = vpack.c.b16 %v255, %v252
  %v322 = vpack.c.b16 %v256, %v253
  %v323 = vpack.c.b16 %v257, %v254
  %v324 = vpack.c.b16 %v261, %v258
  %v325 = vpack.c.b16 %v262, %v259
  %v326 = vpack.c.b16 %v263, %v260
  %v327 = vpack.c.b16 %v267, %v264
  %v328 = vpack.c.b16 %v268, %v265
  %v329 = vpack.c.b16 %v269, %v266
  %v330 = vpack.c.b16 %v273, %v270
  %v331 = vpack.c.b16 %v274, %v271
  %v332 = vpack.c.b16 %v275, %v272
  %v333 = vpack.c.b16 %v279, %v276
  %v334 = vpack.c.b16 %v280, %v277
  %v335 = vpack.c.b16 %v281, %v278
  %v336 = vpack.c.b16 %v285, %v282
  %v337 = vpack.c.b16 %v286, %v283
  %v338 = vpack.c.b16 %v287, %v284
  %v339 = vpack.c.b16 %v291, %v288
  %v340 = vpack.c.b16 %v292, %v289
  %v341 = vpack.c.b16 %v293, %v290
  %v438 = vunpack.c.l.b16 %v79
  %v439 = vunpack.c.l.b16 %v80
  %v440 = vunpack.c.l.b16 %v81
  %v441 = vunpack.c.l.b16 %v82
  %v442 = vunpack.c.l.b16 %v83
  %v443 = vunpack.c.l.b16 %v84
  %v444 = vunpack.c.l.b16 %v85
  %v445 = vunpack.c.l.b16 %v86
  %v446 = vunpack.c.l.b16 %v87
  %v447 = vunpack.c.l.b16 %v88
  %v448 = vunpack.c.l.b16 %v89
  %v449 = vunpack.c.l.b16 %v90
  %v450 = vunpack.c.l.b16 %v91
  %v451 = vunpack.c.l.b16 %v92
  %v452 = vunpack.c.l.b16 %v93
  %v453 = vunpack.c.l.b16 %v94
  %v454 = vunpack.c.l.b16 %v95
  %v455 = vunpack.c.l.b16 %v96
  %v456 = vunpack.c.l.b16 %v97
  %v457 = vunpack.c.l.b16 %v98
  %v458 = vunpack.c.l.b16 %v99
  %v459 = vunpack.c.l.b16 %v100
  %v460 = vunpack.c.l.b16 %v101
  %v461 = vunpack.c.l.b16 %v102
  %v462 = vunpack.c.l.b16 %v103
  %v463 = vunpack.c.l.b16 %v104
  %v464 = vunpack.c.l.b16 %v105
  %v465 = vunpack.c.l.b16 %v106
  %v466 = vunpack.c.l.b16 %v107
  %v467 = vunpack.c.l.b16 %v108
  %v468 = vunpack.c.l.b16 %v109
  %v469 = vunpack.c.l.b16 %v110
  %v470 = vunpack.c.l.b16 %v111
  %v471 = vunpack.c.l.b16 %v112
  %v472 = vunpack.c.l.b16 %v113
  %v473 = vunpack.c.l.b16 %v114
  %v474 = vunpack.c.l.b16 %v115
  %v475 = vunpack.c.l.b16 %v116
  %v476 = vunpack.c.l.b16 %v117
  %v477 = vunpack.c.l.b16 %v118
  %v478 = vunpack.c.l.b16 %v119
  %v479 = vunpack.c.l.b16 %v120
  %v480 = vunpack.c.l.b16 %v121
  %v481 = vunpack.c.l.b16 %v122
  %v482 = vunpack.c.l.b16 %v123
  %v483 = vunpack.c.l.b16 %v124
  %v484 = vunpack.c.l.b16 %v125
  %v485 = vunpack.c.l.b16 %v126
  %v486 = vpack.c.b16 %v439, %v438
  %v487 = vpack.c.b16 %v441, %v440
  %v488 = vpack.c.b16 %v443, %v442
  %v489 = vpack.c.b16 %v445, %v444
  %v490 = vpack.c.b16 %v447, %v446
  %v491 = vpack.c.b16 %v449, %v448
  %v492 = vpack.c.b16 %v451, %v450
  %v493 = vpack.c.b16 %v453, %v452
  %v494 = vpack.c.b16 %v455, %v454
  %v495 = vpack.c.b16 %v457, %v456
  %v496 = vpack.c.b16 %v459, %v458
  %v497 = vpack.c.b16 %v461, %v460
  %v498 = vpack.c.b16 %v463, %v462
  %v499 = vpack.c.b16 %v465, %v464
  %v500 = vpack.c.b16 %v467, %v466
  %v501 = vpack.c.b16 %v469, %v468
  %v502 = vpack.c.b16 %v471, %v470
  %v503 = vpack.c.b16 %v473, %v472
  %v504 = vpack.c.b16 %v475, %v474
  %v505 = vpack.c.b16 %v477, %v476
  %v506 = vpack.c.b16 %v479, %v478
  %v507 = vpack.c.b16 %v481, %v480
  %v508 = vpack.c.b16 %v483, %v482
  %v509 = vpack.c.b16 %v485, %v484
  %534 = vmatprep.subr.bf16.mxu0 0
  %535 = vmatpush1.bf16.msra.mxu0 %v493
  %536 = vmatprep.subr.bf16.mxu0 0
  %537 = vmatpush1.bf16.msra.mxu0 %v492
  %538 = vmatprep.subr.bf16.mxu0 0
  %539 = vmatpush1.bf16.msra.mxu0 %v491
  %540 = vmatprep.subr.bf16.mxu0 0
  %541 = vmatpush1.bf16.msra.mxu0 %v490
  %542 = vmatprep.subr.bf16.mxu0 0
  %543 = vmatpush1.bf16.msra.mxu0 %v489
  %544 = vmatprep.subr.bf16.mxu0 0
  %545 = vmatpush1.bf16.msra.mxu0 %v488
  %546 = vmatprep.subr.bf16.mxu0 0
  %547 = vmatpush1.bf16.msra.mxu0 %v487
  %548 = vmatprep.subr.bf16.mxu0 0
  %549 = vmatpush1.bf16.msra.mxu0 %v486
  %550 = vmatprep.subr.bf16.mxu0 0
  %551 = vmatpush2.bf16.msra.mxu0 %v501
  %552 = vmatprep.subr.bf16.mxu0 0
  %553 = vmatpush2.bf16.msra.mxu0 %v500
  %554 = vmatprep.subr.bf16.mxu0 0
  %555 = vmatpush2.bf16.msra.mxu0 %v499
  %556 = vmatprep.subr.bf16.mxu0 0
  %557 = vmatpush2.bf16.msra.mxu0 %v498
  %558 = vmatprep.subr.bf16.mxu0 0
  %559 = vmatpush2.bf16.msra.mxu0 %v497
  %560 = vmatprep.subr.bf16.mxu0 0
  %561 = vmatpush2.bf16.msra.mxu0 %v496
  %562 = vmatprep.subr.bf16.mxu0 0
  %563 = vmatpush2.bf16.msra.mxu0 %v495
  %564 = vmatprep.subr.bf16.mxu0 0
  %565 = vmatpush2.bf16.msra.mxu0 %v494
  %566 = vmatprep.mubr.bf16.mxu0 %v295
  %567 = vmatmul.mubr.bf16.gmra.mxu0 %v294
  %v568 = vpop.f32.mrf.mxu0
  %v569 = vadd.f32 %v132, %v568
  %v570 = vpop.f32.mrf.mxu0
  %v571 = vpop.f32.mrf.mxu0
  %v572 = vadd.f32 %v132, %v571
  %v573 = vpop.f32.mrf.mxu0
  %574 = vmatprep.mubr.bf16.mxu0 %v298
  %575 = vmatmul.mubr.bf16.gmra.mxu0 %v297
  %v576 = vpop.f32.mrf.mxu0
  %v577 = vadd.f32 %v132, %v576
  %v578 = vpop.f32.mrf.mxu0
  %v579 = vpop.f32.mrf.mxu0
  %v580 = vadd.f32 %v132, %v579
  %v581 = vpop.f32.mrf.mxu0
  %582 = vmatprep.mubr.bf16.mxu0 %v301
  %583 = vmatmul.mubr.bf16.gmra.mxu0 %v300
  %v584 = vpop.f32.mrf.mxu0
  %v585 = vadd.f32 %v132, %v584
  %v586 = vpop.f32.mrf.mxu0
  %v587 = vpop.f32.mrf.mxu0
  %v588 = vadd.f32 %v132, %v587
  %v589 = vpop.f32.mrf.mxu0
  %590 = vmatprep.mubr.bf16.mxu0 %v304
  %591 = vmatmul.mubr.bf16.gmra.mxu0 %v303
  %v592 = vpop.f32.mrf.mxu0
  %v593 = vadd.f32 %v132, %v592
  %v594 = vpop.f32.mrf.mxu0
  %v595 = vpop.f32.mrf.mxu0
  %v596 = vadd.f32 %v132, %v595
  %v597 = vpop.f32.mrf.mxu0
  %598 = vmatprep.mubr.bf16.mxu0 %v307
  %599 = vmatmul.mubr.bf16.gmra.mxu0 %v306
  %v600 = vpop.f32.mrf.mxu0
  %v601 = vadd.f32 %v132, %v600
  %v602 = vpop.f32.mrf.mxu0
  %v603 = vpop.f32.mrf.mxu0
  %v604 = vadd.f32 %v132, %v603
  %v605 = vpop.f32.mrf.mxu0
  %606 = vmatprep.mubr.bf16.mxu0 %v310
  %607 = vmatmul.mubr.bf16.gmra.mxu0 %v309
  %v608 = vpop.f32.mrf.mxu0
  %v609 = vadd.f32 %v132, %v608
  %v610 = vpop.f32.mrf.mxu0
  %v611 = vpop.f32.mrf.mxu0
  %v612 = vadd.f32 %v132, %v611
  %v613 = vpop.f32.mrf.mxu0
  %614 = vmatprep.mubr.bf16.mxu0 %v313
  %615 = vmatmul.mubr.bf16.gmra.mxu0 %v312
  %v616 = vpop.f32.mrf.mxu0
  %v617 = vadd.f32 %v132, %v616
  %v618 = vpop.f32.mrf.mxu0
  %v619 = vpop.f32.mrf.mxu0
  %v620 = vadd.f32 %v132, %v619
  %v621 = vpop.f32.mrf.mxu0
  %622 = vmatprep.mubr.bf16.mxu0 %v316
  %623 = vmatmul.mubr.bf16.gmra.mxu0 %v315
  %v624 = vpop.f32.mrf.mxu0
  %v625 = vadd.f32 %v132, %v624
  %v626 = vpop.f32.mrf.mxu0
  %v627 = vpop.f32.mrf.mxu0
  %v628 = vadd.f32 %v132, %v627
  %v629 = vpop.f32.mrf.mxu0
  %630 = vmatprep.mubr.bf16.mxu0 %v319
  %631 = vmatmul.mubr.bf16.gmra.mxu0 %v318
  %v632 = vpop.f32.mrf.mxu0
  %v633 = vadd.f32 %v132, %v632
  %v634 = vpop.f32.mrf.mxu0
  %v635 = vpop.f32.mrf.mxu0
  %v636 = vadd.f32 %v132, %v635
  %v637 = vpop.f32.mrf.mxu0
  %638 = vmatprep.mubr.bf16.mxu0 %v322
  %639 = vmatmul.mubr.bf16.gmra.mxu0 %v321
  %v640 = vpop.f32.mrf.mxu0
  %v641 = vadd.f32 %v132, %v640
  %v642 = vpop.f32.mrf.mxu0
  %v643 = vpop.f32.mrf.mxu0
  %v644 = vadd.f32 %v132, %v643
  %v645 = vpop.f32.mrf.mxu0
  %646 = vmatprep.mubr.bf16.mxu0 %v325
  %647 = vmatmul.mubr.bf16.gmra.mxu0 %v324
  %v648 = vpop.f32.mrf.mxu0
  %v649 = vadd.f32 %v132, %v648
  %v650 = vpop.f32.mrf.mxu0
  %v651 = vpop.f32.mrf.mxu0
  %v652 = vadd.f32 %v132, %v651
  %v653 = vpop.f32.mrf.mxu0
  %654 = vmatprep.mubr.bf16.mxu0 %v328
  %655 = vmatmul.mubr.bf16.gmra.mxu0 %v327
  %v656 = vpop.f32.mrf.mxu0
  %v657 = vadd.f32 %v132, %v656
  %v658 = vpop.f32.mrf.mxu0
  %v659 = vpop.f32.mrf.mxu0
  %v660 = vadd.f32 %v132, %v659
  %v661 = vpop.f32.mrf.mxu0
  %662 = vmatprep.mubr.bf16.mxu0 %v331
  %663 = vmatmul.mubr.bf16.gmra.mxu0 %v330
  %v664 = vpop.f32.mrf.mxu0
  %v665 = vadd.f32 %v132, %v664
  %v666 = vpop.f32.mrf.mxu0
  %v667 = vpop.f32.mrf.mxu0
  %v668 = vadd.f32 %v132, %v667
  %v669 = vpop.f32.mrf.mxu0
  %670 = vmatprep.mubr.bf16.mxu0 %v334
  %671 = vmatmul.mubr.bf16.gmra.mxu0 %v333
  %v672 = vpop.f32.mrf.mxu0
  %v673 = vadd.f32 %v132, %v672
  %v674 = vpop.f32.mrf.mxu0
  %v675 = vpop.f32.mrf.mxu0
  %v676 = vadd.f32 %v132, %v675
  %v677 = vpop.f32.mrf.mxu0
  %678 = vmatprep.mubr.bf16.mxu0 %v337
  %679 = vmatmul.mubr.bf16.gmra.mxu0 %v336
  %v680 = vpop.f32.mrf.mxu0
  %v681 = vadd.f32 %v132, %v680
  %v682 = vpop.f32.mrf.mxu0
  %v683 = vpop.f32.mrf.mxu0
  %v684 = vadd.f32 %v132, %v683
  %v685 = vpop.f32.mrf.mxu0
  %686 = vmatprep.mubr.bf16.mxu0 %v340
  %687 = vmatmul.mubr.bf16.gmra.mxu0 %v339
  %v688 = vpop.f32.mrf.mxu0
  %v689 = vadd.f32 %v132, %v688
  %v690 = vpop.f32.mrf.mxu0
  %v691 = vpop.f32.mrf.mxu0
  %v692 = vadd.f32 %v132, %v691
  %v693 = vpop.f32.mrf.mxu0
  %694 = vdwg.mxu0
  %695 = vmatprep.subr.bf16.mxu0 0
  %696 = vmatpush1.bf16.msra.mxu0 %v509
  %697 = vmatprep.subr.bf16.mxu0 0
  %698 = vmatpush1.bf16.msra.mxu0 %v508
  %699 = vmatprep.subr.bf16.mxu0 0
  %700 = vmatpush1.bf16.msra.mxu0 %v507
  %701 = vmatprep.subr.bf16.mxu0 0
  %702 = vmatpush1.bf16.msra.mxu0 %v506
  %703 = vmatprep.subr.bf16.mxu0 0
  %704 = vmatpush1.bf16.msra.mxu0 %v505
  %705 = vmatprep.subr.bf16.mxu0 0
  %706 = vmatpush1.bf16.msra.mxu0 %v504
  %707 = vmatprep.subr.bf16.mxu0 0
  %708 = vmatpush1.bf16.msra.mxu0 %v503
  %709 = vmatprep.subr.bf16.mxu0 0
  %710 = vmatpush1.bf16.msra.mxu0 %v502
  %711 = vmatprep.subr.bf16.mxu0 0
  %712 = vmatpush2.bf16.msra.mxu0 0
  %713 = vmatprep.subr.bf16.mxu0 0
  %714 = vmatpush2.bf16.msra.mxu0 0
  %715 = vmatprep.subr.bf16.mxu0 0
  %716 = vmatpush2.bf16.msra.mxu0 0
  %717 = vmatprep.subr.bf16.mxu0 0
  %718 = vmatpush2.bf16.msra.mxu0 0
  %719 = vmatprep.subr.bf16.mxu0 0
  %720 = vmatpush2.bf16.msra.mxu0 0
  %721 = vmatprep.subr.bf16.mxu0 0
  %722 = vmatpush2.bf16.msra.mxu0 0
  %723 = vmatprep.subr.bf16.mxu0 0
  %724 = vmatpush2.bf16.msra.mxu0 0
  %725 = vmatprep.subr.bf16.mxu0 0
  %726 = vmatpush2.bf16.msra.mxu0 0
  %727 = vmatprep.mubr.bf16.mxu0 0
  %728 = vmatmul.mubr.bf16.gmra.mxu0 %v296
  %v729 = vpop.f32.mrf.mxu0
  %v730 = vadd.f32 %v569, %v729
  %v731 = vpop.f32.mrf.mxu0
  %v732 = vpop.f32.mrf.mxu0
  %v733 = vadd.f32 %v572, %v732
  %v734 = vpop.f32.mrf.mxu0
  %735 = vmatprep.mubr.bf16.mxu0 0
  %736 = vmatmul.mubr.bf16.gmra.mxu0 %v299
  %v737 = vpop.f32.mrf.mxu0
  %v738 = vadd.f32 %v577, %v737
  %v739 = vpop.f32.mrf.mxu0
  %v740 = vpop.f32.mrf.mxu0
  %v741 = vadd.f32 %v580, %v740
  %v742 = vpop.f32.mrf.mxu0
  %743 = vmatprep.mubr.bf16.mxu0 0
  %744 = vmatmul.mubr.bf16.gmra.mxu0 %v302
  %v745 = vpop.f32.mrf.mxu0
  %v746 = vadd.f32 %v585, %v745
  %v747 = vpop.f32.mrf.mxu0
  %v748 = vpop.f32.mrf.mxu0
  %v749 = vadd.f32 %v588, %v748
  %v750 = vpop.f32.mrf.mxu0
  %751 = vmatprep.mubr.bf16.mxu0 0
  %752 = vmatmul.mubr.bf16.gmra.mxu0 %v305
  %v753 = vpop.f32.mrf.mxu0
  %v754 = vadd.f32 %v593, %v753
  %v755 = vpop.f32.mrf.mxu0
  %v756 = vpop.f32.mrf.mxu0
  %v757 = vadd.f32 %v596, %v756
  %v758 = vpop.f32.mrf.mxu0
  %759 = vmatprep.mubr.bf16.mxu0 0
  %760 = vmatmul.mubr.bf16.gmra.mxu0 %v308
  %v761 = vpop.f32.mrf.mxu0
  %v762 = vadd.f32 %v601, %v761
  %v763 = vpop.f32.mrf.mxu0
  %v764 = vpop.f32.mrf.mxu0
  %v765 = vadd.f32 %v604, %v764
  %v766 = vpop.f32.mrf.mxu0
  %767 = vmatprep.mubr.bf16.mxu0 0
  %768 = vmatmul.mubr.bf16.gmra.mxu0 %v311
  %v769 = vpop.f32.mrf.mxu0
  %v770 = vadd.f32 %v609, %v769
  %v771 = vpop.f32.mrf.mxu0
  %v772 = vpop.f32.mrf.mxu0
  %v773 = vadd.f32 %v612, %v772
  %v774 = vpop.f32.mrf.mxu0
  %775 = vmatprep.mubr.bf16.mxu0 0
  %776 = vmatmul.mubr.bf16.gmra.mxu0 %v314
  %v777 = vpop.f32.mrf.mxu0
  %v778 = vadd.f32 %v617, %v777
  %v779 = vpop.f32.mrf.mxu0
  %v780 = vpop.f32.mrf.mxu0
  %v781 = vadd.f32 %v620, %v780
  %v782 = vpop.f32.mrf.mxu0
  %783 = vmatprep.mubr.bf16.mxu0 0
  %784 = vmatmul.mubr.bf16.gmra.mxu0 %v317
  %v785 = vpop.f32.mrf.mxu0
  %v786 = vadd.f32 %v625, %v785
  %v787 = vpop.f32.mrf.mxu0
  %v788 = vpop.f32.mrf.mxu0
  %v789 = vadd.f32 %v628, %v788
  %v790 = vpop.f32.mrf.mxu0
  %791 = vmatprep.mubr.bf16.mxu0 0
  %792 = vmatmul.mubr.bf16.gmra.mxu0 %v320
  %v793 = vpop.f32.mrf.mxu0
  %v794 = vadd.f32 %v633, %v793
  %v795 = vpop.f32.mrf.mxu0
  %v796 = vpop.f32.mrf.mxu0
  %v797 = vadd.f32 %v636, %v796
  %v798 = vpop.f32.mrf.mxu0
  %799 = vmatprep.mubr.bf16.mxu0 0
  %800 = vmatmul.mubr.bf16.gmra.mxu0 %v323
  %v801 = vpop.f32.mrf.mxu0
  %v802 = vadd.f32 %v641, %v801
  %v803 = vpop.f32.mrf.mxu0
  %v804 = vpop.f32.mrf.mxu0
  %v805 = vadd.f32 %v644, %v804
  %v806 = vpop.f32.mrf.mxu0
  %807 = vmatprep.mubr.bf16.mxu0 0
  %808 = vmatmul.mubr.bf16.gmra.mxu0 %v326
  %v809 = vpop.f32.mrf.mxu0
  %v810 = vadd.f32 %v649, %v809
  %v811 = vpop.f32.mrf.mxu0
  %v812 = vpop.f32.mrf.mxu0
  %v813 = vadd.f32 %v652, %v812
  %v814 = vpop.f32.mrf.mxu0
  %815 = vmatprep.mubr.bf16.mxu0 0
  %816 = vmatmul.mubr.bf16.gmra.mxu0 %v329
  %v817 = vpop.f32.mrf.mxu0
  %v818 = vadd.f32 %v657, %v817
  %v819 = vpop.f32.mrf.mxu0
  %v820 = vpop.f32.mrf.mxu0
  %v821 = vadd.f32 %v660, %v820
  %v822 = vpop.f32.mrf.mxu0
  %823 = vmatprep.mubr.bf16.mxu0 0
  %824 = vmatmul.mubr.bf16.gmra.mxu0 %v332
  %v825 = vpop.f32.mrf.mxu0
  %v826 = vadd.f32 %v665, %v825
  %v827 = vpop.f32.mrf.mxu0
  %v828 = vpop.f32.mrf.mxu0
  %v829 = vadd.f32 %v668, %v828
  %v830 = vpop.f32.mrf.mxu0
  %831 = vmatprep.mubr.bf16.mxu0 0
  %832 = vmatmul.mubr.bf16.gmra.mxu0 %v335
  %v833 = vpop.f32.mrf.mxu0
  %v834 = vadd.f32 %v673, %v833
  %v835 = vpop.f32.mrf.mxu0
  %v836 = vpop.f32.mrf.mxu0
  %v837 = vadd.f32 %v676, %v836
  %v838 = vpop.f32.mrf.mxu0
  %839 = vmatprep.mubr.bf16.mxu0 0
  %840 = vmatmul.mubr.bf16.gmra.mxu0 %v338
  %v841 = vpop.f32.mrf.mxu0
  %v842 = vadd.f32 %v681, %v841
  %v843 = vpop.f32.mrf.mxu0
  %v844 = vpop.f32.mrf.mxu0
  %v845 = vadd.f32 %v684, %v844
  %v846 = vpop.f32.mrf.mxu0
  %847 = vmatprep.mubr.bf16.mxu0 0
  %848 = vmatmul.mubr.bf16.gmra.mxu0 %v341
  %v849 = vpop.f32.mrf.mxu0
  %v850 = vadd.f32 %v689, %v849
  %v851 = vpop.f32.mrf.mxu0
  %v852 = vpop.f32.mrf.mxu0
  %v853 = vadd.f32 %v692, %v852
  %v854 = vpop.f32.mrf.mxu0
  %855 = vdwg.mxu0
  %v856 = vmax.f32 %v730, 0.0
  %v857 = vmax.f32 %v733, 0.0
  %v858 = vmax.f32 %v738, 0.0
  %v859 = vmax.f32 %v741, 0.0
  %v860 = vmax.f32 %v746, 0.0
  %v861 = vmax.f32 %v749, 0.0
  %v862 = vmax.f32 %v754, 0.0
  %v863 = vmax.f32 %v757, 0.0
  %v864 = vmax.f32 %v762, 0.0
  %v865 = vmax.f32 %v765, 0.0
  %v866 = vmax.f32 %v770, 0.0
  %v867 = vmax.f32 %v773, 0.0
  %v868 = vmax.f32 %v778, 0.0
  %v869 = vmax.f32 %v781, 0.0
  %v870 = vmax.f32 %v786, 0.0
  %v871 = vmax.f32 %v789, 0.0
  %v872 = vmax.f32 %v794, 0.0
  %v873 = vmax.f32 %v797, 0.0
  %v874 = vmax.f32 %v802, 0.0
  %v875 = vmax.f32 %v805, 0.0
  %v876 = vmax.f32 %v810, 0.0
  %v877 = vmax.f32 %v813, 0.0
  %v878 = vmax.f32 %v818, 0.0
  %v879 = vmax.f32 %v821, 0.0
  %v880 = vmax.f32 %v826, 0.0
  %v881 = vmax.f32 %v829, 0.0
  %v882 = vmax.f32 %v834, 0.0
  %v883 = vmax.f32 %v837, 0.0
  %v884 = vmax.f32 %v842, 0.0
  %v885 = vmax.f32 %v845, 0.0
  %v886 = vmax.f32 %v850, 0.0
  %v887 = vmax.f32 %v853, 0.0
  %888 = vst [vmem:[%s3] sm:$0xff] %v856
  %889 = vst [vmem:[%s3 + $0x8] sm:$0xff] %v857
  %890 = vst [vmem:[%s3 + $0x10] sm:$0xff] %v858
  %891 = vst [vmem:[%s3 + $0x18] sm:$0xff] %v859
  %892 = vst [vmem:[%s3 + $0x20] sm:$0xff] %v860
  %893 = vst [vmem:[%s3 + $0x28] sm:$0xff] %v861
  %894 = vst [vmem:[%s3 + $0x30] sm:$0xff] %v862
  %895 = vst [vmem:[%s3 + $0x38] sm:$0xff] %v863
  %896 = vst [vmem:[%s3 + $0x40] sm:$0xff] %v864
  %897 = vst [vmem:[%s3 + $0x48] sm:$0xff] %v865
  %898 = vst [vmem:[%s3 + $0x50] sm:$0xff] %v866
  %899 = vst [vmem:[%s3 + $0x58] sm:$0xff] %v867
  %900 = vst [vmem:[%s3 + $0x60] sm:$0xff] %v868
  %901 = vst [vmem:[%s3 + $0x68] sm:$0xff] %v869
  %902 = vst [vmem:[%s3 + $0x70] sm:$0xff] %v870
  %903 = vst [vmem:[%s3 + $0x78] sm:$0xff] %v871
  %904 = vst [vmem:[%s3 + $0x80] sm:$0xff] %v872
  %905 = vst [vmem:[%s3 + $0x88] sm:$0xff] %v873
  %906 = vst [vmem:[%s3 + $0x90] sm:$0xff] %v874
  %907 = vst [vmem:[%s3 + $0x98] sm:$0xff] %v875
  %908 = vst [vmem:[%s3 + $0xa0] sm:$0xff] %v876
  %909 = vst [vmem:[%s3 + $0xa8] sm:$0xff] %v877
  %910 = vst [vmem:[%s3 + $0xb0] sm:$0xff] %v878
  %911 = vst [vmem:[%s3 + $0xb8] sm:$0xff] %v879
  %912 = vst [vmem:[%s3 + $0xc0] sm:$0xff] %v880
  %913 = vst [vmem:[%s3 + $0xc8] sm:$0xff] %v881
  %914 = vst [vmem:[%s3 + $0xd0] sm:$0xff] %v882
  %915 = vst [vmem:[%s3 + $0xd8] sm:$0xff] %v883
  %916 = vst [vmem:[%s3 + $0xe0] sm:$0xff] %v884
  %917 = vst [vmem:[%s3 + $0xe8] sm:$0xff] %v885
  %918 = vst [vmem:[%s3 + $0xf0] sm:$0xff] %v886
  %919 = vst [vmem:[%s3 + $0xf8] sm:$0xff] %v887
  // Predicated region
  $region14: #{compen_rt_forward.15} parent=0 // pred_check
    _
  $region15: #{compen_rt_forward.15} parent=0 // pred_check_branch
    %921 = sbr.rel (0) target = $region17
  $region16: #{compen_rt_forward.15} parent=0 // pred_region
    _
  $region17: #{compen_rt_forward.15} parent=0 // pred_fallthru
    _
  // Predicated region
  $region18: #{compen_rt_forward.15} parent=0 // pred_check
    _
  $region19: #{compen_rt_forward.15} parent=0 // pred_check_branch
    %923 = sbr.rel (0) target = $region21
  $region20: #{compen_rt_forward.15} parent=0 // pred_region
    _
  $region21: #{compen_rt_forward.15} parent=0 // pred_fallthru
    _

// kernel: compen_rt_forward.16
$region0: #{compen_rt_forward.16}
  #allocation0 [shape = 'u32[]', space=smem, size = 0x4, offset = 0x4, fixed_abs, tag = 'smem constant byte address 0x4 - core index']
  #allocation1 [shape = 'u32[144,128]{1,0:T(1,128)}', space=vmem, size = 0x12000, scoped, tag = 'internal scratch']
  #allocation2 [shape = 'f32[256,128]{1,0:T(8,128)}', space=vmem, size = 0x20000, scoped, tag = 'scratch operand']
  %s0 = inlined_call_operand.vmem [shape: bf16[256,768], index: 0, kind: input, shape index: {}]
  %s1 = inlined_call_operand.vmem [shape: bf16[768,128], index: 1, kind: input, shape index: {}]
  %s2 = inlined_call_operand.vmem [shape: f32[1,128], index: 2, kind: input, shape index: {}]
  %s3 = inlined_call_operand.vmem [shape: f32[256,128], index: 3, kind: output, shape index: {}]
  %s4 = sld [smem:[#allocation0]]
  $region91: #{compen_rt_forward.16} parent=0
    _
  %s6 = ssub.s32 1, %s4
  %s7 = scalar_select 0, %s6, %s4
  $region1: #{compen_rt_forward.16} parent=0
    #allocation3 [shape = 'u8[262144]{0}', space=vmem, size = 0x40000, scoped, tag = 'input window, operand 0']
    loop: start=0, step=1, limit=5
    $region2: #{compen_rt_forward.16} parent=1 // loop_pre_header
      _
    $region3: #{compen_rt_forward.16} parent=1 // loop_header
      %s9 = sphi 0, %s13
      %p10 = scmp.ge.s32.totalorder %s9, 5
      %s16 = sphi 0, %s35
      %s17 = sphi 0, %s31
      %s18 = sphi 0, %s27
      %s19 = sphi 0, %s16
      %s20 = sphi 0, %s17
      %s21 = sphi 0, %s18
      %s22 = sphi 0, %s19
      %s23 = sphi 0, %s20
      %s24 = sphi 0, %s21
      %s40 = sphi 0, %s42
      %s43 = sphi 0, %s40
      %s44 = sphi 0, %s43
      %s60 = sphi 0, %s44
      %s68 = sphi 0, %s70
      %s71 = sphi 0, %s68
      %s72 = sphi 0, %s71
      %s88 = sphi 0, %s72
      %s94 = sphi 0, %s96
      %s97 = sphi 0, %s94
      %s98 = sphi 0, %s97
      %s114 = sphi 0, %s98
      %s122 = sphi 0, %s124
      %s125 = sphi 0, %s122
      %s126 = sphi 0, %s125
      %s142 = sphi 0, %s126
    $region4: #{compen_rt_forward.16} parent=1 // loop_header_branch
      %12 = sbr.rel (%p10) target = $region8
    $region5: #{compen_rt_forward.16} parent=1 // loop_body
      %s14 = ssub.s32 %s9, 1
      %s15 = ssub.s32 %s9, 2
      %s25 = sadd.s32 1, %s18
      %p26 = scmp.ge.s32.totalorder %s25, 3
      %s27 = scalar_select %p26, 0, %s25
      %s28 = sadd.s32 1, %s17
      %s29 = scalar_select %p26, %s28, %s17
      %p30 = scmp.ge.s32.totalorder %s29, 1
      %s31 = scalar_select %p30, 0, %s29
      %s32 = sadd.s32 1, %s16
      %s33 = scalar_select %p30, %s32, %s16
      %p34 = scmp.ge.s32.totalorder %s33, 1
      %s35 = scalar_select %p34, 0, %s33
      %s36 = ssub.s32 %s16, %s35
      %s37 = ssub.s32 %s18, %s27
      %s38 = sor.u32 %s36, %s37
      %p39 = scmp.eq.s32.totalorder %s38, 0
      %s41 = sadd.s32 %s40, 1
      %s42 = scalar_select %p39, %s40, %s41
      %p45 = pneg %p39
      %p46 = scmp.eq.s32.totalorder %s9, 2
      %p47 = por %p45, %p46
      %p48 = scmp.ne.s32.totalorder %s40, %s43
      %p49 = scmp.eq.s32.totalorder %s9, 0
      %p50 = por %p48, %p49
      %p51 = scmp.ne.s32.totalorder %s40, %s43
      %p52 = scmp.eq.s32.totalorder %s14, 2
      %p53 = por %p51, %p52
      %p54 = scmp.ne.s32.totalorder %s43, %s44
      %p55 = scmp.eq.s32.totalorder %s14, 0
      %p56 = por %p54, %p55
      %p57 = scmp.ne.s32.totalorder %s43, %s44
      %p58 = scmp.eq.s32.totalorder %s15, 2
      %p59 = por %p57, %p58
      %p61 = scmp.ne.s32.totalorder %s44, %s60
      %p62 = scmp.eq.s32.totalorder %s15, 0
      %p63 = por %p61, %p62
      %s64 = ssub.s32 %s18, %s27
      %s65 = ssub.s32 %s17, %s31
      %s66 = sor.u32 %s64, %s65
      %p67 = scmp.eq.s32.totalorder %s66, 0
      %s69 = sadd.s32 %s68, 1
      %s70 = scalar_select %p67, %s68, %s69
      %p73 = pneg %p67
      %p74 = scmp.eq.s32.totalorder %s9, 2
      %p75 = por %p73, %p74
      %p76 = scmp.ne.s32.totalorder %s68, %s71
      %p77 = scmp.eq.s32.totalorder %s9, 0
      %p78 = por %p76, %p77
      %p79 = scmp.ne.s32.totalorder %s68, %s71
      %p80 = scmp.eq.s32.totalorder %s14, 2
      %p81 = por %p79, %p80
      %p82 = scmp.ne.s32.totalorder %s71, %s72
      %p83 = scmp.eq.s32.totalorder %s14, 0
      %p84 = por %p82, %p83
      %p85 = scmp.ne.s32.totalorder %s71, %s72
      %p86 = scmp.eq.s32.totalorder %s15, 2
      %p87 = por %p85, %p86
      %p89 = scmp.ne.s32.totalorder %s72, %s88
      %p90 = scmp.eq.s32.totalorder %s15, 0
      %p91 = por %p89, %p90
      %s92 = ssub.s32 %s17, %s31
      %p93 = scmp.eq.s32.totalorder %s92, 0
      %s95 = sadd.s32 %s94, 1
      %s96 = scalar_select %p93, %s94, %s95
      %p99 = pneg %p93
      %p100 = scmp.eq.s32.totalorder %s9, 2
      %p101 = por %p99, %p100
      %p102 = scmp.ne.s32.totalorder %s94, %s97
      %p103 = scmp.eq.s32.totalorder %s9, 0
      %p104 = por %p102, %p103
      %p105 = scmp.ne.s32.totalorder %s94, %s97
      %p106 = scmp.eq.s32.totalorder %s14, 2
      %p107 = por %p105, %p106
      %p108 = scmp.ne.s32.totalorder %s97, %s98
      %p109 = scmp.eq.s32.totalorder %s14, 0
      %p110 = por %p108, %p109
      %p111 = scmp.ne.s32.totalorder %s97, %s98
      %p112 = scmp.eq.s32.totalorder %s15, 2
      %p113 = por %p111, %p112
      %p115 = scmp.ne.s32.totalorder %s98, %s114
      %p116 = scmp.eq.s32.totalorder %s15, 0
      %p117 = por %p115, %p116
      %s118 = ssub.s32 %s16, %s35
      %s119 = ssub.s32 %s17, %s31
      %s120 = sor.u32 %s118, %s119
      %p121 = scmp.eq.s32.totalorder %s120, 0
      %s123 = sadd.s32 %s122, 1
      %s124 = scalar_select %p121, %s122, %s123
      %p127 = pneg %p121
      %p128 = scmp.eq.s32.totalorder %s9, 2
      %p129 = por %p127, %p128
      %p130 = scmp.ne.s32.totalorder %s122, %s125
      %p131 = scmp.eq.s32.totalorder %s9, 0
      %p132 = por %p130, %p131
      %p133 = scmp.ne.s32.totalorder %s122, %s125
      %p134 = scmp.eq.s32.totalorder %s14, 2
      %p135 = por %p133, %p134
      %p136 = scmp.ne.s32.totalorder %s125, %s126
      %p137 = scmp.eq.s32.totalorder %s14, 0
      %p138 = por %p136, %p137
      %p139 = scmp.ne.s32.totalorder %s125, %s126
      %p140 = scmp.eq.s32.totalorder %s15, 2
      %p141 = por %p139, %p140
      %p143 = scmp.ne.s32.totalorder %s126, %s142
      %p144 = scmp.eq.s32.totalorder %s15, 0
      %p145 = por %p143, %p144
      %p146 = scmp.le.s32.totalorder 1, %s9
      %p147 = scmp.lt.s32.totalorder %s9, 4
      %p148 = pnand %p146, %p147
      %p149 = pneg %p148
      // Predicated region
      $region9: #{compen_rt_forward.16} parent=5 // pred_check
        _
      $region10: #{compen_rt_forward.16} parent=5 // pred_check_branch
        %151 = sbr.rel (%p148) target = $region12
      $region11: #{compen_rt_forward.16} parent=5 // pred_region
        %s152 = ssub.s32 %s9, 1
        // Predicated region
        $region13: #{compen_rt_forward.16} parent=11 // pred_check
          %p153 = pneg %p110
        $region14: #{compen_rt_forward.16} parent=11 // pred_check_branch
          %155 = sbr.rel (%p153) target = $region16
        $region15: #{compen_rt_forward.16} parent=11 // pred_region
          %p156 = scmp.lt.s32.totalorder %s20, 0
          %s157 = scalar_select %p156, %s20, 0
          %s158 = scalar_lea.vmem %s2, %s157
        $region16: #{compen_rt_forward.16} parent=11 // pred_fallthru
          _
      $region12: #{compen_rt_forward.16} parent=5 // pred_fallthru
        _
      %p159 = scmp.lt.s32.totalorder %s9, 3
      // Predicated region
      $region17: #{compen_rt_forward.16} parent=5 // pred_check
        %p160 = pneg %p159
      $region18: #{compen_rt_forward.16} parent=5 // pred_check_branch
        %162 = sbr.rel (%p160) target = $region20
      $region19: #{compen_rt_forward.16} parent=5 // pred_region
        // Predicated region
        $region21: #{compen_rt_forward.16} parent=19 // pred_check
          %p163 = pneg %p50
        $region22: #{compen_rt_forward.16} parent=19 // pred_check_branch
          %165 = sbr.rel (%p163) target = $region24
        $region23: #{compen_rt_forward.16} parent=19 // pred_region
          %s166 = sand.u32 %s40, 1
          %s167 = sand.u32 %s40, 1
          %s168 = smul.addr %s167, 256
          %s169 = scalar_lea.vmem [#allocation3], %s168
          %s170 = smul.u32 32, %s16
          %s171 = smul.u32 2, %s18
          %s172 = smul.addr %s170, 6
          %s173 = sadd.s32 %s171, %s172
          %s174 = smul.addr %s173, 4
          %s175 = scalar_lea.vmem %s0, %s174
          // Predicated region
          $region25: #{compen_rt_forward.16} parent=23 // pred_check
            _
          $region26: #{compen_rt_forward.16} parent=23 // pred_check_branch
            %177 = sbr.rel (0) target = $region28
          $region27: #{compen_rt_forward.16} parent=23 // pred_region
            // Predicated region
            $region29: #{compen_rt_forward.16} parent=27 // pred_check
              _
            $region30: #{compen_rt_forward.16} parent=27 // pred_check_branch
              %179 = sbr.rel (0) target = $region32
            $region31: #{compen_rt_forward.16} parent=27 // pred_region
              // Predicated region
              $region44: #{compen_rt_forward.16} parent=31 // pred_check
                _
              $region45: #{compen_rt_forward.16} parent=31 // pred_check_branch
                %257 = sbr.rel (0) target = $region47
              $region46: #{compen_rt_forward.16} parent=31 // pred_region
                loop: start=0, step=1, limit=1
                $region48: #{compen_rt_forward.16} parent=46 // loop_pre_header
                  _
                $region49: #{compen_rt_forward.16} parent=46 // loop_header
                  %s259 = sphi 0, %s263
                  %p260 = scmp.ge.s32.totalorder %s259, 1
                  %s264 = sphi %s175, %s175
                  %s265 = sphi %s169, %s169
                $region50: #{compen_rt_forward.16} parent=46 // loop_header_branch
                  %262 = sbr.rel (%p260) target = $region54
                $region51: #{compen_rt_forward.16} parent=46 // loop_body
                  %v266 = vld [vmem:[%s264] sm:$0xff]
                  %267 = vst [vmem:[%s265] sm:$0xff] %v266
                  %v268 = vld [vmem:[%s264 + $0x18] sm:$0xff]
                  %269 = vst [vmem:[%s265 + $0x8] sm:$0xff] %v268
                  %v270 = vld [vmem:[%s264 + $0x30] sm:$0xff]
                  %271 = vst [vmem:[%s265 + $0x10] sm:$0xff] %v270
                  %v272 = vld [vmem:[%s264 + $0x48] sm:$0xff]
                  %273 = vst [vmem:[%s265 + $0x18] sm:$0xff] %v272
                  %v274 = vld [vmem:[%s264 + $0x60] sm:$0xff]
                  %275 = vst [vmem:[%s265 + $0x20] sm:$0xff] %v274
                  %v276 = vld [vmem:[%s264 + $0x78] sm:$0xff]
                  %277 = vst [vmem:[%s265 + $0x28] sm:$0xff] %v276
                  %v278 = vld [vmem:[%s264 + $0x90] sm:$0xff]
                  %279 = vst [vmem:[%s265 + $0x30] sm:$0xff] %v278
                  %v280 = vld [vmem:[%s264 + $0xa8] sm:$0xff]
                  %281 = vst [vmem:[%s265 + $0x38] sm:$0xff] %v280
                  %v282 = vld [vmem:[%s264 + $0xc0] sm:$0xff]
                  %283 = vst [vmem:[%s265 + $0x40] sm:$0xff] %v282
                  %v284 = vld [vmem:[%s264 + $0xd8] sm:$0xff]
                  %285 = vst [vmem:[%s265 + $0x48] sm:$0xff] %v284
                  %v286 = vld [vmem:[%s264 + $0xf0] sm:$0xff]
                  %287 = vst [vmem:[%s265 + $0x50] sm:$0xff] %v286
                  %v288 = vld [vmem:[%s264 + $0x108] sm:$0xff]
                  %289 = vst [vmem:[%s265 + $0x58] sm:$0xff] %v288
                  %v290 = vld [vmem:[%s264 + $0x120] sm:$0xff]
                  %291 = vst [vmem:[%s265 + $0x60] sm:$0xff] %v290
                  %v292 = vld [vmem:[%s264 + $0x138] sm:$0xff]
                  %293 = vst [vmem:[%s265 + $0x68] sm:$0xff] %v292
                  %v294 = vld [vmem:[%s264 + $0x150] sm:$0xff]
                  %295 = vst [vmem:[%s265 + $0x70] sm:$0xff] %v294
                  %v296 = vld [vmem:[%s264 + $0x168] sm:$0xff]
                  %297 = vst [vmem:[%s265 + $0x78] sm:$0xff] %v296
                  %v298 = vld [vmem:[%s264 + $0x180] sm:$0xff]
                  %299 = vst [vmem:[%s265 + $0x80] sm:$0xff] %v298
                  %v300 = vld [vmem:[%s264 + $0x198] sm:$0xff]
                  %301 = vst [vmem:[%s265 + $0x88] sm:$0xff] %v300
                  %v302 = vld [vmem:[%s264 + $0x1b0] sm:$0xff]
                  %303 = vst [vmem:[%s265 + $0x90] sm:$0xff] %v302
                  %v304 = vld [vmem:[%s264 + $0x1c8] sm:$0xff]
                  %305 = vst [vmem:[%s265 + $0x98] sm:$0xff] %v304
                  %v306 = vld [vmem:[%s264 + $0x1e0] sm:$0xff]
                  %307 = vst [vmem:[%s265 + $0xa0] sm:$0xff] %v306
                  %v308 = vld [vmem:[%s264 + $0x1f8] sm:$0xff]
                  %309 = vst [vmem:[%s265 + $0xa8] sm:$0xff] %v308
                  %v310 = vld [vmem:[%s264 + $0x210] sm:$0xff]
                  %311 = vst [vmem:[%s265 + $0xb0] sm:$0xff] %v310
                  %v312 = vld [vmem:[%s264 + $0x228] sm:$0xff]
                  %313 = vst [vmem:[%s265 + $0xb8] sm:$0xff] %v312
                  %v314 = vld [vmem:[%s264 + $0x240] sm:$0xff]
                  %315 = vst [vmem:[%s265 + $0xc0] sm:$0xff] %v314
                  %v316 = vld [vmem:[%s264 + $0x258] sm:$0xff]
                  %317 = vst [vmem:[%s265 + $0xc8] sm:$0xff] %v316
                  %v318 = vld [vmem:[%s264 + $0x270] sm:$0xff]
                  %319 = vst [vmem:[%s265 + $0xd0] sm:$0xff] %v318
                  %v320 = vld [vmem:[%s264 + $0x288] sm:$0xff]
                  %321 = vst [vmem:[%s265 + $0xd8] sm:$0xff] %v320
                  %v322 = vld [vmem:[%s264 + $0x2a0] sm:$0xff]
                  %323 = vst [vmem:[%s265 + $0xe0] sm:$0xff] %v322
                  %v324 = vld [vmem:[%s264 + $0x2b8] sm:$0xff]
                  %325 = vst [vmem:[%s265 + $0xe8] sm:$0xff] %v324
                  %v326 = vld [vmem:[%s264 + $0x2d0] sm:$0xff]
                  %327 = vst [vmem:[%s265 + $0xf0] sm:$0xff] %v326
                  %v328 = vld [vmem:[%s264 + $0x2e8] sm:$0xff]
                  %329 = vst [vmem:[%s265 + $0xf8] sm:$0xff] %v328
                $region52: #{compen_rt_forward.16} parent=46 // loop_footer
                  %s263 = sadd.s32 1, %s259
                $region53: #{compen_rt_forward.16} parent=46 // loop_footer_branch
                  %258 = sbr.rel target = $region49
                $region54: #{compen_rt_forward.16} parent=46 // loop_exit
                  _
              $region47: #{compen_rt_forward.16} parent=31 // pred_fallthru
                _
              // Predicated region
              $region55: #{compen_rt_forward.16} parent=31 // pred_check
                _
              $region56: #{compen_rt_forward.16} parent=31 // pred_check_branch
                %331 = sbr.rel target = $region58
              $region57: #{compen_rt_forward.16} parent=31 // pred_region
                _
              $region58: #{compen_rt_forward.16} parent=31 // pred_fallthru
                _
            $region32: #{compen_rt_forward.16} parent=27 // pred_fallthru
              _
            // Predicated region
            $region33: #{compen_rt_forward.16} parent=27 // pred_check
              _
            $region34: #{compen_rt_forward.16} parent=27 // pred_check_branch
              %181 = sbr.rel target = $region36
            $region35: #{compen_rt_forward.16} parent=27 // pred_region
              %s183 = ssub.s32 256, 1
              loop: start=0, step=1, limit=1
              $region37: #{compen_rt_forward.16} parent=35 // loop_pre_header
                _
              $region38: #{compen_rt_forward.16} parent=35 // loop_header
                %s185 = sphi 0, %s189
                %p186 = scmp.ge.s32.totalorder %s185, 1
                %s190 = sphi %s175, %s175
                %s191 = sphi %s169, %s169
              $region39: #{compen_rt_forward.16} parent=35 // loop_header_branch
                %188 = sbr.rel (%p186) target = $region43
              $region40: #{compen_rt_forward.16} parent=35 // loop_body
                %v192 = vld [vmem:[%s190] sm:%s183]
                %193 = vst [vmem:[%s191] sm:%s183] %v192
                %v194 = vld [vmem:[%s190 + $0x18] sm:%s183]
                %195 = vst [vmem:[%s191 + $0x8] sm:%s183] %v194
                %v196 = vld [vmem:[%s190 + $0x30] sm:%s183]
                %197 = vst [vmem:[%s191 + $0x10] sm:%s183] %v196
                %v198 = vld [vmem:[%s190 + $0x48] sm:%s183]
                %199 = vst [vmem:[%s191 + $0x18] sm:%s183] %v198
                %v200 = vld [vmem:[%s190 + $0x60] sm:%s183]
                %201 = vst [vmem:[%s191 + $0x20] sm:%s183] %v200
                %v202 = vld [vmem:[%s190 + $0x78] sm:%s183]
                %203 = vst [vmem:[%s191 + $0x28] sm:%s183] %v202
                %v204 = vld [vmem:[%s190 + $0x90] sm:%s183]
                %205 = vst [vmem:[%s191 + $0x30] sm:%s183] %v204
                %v206 = vld [vmem:[%s190 + $0xa8] sm:%s183]
                %207 = vst [vmem:[%s191 + $0x38] sm:%s183] %v206
                %v208 = vld [vmem:[%s190 + $0xc0] sm:%s183]
                %209 = vst [vmem:[%s191 + $0x40] sm:%s183] %v208
                %v210 = vld [vmem:[%s190 + $0xd8] sm:%s183]
                %211 = vst [vmem:[%s191 + $0x48] sm:%s183] %v210
                %v212 = vld [vmem:[%s190 + $0xf0] sm:%s183]
                %213 = vst [vmem:[%s191 + $0x50] sm:%s183] %v212
                %v214 = vld [vmem:[%s190 + $0x108] sm:%s183]
                %215 = vst [vmem:[%s191 + $0x58] sm:%s183] %v214
                %v216 = vld [vmem:[%s190 + $0x120] sm:%s183]
                %217 = vst [vmem:[%s191 + $0x60] sm:%s183] %v216
                %v218 = vld [vmem:[%s190 + $0x138] sm:%s183]
                %219 = vst [vmem:[%s191 + $0x68] sm:%s183] %v218
                %v220 = vld [vmem:[%s190 + $0x150] sm:%s183]
                %221 = vst [vmem:[%s191 + $0x70] sm:%s183] %v220
                %v222 = vld [vmem:[%s190 + $0x168] sm:%s183]
                %223 = vst [vmem:[%s191 + $0x78] sm:%s183] %v222
                %v224 = vld [vmem:[%s190 + $0x180] sm:%s183]
                %225 = vst [vmem:[%s191 + $0x80] sm:%s183] %v224
                %v226 = vld [vmem:[%s190 + $0x198] sm:%s183]
                %227 = vst [vmem:[%s191 + $0x88] sm:%s183] %v226
                %v228 = vld [vmem:[%s190 + $0x1b0] sm:%s183]
                %229 = vst [vmem:[%s191 + $0x90] sm:%s183] %v228
                %v230 = vld [vmem:[%s190 + $0x1c8] sm:%s183]
                %231 = vst [vmem:[%s191 + $0x98] sm:%s183] %v230
                %v232 = vld [vmem:[%s190 + $0x1e0] sm:%s183]
                %233 = vst [vmem:[%s191 + $0xa0] sm:%s183] %v232
                %v234 = vld [vmem:[%s190 + $0x1f8] sm:%s183]
                %235 = vst [vmem:[%s191 + $0xa8] sm:%s183] %v234
                %v236 = vld [vmem:[%s190 + $0x210] sm:%s183]
                %237 = vst [vmem:[%s191 + $0xb0] sm:%s183] %v236
                %v238 = vld [vmem:[%s190 + $0x228] sm:%s183]
                %239 = vst [vmem:[%s191 + $0xb8] sm:%s183] %v238
                %v240 = vld [vmem:[%s190 + $0x240] sm:%s183]
                %241 = vst [vmem:[%s191 + $0xc0] sm:%s183] %v240
                %v242 = vld [vmem:[%s190 + $0x258] sm:%s183]
                %243 = vst [vmem:[%s191 + $0xc8] sm:%s183] %v242
                %v244 = vld [vmem:[%s190 + $0x270] sm:%s183]
                %245 = vst [vmem:[%s191 + $0xd0] sm:%s183] %v244
                %v246 = vld [vmem:[%s190 + $0x288] sm:%s183]
                %247 = vst [vmem:[%s191 + $0xd8] sm:%s183] %v246
                %v248 = vld [vmem:[%s190 + $0x2a0] sm:%s183]
                %249 = vst [vmem:[%s191 + $0xe0] sm:%s183] %v248
                %v250 = vld [vmem:[%s190 + $0x2b8] sm:%s183]
                %251 = vst [vmem:[%s191 + $0xe8] sm:%s183] %v250
                %v252 = vld [vmem:[%s190 + $0x2d0] sm:%s183]
                %253 = vst [vmem:[%s191 + $0xf0] sm:%s183] %v252
                %v254 = vld [vmem:[%s190 + $0x2e8] sm:%s183]
                %255 = vst [vmem:[%s191 + $0xf8] sm:%s183] %v254
              $region41: #{compen_rt_forward.16} parent=35 // loop_footer
                %s189 = sadd.s32 1, %s185
              $region42: #{compen_rt_forward.16} parent=35 // loop_footer_branch
                %184 = sbr.rel target = $region38
              $region43: #{compen_rt_forward.16} parent=35 // loop_exit
                _
            $region36: #{compen_rt_forward.16} parent=27 // pred_fallthru
              _
          $region28: #{compen_rt_forward.16} parent=23 // pred_fallthru
            _
          %332 = vnop
        $region24: #{compen_rt_forward.16} parent=19 // pred_fallthru
          _
        // Predicated region
        $region59: #{compen_rt_forward.16} parent=19 // pred_check
          %p333 = pneg %p78
        $region60: #{compen_rt_forward.16} parent=19 // pred_check_branch
          %335 = sbr.rel (%p333) target = $region62
        $region61: #{compen_rt_forward.16} parent=19 // pred_region
          %s336 = smul.u32 32, %s18
          %p337 = scmp.lt.s32.totalorder %s336, 95
          %s338 = scalar_select %p337, %s336, 95
          %p339 = scmp.lt.s32.totalorder %s17, 0
          %s340 = scalar_select %p339, %s17, 0
          %s341 = sadd.s32 %s340, %s338
          %s342 = smul.addr %s341, 4
          %s343 = scalar_lea.vmem %s1, %s342
          %s344 = smul.u32 32, %s18
        $region62: #{compen_rt_forward.16} parent=19 // pred_fallthru
          _
      $region20: #{compen_rt_forward.16} parent=5 // pred_fallthru
        _
      %p345 = scmp.le.s32.totalorder 1, %s9
      %p346 = scmp.lt.s32.totalorder %s9, 4
      %p347 = pnand %p345, %p346
      %p348 = pneg %p347
      // Predicated region
      $region63: #{compen_rt_forward.16} parent=5 // pred_check
        _
      $region64: #{compen_rt_forward.16} parent=5 // pred_check_branch
        %350 = sbr.rel (%p347) target = $region66
      $region65: #{compen_rt_forward.16} parent=5 // pred_region
        %s351 = ssub.s32 %s9, 1
        %s352 = sand.u32 %s43, 1
        %s353 = sand.u32 %s43, 1
        %s354 = smul.addr %s353, 256
        %s355 = scalar_lea.vmem [#allocation3], %s354
        // Predicated region
        $region67: #{compen_rt_forward.16} parent=65 // pred_check
          %p356 = pneg %p56
        $region68: #{compen_rt_forward.16} parent=65 // pred_check_branch
          %358 = sbr.rel (%p356) target = $region70
        $region69: #{compen_rt_forward.16} parent=65 // pred_region
          _
        $region70: #{compen_rt_forward.16} parent=65 // pred_fallthru
          _
        %s359 = sand.u32 %s43, 1
        %s360 = sand.u32 %s43, 1
        %s361 = smul.addr %s360, 256
        %s362 = scalar_lea.vmem [#allocation3], %s361
        %p363 = pneg %p56
        %p364 = pneg %p53
        %s365 = smul.u32 32, %s21
        %p366 = scmp.lt.s32.totalorder %s365, 95
        %s367 = scalar_select %p366, %s365, 95
        %p368 = scmp.lt.s32.totalorder %s20, 0
        %s369 = scalar_select %p368, %s20, 0
        %s370 = sadd.s32 %s369, %s367
        %s371 = smul.addr %s370, 4
        %s372 = scalar_lea.vmem %s1, %s371
        %p373 = pneg %p84
        %p374 = pneg %p81
        %p375 = scmp.lt.s32.totalorder %s20, 0
        %s376 = scalar_select %p375, %s20, 0
        %s377 = scalar_lea.vmem %s2, %s376
        %p378 = pneg %p110
        %p379 = pneg %p107
        %p380 = pneg %p138
        %p381 = pneg %p135
        %s382 = smul.u32 32, %s19
        %p383 = scmp.lt.s32.totalorder %s382, 31
        %s384 = scalar_select %p383, %s382, 31
        %p385 = scmp.lt.s32.totalorder %s20, 0
        %s386 = scalar_select %p385, %s20, 0
        %s387 = sadd.s32 %s386, %s384
        %s388 = smul.addr %s387, 8
        %s389 = scalar_lea.vmem %s3, %s388
        %s390 = smul.u32 32, %s19
        %s391 = smul.u32 2, %s21
        %s392 = smul.u32 32, %s21
        %p393 = scmp.lt.s32.totalorder %s392, 95
        %s394 = scalar_select %p393, %s392, 95
        %p395 = scmp.lt.s32.totalorder %s20, 0
        %s396 = scalar_select %p395, %s20, 0
        %s397 = sadd.s32 %s396, %s394
        %s398 = smul.addr %s397, 4
        %s399 = scalar_lea.vmem %s1, %s398
        %s400 = smul.u32 32, %s21
        %p401 = scmp.lt.s32.totalorder %s20, 0
        %s402 = scalar_select %p401, %s20, 0
        %s403 = scalar_lea.vmem %s2, %s402
        %s404 = smul.u32 32, %s19
        %p405 = scmp.lt.s32.totalorder %s404, 31
        %s406 = scalar_select %p405, %s404, 31
        %p407 = scmp.lt.s32.totalorder %s20, 0
        %s408 = scalar_select %p407, %s20, 0
        %s409 = sadd.s32 %s408, %s406
        %s410 = smul.addr %s409, 8
        %s411 = scalar_lea.vmem %s3, %s410
        %s412 = smul.u32 32, %s19
        %p414 = scmp.eq.s32.totalorder %s21, 0
        // Predicated region
        $region71: #{compen_rt_forward.16} parent=65 // pred_check
          %p415 = pneg %p414
        $region72: #{compen_rt_forward.16} parent=65 // pred_check_branch
          %417 = sbr.rel (%p415) target = $region74
        $region73: #{compen_rt_forward.16} parent=65 // pred_region
          %v418 = vld [vmem:[%s403] sm:$0x1]
          %v420 = vlaneseq
          %v421 = vshrl.u32 %v420, 7
          %v422 = vsub.s32 0, %v421
          %v423 = vrot.slane %v418, %v422
          %v425 = vadd.f32 %v423, 0.0
          %426 = vst [vmem:[#allocation2] sm:$0xff] %v425
          %427 = vst [vmem:[#allocation2 + $0x8] sm:$0xff] %v425
          %428 = vst [vmem:[#allocation2 + $0x10] sm:$0xff] %v425
          %429 = vst [vmem:[#allocation2 + $0x18] sm:$0xff] %v425
          %430 = vst [vmem:[#allocation2 + $0x20] sm:$0xff] %v425
          %431 = vst [vmem:[#allocation2 + $0x28] sm:$0xff] %v425
          %432 = vst [vmem:[#allocation2 + $0x30] sm:$0xff] %v425
          %433 = vst [vmem:[#allocation2 + $0x38] sm:$0xff] %v425
          %434 = vst [vmem:[#allocation2 + $0x40] sm:$0xff] %v425
          %435 = vst [vmem:[#allocation2 + $0x48] sm:$0xff] %v425
          %436 = vst [vmem:[#allocation2 + $0x50] sm:$0xff] %v425
          %437 = vst [vmem:[#allocation2 + $0x58] sm:$0xff] %v425
          %438 = vst [vmem:[#allocation2 + $0x60] sm:$0xff] %v425
          %439 = vst [vmem:[#allocation2 + $0x68] sm:$0xff] %v425
          %440 = vst [vmem:[#allocation2 + $0x70] sm:$0xff] %v425
          %441 = vst [vmem:[#allocation2 + $0x78] sm:$0xff] %v425
          %442 = vst [vmem:[#allocation2 + $0x80] sm:$0xff] %v425
          %443 = vst [vmem:[#allocation2 + $0x88] sm:$0xff] %v425
          %444 = vst [vmem:[#allocation2 + $0x90] sm:$0xff] %v425
          %445 = vst [vmem:[#allocation2 + $0x98] sm:$0xff] %v425
          %446 = vst [vmem:[#allocation2 + $0xa0] sm:$0xff] %v425
          %447 = vst [vmem:[#allocation2 + $0xa8] sm:$0xff] %v425
          %448 = vst [vmem:[#allocation2 + $0xb0] sm:$0xff] %v425
          %449 = vst [vmem:[#allocation2 + $0xb8] sm:$0xff] %v425
          %450 = vst [vmem:[#allocation2 + $0xc0] sm:$0xff] %v425
          %451 = vst [vmem:[#allocation2 + $0xc8] sm:$0xff] %v425
          %452 = vst [vmem:[#allocation2 + $0xd0] sm:$0xff] %v425
          %453 = vst [vmem:[#allocation2 + $0xd8] sm:$0xff] %v425
          %454 = vst [vmem:[#allocation2 + $0xe0] sm:$0xff] %v425
          %455 = vst [vmem:[#allocation2 + $0xe8] sm:$0xff] %v425
          %456 = vst [vmem:[#allocation2 + $0xf0] sm:$0xff] %v425
          %457 = vst [vmem:[#allocation2 + $0xf8] sm:$0xff] %v425
        $region74: #{compen_rt_forward.16} parent=65 // pred_fallthru
          _
        %v458 = vld [vmem:[#allocation2] sm:$0xff]
        %v459 = vld [vmem:[#allocation2 + $0x8] sm:$0xff]
        %v460 = vld [vmem:[#allocation2 + $0x10] sm:$0xff]
        %v461 = vld [vmem:[#allocation2 + $0x18] sm:$0xff]
        %v462 = vld [vmem:[#allocation2 + $0x20] sm:$0xff]
        %v463 = vld [vmem:[#allocation2 + $0x28] sm:$0xff]
        %v464 = vld [vmem:[#allocation2 + $0x30] sm:$0xff]
        %v465 = vld [vmem:[#allocation2 + $0x38] sm:$0xff]
        %v466 = vld [vmem:[#allocation2 + $0x40] sm:$0xff]
        %v467 = vld [vmem:[#allocation2 + $0x48] sm:$0xff]
        %v468 = vld [vmem:[#allocation2 + $0x50] sm:$0xff]
        %v469 = vld [vmem:[#allocation2 + $0x58] sm:$0xff]
        %v470 = vld [vmem:[#allocation2 + $0x60] sm:$0xff]
        %v471 = vld [vmem:[#allocation2 + $0x68] sm:$0xff]
        %v472 = vld [vmem:[#allocation2 + $0x70] sm:$0xff]
        %v473 = vld [vmem:[#allocation2 + $0x78] sm:$0xff]
        %v474 = vld [vmem:[#allocation2 + $0x80] sm:$0xff]
        %v475 = vld [vmem:[#allocation2 + $0x88] sm:$0xff]
        %v476 = vld [vmem:[#allocation2 + $0x90] sm:$0xff]
        %v477 = vld [vmem:[#allocation2 + $0x98] sm:$0xff]
        %v478 = vld [vmem:[#allocation2 + $0xa0] sm:$0xff]
        %v479 = vld [vmem:[#allocation2 + $0xa8] sm:$0xff]
        %v480 = vld [vmem:[#allocation2 + $0xb0] sm:$0xff]
        %v481 = vld [vmem:[#allocation2 + $0xb8] sm:$0xff]
        %v482 = vld [vmem:[#allocation2 + $0xc0] sm:$0xff]
        %v483 = vld [vmem:[#allocation2 + $0xc8] sm:$0xff]
        %v484 = vld [vmem:[#allocation2 + $0xd0] sm:$0xff]
        %v485 = vld [vmem:[#allocation2 + $0xd8] sm:$0xff]
        %v486 = vld [vmem:[#allocation2 + $0xe0] sm:$0xff]
        %v487 = vld [vmem:[#allocation2 + $0xe8] sm:$0xff]
        %v488 = vld [vmem:[#allocation2 + $0xf0] sm:$0xff]
        %v489 = vld [vmem:[#allocation2 + $0xf8] sm:$0xff]
        %v490 = vld [vmem:[%s355] sm:$0xff]
        %v491 = vld [vmem:[%s355 + $0x8] sm:$0xff]
        %v492 = vld [vmem:[%s355 + $0x10] sm:$0xff]
        %v493 = vld [vmem:[%s355 + $0x18] sm:$0xff]
        %v494 = vld [vmem:[%s355 + $0x20] sm:$0xff]
        %v495 = vld [vmem:[%s355 + $0x28] sm:$0xff]
        %v496 = vld [vmem:[%s355 + $0x30] sm:$0xff]
        %v497 = vld [vmem:[%s355 + $0x38] sm:$0xff]
        %v498 = vld [vmem:[%s355 + $0x40] sm:$0xff]
        %v499 = vld [vmem:[%s355 + $0x48] sm:$0xff]
        %v500 = vld [vmem:[%s355 + $0x50] sm:$0xff]
        %v501 = vld [vmem:[%s355 + $0x58] sm:$0xff]
        %v502 = vld [vmem:[%s355 + $0x60] sm:$0xff]
        %v503 = vld [vmem:[%s355 + $0x68] sm:$0xff]
        %v504 = vld [vmem:[%s355 + $0x70] sm:$0xff]
        %v505 = vld [vmem:[%s355 + $0x78] sm:$0xff]
        %v506 = vld [vmem:[%s355 + $0x80] sm:$0xff]
        %v507 = vld [vmem:[%s355 + $0x88] sm:$0xff]
        %v508 = vld [vmem:[%s355 + $0x90] sm:$0xff]
        %v509 = vld [vmem:[%s355 + $0x98] sm:$0xff]
        %v510 = vld [vmem:[%s355 + $0xa0] sm:$0xff]
        %v511 = vld [vmem:[%s355 + $0xa8] sm:$0xff]
        %v512 = vld [vmem:[%s355 + $0xb0] sm:$0xff]
        %v513 = vld [vmem:[%s355 + $0xb8] sm:$0xff]
        %v514 = vld [vmem:[%s355 + $0xc0] sm:$0xff]
        %v515 = vld [vmem:[%s355 + $0xc8] sm:$0xff]
        %v516 = vld [vmem:[%s355 + $0xd0] sm:$0xff]
        %v517 = vld [vmem:[%s355 + $0xd8] sm:$0xff]
        %v518 = vld [vmem:[%s355 + $0xe0] sm:$0xff]
        %v519 = vld [vmem:[%s355 + $0xe8] sm:$0xff]
        %v520 = vld [vmem:[%s355 + $0xf0] sm:$0xff]
        %v521 = vld [vmem:[%s355 + $0xf8] sm:$0xff]
        %v522 = vld [vmem:[%s399] sm:$0xf]
        %v523 = vld [vmem:[%s399 + $0x4] sm:$0xf]
        %v524 = vld [vmem:[%s399 + $0x8] sm:$0xf]
        %v525 = vld [vmem:[%s399 + $0xc] sm:$0xf]
        %v526 = vld [vmem:[%s399 + $0x10] sm:$0xf]
        %v527 = vld [vmem:[%s399 + $0x14] sm:$0xf]
        %v528 = vld [vmem:[%s399 + $0x18] sm:$0xf]
        %v529 = vld [vmem:[%s399 + $0x1c] sm:$0xf]
        %v530 = vld [vmem:[%s399 + $0x20] sm:$0xf]
        %v531 = vld [vmem:[%s399 + $0x24] sm:$0xf]
        %v532 = vld [vmem:[%s399 + $0x28] sm:$0xf]
        %v533 = vld [vmem:[%s399 + $0x2c] sm:$0xf]
        %v534 = vld [vmem:[%s399 + $0x30] sm:$0xf]
        %v535 = vld [vmem:[%s399 + $0x34] sm:$0xf]
        %v536 = vld [vmem:[%s399 + $0x38] sm:$0xf]
        %v537 = vld [vmem:[%s399 + $0x3c] sm:$0xf]
        %v538 = vld [vmem:[%s399 + $0x40] sm:$0xf]
        %v539 = vld [vmem:[%s399 + $0x44] sm:$0xf]
        %v540 = vld [vmem:[%s399 + $0x48] sm:$0xf]
        %v541 = vld [vmem:[%s399 + $0x4c] sm:$0xf]
        %v542 = vld [vmem:[%s399 + $0x50] sm:$0xf]
        %v543 = vld [vmem:[%s399 + $0x54] sm:$0xf]
        %v544 = vld [vmem:[%s399 + $0x58] sm:$0xf]
        %v545 = vld [vmem:[%s399 + $0x5c] sm:$0xf]
        %v546 = vld [vmem:[%s399 + $0x60] sm:$0xf]
        %v547 = vld [vmem:[%s399 + $0x64] sm:$0xf]
        %v548 = vld [vmem:[%s399 + $0x68] sm:$0xf]
        %v549 = vld [vmem:[%s399 + $0x6c] sm:$0xf]
        %v550 = vld [vmem:[%s399 + $0x70] sm:$0xf]
        %v551 = vld [vmem:[%s399 + $0x74] sm:$0xf]
        %v552 = vld [vmem:[%s399 + $0x78] sm:$0xf]
        %v553 = vld [vmem:[%s399 + $0x7c] sm:$0xf]
        %v586 = vunpack.c.l.b16 %v490
        %v587 = vunpack.c.h.b16 %v490
        %v588 = vunpack.c.l.b16 %v491
        %v589 = vunpack.c.h.b16 %v491
        %v590 = vunpack.c.l.b16 %v492
        %v591 = vunpack.c.h.b16 %v492
        %v592 = vunpack.c.l.b16 %v493
        %v593 = vunpack.c.h.b16 %v493
        %v594 = vunpack.c.l.b16 %v494
        %v595 = vunpack.c.h.b16 %v494
        %v596 = vunpack.c.l.b16 %v495
        %v597 = vunpack.c.h.b16 %v495
        %v598 = vunpack.c.l.b16 %v496
        %v599 = vunpack.c.h.b16 %v496
        %v600 = vunpack.c.l.b16 %v497
        %v601 = vunpack.c.h.b16 %v497
        %v602 = vunpack.c.l.b16 %v498
        %v603 = vunpack.c.h.b16 %v498
        %v604 = vunpack.c.l.b16 %v499
        %v605 = vunpack.c.h.b16 %v499
        %v606 = vunpack.c.l.b16 %v500
        %v607 = vunpack.c.h.b16 %v500
        %v608 = vunpack.c.l.b16 %v501
        %v609 = vunpack.c.h.b16 %v501
        %v610 = vunpack.c.l.b16 %v502
        %v611 = vunpack.c.h.b16 %v502
        %v612 = vunpack.c.l.b16 %v503
        %v613 = vunpack.c.h.b16 %v503
        %v614 = vunpack.c.l.b16 %v504
        %v615 = vunpack.c.h.b16 %v504
        %v616 = vunpack.c.l.b16 %v505
        %v617 = vunpack.c.h.b16 %v505
        %v618 = vunpack.c.l.b16 %v506
        %v619 = vunpack.c.h.b16 %v506
        %v620 = vunpack.c.l.b16 %v507
        %v621 = vunpack.c.h.b16 %v507
        %v622 = vunpack.c.l.b16 %v508
        %v623 = vunpack.c.h.b16 %v508
        %v624 = vunpack.c.l.b16 %v509
        %v625 = vunpack.c.h.b16 %v509
        %v626 = vunpack.c.l.b16 %v510
        %v627 = vunpack.c.h.b16 %v510
        %v628 = vunpack.c.l.b16 %v511
        %v629 = vunpack.c.h.b16 %v511
        %v630 = vunpack.c.l.b16 %v512
        %v631 = vunpack.c.h.b16 %v512
        %v632 = vunpack.c.l.b16 %v513
        %v633 = vunpack.c.h.b16 %v513
        %v634 = vunpack.c.l.b16 %v514
        %v635 = vunpack.c.h.b16 %v514
        %v636 = vunpack.c.l.b16 %v515
        %v637 = vunpack.c.h.b16 %v515
        %v638 = vunpack.c.l.b16 %v516
        %v639 = vunpack.c.h.b16 %v516
        %v640 = vunpack.c.l.b16 %v517
        %v641 = vunpack.c.h.b16 %v517
        %v642 = vunpack.c.l.b16 %v518
        %v643 = vunpack.c.h.b16 %v518
        %v644 = vunpack.c.l.b16 %v519
        %v645 = vunpack.c.h.b16 %v519
        %v646 = vunpack.c.l.b16 %v520
        %v647 = vunpack.c.h.b16 %v520
        %v648 = vunpack.c.l.b16 %v521
        %v649 = vunpack.c.h.b16 %v521
        %v650 = vpack.c.b16 %v588, %v586
        %v651 = vpack.c.b16 %v589, %v587
        %v652 = vpack.c.b16 %v592, %v590
        %v653 = vpack.c.b16 %v593, %v591
        %v654 = vpack.c.b16 %v596, %v594
        %v655 = vpack.c.b16 %v597, %v595
        %v656 = vpack.c.b16 %v600, %v598
        %v657 = vpack.c.b16 %v601, %v599
        %v658 = vpack.c.b16 %v604, %v602
        %v659 = vpack.c.b16 %v605, %v603
        %v660 = vpack.c.b16 %v608, %v606
        %v661 = vpack.c.b16 %v609, %v607
        %v662 = vpack.c.b16 %v612, %v610
        %v663 = vpack.c.b16 %v613, %v611
        %v664 = vpack.c.b16 %v616, %v614
        %v665 = vpack.c.b16 %v617, %v615
        %v666 = vpack.c.b16 %v620, %v618
        %v667 = vpack.c.b16 %v621, %v619
        %v668 = vpack.c.b16 %v624, %v622
        %v669 = vpack.c.b16 %v625, %v623
        %v670 = vpack.c.b16 %v628, %v626
        %v671 = vpack.c.b16 %v629, %v627
        %v672 = vpack.c.b16 %v632, %v630
        %v673 = vpack.c.b16 %v633, %v631
        %v674 = vpack.c.b16 %v636, %v634
        %v675 = vpack.c.b16 %v637, %v635
        %v676 = vpack.c.b16 %v640, %v638
        %v677 = vpack.c.b16 %v641, %v639
        %v678 = vpack.c.b16 %v644, %v642
        %v679 = vpack.c.b16 %v645, %v643
        %v680 = vpack.c.b16 %v648, %v646
        %v681 = vpack.c.b16 %v649, %v647
        %v746 = vunpack.c.l.b16 %v522
        %v747 = vunpack.c.l.b16 %v523
        %v748 = vunpack.c.l.b16 %v524
        %v749 = vunpack.c.l.b16 %v525
        %v750 = vunpack.c.l.b16 %v526
        %v751 = vunpack.c.l.b16 %v527
        %v752 = vunpack.c.l.b16 %v528
        %v753 = vunpack.c.l.b16 %v529
        %v754 = vunpack.c.l.b16 %v530
        %v755 = vunpack.c.l.b16 %v531
        %v756 = vunpack.c.l.b16 %v532
        %v757 = vunpack.c.l.b16 %v533
        %v758 = vunpack.c.l.b16 %v534
        %v759 = vunpack.c.l.b16 %v535
        %v760 = vunpack.c.l.b16 %v536
        %v761 = vunpack.c.l.b16 %v537
        %v762 = vunpack.c.l.b16 %v538
        %v763 = vunpack.c.l.b16 %v539
        %v764 = vunpack.c.l.b16 %v540
        %v765 = vunpack.c.l.b16 %v541
        %v766 = vunpack.c.l.b16 %v542
        %v767 = vunpack.c.l.b16 %v543
        %v768 = vunpack.c.l.b16 %v544
        %v769 = vunpack.c.l.b16 %v545
        %v770 = vunpack.c.l.b16 %v546
        %v771 = vunpack.c.l.b16 %v547
        %v772 = vunpack.c.l.b16 %v548
        %v773 = vunpack.c.l.b16 %v549
        %v774 = vunpack.c.l.b16 %v550
        %v775 = vunpack.c.l.b16 %v551
        %v776 = vunpack.c.l.b16 %v552
        %v777 = vunpack.c.l.b16 %v553
        %v778 = vpack.c.b16 %v747, %v746
        %v779 = vpack.c.b16 %v749, %v748
        %v780 = vpack.c.b16 %v751, %v750
        %v781 = vpack.c.b16 %v753, %v752
        %v782 = vpack.c.b16 %v755, %v754
        %v783 = vpack.c.b16 %v757, %v756
        %v784 = vpack.c.b16 %v759, %v758
        %v785 = vpack.c.b16 %v761, %v760
        %v786 = vpack.c.b16 %v763, %v762
        %v787 = vpack.c.b16 %v765, %v764
        %v788 = vpack.c.b16 %v767, %v766
        %v789 = vpack.c.b16 %v769, %v768
        %v790 = vpack.c.b16 %v771, %v770
        %v791 = vpack.c.b16 %v773, %v772
        %v792 = vpack.c.b16 %v775, %v774
        %v793 = vpack.c.b16 %v777, %v776
        %810 = vmatprep.subr.bf16.mxu0 0
        %811 = vmatpush1.bf16.msra.mxu0 %v785
        %812 = vmatprep.subr.bf16.mxu0 0
        %813 = vmatpush1.bf16.msra.mxu0 %v784
        %814 = vmatprep.subr.bf16.mxu0 0
        %815 = vmatpush1.bf16.msra.mxu0 %v783
        %816 = vmatprep.subr.bf16.mxu0 0
        %817 = vmatpush1.bf16.msra.mxu0 %v782
        %818 = vmatprep.subr.bf16.mxu0 0
        %819 = vmatpush1.bf16.msra.mxu0 %v781
        %820 = vmatprep.subr.bf16.mxu0 0
        %821 = vmatpush1.bf16.msra.mxu0 %v780
        %822 = vmatprep.subr.bf16.mxu0 0
        %823 = vmatpush1.bf16.msra.mxu0 %v779
        %824 = vmatprep.subr.bf16.mxu0 0
        %825 = vmatpush1.bf16.msra.mxu0 %v778
        %826 = vmatprep.subr.bf16.mxu0 0
        %827 = vmatpush2.bf16.msra.mxu0 %v793
        %828 = vmatprep.subr.bf16.mxu0 0
        %829 = vmatpush2.bf16.msra.mxu0 %v792
        %830 = vmatprep.subr.bf16.mxu0 0
        %831 = vmatpush2.bf16.msra.mxu0 %v791
        %832 = vmatprep.subr.bf16.mxu0 0
        %833 = vmatpush2.bf16.msra.mxu0 %v790
        %834 = vmatprep.subr.bf16.mxu0 0
        %835 = vmatpush2.bf16.msra.mxu0 %v789
        %836 = vmatprep.subr.bf16.mxu0 0
        %837 = vmatpush2.bf16.msra.mxu0 %v788
        %838 = vmatprep.subr.bf16.mxu0 0
        %839 = vmatpush2.bf16.msra.mxu0 %v787
        %840 = vmatprep.subr.bf16.mxu0 0
        %841 = vmatpush2.bf16.msra.mxu0 %v786
        %842 = vmatprep.mubr.bf16.mxu0 %v651
        %843 = vmatmul.mubr.bf16.gmra.mxu0 %v650
        %v844 = vpop.f32.mrf.mxu0
        %v845 = vadd.f32 0.0, %v844
        %v846 = vpop.f32.mrf.mxu0
        %v847 = vpop.f32.mrf.mxu0
        %v848 = vadd.f32 0.0, %v847
        %v849 = vpop.f32.mrf.mxu0
        %850 = vmatprep.mubr.bf16.mxu0 %v653
        %851 = vmatmul.mubr.bf16.gmra.mxu0 %v652
        %v852 = vpop.f32.mrf.mxu0
        %v853 = vadd.f32 0.0, %v852
        %v854 = vpop.f32.mrf.mxu0
        %v855 = vpop.f32.mrf.mxu0
        %v856 = vadd.f32 0.0, %v855
        %v857 = vpop.f32.mrf.mxu0
        %858 = vmatprep.mubr.bf16.mxu0 %v655
        %859 = vmatmul.mubr.bf16.gmra.mxu0 %v654
        %v860 = vpop.f32.mrf.mxu0
        %v861 = vadd.f32 0.0, %v860
        %v862 = vpop.f32.mrf.mxu0
        %v863 = vpop.f32.mrf.mxu0
        %v864 = vadd.f32 0.0, %v863
        %v865 = vpop.f32.mrf.mxu0
        %866 = vmatprep.mubr.bf16.mxu0 %v657
        %867 = vmatmul.mubr.bf16.gmra.mxu0 %v656
        %v868 = vpop.f32.mrf.mxu0
        %v869 = vadd.f32 0.0, %v868
        %v870 = vpop.f32.mrf.mxu0
        %v871 = vpop.f32.mrf.mxu0
        %v872 = vadd.f32 0.0, %v871
        %v873 = vpop.f32.mrf.mxu0
        %874 = vmatprep.mubr.bf16.mxu0 %v659
        %875 = vmatmul.mubr.bf16.gmra.mxu0 %v658
        %v876 = vpop.f32.mrf.mxu0
        %v877 = vadd.f32 0.0, %v876
        %v878 = vpop.f32.mrf.mxu0
        %v879 = vpop.f32.mrf.mxu0
        %v880 = vadd.f32 0.0, %v879
        %v881 = vpop.f32.mrf.mxu0
        %882 = vmatprep.mubr.bf16.mxu0 %v661
        %883 = vmatmul.mubr.bf16.gmra.mxu0 %v660
        %v884 = vpop.f32.mrf.mxu0
        %v885 = vadd.f32 0.0, %v884
        %v886 = vpop.f32.mrf.mxu0
        %v887 = vpop.f32.mrf.mxu0
        %v888 = vadd.f32 0.0, %v887
        %v889 = vpop.f32.mrf.mxu0
        %890 = vmatprep.mubr.bf16.mxu0 %v663
        %891 = vmatmul.mubr.bf16.gmra.mxu0 %v662
        %v892 = vpop.f32.mrf.mxu0
        %v893 = vadd.f32 0.0, %v892
        %v894 = vpop.f32.mrf.mxu0
        %v895 = vpop.f32.mrf.mxu0
        %v896 = vadd.f32 0.0, %v895
        %v897 = vpop.f32.mrf.mxu0
        %898 = vmatprep.mubr.bf16.mxu0 %v665
        %899 = vmatmul.mubr.bf16.gmra.mxu0 %v664
        %v900 = vpop.f32.mrf.mxu0
        %v901 = vadd.f32 0.0, %v900
        %v902 = vpop.f32.mrf.mxu0
        %v903 = vpop.f32.mrf.mxu0
        %v904 = vadd.f32 0.0, %v903
        %v905 = vpop.f32.mrf.mxu0
        %906 = vmatprep.mubr.bf16.mxu0 %v667
        %907 = vmatmul.mubr.bf16.gmra.mxu0 %v666
        %v908 = vpop.f32.mrf.mxu0
        %v909 = vadd.f32 0.0, %v908
        %v910 = vpop.f32.mrf.mxu0
        %v911 = vpop.f32.mrf.mxu0
        %v912 = vadd.f32 0.0, %v911
        %v913 = vpop.f32.mrf.mxu0
        %914 = vmatprep.mubr.bf16.mxu0 %v669
        %915 = vmatmul.mubr.bf16.gmra.mxu0 %v668
        %v916 = vpop.f32.mrf.mxu0
        %v917 = vadd.f32 0.0, %v916
        %v918 = vpop.f32.mrf.mxu0
        %v919 = vpop.f32.mrf.mxu0
        %v920 = vadd.f32 0.0, %v919
        %v921 = vpop.f32.mrf.mxu0
        %922 = vmatprep.mubr.bf16.mxu0 %v671
        %923 = vmatmul.mubr.bf16.gmra.mxu0 %v670
        %v924 = vpop.f32.mrf.mxu0
        %v925 = vadd.f32 0.0, %v924
        %v926 = vpop.f32.mrf.mxu0
        %v927 = vpop.f32.mrf.mxu0
        %v928 = vadd.f32 0.0, %v927
        %v929 = vpop.f32.mrf.mxu0
        %930 = vmatprep.mubr.bf16.mxu0 %v673
        %931 = vmatmul.mubr.bf16.gmra.mxu0 %v672
        %v932 = vpop.f32.mrf.mxu0
        %v933 = vadd.f32 0.0, %v932
        %v934 = vpop.f32.mrf.mxu0
        %v935 = vpop.f32.mrf.mxu0
        %v936 = vadd.f32 0.0, %v935
        %v937 = vpop.f32.mrf.mxu0
        %938 = vmatprep.mubr.bf16.mxu0 %v675
        %939 = vmatmul.mubr.bf16.gmra.mxu0 %v674
        %v940 = vpop.f32.mrf.mxu0
        %v941 = vadd.f32 0.0, %v940
        %v942 = vpop.f32.mrf.mxu0
        %v943 = vpop.f32.mrf.mxu0
        %v944 = vadd.f32 0.0, %v943
        %v945 = vpop.f32.mrf.mxu0
        %946 = vmatprep.mubr.bf16.mxu0 %v677
        %947 = vmatmul.mubr.bf16.gmra.mxu0 %v676
        %v948 = vpop.f32.mrf.mxu0
        %v949 = vadd.f32 0.0, %v948
        %v950 = vpop.f32.mrf.mxu0
        %v951 = vpop.f32.mrf.mxu0
        %v952 = vadd.f32 0.0, %v951
        %v953 = vpop.f32.mrf.mxu0
        %954 = vmatprep.mubr.bf16.mxu0 %v679
        %955 = vmatmul.mubr.bf16.gmra.mxu0 %v678
        %v956 = vpop.f32.mrf.mxu0
        %v957 = vadd.f32 0.0, %v956
        %v958 = vpop.f32.mrf.mxu0
        %v959 = vpop.f32.mrf.mxu0
        %v960 = vadd.f32 0.0, %v959
        %v961 = vpop.f32.mrf.mxu0
        %962 = vmatprep.mubr.bf16.mxu0 %v681
        %963 = vmatmul.mubr.bf16.gmra.mxu0 %v680
        %v964 = vpop.f32.mrf.mxu0
        %v965 = vadd.f32 0.0, %v964
        %v966 = vpop.f32.mrf.mxu0
        %v967 = vpop.f32.mrf.mxu0
        %v968 = vadd.f32 0.0, %v967
        %v969 = vpop.f32.mrf.mxu0
        %970 = vdwg.mxu0
        %v971 = vadd.f32 %v458, %v845
        %v972 = vadd.f32 %v459, %v848
        %v973 = vadd.f32 %v460, %v853
        %v974 = vadd.f32 %v461, %v856
        %v975 = vadd.f32 %v462, %v861
        %v976 = vadd.f32 %v463, %v864
        %v977 = vadd.f32 %v464, %v869
        %v978 = vadd.f32 %v465, %v872
        %v979 = vadd.f32 %v466, %v877
        %v980 = vadd.f32 %v467, %v880
        %v981 = vadd.f32 %v468, %v885
        %v982 = vadd.f32 %v469, %v888
        %v983 = vadd.f32 %v470, %v893
        %v984 = vadd.f32 %v471, %v896
        %v985 = vadd.f32 %v472, %v901
        %v986 = vadd.f32 %v473, %v904
        %v987 = vadd.f32 %v474, %v909
        %v988 = vadd.f32 %v475, %v912
        %v989 = vadd.f32 %v476, %v917
        %v990 = vadd.f32 %v477, %v920
        %v991 = vadd.f32 %v478, %v925
        %v992 = vadd.f32 %v479, %v928
        %v993 = vadd.f32 %v480, %v933
        %v994 = vadd.f32 %v481, %v936
        %v995 = vadd.f32 %v482, %v941
        %v996 = vadd.f32 %v483, %v944
        %v997 = vadd.f32 %v484, %v949
        %v998 = vadd.f32 %v485, %v952
        %v999 = vadd.f32 %v486, %v957
        %v1000 = vadd.f32 %v487, %v960
        %v1001 = vadd.f32 %v488, %v965
        %v1002 = vadd.f32 %v489, %v968
        %1003 = vst [vmem:[#allocation2] sm:$0xff] %v971
        %1004 = vst [vmem:[#allocation2 + $0x8] sm:$0xff] %v972
        %1005 = vst [vmem:[#allocation2 + $0x10] sm:$0xff] %v973
        %1006 = vst [vmem:[#allocation2 + $0x18] sm:$0xff] %v974
        %1007 = vst [vmem:[#allocation2 + $0x20] sm:$0xff] %v975
        %1008 = vst [vmem:[#allocation2 + $0x28] sm:$0xff] %v976
        %1009 = vst [vmem:[#allocation2 + $0x30] sm:$0xff] %v977
        %1010 = vst [vmem:[#allocation2 + $0x38] sm:$0xff] %v978
        %1011 = vst [vmem:[#allocation2 + $0x40] sm:$0xff] %v979
        %1012 = vst [vmem:[#allocation2 + $0x48] sm:$0xff] %v980
        %1013 = vst [vmem:[#allocation2 + $0x50] sm:$0xff] %v981
        %1014 = vst [vmem:[#allocation2 + $0x58] sm:$0xff] %v982
        %1015 = vst [vmem:[#allocation2 + $0x60] sm:$0xff] %v983
        %1016 = vst [vmem:[#allocation2 + $0x68] sm:$0xff] %v984
        %1017 = vst [vmem:[#allocation2 + $0x70] sm:$0xff] %v985
        %1018 = vst [vmem:[#allocation2 + $0x78] sm:$0xff] %v986
        %1019 = vst [vmem:[#allocation2 + $0x80] sm:$0xff] %v987
        %1020 = vst [vmem:[#allocation2 + $0x88] sm:$0xff] %v988
        %1021 = vst [vmem:[#allocation2 + $0x90] sm:$0xff] %v989
        %1022 = vst [vmem:[#allocation2 + $0x98] sm:$0xff] %v990
        %1023 = vst [vmem:[#allocation2 + $0xa0] sm:$0xff] %v991
        %1024 = vst [vmem:[#allocation2 + $0xa8] sm:$0xff] %v992
        %1025 = vst [vmem:[#allocation2 + $0xb0] sm:$0xff] %v993
        %1026 = vst [vmem:[#allocation2 + $0xb8] sm:$0xff] %v994
        %1027 = vst [vmem:[#allocation2 + $0xc0] sm:$0xff] %v995
        %1028 = vst [vmem:[#allocation2 + $0xc8] sm:$0xff] %v996
        %1029 = vst [vmem:[#allocation2 + $0xd0] sm:$0xff] %v997
        %1030 = vst [vmem:[#allocation2 + $0xd8] sm:$0xff] %v998
        %1031 = vst [vmem:[#allocation2 + $0xe0] sm:$0xff] %v999
        %1032 = vst [vmem:[#allocation2 + $0xe8] sm:$0xff] %v1000
        %1033 = vst [vmem:[#allocation2 + $0xf0] sm:$0xff] %v1001
        %1034 = vst [vmem:[#allocation2 + $0xf8] sm:$0xff] %v1002
        %p1035 = scmp.eq.s32.totalorder %s21, 2
        // Predicated region
        $region75: #{compen_rt_forward.16} parent=65 // pred_check
          %p1036 = pneg %p1035
        $region76: #{compen_rt_forward.16} parent=65 // pred_check_branch
          %1038 = sbr.rel (%p1036) target = $region78
        $region77: #{compen_rt_forward.16} parent=65 // pred_region
          %v1039 = vld [vmem:[#allocation2] sm:$0xff]
          %v1040 = vld [vmem:[#allocation2 + $0x8] sm:$0xff]
          %v1041 = vld [vmem:[#allocation2 + $0x10] sm:$0xff]
          %v1042 = vld [vmem:[#allocation2 + $0x18] sm:$0xff]
          %v1043 = vld [vmem:[#allocation2 + $0x20] sm:$0xff]
          %v1044 = vld [vmem:[#allocation2 + $0x28] sm:$0xff]
          %v1045 = vld [vmem:[#allocation2 + $0x30] sm:$0xff]
          %v1046 = vld [vmem:[#allocation2 + $0x38] sm:$0xff]
          %v1047 = vld [vmem:[#allocation2 + $0x40] sm:$0xff]
          %v1048 = vld [vmem:[#allocation2 + $0x48] sm:$0xff]
          %v1049 = vld [vmem:[#allocation2 + $0x50] sm:$0xff]
          %v1050 = vld [vmem:[#allocation2 + $0x58] sm:$0xff]
          %v1051 = vld [vmem:[#allocation2 + $0x60] sm:$0xff]
          %v1052 = vld [vmem:[#allocation2 + $0x68] sm:$0xff]
          %v1053 = vld [vmem:[#allocation2 + $0x70] sm:$0xff]
          %v1054 = vld [vmem:[#allocation2 + $0x78] sm:$0xff]
          %v1055 = vld [vmem:[#allocation2 + $0x80] sm:$0xff]
          %v1056 = vld [vmem:[#allocation2 + $0x88] sm:$0xff]
          %v1057 = vld [vmem:[#allocation2 + $0x90] sm:$0xff]
          %v1058 = vld [vmem:[#allocation2 + $0x98] sm:$0xff]
          %v1059 = vld [vmem:[#allocation2 + $0xa0] sm:$0xff]
          %v1060 = vld [vmem:[#allocation2 + $0xa8] sm:$0xff]
          %v1061 = vld [vmem:[#allocation2 + $0xb0] sm:$0xff]
          %v1062 = vld [vmem:[#allocation2 + $0xb8] sm:$0xff]
          %v1063 = vld [vmem:[#allocation2 + $0xc0] sm:$0xff]
          %v1064 = vld [vmem:[#allocation2 + $0xc8] sm:$0xff]
          %v1065 = vld [vmem:[#allocation2 + $0xd0] sm:$0xff]
          %v1066 = vld [vmem:[#allocation2 + $0xd8] sm:$0xff]
          %v1067 = vld [vmem:[#allocation2 + $0xe0] sm:$0xff]
          %v1068 = vld [vmem:[#allocation2 + $0xe8] sm:$0xff]
          %v1069 = vld [vmem:[#allocation2 + $0xf0] sm:$0xff]
          %v1070 = vld [vmem:[#allocation2 + $0xf8] sm:$0xff]
          %1071 = vst [vmem:[%s411] sm:$0xff] %v1039
          %1072 = vst [vmem:[%s411 + $0x8] sm:$0xff] %v1040
          %1073 = vst [vmem:[%s411 + $0x10] sm:$0xff] %v1041
          %1074 = vst [vmem:[%s411 + $0x18] sm:$0xff] %v1042
          %1075 = vst [vmem:[%s411 + $0x20] sm:$0xff] %v1043
          %1076 = vst [vmem:[%s411 + $0x28] sm:$0xff] %v1044
          %1077 = vst [vmem:[%s411 + $0x30] sm:$0xff] %v1045
          %1078 = vst [vmem:[%s411 + $0x38] sm:$0xff] %v1046
          %1079 = vst [vmem:[%s411 + $0x40] sm:$0xff] %v1047
          %1080 = vst [vmem:[%s411 + $0x48] sm:$0xff] %v1048
          %1081 = vst [vmem:[%s411 + $0x50] sm:$0xff] %v1049
          %1082 = vst [vmem:[%s411 + $0x58] sm:$0xff] %v1050
          %1083 = vst [vmem:[%s411 + $0x60] sm:$0xff] %v1051
          %1084 = vst [vmem:[%s411 + $0x68] sm:$0xff] %v1052
          %1085 = vst [vmem:[%s411 + $0x70] sm:$0xff] %v1053
          %1086 = vst [vmem:[%s411 + $0x78] sm:$0xff] %v1054
          %1087 = vst [vmem:[%s411 + $0x80] sm:$0xff] %v1055
          %1088 = vst [vmem:[%s411 + $0x88] sm:$0xff] %v1056
          %1089 = vst [vmem:[%s411 + $0x90] sm:$0xff] %v1057
          %1090 = vst [vmem:[%s411 + $0x98] sm:$0xff] %v1058
          %1091 = vst [vmem:[%s411 + $0xa0] sm:$0xff] %v1059
          %1092 = vst [vmem:[%s411 + $0xa8] sm:$0xff] %v1060
          %1093 = vst [vmem:[%s411 + $0xb0] sm:$0xff] %v1061
          %1094 = vst [vmem:[%s411 + $0xb8] sm:$0xff] %v1062
          %1095 = vst [vmem:[%s411 + $0xc0] sm:$0xff] %v1063
          %1096 = vst [vmem:[%s411 + $0xc8] sm:$0xff] %v1064
          %1097 = vst [vmem:[%s411 + $0xd0] sm:$0xff] %v1065
          %1098 = vst [vmem:[%s411 + $0xd8] sm:$0xff] %v1066
          %1099 = vst [vmem:[%s411 + $0xe0] sm:$0xff] %v1067
          %1100 = vst [vmem:[%s411 + $0xe8] sm:$0xff] %v1068
          %1101 = vst [vmem:[%s411 + $0xf0] sm:$0xff] %v1069
          %1102 = vst [vmem:[%s411 + $0xf8] sm:$0xff] %v1070
        $region78: #{compen_rt_forward.16} parent=65 // pred_fallthru
          _
        %s1103 = smul.u32 32, %s19
        %p1104 = scmp.lt.s32.totalorder %s1103, 31
        %s1105 = scalar_select %p1104, %s1103, 31
        %p1106 = scmp.lt.s32.totalorder %s20, 0
        %s1107 = scalar_select %p1106, %s20, 0
        %s1108 = sadd.s32 %s1107, %s1105
        %s1109 = smul.addr %s1108, 8
        %s1110 = scalar_lea.vmem %s3, %s1109
        // Predicated region
        $region79: #{compen_rt_forward.16} parent=65 // pred_check
          %p1111 = pneg %p135
        $region80: #{compen_rt_forward.16} parent=65 // pred_check_branch
          %1113 = sbr.rel (%p1111) target = $region82
        $region81: #{compen_rt_forward.16} parent=65 // pred_region
          %s1114 = smul.u32 32, %s19
        $region82: #{compen_rt_forward.16} parent=65 // pred_fallthru
          _
        // Predicated region
        $region83: #{compen_rt_forward.16} parent=65 // pred_check
          %p1115 = pneg %p135
        $region84: #{compen_rt_forward.16} parent=65 // pred_check_branch
          %1117 = sbr.rel (%p1115) target = $region86
        $region85: #{compen_rt_forward.16} parent=65 // pred_region
          %s1118 = smul.u32 32, %s19
          %p1119 = scmp.lt.s32.totalorder %s1118, 31
          %s1120 = scalar_select %p1119, %s1118, 31
          %p1121 = scmp.lt.s32.totalorder %s20, 0
          %s1122 = scalar_select %p1121, %s20, 0
          %s1123 = sadd.s32 %s1122, %s1120
          %s1124 = smul.addr %s1123, 8
          %s1125 = scalar_lea.vmem %s3, %s1124
        $region86: #{compen_rt_forward.16} parent=65 // pred_fallthru
          _
      $region66: #{compen_rt_forward.16} parent=5 // pred_fallthru
        _
      %p1126 = scmp.le.s32.totalorder 2, %s9
      // Predicated region
      $region87: #{compen_rt_forward.16} parent=5 // pred_check
        %p1127 = pneg %p1126
      $region88: #{compen_rt_forward.16} parent=5 // pred_check_branch
        %1129 = sbr.rel (%p1127) target = $region90
      $region89: #{compen_rt_forward.16} parent=5 // pred_region
        %s1130 = ssub.s32 %s9, 2
      $region90: #{compen_rt_forward.16} parent=5 // pred_fallthru
        _
    $region6: #{compen_rt_forward.16} parent=1 // loop_footer
      %s13 = sadd.s32 1, %s9
    $region7: #{compen_rt_forward.16} parent=1 // loop_footer_branch
      %8 = sbr.rel target = $region3
    $region8: #{compen_rt_forward.16} parent=1 // loop_exit
      _

// kernel: compen_rt_forward.17
$region0: #{compen_rt_forward.17}
  #allocation0 [shape = 'u32[]', space=smem, size = 0x4, offset = 0x4, fixed_abs, tag = 'smem constant byte address 0x4 - core index']
  #allocation1 [shape = 'u32[144,128]{1,0:T(1,128)}', space=vmem, size = 0x12000, scoped, tag = 'internal scratch']
  #allocation2 [shape = 'f32[128,128]{1,0:T(8,128)}', space=vmem, size = 0x10000, scoped, tag = 'scratch operand']
  %s0 = inlined_call_operand.vmem [shape: bf16[128,1280], index: 0, kind: input, shape index: {}]
  %s1 = inlined_call_operand.vmem [shape: bf16[1280,128], index: 1, kind: input, shape index: {}]
  %s2 = inlined_call_operand.vmem [shape: f32[1,128], index: 2, kind: input, shape index: {}]
  %s3 = inlined_call_operand.vmem [shape: f32[128,128], index: 3, kind: output, shape index: {}]
  %s4 = sld [smem:[#allocation0]]
  $region91: #{compen_rt_forward.17} parent=0
    _
  %s6 = ssub.s32 1, %s4
  %s7 = scalar_select 0, %s6, %s4
  $region1: #{compen_rt_forward.17} parent=0
    #allocation3 [shape = 'u8[131072]{0}', space=vmem, size = 0x20000, scoped, tag = 'input window, operand 0']
    loop: start=0, step=1, limit=7
    $region2: #{compen_rt_forward.17} parent=1 // loop_pre_header
      _
    $region3: #{compen_rt_forward.17} parent=1 // loop_header
      %s9 = sphi 0, %s13
      %p10 = scmp.ge.s32.totalorder %s9, 7
      %s16 = sphi 0, %s35
      %s17 = sphi 0, %s31
      %s18 = sphi 0, %s27
      %s19 = sphi 0, %s16
      %s20 = sphi 0, %s17
      %s21 = sphi 0, %s18
      %s22 = sphi 0, %s19
      %s23 = sphi 0, %s20
      %s24 = sphi 0, %s21
      %s40 = sphi 0, %s42
      %s43 = sphi 0, %s40
      %s44 = sphi 0, %s43
      %s60 = sphi 0, %s44
      %s68 = sphi 0, %s70
      %s71 = sphi 0, %s68
      %s72 = sphi 0, %s71
      %s88 = sphi 0, %s72
      %s94 = sphi 0, %s96
      %s97 = sphi 0, %s94
      %s98 = sphi 0, %s97
      %s114 = sphi 0, %s98
      %s122 = sphi 0, %s124
      %s125 = sphi 0, %s122
      %s126 = sphi 0, %s125
      %s142 = sphi 0, %s126
    $region4: #{compen_rt_forward.17} parent=1 // loop_header_branch
      %12 = sbr.rel (%p10) target = $region8
    $region5: #{compen_rt_forward.17} parent=1 // loop_body
      %s14 = ssub.s32 %s9, 1
      %s15 = ssub.s32 %s9, 2
      %s25 = sadd.s32 1, %s18
      %p26 = scmp.ge.s32.totalorder %s25, 5
      %s27 = scalar_select %p26, 0, %s25
      %s28 = sadd.s32 1, %s17
      %s29 = scalar_select %p26, %s28, %s17
      %p30 = scmp.ge.s32.totalorder %s29, 1
      %s31 = scalar_select %p30, 0, %s29
      %s32 = sadd.s32 1, %s16
      %s33 = scalar_select %p30, %s32, %s16
      %p34 = scmp.ge.s32.totalorder %s33, 1
      %s35 = scalar_select %p34, 0, %s33
      %s36 = ssub.s32 %s16, %s35
      %s37 = ssub.s32 %s18, %s27
      %s38 = sor.u32 %s36, %s37
      %p39 = scmp.eq.s32.totalorder %s38, 0
      %s41 = sadd.s32 %s40, 1
      %s42 = scalar_select %p39, %s40, %s41
      %p45 = pneg %p39
      %p46 = scmp.eq.s32.totalorder %s9, 4
      %p47 = por %p45, %p46
      %p48 = scmp.ne.s32.totalorder %s40, %s43
      %p49 = scmp.eq.s32.totalorder %s9, 0
      %p50 = por %p48, %p49
      %p51 = scmp.ne.s32.totalorder %s40, %s43
      %p52 = scmp.eq.s32.totalorder %s14, 4
      %p53 = por %p51, %p52
      %p54 = scmp.ne.s32.totalorder %s43, %s44
      %p55 = scmp.eq.s32.totalorder %s14, 0
      %p56 = por %p54, %p55
      %p57 = scmp.ne.s32.totalorder %s43, %s44
      %p58 = scmp.eq.s32.totalorder %s15, 4
      %p59 = por %p57, %p58
      %p61 = scmp.ne.s32.totalorder %s44, %s60
      %p62 = scmp.eq.s32.totalorder %s15, 0
      %p63 = por %p61, %p62
      %s64 = ssub.s32 %s18, %s27
      %s65 = ssub.s32 %s17, %s31
      %s66 = sor.u32 %s64, %s65
      %p67 = scmp.eq.s32.totalorder %s66, 0
      %s69 = sadd.s32 %s68, 1
      %s70 = scalar_select %p67, %s68, %s69
      %p73 = pneg %p67
      %p74 = scmp.eq.s32.totalorder %s9, 4
      %p75 = por %p73, %p74
      %p76 = scmp.ne.s32.totalorder %s68, %s71
      %p77 = scmp.eq.s32.totalorder %s9, 0
      %p78 = por %p76, %p77
      %p79 = scmp.ne.s32.totalorder %s68, %s71
      %p80 = scmp.eq.s32.totalorder %s14, 4
      %p81 = por %p79, %p80
      %p82 = scmp.ne.s32.totalorder %s71, %s72
      %p83 = scmp.eq.s32.totalorder %s14, 0
      %p84 = por %p82, %p83
      %p85 = scmp.ne.s32.totalorder %s71, %s72
      %p86 = scmp.eq.s32.totalorder %s15, 4
      %p87 = por %p85, %p86
      %p89 = scmp.ne.s32.totalorder %s72, %s88
      %p90 = scmp.eq.s32.totalorder %s15, 0
      %p91 = por %p89, %p90
      %s92 = ssub.s32 %s17, %s31
      %p93 = scmp.eq.s32.totalorder %s92, 0
      %s95 = sadd.s32 %s94, 1
      %s96 = scalar_select %p93, %s94, %s95
      %p99 = pneg %p93
      %p100 = scmp.eq.s32.totalorder %s9, 4
      %p101 = por %p99, %p100
      %p102 = scmp.ne.s32.totalorder %s94, %s97
      %p103 = scmp.eq.s32.totalorder %s9, 0
      %p104 = por %p102, %p103
      %p105 = scmp.ne.s32.totalorder %s94, %s97
      %p106 = scmp.eq.s32.totalorder %s14, 4
      %p107 = por %p105, %p106
      %p108 = scmp.ne.s32.totalorder %s97, %s98
      %p109 = scmp.eq.s32.totalorder %s14, 0
      %p110 = por %p108, %p109
      %p111 = scmp.ne.s32.totalorder %s97, %s98
      %p112 = scmp.eq.s32.totalorder %s15, 4
      %p113 = por %p111, %p112
      %p115 = scmp.ne.s32.totalorder %s98, %s114
      %p116 = scmp.eq.s32.totalorder %s15, 0
      %p117 = por %p115, %p116
      %s118 = ssub.s32 %s16, %s35
      %s119 = ssub.s32 %s17, %s31
      %s120 = sor.u32 %s118, %s119
      %p121 = scmp.eq.s32.totalorder %s120, 0
      %s123 = sadd.s32 %s122, 1
      %s124 = scalar_select %p121, %s122, %s123
      %p127 = pneg %p121
      %p128 = scmp.eq.s32.totalorder %s9, 4
      %p129 = por %p127, %p128
      %p130 = scmp.ne.s32.totalorder %s122, %s125
      %p131 = scmp.eq.s32.totalorder %s9, 0
      %p132 = por %p130, %p131
      %p133 = scmp.ne.s32.totalorder %s122, %s125
      %p134 = scmp.eq.s32.totalorder %s14, 4
      %p135 = por %p133, %p134
      %p136 = scmp.ne.s32.totalorder %s125, %s126
      %p137 = scmp.eq.s32.totalorder %s14, 0
      %p138 = por %p136, %p137
      %p139 = scmp.ne.s32.totalorder %s125, %s126
      %p140 = scmp.eq.s32.totalorder %s15, 4
      %p141 = por %p139, %p140
      %p143 = scmp.ne.s32.totalorder %s126, %s142
      %p144 = scmp.eq.s32.totalorder %s15, 0
      %p145 = por %p143, %p144
      %p146 = scmp.le.s32.totalorder 1, %s9
      %p147 = scmp.lt.s32.totalorder %s9, 6
      %p148 = pnand %p146, %p147
      %p149 = pneg %p148
      // Predicated region
      $region9: #{compen_rt_forward.17} parent=5 // pred_check
        _
      $region10: #{compen_rt_forward.17} parent=5 // pred_check_branch
        %151 = sbr.rel (%p148) target = $region12
      $region11: #{compen_rt_forward.17} parent=5 // pred_region
        %s152 = ssub.s32 %s9, 1
        // Predicated region
        $region13: #{compen_rt_forward.17} parent=11 // pred_check
          %p153 = pneg %p110
        $region14: #{compen_rt_forward.17} parent=11 // pred_check_branch
          %155 = sbr.rel (%p153) target = $region16
        $region15: #{compen_rt_forward.17} parent=11 // pred_region
          %p156 = scmp.lt.s32.totalorder %s20, 0
          %s157 = scalar_select %p156, %s20, 0
          %s158 = scalar_lea.vmem %s2, %s157
        $region16: #{compen_rt_forward.17} parent=11 // pred_fallthru
          _
      $region12: #{compen_rt_forward.17} parent=5 // pred_fallthru
        _
      %p159 = scmp.lt.s32.totalorder %s9, 5
      // Predicated region
      $region17: #{compen_rt_forward.17} parent=5 // pred_check
        %p160 = pneg %p159
      $region18: #{compen_rt_forward.17} parent=5 // pred_check_branch
        %162 = sbr.rel (%p160) target = $region20
      $region19: #{compen_rt_forward.17} parent=5 // pred_region
        // Predicated region
        $region21: #{compen_rt_forward.17} parent=19 // pred_check
          %p163 = pneg %p50
        $region22: #{compen_rt_forward.17} parent=19 // pred_check_branch
          %165 = sbr.rel (%p163) target = $region24
        $region23: #{compen_rt_forward.17} parent=19 // pred_region
          %s166 = sand.u32 %s40, 1
          %s167 = sand.u32 %s40, 1
          %s168 = smul.addr %s167, 128
          %s169 = scalar_lea.vmem [#allocation3], %s168
          %s170 = smul.u32 16, %s16
          %s171 = smul.u32 2, %s18
          %s172 = smul.addr %s170, 10
          %s173 = sadd.s32 %s171, %s172
          %s174 = smul.addr %s173, 4
          %s175 = scalar_lea.vmem %s0, %s174
          // Predicated region
          $region25: #{compen_rt_forward.17} parent=23 // pred_check
            _
          $region26: #{compen_rt_forward.17} parent=23 // pred_check_branch
            %177 = sbr.rel (0) target = $region28
          $region27: #{compen_rt_forward.17} parent=23 // pred_region
            // Predicated region
            $region29: #{compen_rt_forward.17} parent=27 // pred_check
              _
            $region30: #{compen_rt_forward.17} parent=27 // pred_check_branch
              %179 = sbr.rel (0) target = $region32
            $region31: #{compen_rt_forward.17} parent=27 // pred_region
              // Predicated region
              $region44: #{compen_rt_forward.17} parent=31 // pred_check
                _
              $region45: #{compen_rt_forward.17} parent=31 // pred_check_branch
                %225 = sbr.rel (0) target = $region47
              $region46: #{compen_rt_forward.17} parent=31 // pred_region
                loop: start=0, step=1, limit=1
                $region48: #{compen_rt_forward.17} parent=46 // loop_pre_header
                  _
                $region49: #{compen_rt_forward.17} parent=46 // loop_header
                  %s227 = sphi 0, %s231
                  %p228 = scmp.ge.s32.totalorder %s227, 1
                  %s232 = sphi %s175, %s175
                  %s233 = sphi %s169, %s169
                $region50: #{compen_rt_forward.17} parent=46 // loop_header_branch
                  %230 = sbr.rel (%p228) target = $region54
                $region51: #{compen_rt_forward.17} parent=46 // loop_body
                  %v234 = vld [vmem:[%s232] sm:$0xff]
                  %235 = vst [vmem:[%s233] sm:$0xff] %v234
                  %v236 = vld [vmem:[%s232 + $0x28] sm:$0xff]
                  %237 = vst [vmem:[%s233 + $0x8] sm:$0xff] %v236
                  %v238 = vld [vmem:[%s232 + $0x50] sm:$0xff]
                  %239 = vst [vmem:[%s233 + $0x10] sm:$0xff] %v238
                  %v240 = vld [vmem:[%s232 + $0x78] sm:$0xff]
                  %241 = vst [vmem:[%s233 + $0x18] sm:$0xff] %v240
                  %v242 = vld [vmem:[%s232 + $0xa0] sm:$0xff]
                  %243 = vst [vmem:[%s233 + $0x20] sm:$0xff] %v242
                  %v244 = vld [vmem:[%s232 + $0xc8] sm:$0xff]
                  %245 = vst [vmem:[%s233 + $0x28] sm:$0xff] %v244
                  %v246 = vld [vmem:[%s232 + $0xf0] sm:$0xff]
                  %247 = vst [vmem:[%s233 + $0x30] sm:$0xff] %v246
                  %v248 = vld [vmem:[%s232 + $0x118] sm:$0xff]
                  %249 = vst [vmem:[%s233 + $0x38] sm:$0xff] %v248
                  %v250 = vld [vmem:[%s232 + $0x140] sm:$0xff]
                  %251 = vst [vmem:[%s233 + $0x40] sm:$0xff] %v250
                  %v252 = vld [vmem:[%s232 + $0x168] sm:$0xff]
                  %253 = vst [vmem:[%s233 + $0x48] sm:$0xff] %v252
                  %v254 = vld [vmem:[%s232 + $0x190] sm:$0xff]
                  %255 = vst [vmem:[%s233 + $0x50] sm:$0xff] %v254
                  %v256 = vld [vmem:[%s232 + $0x1b8] sm:$0xff]
                  %257 = vst [vmem:[%s233 + $0x58] sm:$0xff] %v256
                  %v258 = vld [vmem:[%s232 + $0x1e0] sm:$0xff]
                  %259 = vst [vmem:[%s233 + $0x60] sm:$0xff] %v258
                  %v260 = vld [vmem:[%s232 + $0x208] sm:$0xff]
                  %261 = vst [vmem:[%s233 + $0x68] sm:$0xff] %v260
                  %v262 = vld [vmem:[%s232 + $0x230] sm:$0xff]
                  %263 = vst [vmem:[%s233 + $0x70] sm:$0xff] %v262
                  %v264 = vld [vmem:[%s232 + $0x258] sm:$0xff]
                  %265 = vst [vmem:[%s233 + $0x78] sm:$0xff] %v264
                $region52: #{compen_rt_forward.17} parent=46 // loop_footer
                  %s231 = sadd.s32 1, %s227
                $region53: #{compen_rt_forward.17} parent=46 // loop_footer_branch
                  %226 = sbr.rel target = $region49
                $region54: #{compen_rt_forward.17} parent=46 // loop_exit
                  _
              $region47: #{compen_rt_forward.17} parent=31 // pred_fallthru
                _
              // Predicated region
              $region55: #{compen_rt_forward.17} parent=31 // pred_check
                _
              $region56: #{compen_rt_forward.17} parent=31 // pred_check_branch
                %267 = sbr.rel target = $region58
              $region57: #{compen_rt_forward.17} parent=31 // pred_region
                _
              $region58: #{compen_rt_forward.17} parent=31 // pred_fallthru
                _
            $region32: #{compen_rt_forward.17} parent=27 // pred_fallthru
              _
            // Predicated region
            $region33: #{compen_rt_forward.17} parent=27 // pred_check
              _
            $region34: #{compen_rt_forward.17} parent=27 // pred_check_branch
              %181 = sbr.rel target = $region36
            $region35: #{compen_rt_forward.17} parent=27 // pred_region
              %s183 = ssub.s32 256, 1
              loop: start=0, step=1, limit=1
              $region37: #{compen_rt_forward.17} parent=35 // loop_pre_header
                _
              $region38: #{compen_rt_forward.17} parent=35 // loop_header
                %s185 = sphi 0, %s189
                %p186 = scmp.ge.s32.totalorder %s185, 1
                %s190 = sphi %s175, %s175
                %s191 = sphi %s169, %s169
              $region39: #{compen_rt_forward.17} parent=35 // loop_header_branch
                %188 = sbr.rel (%p186) target = $region43
              $region40: #{compen_rt_forward.17} parent=35 // loop_body
                %v192 = vld [vmem:[%s190] sm:%s183]
                %193 = vst [vmem:[%s191] sm:%s183] %v192
                %v194 = vld [vmem:[%s190 + $0x28] sm:%s183]
                %195 = vst [vmem:[%s191 + $0x8] sm:%s183] %v194
                %v196 = vld [vmem:[%s190 + $0x50] sm:%s183]
                %197 = vst [vmem:[%s191 + $0x10] sm:%s183] %v196
                %v198 = vld [vmem:[%s190 + $0x78] sm:%s183]
                %199 = vst [vmem:[%s191 + $0x18] sm:%s183] %v198
                %v200 = vld [vmem:[%s190 + $0xa0] sm:%s183]
                %201 = vst [vmem:[%s191 + $0x20] sm:%s183] %v200
                %v202 = vld [vmem:[%s190 + $0xc8] sm:%s183]
                %203 = vst [vmem:[%s191 + $0x28] sm:%s183] %v202
                %v204 = vld [vmem:[%s190 + $0xf0] sm:%s183]
                %205 = vst [vmem:[%s191 + $0x30] sm:%s183] %v204
                %v206 = vld [vmem:[%s190 + $0x118] sm:%s183]
                %207 = vst [vmem:[%s191 + $0x38] sm:%s183] %v206
                %v208 = vld [vmem:[%s190 + $0x140] sm:%s183]
                %209 = vst [vmem:[%s191 + $0x40] sm:%s183] %v208
                %v210 = vld [vmem:[%s190 + $0x168] sm:%s183]
                %211 = vst [vmem:[%s191 + $0x48] sm:%s183] %v210
                %v212 = vld [vmem:[%s190 + $0x190] sm:%s183]
                %213 = vst [vmem:[%s191 + $0x50] sm:%s183] %v212
                %v214 = vld [vmem:[%s190 + $0x1b8] sm:%s183]
                %215 = vst [vmem:[%s191 + $0x58] sm:%s183] %v214
                %v216 = vld [vmem:[%s190 + $0x1e0] sm:%s183]
                %217 = vst [vmem:[%s191 + $0x60] sm:%s183] %v216
                %v218 = vld [vmem:[%s190 + $0x208] sm:%s183]
                %219 = vst [vmem:[%s191 + $0x68] sm:%s183] %v218
                %v220 = vld [vmem:[%s190 + $0x230] sm:%s183]
                %221 = vst [vmem:[%s191 + $0x70] sm:%s183] %v220
                %v222 = vld [vmem:[%s190 + $0x258] sm:%s183]
                %223 = vst [vmem:[%s191 + $0x78] sm:%s183] %v222
              $region41: #{compen_rt_forward.17} parent=35 // loop_footer
                %s189 = sadd.s32 1, %s185
              $region42: #{compen_rt_forward.17} parent=35 // loop_footer_branch
                %184 = sbr.rel target = $region38
              $region43: #{compen_rt_forward.17} parent=35 // loop_exit
                _
            $region36: #{compen_rt_forward.17} parent=27 // pred_fallthru
              _
          $region28: #{compen_rt_forward.17} parent=23 // pred_fallthru
            _
          %268 = vnop
        $region24: #{compen_rt_forward.17} parent=19 // pred_fallthru
          _
        // Predicated region
        $region59: #{compen_rt_forward.17} parent=19 // pred_check
          %p269 = pneg %p78
        $region60: #{compen_rt_forward.17} parent=19 // pred_check_branch
          %271 = sbr.rel (%p269) target = $region62
        $region61: #{compen_rt_forward.17} parent=19 // pred_region
          %s272 = smul.u32 32, %s18
          %p273 = scmp.lt.s32.totalorder %s272, 159
          %s274 = scalar_select %p273, %s272, 159
          %p275 = scmp.lt.s32.totalorder %s17, 0
          %s276 = scalar_select %p275, %s17, 0
          %s277 = sadd.s32 %s276, %s274
          %s278 = smul.addr %s277, 4
          %s279 = scalar_lea.vmem %s1, %s278
          %s280 = smul.u32 32, %s18
        $region62: #{compen_rt_forward.17} parent=19 // pred_fallthru
          _
      $region20: #{compen_rt_forward.17} parent=5 // pred_fallthru
        _
      %p281 = scmp.le.s32.totalorder 1, %s9
      %p282 = scmp.lt.s32.totalorder %s9, 6
      %p283 = pnand %p281, %p282
      %p284 = pneg %p283
      // Predicated region
      $region63: #{compen_rt_forward.17} parent=5 // pred_check
        _
      $region64: #{compen_rt_forward.17} parent=5 // pred_check_branch
        %286 = sbr.rel (%p283) target = $region66
      $region65: #{compen_rt_forward.17} parent=5 // pred_region
        %s287 = ssub.s32 %s9, 1
        %s288 = sand.u32 %s43, 1
        %s289 = sand.u32 %s43, 1
        %s290 = smul.addr %s289, 128
        %s291 = scalar_lea.vmem [#allocation3], %s290
        // Predicated region
        $region67: #{compen_rt_forward.17} parent=65 // pred_check
          %p292 = pneg %p56
        $region68: #{compen_rt_forward.17} parent=65 // pred_check_branch
          %294 = sbr.rel (%p292) target = $region70
        $region69: #{compen_rt_forward.17} parent=65 // pred_region
          _
        $region70: #{compen_rt_forward.17} parent=65 // pred_fallthru
          _
        %s295 = sand.u32 %s43, 1
        %s296 = sand.u32 %s43, 1
        %s297 = smul.addr %s296, 128
        %s298 = scalar_lea.vmem [#allocation3], %s297
        %p299 = pneg %p56
        %p300 = pneg %p53
        %s301 = smul.u32 32, %s21
        %p302 = scmp.lt.s32.totalorder %s301, 159
        %s303 = scalar_select %p302, %s301, 159
        %p304 = scmp.lt.s32.totalorder %s20, 0
        %s305 = scalar_select %p304, %s20, 0
        %s306 = sadd.s32 %s305, %s303
        %s307 = smul.addr %s306, 4
        %s308 = scalar_lea.vmem %s1, %s307
        %p309 = pneg %p84
        %p310 = pneg %p81
        %p311 = scmp.lt.s32.totalorder %s20, 0
        %s312 = scalar_select %p311, %s20, 0
        %s313 = scalar_lea.vmem %s2, %s312
        %p314 = pneg %p110
        %p315 = pneg %p107
        %p316 = pneg %p138
        %p317 = pneg %p135
        %s318 = smul.u32 16, %s19
        %p319 = scmp.lt.s32.totalorder %s318, 15
        %s320 = scalar_select %p319, %s318, 15
        %p321 = scmp.lt.s32.totalorder %s20, 0
        %s322 = scalar_select %p321, %s20, 0
        %s323 = sadd.s32 %s322, %s320
        %s324 = smul.addr %s323, 8
        %s325 = scalar_lea.vmem %s3, %s324
        %s326 = smul.u32 16, %s19
        %s327 = smul.u32 2, %s21
        %s328 = smul.u32 32, %s21
        %p329 = scmp.lt.s32.totalorder %s328, 159
        %s330 = scalar_select %p329, %s328, 159
        %p331 = scmp.lt.s32.totalorder %s20, 0
        %s332 = scalar_select %p331, %s20, 0
        %s333 = sadd.s32 %s332, %s330
        %s334 = smul.addr %s333, 4
        %s335 = scalar_lea.vmem %s1, %s334
        %s336 = smul.u32 32, %s21
        %p337 = scmp.lt.s32.totalorder %s20, 0
        %s338 = scalar_select %p337, %s20, 0
        %s339 = scalar_lea.vmem %s2, %s338
        %s340 = smul.u32 16, %s19
        %p341 = scmp.lt.s32.totalorder %s340, 15
        %s342 = scalar_select %p341, %s340, 15
        %p343 = scmp.lt.s32.totalorder %s20, 0
        %s344 = scalar_select %p343, %s20, 0
        %s345 = sadd.s32 %s344, %s342
        %s346 = smul.addr %s345, 8
        %s347 = scalar_lea.vmem %s3, %s346
        %s348 = smul.u32 16, %s19
        %p350 = scmp.eq.s32.totalorder %s21, 0
        // Predicated region
        $region71: #{compen_rt_forward.17} parent=65 // pred_check
          %p351 = pneg %p350
        $region72: #{compen_rt_forward.17} parent=65 // pred_check_branch
          %353 = sbr.rel (%p351) target = $region74
        $region73: #{compen_rt_forward.17} parent=65 // pred_region
          %v354 = vld [vmem:[%s339] sm:$0x1]
          %v356 = vlaneseq
          %v357 = vshrl.u32 %v356, 7
          %v358 = vsub.s32 0, %v357
          %v359 = vrot.slane %v354, %v358
          %v361 = vadd.f32 %v359, 0.0
          %362 = vst [vmem:[#allocation2] sm:$0xff] %v361
          %363 = vst [vmem:[#allocation2 + $0x8] sm:$0xff] %v361
          %364 = vst [vmem:[#allocation2 + $0x10] sm:$0xff] %v361
          %365 = vst [vmem:[#allocation2 + $0x18] sm:$0xff] %v361
          %366 = vst [vmem:[#allocation2 + $0x20] sm:$0xff] %v361
          %367 = vst [vmem:[#allocation2 + $0x28] sm:$0xff] %v361
          %368 = vst [vmem:[#allocation2 + $0x30] sm:$0xff] %v361
          %369 = vst [vmem:[#allocation2 + $0x38] sm:$0xff] %v361
          %370 = vst [vmem:[#allocation2 + $0x40] sm:$0xff] %v361
          %371 = vst [vmem:[#allocation2 + $0x48] sm:$0xff] %v361
          %372 = vst [vmem:[#allocation2 + $0x50] sm:$0xff] %v361
          %373 = vst [vmem:[#allocation2 + $0x58] sm:$0xff] %v361
          %374 = vst [vmem:[#allocation2 + $0x60] sm:$0xff] %v361
          %375 = vst [vmem:[#allocation2 + $0x68] sm:$0xff] %v361
          %376 = vst [vmem:[#allocation2 + $0x70] sm:$0xff] %v361
          %377 = vst [vmem:[#allocation2 + $0x78] sm:$0xff] %v361
        $region74: #{compen_rt_forward.17} parent=65 // pred_fallthru
          _
        %v378 = vld [vmem:[#allocation2] sm:$0xff]
        %v379 = vld [vmem:[#allocation2 + $0x8] sm:$0xff]
        %v380 = vld [vmem:[#allocation2 + $0x10] sm:$0xff]
        %v381 = vld [vmem:[#allocation2 + $0x18] sm:$0xff]
        %v382 = vld [vmem:[#allocation2 + $0x20] sm:$0xff]
        %v383 = vld [vmem:[#allocation2 + $0x28] sm:$0xff]
        %v384 = vld [vmem:[#allocation2 + $0x30] sm:$0xff]
        %v385 = vld [vmem:[#allocation2 + $0x38] sm:$0xff]
        %v386 = vld [vmem:[#allocation2 + $0x40] sm:$0xff]
        %v387 = vld [vmem:[#allocation2 + $0x48] sm:$0xff]
        %v388 = vld [vmem:[#allocation2 + $0x50] sm:$0xff]
        %v389 = vld [vmem:[#allocation2 + $0x58] sm:$0xff]
        %v390 = vld [vmem:[#allocation2 + $0x60] sm:$0xff]
        %v391 = vld [vmem:[#allocation2 + $0x68] sm:$0xff]
        %v392 = vld [vmem:[#allocation2 + $0x70] sm:$0xff]
        %v393 = vld [vmem:[#allocation2 + $0x78] sm:$0xff]
        %v394 = vld [vmem:[%s291] sm:$0xff]
        %v395 = vld [vmem:[%s291 + $0x8] sm:$0xff]
        %v396 = vld [vmem:[%s291 + $0x10] sm:$0xff]
        %v397 = vld [vmem:[%s291 + $0x18] sm:$0xff]
        %v398 = vld [vmem:[%s291 + $0x20] sm:$0xff]
        %v399 = vld [vmem:[%s291 + $0x28] sm:$0xff]
        %v400 = vld [vmem:[%s291 + $0x30] sm:$0xff]
        %v401 = vld [vmem:[%s291 + $0x38] sm:$0xff]
        %v402 = vld [vmem:[%s291 + $0x40] sm:$0xff]
        %v403 = vld [vmem:[%s291 + $0x48] sm:$0xff]
        %v404 = vld [vmem:[%s291 + $0x50] sm:$0xff]
        %v405 = vld [vmem:[%s291 + $0x58] sm:$0xff]
        %v406 = vld [vmem:[%s291 + $0x60] sm:$0xff]
        %v407 = vld [vmem:[%s291 + $0x68] sm:$0xff]
        %v408 = vld [vmem:[%s291 + $0x70] sm:$0xff]
        %v409 = vld [vmem:[%s291 + $0x78] sm:$0xff]
        %v410 = vld [vmem:[%s335] sm:$0xf]
        %v411 = vld [vmem:[%s335 + $0x4] sm:$0xf]
        %v412 = vld [vmem:[%s335 + $0x8] sm:$0xf]
        %v413 = vld [vmem:[%s335 + $0xc] sm:$0xf]
        %v414 = vld [vmem:[%s335 + $0x10] sm:$0xf]
        %v415 = vld [vmem:[%s335 + $0x14] sm:$0xf]
        %v416 = vld [vmem:[%s335 + $0x18] sm:$0xf]
        %v417 = vld [vmem:[%s335 + $0x1c] sm:$0xf]
        %v418 = vld [vmem:[%s335 + $0x20] sm:$0xf]
        %v419 = vld [vmem:[%s335 + $0x24] sm:$0xf]
        %v420 = vld [vmem:[%s335 + $0x28] sm:$0xf]
        %v421 = vld [vmem:[%s335 + $0x2c] sm:$0xf]
        %v422 = vld [vmem:[%s335 + $0x30] sm:$0xf]
        %v423 = vld [vmem:[%s335 + $0x34] sm:$0xf]
        %v424 = vld [vmem:[%s335 + $0x38] sm:$0xf]
        %v425 = vld [vmem:[%s335 + $0x3c] sm:$0xf]
        %v426 = vld [vmem:[%s335 + $0x40] sm:$0xf]
        %v427 = vld [vmem:[%s335 + $0x44] sm:$0xf]
        %v428 = vld [vmem:[%s335 + $0x48] sm:$0xf]
        %v429 = vld [vmem:[%s335 + $0x4c] sm:$0xf]
        %v430 = vld [vmem:[%s335 + $0x50] sm:$0xf]
        %v431 = vld [vmem:[%s335 + $0x54] sm:$0xf]
        %v432 = vld [vmem:[%s335 + $0x58] sm:$0xf]
        %v433 = vld [vmem:[%s335 + $0x5c] sm:$0xf]
        %v434 = vld [vmem:[%s335 + $0x60] sm:$0xf]
        %v435 = vld [vmem:[%s335 + $0x64] sm:$0xf]
        %v436 = vld [vmem:[%s335 + $0x68] sm:$0xf]
        %v437 = vld [vmem:[%s335 + $0x6c] sm:$0xf]
        %v438 = vld [vmem:[%s335 + $0x70] sm:$0xf]
        %v439 = vld [vmem:[%s335 + $0x74] sm:$0xf]
        %v440 = vld [vmem:[%s335 + $0x78] sm:$0xf]
        %v441 = vld [vmem:[%s335 + $0x7c] sm:$0xf]
        %v458 = vunpack.c.l.b16 %v394
        %v459 = vunpack.c.h.b16 %v394
        %v460 = vunpack.c.l.b16 %v395
        %v461 = vunpack.c.h.b16 %v395
        %v462 = vunpack.c.l.b16 %v396
        %v463 = vunpack.c.h.b16 %v396
        %v464 = vunpack.c.l.b16 %v397
        %v465 = vunpack.c.h.b16 %v397
        %v466 = vunpack.c.l.b16 %v398
        %v467 = vunpack.c.h.b16 %v398
        %v468 = vunpack.c.l.b16 %v399
        %v469 = vunpack.c.h.b16 %v399
        %v470 = vunpack.c.l.b16 %v400
        %v471 = vunpack.c.h.b16 %v400
        %v472 = vunpack.c.l.b16 %v401
        %v473 = vunpack.c.h.b16 %v401
        %v474 = vunpack.c.l.b16 %v402
        %v475 = vunpack.c.h.b16 %v402
        %v476 = vunpack.c.l.b16 %v403
        %v477 = vunpack.c.h.b16 %v403
        %v478 = vunpack.c.l.b16 %v404
        %v479 = vunpack.c.h.b16 %v404
        %v480 = vunpack.c.l.b16 %v405
        %v481 = vunpack.c.h.b16 %v405
        %v482 = vunpack.c.l.b16 %v406
        %v483 = vunpack.c.h.b16 %v406
        %v484 = vunpack.c.l.b16 %v407
        %v485 = vunpack.c.h.b16 %v407
        %v486 = vunpack.c.l.b16 %v408
        %v487 = vunpack.c.h.b16 %v408
        %v488 = vunpack.c.l.b16 %v409
        %v489 = vunpack.c.h.b16 %v409
        %v490 = vpack.c.b16 %v460, %v458
        %v491 = vpack.c.b16 %v461, %v459
        %v492 = vpack.c.b16 %v464, %v462
        %v493 = vpack.c.b16 %v465, %v463
        %v494 = vpack.c.b16 %v468, %v466
        %v495 = vpack.c.b16 %v469, %v467
        %v496 = vpack.c.b16 %v472, %v470
        %v497 = vpack.c.b16 %v473, %v471
        %v498 = vpack.c.b16 %v476, %v474
        %v499 = vpack.c.b16 %v477, %v475
        %v500 = vpack.c.b16 %v480, %v478
        %v501 = vpack.c.b16 %v481, %v479
        %v502 = vpack.c.b16 %v484, %v482
        %v503 = vpack.c.b16 %v485, %v483
        %v504 = vpack.c.b16 %v488, %v486
        %v505 = vpack.c.b16 %v489, %v487
        %v554 = vunpack.c.l.b16 %v410
        %v555 = vunpack.c.l.b16 %v411
        %v556 = vunpack.c.l.b16 %v412
        %v557 = vunpack.c.l.b16 %v413
        %v558 = vunpack.c.l.b16 %v414
        %v559 = vunpack.c.l.b16 %v415
        %v560 = vunpack.c.l.b16 %v416
        %v561 = vunpack.c.l.b16 %v417
        %v562 = vunpack.c.l.b16 %v418
        %v563 = vunpack.c.l.b16 %v419
        %v564 = vunpack.c.l.b16 %v420
        %v565 = vunpack.c.l.b16 %v421
        %v566 = vunpack.c.l.b16 %v422
        %v567 = vunpack.c.l.b16 %v423
        %v568 = vunpack.c.l.b16 %v424
        %v569 = vunpack.c.l.b16 %v425
        %v570 = vunpack.c.l.b16 %v426
        %v571 = vunpack.c.l.b16 %v427
        %v572 = vunpack.c.l.b16 %v428
        %v573 = vunpack.c.l.b16 %v429
        %v574 = vunpack.c.l.b16 %v430
        %v575 = vunpack.c.l.b16 %v431
        %v576 = vunpack.c.l.b16 %v432
        %v577 = vunpack.c.l.b16 %v433
        %v578 = vunpack.c.l.b16 %v434
        %v579 = vunpack.c.l.b16 %v435
        %v580 = vunpack.c.l.b16 %v436
        %v581 = vunpack.c.l.b16 %v437
        %v582 = vunpack.c.l.b16 %v438
        %v583 = vunpack.c.l.b16 %v439
        %v584 = vunpack.c.l.b16 %v440
        %v585 = vunpack.c.l.b16 %v441
        %v586 = vpack.c.b16 %v555, %v554
        %v587 = vpack.c.b16 %v557, %v556
        %v588 = vpack.c.b16 %v559, %v558
        %v589 = vpack.c.b16 %v561, %v560
        %v590 = vpack.c.b16 %v563, %v562
        %v591 = vpack.c.b16 %v565, %v564
        %v592 = vpack.c.b16 %v567, %v566
        %v593 = vpack.c.b16 %v569, %v568
        %v594 = vpack.c.b16 %v571, %v570
        %v595 = vpack.c.b16 %v573, %v572
        %v596 = vpack.c.b16 %v575, %v574
        %v597 = vpack.c.b16 %v577, %v576
        %v598 = vpack.c.b16 %v579, %v578
        %v599 = vpack.c.b16 %v581, %v580
        %v600 = vpack.c.b16 %v583, %v582
        %v601 = vpack.c.b16 %v585, %v584
        %618 = vmatprep.subr.bf16.mxu0 0
        %619 = vmatpush1.bf16.msra.mxu0 %v593
        %620 = vmatprep.subr.bf16.mxu0 0
        %621 = vmatpush1.bf16.msra.mxu0 %v592
        %622 = vmatprep.subr.bf16.mxu0 0
        %623 = vmatpush1.bf16.msra.mxu0 %v591
        %624 = vmatprep.subr.bf16.mxu0 0
        %625 = vmatpush1.bf16.msra.mxu0 %v590
        %626 = vmatprep.subr.bf16.mxu0 0
        %627 = vmatpush1.bf16.msra.mxu0 %v589
        %628 = vmatprep.subr.bf16.mxu0 0
        %629 = vmatpush1.bf16.msra.mxu0 %v588
        %630 = vmatprep.subr.bf16.mxu0 0
        %631 = vmatpush1.bf16.msra.mxu0 %v587
        %632 = vmatprep.subr.bf16.mxu0 0
        %633 = vmatpush1.bf16.msra.mxu0 %v586
        %634 = vmatprep.subr.bf16.mxu0 0
        %635 = vmatpush2.bf16.msra.mxu0 %v601
        %636 = vmatprep.subr.bf16.mxu0 0
        %637 = vmatpush2.bf16.msra.mxu0 %v600
        %638 = vmatprep.subr.bf16.mxu0 0
        %639 = vmatpush2.bf16.msra.mxu0 %v599
        %640 = vmatprep.subr.bf16.mxu0 0
        %641 = vmatpush2.bf16.msra.mxu0 %v598
        %642 = vmatprep.subr.bf16.mxu0 0
        %643 = vmatpush2.bf16.msra.mxu0 %v597
        %644 = vmatprep.subr.bf16.mxu0 0
        %645 = vmatpush2.bf16.msra.mxu0 %v596
        %646 = vmatprep.subr.bf16.mxu0 0
        %647 = vmatpush2.bf16.msra.mxu0 %v595
        %648 = vmatprep.subr.bf16.mxu0 0
        %649 = vmatpush2.bf16.msra.mxu0 %v594
        %650 = vmatprep.mubr.bf16.mxu0 %v491
        %651 = vmatmul.mubr.bf16.gmra.mxu0 %v490
        %v652 = vpop.f32.mrf.mxu0
        %v653 = vadd.f32 0.0, %v652
        %v654 = vpop.f32.mrf.mxu0
        %v655 = vpop.f32.mrf.mxu0
        %v656 = vadd.f32 0.0, %v655
        %v657 = vpop.f32.mrf.mxu0
        %658 = vmatprep.mubr.bf16.mxu0 %v493
        %659 = vmatmul.mubr.bf16.gmra.mxu0 %v492
        %v660 = vpop.f32.mrf.mxu0
        %v661 = vadd.f32 0.0, %v660
        %v662 = vpop.f32.mrf.mxu0
        %v663 = vpop.f32.mrf.mxu0
        %v664 = vadd.f32 0.0, %v663
        %v665 = vpop.f32.mrf.mxu0
        %666 = vmatprep.mubr.bf16.mxu0 %v495
        %667 = vmatmul.mubr.bf16.gmra.mxu0 %v494
        %v668 = vpop.f32.mrf.mxu0
        %v669 = vadd.f32 0.0, %v668
        %v670 = vpop.f32.mrf.mxu0
        %v671 = vpop.f32.mrf.mxu0
        %v672 = vadd.f32 0.0, %v671
        %v673 = vpop.f32.mrf.mxu0
        %674 = vmatprep.mubr.bf16.mxu0 %v497
        %675 = vmatmul.mubr.bf16.gmra.mxu0 %v496
        %v676 = vpop.f32.mrf.mxu0
        %v677 = vadd.f32 0.0, %v676
        %v678 = vpop.f32.mrf.mxu0
        %v679 = vpop.f32.mrf.mxu0
        %v680 = vadd.f32 0.0, %v679
        %v681 = vpop.f32.mrf.mxu0
        %682 = vmatprep.mubr.bf16.mxu0 %v499
        %683 = vmatmul.mubr.bf16.gmra.mxu0 %v498
        %v684 = vpop.f32.mrf.mxu0
        %v685 = vadd.f32 0.0, %v684
        %v686 = vpop.f32.mrf.mxu0
        %v687 = vpop.f32.mrf.mxu0
        %v688 = vadd.f32 0.0, %v687
        %v689 = vpop.f32.mrf.mxu0
        %690 = vmatprep.mubr.bf16.mxu0 %v501
        %691 = vmatmul.mubr.bf16.gmra.mxu0 %v500
        %v692 = vpop.f32.mrf.mxu0
        %v693 = vadd.f32 0.0, %v692
        %v694 = vpop.f32.mrf.mxu0
        %v695 = vpop.f32.mrf.mxu0
        %v696 = vadd.f32 0.0, %v695
        %v697 = vpop.f32.mrf.mxu0
        %698 = vmatprep.mubr.bf16.mxu0 %v503
        %699 = vmatmul.mubr.bf16.gmra.mxu0 %v502
        %v700 = vpop.f32.mrf.mxu0
        %v701 = vadd.f32 0.0, %v700
        %v702 = vpop.f32.mrf.mxu0
        %v703 = vpop.f32.mrf.mxu0
        %v704 = vadd.f32 0.0, %v703
        %v705 = vpop.f32.mrf.mxu0
        %706 = vmatprep.mubr.bf16.mxu0 %v505
        %707 = vmatmul.mubr.bf16.gmra.mxu0 %v504
        %v708 = vpop.f32.mrf.mxu0
        %v709 = vadd.f32 0.0, %v708
        %v710 = vpop.f32.mrf.mxu0
        %v711 = vpop.f32.mrf.mxu0
        %v712 = vadd.f32 0.0, %v711
        %v713 = vpop.f32.mrf.mxu0
        %714 = vdwg.mxu0
        %v715 = vadd.f32 %v378, %v653
        %v716 = vadd.f32 %v379, %v656
        %v717 = vadd.f32 %v380, %v661
        %v718 = vadd.f32 %v381, %v664
        %v719 = vadd.f32 %v382, %v669
        %v720 = vadd.f32 %v383, %v672
        %v721 = vadd.f32 %v384, %v677
        %v722 = vadd.f32 %v385, %v680
        %v723 = vadd.f32 %v386, %v685
        %v724 = vadd.f32 %v387, %v688
        %v725 = vadd.f32 %v388, %v693
        %v726 = vadd.f32 %v389, %v696
        %v727 = vadd.f32 %v390, %v701
        %v728 = vadd.f32 %v391, %v704
        %v729 = vadd.f32 %v392, %v709
        %v730 = vadd.f32 %v393, %v712
        %731 = vst [vmem:[#allocation2] sm:$0xff] %v715
        %732 = vst [vmem:[#allocation2 + $0x8] sm:$0xff] %v716
        %733 = vst [vmem:[#allocation2 + $0x10] sm:$0xff] %v717
        %734 = vst [vmem:[#allocation2 + $0x18] sm:$0xff] %v718
        %735 = vst [vmem:[#allocation2 + $0x20] sm:$0xff] %v719
        %736 = vst [vmem:[#allocation2 + $0x28] sm:$0xff] %v720
        %737 = vst [vmem:[#allocation2 + $0x30] sm:$0xff] %v721
        %738 = vst [vmem:[#allocation2 + $0x38] sm:$0xff] %v722
        %739 = vst [vmem:[#allocation2 + $0x40] sm:$0xff] %v723
        %740 = vst [vmem:[#allocation2 + $0x48] sm:$0xff] %v724
        %741 = vst [vmem:[#allocation2 + $0x50] sm:$0xff] %v725
        %742 = vst [vmem:[#allocation2 + $0x58] sm:$0xff] %v726
        %743 = vst [vmem:[#allocation2 + $0x60] sm:$0xff] %v727
        %744 = vst [vmem:[#allocation2 + $0x68] sm:$0xff] %v728
        %745 = vst [vmem:[#allocation2 + $0x70] sm:$0xff] %v729
        %746 = vst [vmem:[#allocation2 + $0x78] sm:$0xff] %v730
        %p747 = scmp.eq.s32.totalorder %s21, 4
        // Predicated region
        $region75: #{compen_rt_forward.17} parent=65 // pred_check
          %p748 = pneg %p747
        $region76: #{compen_rt_forward.17} parent=65 // pred_check_branch
          %750 = sbr.rel (%p748) target = $region78
        $region77: #{compen_rt_forward.17} parent=65 // pred_region
          %v751 = vld [vmem:[#allocation2] sm:$0xff]
          %v752 = vld [vmem:[#allocation2 + $0x8] sm:$0xff]
          %v753 = vld [vmem:[#allocation2 + $0x10] sm:$0xff]
          %v754 = vld [vmem:[#allocation2 + $0x18] sm:$0xff]
          %v755 = vld [vmem:[#allocation2 + $0x20] sm:$0xff]
          %v756 = vld [vmem:[#allocation2 + $0x28] sm:$0xff]
          %v757 = vld [vmem:[#allocation2 + $0x30] sm:$0xff]
          %v758 = vld [vmem:[#allocation2 + $0x38] sm:$0xff]
          %v759 = vld [vmem:[#allocation2 + $0x40] sm:$0xff]
          %v760 = vld [vmem:[#allocation2 + $0x48] sm:$0xff]
          %v761 = vld [vmem:[#allocation2 + $0x50] sm:$0xff]
          %v762 = vld [vmem:[#allocation2 + $0x58] sm:$0xff]
          %v763 = vld [vmem:[#allocation2 + $0x60] sm:$0xff]
          %v764 = vld [vmem:[#allocation2 + $0x68] sm:$0xff]
          %v765 = vld [vmem:[#allocation2 + $0x70] sm:$0xff]
          %v766 = vld [vmem:[#allocation2 + $0x78] sm:$0xff]
          %767 = vst [vmem:[%s347] sm:$0xff] %v751
          %768 = vst [vmem:[%s347 + $0x8] sm:$0xff] %v752
          %769 = vst [vmem:[%s347 + $0x10] sm:$0xff] %v753
          %770 = vst [vmem:[%s347 + $0x18] sm:$0xff] %v754
          %771 = vst [vmem:[%s347 + $0x20] sm:$0xff] %v755
          %772 = vst [vmem:[%s347 + $0x28] sm:$0xff] %v756
          %773 = vst [vmem:[%s347 + $0x30] sm:$0xff] %v757
          %774 = vst [vmem:[%s347 + $0x38] sm:$0xff] %v758
          %775 = vst [vmem:[%s347 + $0x40] sm:$0xff] %v759
          %776 = vst [vmem:[%s347 + $0x48] sm:$0xff] %v760
          %777 = vst [vmem:[%s347 + $0x50] sm:$0xff] %v761
          %778 = vst [vmem:[%s347 + $0x58] sm:$0xff] %v762
          %779 = vst [vmem:[%s347 + $0x60] sm:$0xff] %v763
          %780 = vst [vmem:[%s347 + $0x68] sm:$0xff] %v764
          %781 = vst [vmem:[%s347 + $0x70] sm:$0xff] %v765
          %782 = vst [vmem:[%s347 + $0x78] sm:$0xff] %v766
        $region78: #{compen_rt_forward.17} parent=65 // pred_fallthru
          _
        %s783 = smul.u32 16, %s19
        %p784 = scmp.lt.s32.totalorder %s783, 15
        %s785 = scalar_select %p784, %s783, 15
        %p786 = scmp.lt.s32.totalorder %s20, 0
        %s787 = scalar_select %p786, %s20, 0
        %s788 = sadd.s32 %s787, %s785
        %s789 = smul.addr %s788, 8
        %s790 = scalar_lea.vmem %s3, %s789
        // Predicated region
        $region79: #{compen_rt_forward.17} parent=65 // pred_check
          %p791 = pneg %p135
        $region80: #{compen_rt_forward.17} parent=65 // pred_check_branch
          %793 = sbr.rel (%p791) target = $region82
        $region81: #{compen_rt_forward.17} parent=65 // pred_region
          %s794 = smul.u32 16, %s19
        $region82: #{compen_rt_forward.17} parent=65 // pred_fallthru
          _
        // Predicated region
        $region83: #{compen_rt_forward.17} parent=65 // pred_check
          %p795 = pneg %p135
        $region84: #{compen_rt_forward.17} parent=65 // pred_check_branch
          %797 = sbr.rel (%p795) target = $region86
        $region85: #{compen_rt_forward.17} parent=65 // pred_region
          %s798 = smul.u32 16, %s19
          %p799 = scmp.lt.s32.totalorder %s798, 15
          %s800 = scalar_select %p799, %s798, 15
          %p801 = scmp.lt.s32.totalorder %s20, 0
          %s802 = scalar_select %p801, %s20, 0
          %s803 = sadd.s32 %s802, %s800
          %s804 = smul.addr %s803, 8
          %s805 = scalar_lea.vmem %s3, %s804
        $region86: #{compen_rt_forward.17} parent=65 // pred_fallthru
          _
      $region66: #{compen_rt_forward.17} parent=5 // pred_fallthru
        _
      %p806 = scmp.le.s32.totalorder 2, %s9
      // Predicated region
      $region87: #{compen_rt_forward.17} parent=5 // pred_check
        %p807 = pneg %p806
      $region88: #{compen_rt_forward.17} parent=5 // pred_check_branch
        %809 = sbr.rel (%p807) target = $region90
      $region89: #{compen_rt_forward.17} parent=5 // pred_region
        %s810 = ssub.s32 %s9, 2
      $region90: #{compen_rt_forward.17} parent=5 // pred_fallthru
        _
    $region6: #{compen_rt_forward.17} parent=1 // loop_footer
      %s13 = sadd.s32 1, %s9
    $region7: #{compen_rt_forward.17} parent=1 // loop_footer_branch
      %8 = sbr.rel target = $region3
    $region8: #{compen_rt_forward.17} parent=1 // loop_exit
      _

// kernel: compen_rt_forward.18
$region0: #{compen_rt_forward.18}
  #allocation0 [shape = 'u32[]', space=smem, size = 0x4, offset = 0x4, fixed_abs, tag = 'smem constant byte address 0x4 - core index']
  #allocation1 [shape = 'u32[144,128]{1,0:T(1,128)}', space=vmem, size = 0x12000, scoped, tag = 'internal scratch']
  #allocation2 [shape = 'f32[256,128]{1,0:T(8,128)}', space=vmem, size = 0x20000, scoped, tag = 'scratch operand']
  %s0 = inlined_call_operand.vmem [shape: bf16[512,768], index: 0, kind: input, shape index: {}]
  %s1 = inlined_call_operand.vmem [shape: bf16[768,128], index: 1, kind: input, shape index: {}]
  %s2 = inlined_call_operand.vmem [shape: f32[1,128], index: 2, kind: input, shape index: {}]
  %s3 = inlined_call_operand.vmem [shape: f32[512,128], index: 3, kind: output, shape index: {}]
  %s4 = sld [smem:[#allocation0]]
  $region91: #{compen_rt_forward.18} parent=0
    _
  %s6 = ssub.s32 1, %s4
  %s7 = scalar_select 0, %s6, %s4
  $region1: #{compen_rt_forward.18} parent=0
    #allocation3 [shape = 'u8[262144]{0}', space=vmem, size = 0x40000, scoped, tag = 'input window, operand 0']
    loop: start=0, step=1, limit=8
    $region2: #{compen_rt_forward.18} parent=1 // loop_pre_header
      _
    $region3: #{compen_rt_forward.18} parent=1 // loop_header
      %s9 = sphi 0, %s13
      %p10 = scmp.ge.s32.totalorder %s9, 8
      %s16 = sphi 0, %s35
      %s17 = sphi 0, %s31
      %s18 = sphi 0, %s27
      %s19 = sphi 0, %s16
      %s20 = sphi 0, %s17
      %s21 = sphi 0, %s18
      %s22 = sphi 0, %s19
      %s23 = sphi 0, %s20
      %s24 = sphi 0, %s21
      %s40 = sphi 0, %s42
      %s43 = sphi 0, %s40
      %s44 = sphi 0, %s43
      %s60 = sphi 0, %s44
      %s68 = sphi 0, %s70
      %s71 = sphi 0, %s68
      %s72 = sphi 0, %s71
      %s88 = sphi 0, %s72
      %s94 = sphi 0, %s96
      %s97 = sphi 0, %s94
      %s98 = sphi 0, %s97
      %s114 = sphi 0, %s98
      %s122 = sphi 0, %s124
      %s125 = sphi 0, %s122
      %s126 = sphi 0, %s125
      %s142 = sphi 0, %s126
    $region4: #{compen_rt_forward.18} parent=1 // loop_header_branch
      %12 = sbr.rel (%p10) target = $region8
    $region5: #{compen_rt_forward.18} parent=1 // loop_body
      %s14 = ssub.s32 %s9, 1
      %s15 = ssub.s32 %s9, 2
      %s25 = sadd.s32 1, %s18
      %p26 = scmp.ge.s32.totalorder %s25, 3
      %s27 = scalar_select %p26, 0, %s25
      %s28 = sadd.s32 1, %s17
      %s29 = scalar_select %p26, %s28, %s17
      %p30 = scmp.ge.s32.totalorder %s29, 1
      %s31 = scalar_select %p30, 0, %s29
      %s32 = sadd.s32 1, %s16
      %s33 = scalar_select %p30, %s32, %s16
      %p34 = scmp.ge.s32.totalorder %s33, 2
      %s35 = scalar_select %p34, 0, %s33
      %s36 = ssub.s32 %s16, %s35
      %s37 = ssub.s32 %s18, %s27
      %s38 = sor.u32 %s36, %s37
      %p39 = scmp.eq.s32.totalorder %s38, 0
      %s41 = sadd.s32 %s40, 1
      %s42 = scalar_select %p39, %s40, %s41
      %p45 = pneg %p39
      %p46 = scmp.eq.s32.totalorder %s9, 5
      %p47 = por %p45, %p46
      %p48 = scmp.ne.s32.totalorder %s40, %s43
      %p49 = scmp.eq.s32.totalorder %s9, 0
      %p50 = por %p48, %p49
      %p51 = scmp.ne.s32.totalorder %s40, %s43
      %p52 = scmp.eq.s32.totalorder %s14, 5
      %p53 = por %p51, %p52
      %p54 = scmp.ne.s32.totalorder %s43, %s44
      %p55 = scmp.eq.s32.totalorder %s14, 0
      %p56 = por %p54, %p55
      %p57 = scmp.ne.s32.totalorder %s43, %s44
      %p58 = scmp.eq.s32.totalorder %s15, 5
      %p59 = por %p57, %p58
      %p61 = scmp.ne.s32.totalorder %s44, %s60
      %p62 = scmp.eq.s32.totalorder %s15, 0
      %p63 = por %p61, %p62
      %s64 = ssub.s32 %s18, %s27
      %s65 = ssub.s32 %s17, %s31
      %s66 = sor.u32 %s64, %s65
      %p67 = scmp.eq.s32.totalorder %s66, 0
      %s69 = sadd.s32 %s68, 1
      %s70 = scalar_select %p67, %s68, %s69
      %p73 = pneg %p67
      %p74 = scmp.eq.s32.totalorder %s9, 5
      %p75 = por %p73, %p74
      %p76 = scmp.ne.s32.totalorder %s68, %s71
      %p77 = scmp.eq.s32.totalorder %s9, 0
      %p78 = por %p76, %p77
      %p79 = scmp.ne.s32.totalorder %s68, %s71
      %p80 = scmp.eq.s32.totalorder %s14, 5
      %p81 = por %p79, %p80
      %p82 = scmp.ne.s32.totalorder %s71, %s72
      %p83 = scmp.eq.s32.totalorder %s14, 0
      %p84 = por %p82, %p83
      %p85 = scmp.ne.s32.totalorder %s71, %s72
      %p86 = scmp.eq.s32.totalorder %s15, 5
      %p87 = por %p85, %p86
      %p89 = scmp.ne.s32.totalorder %s72, %s88
      %p90 = scmp.eq.s32.totalorder %s15, 0
      %p91 = por %p89, %p90
      %s92 = ssub.s32 %s17, %s31
      %p93 = scmp.eq.s32.totalorder %s92, 0
      %s95 = sadd.s32 %s94, 1
      %s96 = scalar_select %p93, %s94, %s95
      %p99 = pneg %p93
      %p100 = scmp.eq.s32.totalorder %s9, 5
      %p101 = por %p99, %p100
      %p102 = scmp.ne.s32.totalorder %s94, %s97
      %p103 = scmp.eq.s32.totalorder %s9, 0
      %p104 = por %p102, %p103
      %p105 = scmp.ne.s32.totalorder %s94, %s97
      %p106 = scmp.eq.s32.totalorder %s14, 5
      %p107 = por %p105, %p106
      %p108 = scmp.ne.s32.totalorder %s97, %s98
      %p109 = scmp.eq.s32.totalorder %s14, 0
      %p110 = por %p108, %p109
      %p111 = scmp.ne.s32.totalorder %s97, %s98
      %p112 = scmp.eq.s32.totalorder %s15, 5
      %p113 = por %p111, %p112
      %p115 = scmp.ne.s32.totalorder %s98, %s114
      %p116 = scmp.eq.s32.totalorder %s15, 0
      %p117 = por %p115, %p116
      %s118 = ssub.s32 %s16, %s35
      %s119 = ssub.s32 %s17, %s31
      %s120 = sor.u32 %s118, %s119
      %p121 = scmp.eq.s32.totalorder %s120, 0
      %s123 = sadd.s32 %s122, 1
      %s124 = scalar_select %p121, %s122, %s123
      %p127 = pneg %p121
      %p128 = scmp.eq.s32.totalorder %s9, 5
      %p129 = por %p127, %p128
      %p130 = scmp.ne.s32.totalorder %s122, %s125
      %p131 = scmp.eq.s32.totalorder %s9, 0
      %p132 = por %p130, %p131
      %p133 = scmp.ne.s32.totalorder %s122, %s125
      %p134 = scmp.eq.s32.totalorder %s14, 5
      %p135 = por %p133, %p134
      %p136 = scmp.ne.s32.totalorder %s125, %s126
      %p137 = scmp.eq.s32.totalorder %s14, 0
      %p138 = por %p136, %p137
      %p139 = scmp.ne.s32.totalorder %s125, %s126
      %p140 = scmp.eq.s32.totalorder %s15, 5
      %p141 = por %p139, %p140
      %p143 = scmp.ne.s32.totalorder %s126, %s142
      %p144 = scmp.eq.s32.totalorder %s15, 0
      %p145 = por %p143, %p144
      %p146 = scmp.le.s32.totalorder 1, %s9
      %p147 = scmp.lt.s32.totalorder %s9, 7
      %p148 = pnand %p146, %p147
      %p149 = pneg %p148
      // Predicated region
      $region9: #{compen_rt_forward.18} parent=5 // pred_check
        _
      $region10: #{compen_rt_forward.18} parent=5 // pred_check_branch
        %151 = sbr.rel (%p148) target = $region12
      $region11: #{compen_rt_forward.18} parent=5 // pred_region
        %s152 = ssub.s32 %s9, 1
        // Predicated region
        $region13: #{compen_rt_forward.18} parent=11 // pred_check
          %p153 = pneg %p110
        $region14: #{compen_rt_forward.18} parent=11 // pred_check_branch
          %155 = sbr.rel (%p153) target = $region16
        $region15: #{compen_rt_forward.18} parent=11 // pred_region
          %p156 = scmp.lt.s32.totalorder %s20, 0
          %s157 = scalar_select %p156, %s20, 0
          %s158 = scalar_lea.vmem %s2, %s157
        $region16: #{compen_rt_forward.18} parent=11 // pred_fallthru
          _
      $region12: #{compen_rt_forward.18} parent=5 // pred_fallthru
        _
      %p159 = scmp.lt.s32.totalorder %s9, 6
      // Predicated region
      $region17: #{compen_rt_forward.18} parent=5 // pred_check
        %p160 = pneg %p159
      $region18: #{compen_rt_forward.18} parent=5 // pred_check_branch
        %162 = sbr.rel (%p160) target = $region20
      $region19: #{compen_rt_forward.18} parent=5 // pred_region
        // Predicated region
        $region21: #{compen_rt_forward.18} parent=19 // pred_check
          %p163 = pneg %p50
        $region22: #{compen_rt_forward.18} parent=19 // pred_check_branch
          %165 = sbr.rel (%p163) target = $region24
        $region23: #{compen_rt_forward.18} parent=19 // pred_region
          %s166 = sand.u32 %s40, 1
          %s167 = sand.u32 %s40, 1
          %s168 = smul.addr %s167, 256
          %s169 = scalar_lea.vmem [#allocation3], %s168
          %s170 = smul.u32 32, %s16
          %s171 = smul.u32 2, %s18
          %s172 = smul.addr %s170, 6
          %s173 = sadd.s32 %s171, %s172
          %s174 = smul.addr %s173, 4
          %s175 = scalar_lea.vmem %s0, %s174
          // Predicated region
          $region25: #{compen_rt_forward.18} parent=23 // pred_check
            _
          $region26: #{compen_rt_forward.18} parent=23 // pred_check_branch
            %177 = sbr.rel (0) target = $region28
          $region27: #{compen_rt_forward.18} parent=23 // pred_region
            // Predicated region
            $region29: #{compen_rt_forward.18} parent=27 // pred_check
              _
            $region30: #{compen_rt_forward.18} parent=27 // pred_check_branch
              %179 = sbr.rel (0) target = $region32
            $region31: #{compen_rt_forward.18} parent=27 // pred_region
              // Predicated region
              $region44: #{compen_rt_forward.18} parent=31 // pred_check
                _
              $region45: #{compen_rt_forward.18} parent=31 // pred_check_branch
                %257 = sbr.rel (0) target = $region47
              $region46: #{compen_rt_forward.18} parent=31 // pred_region
                loop: start=0, step=1, limit=1
                $region48: #{compen_rt_forward.18} parent=46 // loop_pre_header
                  _
                $region49: #{compen_rt_forward.18} parent=46 // loop_header
                  %s259 = sphi 0, %s263
                  %p260 = scmp.ge.s32.totalorder %s259, 1
                  %s264 = sphi %s175, %s175
                  %s265 = sphi %s169, %s169
                $region50: #{compen_rt_forward.18} parent=46 // loop_header_branch
                  %262 = sbr.rel (%p260) target = $region54
                $region51: #{compen_rt_forward.18} parent=46 // loop_body
                  %v266 = vld [vmem:[%s264] sm:$0xff]
                  %267 = vst [vmem:[%s265] sm:$0xff] %v266
                  %v268 = vld [vmem:[%s264 + $0x18] sm:$0xff]
                  %269 = vst [vmem:[%s265 + $0x8] sm:$0xff] %v268
                  %v270 = vld [vmem:[%s264 + $0x30] sm:$0xff]
                  %271 = vst [vmem:[%s265 + $0x10] sm:$0xff] %v270
                  %v272 = vld [vmem:[%s264 + $0x48] sm:$0xff]
                  %273 = vst [vmem:[%s265 + $0x18] sm:$0xff] %v272
                  %v274 = vld [vmem:[%s264 + $0x60] sm:$0xff]
                  %275 = vst [vmem:[%s265 + $0x20] sm:$0xff] %v274
                  %v276 = vld [vmem:[%s264 + $0x78] sm:$0xff]
                  %277 = vst [vmem:[%s265 + $0x28] sm:$0xff] %v276
                  %v278 = vld [vmem:[%s264 + $0x90] sm:$0xff]
                  %279 = vst [vmem:[%s265 + $0x30] sm:$0xff] %v278
                  %v280 = vld [vmem:[%s264 + $0xa8] sm:$0xff]
                  %281 = vst [vmem:[%s265 + $0x38] sm:$0xff] %v280
                  %v282 = vld [vmem:[%s264 + $0xc0] sm:$0xff]
                  %283 = vst [vmem:[%s265 + $0x40] sm:$0xff] %v282
                  %v284 = vld [vmem:[%s264 + $0xd8] sm:$0xff]
                  %285 = vst [vmem:[%s265 + $0x48] sm:$0xff] %v284
                  %v286 = vld [vmem:[%s264 + $0xf0] sm:$0xff]
                  %287 = vst [vmem:[%s265 + $0x50] sm:$0xff] %v286
                  %v288 = vld [vmem:[%s264 + $0x108] sm:$0xff]
                  %289 = vst [vmem:[%s265 + $0x58] sm:$0xff] %v288
                  %v290 = vld [vmem:[%s264 + $0x120] sm:$0xff]
                  %291 = vst [vmem:[%s265 + $0x60] sm:$0xff] %v290
                  %v292 = vld [vmem:[%s264 + $0x138] sm:$0xff]
                  %293 = vst [vmem:[%s265 + $0x68] sm:$0xff] %v292
                  %v294 = vld [vmem:[%s264 + $0x150] sm:$0xff]
                  %295 = vst [vmem:[%s265 + $0x70] sm:$0xff] %v294
                  %v296 = vld [vmem:[%s264 + $0x168] sm:$0xff]
                  %297 = vst [vmem:[%s265 + $0x78] sm:$0xff] %v296
                  %v298 = vld [vmem:[%s264 + $0x180] sm:$0xff]
                  %299 = vst [vmem:[%s265 + $0x80] sm:$0xff] %v298
                  %v300 = vld [vmem:[%s264 + $0x198] sm:$0xff]
                  %301 = vst [vmem:[%s265 + $0x88] sm:$0xff] %v300
                  %v302 = vld [vmem:[%s264 + $0x1b0] sm:$0xff]
                  %303 = vst [vmem:[%s265 + $0x90] sm:$0xff] %v302
                  %v304 = vld [vmem:[%s264 + $0x1c8] sm:$0xff]
                  %305 = vst [vmem:[%s265 + $0x98] sm:$0xff] %v304
                  %v306 = vld [vmem:[%s264 + $0x1e0] sm:$0xff]
                  %307 = vst [vmem:[%s265 + $0xa0] sm:$0xff] %v306
                  %v308 = vld [vmem:[%s264 + $0x1f8] sm:$0xff]
                  %309 = vst [vmem:[%s265 + $0xa8] sm:$0xff] %v308
                  %v310 = vld [vmem:[%s264 + $0x210] sm:$0xff]
                  %311 = vst [vmem:[%s265 + $0xb0] sm:$0xff] %v310
                  %v312 = vld [vmem:[%s264 + $0x228] sm:$0xff]
                  %313 = vst [vmem:[%s265 + $0xb8] sm:$0xff] %v312
                  %v314 = vld [vmem:[%s264 + $0x240] sm:$0xff]
                  %315 = vst [vmem:[%s265 + $0xc0] sm:$0xff] %v314
                  %v316 = vld [vmem:[%s264 + $0x258] sm:$0xff]
                  %317 = vst [vmem:[%s265 + $0xc8] sm:$0xff] %v316
                  %v318 = vld [vmem:[%s264 + $0x270] sm:$0xff]
                  %319 = vst [vmem:[%s265 + $0xd0] sm:$0xff] %v318
                  %v320 = vld [vmem:[%s264 + $0x288] sm:$0xff]
                  %321 = vst [vmem:[%s265 + $0xd8] sm:$0xff] %v320
                  %v322 = vld [vmem:[%s264 + $0x2a0] sm:$0xff]
                  %323 = vst [vmem:[%s265 + $0xe0] sm:$0xff] %v322
                  %v324 = vld [vmem:[%s264 + $0x2b8] sm:$0xff]
                  %325 = vst [vmem:[%s265 + $0xe8] sm:$0xff] %v324
                  %v326 = vld [vmem:[%s264 + $0x2d0] sm:$0xff]
                  %327 = vst [vmem:[%s265 + $0xf0] sm:$0xff] %v326
                  %v328 = vld [vmem:[%s264 + $0x2e8] sm:$0xff]
                  %329 = vst [vmem:[%s265 + $0xf8] sm:$0xff] %v328
                $region52: #{compen_rt_forward.18} parent=46 // loop_footer
                  %s263 = sadd.s32 1, %s259
                $region53: #{compen_rt_forward.18} parent=46 // loop_footer_branch
                  %258 = sbr.rel target = $region49
                $region54: #{compen_rt_forward.18} parent=46 // loop_exit
                  _
              $region47: #{compen_rt_forward.18} parent=31 // pred_fallthru
                _
              // Predicated region
              $region55: #{compen_rt_forward.18} parent=31 // pred_check
                _
              $region56: #{compen_rt_forward.18} parent=31 // pred_check_branch
                %331 = sbr.rel target = $region58
              $region57: #{compen_rt_forward.18} parent=31 // pred_region
                _
              $region58: #{compen_rt_forward.18} parent=31 // pred_fallthru
                _
            $region32: #{compen_rt_forward.18} parent=27 // pred_fallthru
              _
            // Predicated region
            $region33: #{compen_rt_forward.18} parent=27 // pred_check
              _
            $region34: #{compen_rt_forward.18} parent=27 // pred_check_branch
              %181 = sbr.rel target = $region36
            $region35: #{compen_rt_forward.18} parent=27 // pred_region
              %s183 = ssub.s32 256, 1
              loop: start=0, step=1, limit=1
              $region37: #{compen_rt_forward.18} parent=35 // loop_pre_header
                _
              $region38: #{compen_rt_forward.18} parent=35 // loop_header
                %s185 = sphi 0, %s189
                %p186 = scmp.ge.s32.totalorder %s185, 1
                %s190 = sphi %s175, %s175
                %s191 = sphi %s169, %s169
              $region39: #{compen_rt_forward.18} parent=35 // loop_header_branch
                %188 = sbr.rel (%p186) target = $region43
              $region40: #{compen_rt_forward.18} parent=35 // loop_body
                %v192 = vld [vmem:[%s190] sm:%s183]
                %193 = vst [vmem:[%s191] sm:%s183] %v192
                %v194 = vld [vmem:[%s190 + $0x18] sm:%s183]
                %195 = vst [vmem:[%s191 + $0x8] sm:%s183] %v194
                %v196 = vld [vmem:[%s190 + $0x30] sm:%s183]
                %197 = vst [vmem:[%s191 + $0x10] sm:%s183] %v196
                %v198 = vld [vmem:[%s190 + $0x48] sm:%s183]
                %199 = vst [vmem:[%s191 + $0x18] sm:%s183] %v198
                %v200 = vld [vmem:[%s190 + $0x60] sm:%s183]
                %201 = vst [vmem:[%s191 + $0x20] sm:%s183] %v200
                %v202 = vld [vmem:[%s190 + $0x78] sm:%s183]
                %203 = vst [vmem:[%s191 + $0x28] sm:%s183] %v202
                %v204 = vld [vmem:[%s190 + $0x90] sm:%s183]
                %205 = vst [vmem:[%s191 + $0x30] sm:%s183] %v204
                %v206 = vld [vmem:[%s190 + $0xa8] sm:%s183]
                %207 = vst [vmem:[%s191 + $0x38] sm:%s183] %v206
                %v208 = vld [vmem:[%s190 + $0xc0] sm:%s183]
                %209 = vst [vmem:[%s191 + $0x40] sm:%s183] %v208
                %v210 = vld [vmem:[%s190 + $0xd8] sm:%s183]
                %211 = vst [vmem:[%s191 + $0x48] sm:%s183] %v210
                %v212 = vld [vmem:[%s190 + $0xf0] sm:%s183]
                %213 = vst [vmem:[%s191 + $0x50] sm:%s183] %v212
                %v214 = vld [vmem:[%s190 + $0x108] sm:%s183]
                %215 = vst [vmem:[%s191 + $0x58] sm:%s183] %v214
                %v216 = vld [vmem:[%s190 + $0x120] sm:%s183]
                %217 = vst [vmem:[%s191 + $0x60] sm:%s183] %v216
                %v218 = vld [vmem:[%s190 + $0x138] sm:%s183]
                %219 = vst [vmem:[%s191 + $0x68] sm:%s183] %v218
                %v220 = vld [vmem:[%s190 + $0x150] sm:%s183]
                %221 = vst [vmem:[%s191 + $0x70] sm:%s183] %v220
                %v222 = vld [vmem:[%s190 + $0x168] sm:%s183]
                %223 = vst [vmem:[%s191 + $0x78] sm:%s183] %v222
                %v224 = vld [vmem:[%s190 + $0x180] sm:%s183]
                %225 = vst [vmem:[%s191 + $0x80] sm:%s183] %v224
                %v226 = vld [vmem:[%s190 + $0x198] sm:%s183]
                %227 = vst [vmem:[%s191 + $0x88] sm:%s183] %v226
                %v228 = vld [vmem:[%s190 + $0x1b0] sm:%s183]
                %229 = vst [vmem:[%s191 + $0x90] sm:%s183] %v228
                %v230 = vld [vmem:[%s190 + $0x1c8] sm:%s183]
                %231 = vst [vmem:[%s191 + $0x98] sm:%s183] %v230
                %v232 = vld [vmem:[%s190 + $0x1e0] sm:%s183]
                %233 = vst [vmem:[%s191 + $0xa0] sm:%s183] %v232
                %v234 = vld [vmem:[%s190 + $0x1f8] sm:%s183]
                %235 = vst [vmem:[%s191 + $0xa8] sm:%s183] %v234
                %v236 = vld [vmem:[%s190 + $0x210] sm:%s183]
                %237 = vst [vmem:[%s191 + $0xb0] sm:%s183] %v236
                %v238 = vld [vmem:[%s190 + $0x228] sm:%s183]
                %239 = vst [vmem:[%s191 + $0xb8] sm:%s183] %v238
                %v240 = vld [vmem:[%s190 + $0x240] sm:%s183]
                %241 = vst [vmem:[%s191 + $0xc0] sm:%s183] %v240
                %v242 = vld [vmem:[%s190 + $0x258] sm:%s183]
                %243 = vst [vmem:[%s191 + $0xc8] sm:%s183] %v242
                %v244 = vld [vmem:[%s190 + $0x270] sm:%s183]
                %245 = vst [vmem:[%s191 + $0xd0] sm:%s183] %v244
                %v246 = vld [vmem:[%s190 + $0x288] sm:%s183]
                %247 = vst [vmem:[%s191 + $0xd8] sm:%s183] %v246
                %v248 = vld [vmem:[%s190 + $0x2a0] sm:%s183]
                %249 = vst [vmem:[%s191 + $0xe0] sm:%s183] %v248
                %v250 = vld [vmem:[%s190 + $0x2b8] sm:%s183]
                %251 = vst [vmem:[%s191 + $0xe8] sm:%s183] %v250
                %v252 = vld [vmem:[%s190 + $0x2d0] sm:%s183]
                %253 = vst [vmem:[%s191 + $0xf0] sm:%s183] %v252
                %v254 = vld [vmem:[%s190 + $0x2e8] sm:%s183]
                %255 = vst [vmem:[%s191 + $0xf8] sm:%s183] %v254
              $region41: #{compen_rt_forward.18} parent=35 // loop_footer
                %s189 = sadd.s32 1, %s185
              $region42: #{compen_rt_forward.18} parent=35 // loop_footer_branch
                %184 = sbr.rel target = $region38
              $region43: #{compen_rt_forward.18} parent=35 // loop_exit
                _
            $region36: #{compen_rt_forward.18} parent=27 // pred_fallthru
              _
          $region28: #{compen_rt_forward.18} parent=23 // pred_fallthru
            _
          %332 = vnop
        $region24: #{compen_rt_forward.18} parent=19 // pred_fallthru
          _
        // Predicated region
        $region59: #{compen_rt_forward.18} parent=19 // pred_check
          %p333 = pneg %p78
        $region60: #{compen_rt_forward.18} parent=19 // pred_check_branch
          %335 = sbr.rel (%p333) target = $region62
        $region61: #{compen_rt_forward.18} parent=19 // pred_region
          %s336 = smul.u32 32, %s18
          %p337 = scmp.lt.s32.totalorder %s336, 95
          %s338 = scalar_select %p337, %s336, 95
          %p339 = scmp.lt.s32.totalorder %s17, 0
          %s340 = scalar_select %p339, %s17, 0
          %s341 = sadd.s32 %s340, %s338
          %s342 = smul.addr %s341, 4
          %s343 = scalar_lea.vmem %s1, %s342
          %s344 = smul.u32 32, %s18
        $region62: #{compen_rt_forward.18} parent=19 // pred_fallthru
          _
      $region20: #{compen_rt_forward.18} parent=5 // pred_fallthru
        _
      %p345 = scmp.le.s32.totalorder 1, %s9
      %p346 = scmp.lt.s32.totalorder %s9, 7
      %p347 = pnand %p345, %p346
      %p348 = pneg %p347
      // Predicated region
      $region63: #{compen_rt_forward.18} parent=5 // pred_check
        _
      $region64: #{compen_rt_forward.18} parent=5 // pred_check_branch
        %350 = sbr.rel (%p347) target = $region66
      $region65: #{compen_rt_forward.18} parent=5 // pred_region
        %s351 = ssub.s32 %s9, 1
        %s352 = sand.u32 %s43, 1
        %s353 = sand.u32 %s43, 1
        %s354 = smul.addr %s353, 256
        %s355 = scalar_lea.vmem [#allocation3], %s354
        // Predicated region
        $region67: #{compen_rt_forward.18} parent=65 // pred_check
          %p356 = pneg %p56
        $region68: #{compen_rt_forward.18} parent=65 // pred_check_branch
          %358 = sbr.rel (%p356) target = $region70
        $region69: #{compen_rt_forward.18} parent=65 // pred_region
          _
        $region70: #{compen_rt_forward.18} parent=65 // pred_fallthru
          _
        %s359 = sand.u32 %s43, 1
        %s360 = sand.u32 %s43, 1
        %s361 = smul.addr %s360, 256
        %s362 = scalar_lea.vmem [#allocation3], %s361
        %p363 = pneg %p56
        %p364 = pneg %p53
        %s365 = smul.u32 32, %s21
        %p366 = scmp.lt.s32.totalorder %s365, 95
        %s367 = scalar_select %p366, %s365, 95
        %p368 = scmp.lt.s32.totalorder %s20, 0
        %s369 = scalar_select %p368, %s20, 0
        %s370 = sadd.s32 %s369, %s367
        %s371 = smul.addr %s370, 4
        %s372 = scalar_lea.vmem %s1, %s371
        %p373 = pneg %p84
        %p374 = pneg %p81
        %p375 = scmp.lt.s32.totalorder %s20, 0
        %s376 = scalar_select %p375, %s20, 0
        %s377 = scalar_lea.vmem %s2, %s376
        %p378 = pneg %p110
        %p379 = pneg %p107
        %p380 = pneg %p138
        %p381 = pneg %p135
        %s382 = smul.u32 32, %s19
        %p383 = scmp.lt.s32.totalorder %s382, 63
        %s384 = scalar_select %p383, %s382, 63
        %p385 = scmp.lt.s32.totalorder %s20, 0
        %s386 = scalar_select %p385, %s20, 0
        %s387 = sadd.s32 %s386, %s384
        %s388 = smul.addr %s387, 8
        %s389 = scalar_lea.vmem %s3, %s388
        %s390 = smul.u32 32, %s19
        %s391 = smul.u32 2, %s21
        %s392 = smul.u32 32, %s21
        %p393 = scmp.lt.s32.totalorder %s392, 95
        %s394 = scalar_select %p393, %s392, 95
        %p395 = scmp.lt.s32.totalorder %s20, 0
        %s396 = scalar_select %p395, %s20, 0
        %s397 = sadd.s32 %s396, %s394
        %s398 = smul.addr %s397, 4
        %s399 = scalar_lea.vmem %s1, %s398
        %s400 = smul.u32 32, %s21
        %p401 = scmp.lt.s32.totalorder %s20, 0
        %s402 = scalar_select %p401, %s20, 0
        %s403 = scalar_lea.vmem %s2, %s402
        %s404 = smul.u32 32, %s19
        %p405 = scmp.lt.s32.totalorder %s404, 63
        %s406 = scalar_select %p405, %s404, 63
        %p407 = scmp.lt.s32.totalorder %s20, 0
        %s408 = scalar_select %p407, %s20, 0
        %s409 = sadd.s32 %s408, %s406
        %s410 = smul.addr %s409, 8
        %s411 = scalar_lea.vmem %s3, %s410
        %s412 = smul.u32 32, %s19
        %p414 = scmp.eq.s32.totalorder %s21, 0
        // Predicated region
        $region71: #{compen_rt_forward.18} parent=65 // pred_check
          %p415 = pneg %p414
        $region72: #{compen_rt_forward.18} parent=65 // pred_check_branch
          %417 = sbr.rel (%p415) target = $region74
        $region73: #{compen_rt_forward.18} parent=65 // pred_region
          %v418 = vld [vmem:[%s403] sm:$0x1]
          %v420 = vlaneseq
          %v421 = vshrl.u32 %v420, 7
          %v422 = vsub.s32 0, %v421
          %v423 = vrot.slane %v418, %v422
          %v425 = vadd.f32 %v423, 0.0
          %426 = vst [vmem:[#allocation2] sm:$0xff] %v425
          %427 = vst [vmem:[#allocation2 + $0x8] sm:$0xff] %v425
          %428 = vst [vmem:[#allocation2 + $0x10] sm:$0xff] %v425
          %429 = vst [vmem:[#allocation2 + $0x18] sm:$0xff] %v425
          %430 = vst [vmem:[#allocation2 + $0x20] sm:$0xff] %v425
          %431 = vst [vmem:[#allocation2 + $0x28] sm:$0xff] %v425
          %432 = vst [vmem:[#allocation2 + $0x30] sm:$0xff] %v425
          %433 = vst [vmem:[#allocation2 + $0x38] sm:$0xff] %v425
          %434 = vst [vmem:[#allocation2 + $0x40] sm:$0xff] %v425
          %435 = vst [vmem:[#allocation2 + $0x48] sm:$0xff] %v425
          %436 = vst [vmem:[#allocation2 + $0x50] sm:$0xff] %v425
          %437 = vst [vmem:[#allocation2 + $0x58] sm:$0xff] %v425
          %438 = vst [vmem:[#allocation2 + $0x60] sm:$0xff] %v425
          %439 = vst [vmem:[#allocation2 + $0x68] sm:$0xff] %v425
          %440 = vst [vmem:[#allocation2 + $0x70] sm:$0xff] %v425
          %441 = vst [vmem:[#allocation2 + $0x78] sm:$0xff] %v425
          %442 = vst [vmem:[#allocation2 + $0x80] sm:$0xff] %v425
          %443 = vst [vmem:[#allocation2 + $0x88] sm:$0xff] %v425
          %444 = vst [vmem:[#allocation2 + $0x90] sm:$0xff] %v425
          %445 = vst [vmem:[#allocation2 + $0x98] sm:$0xff] %v425
          %446 = vst [vmem:[#allocation2 + $0xa0] sm:$0xff] %v425
          %447 = vst [vmem:[#allocation2 + $0xa8] sm:$0xff] %v425
          %448 = vst [vmem:[#allocation2 + $0xb0] sm:$0xff] %v425
          %449 = vst [vmem:[#allocation2 + $0xb8] sm:$0xff] %v425
          %450 = vst [vmem:[#allocation2 + $0xc0] sm:$0xff] %v425
          %451 = vst [vmem:[#allocation2 + $0xc8] sm:$0xff] %v425
          %452 = vst [vmem:[#allocation2 + $0xd0] sm:$0xff] %v425
          %453 = vst [vmem:[#allocation2 + $0xd8] sm:$0xff] %v425
          %454 = vst [vmem:[#allocation2 + $0xe0] sm:$0xff] %v425
          %455 = vst [vmem:[#allocation2 + $0xe8] sm:$0xff] %v425
          %456 = vst [vmem:[#allocation2 + $0xf0] sm:$0xff] %v425
          %457 = vst [vmem:[#allocation2 + $0xf8] sm:$0xff] %v425
        $region74: #{compen_rt_forward.18} parent=65 // pred_fallthru
          _
        %v458 = vld [vmem:[#allocation2] sm:$0xff]
        %v459 = vld [vmem:[#allocation2 + $0x8] sm:$0xff]
        %v460 = vld [vmem:[#allocation2 + $0x10] sm:$0xff]
        %v461 = vld [vmem:[#allocation2 + $0x18] sm:$0xff]
        %v462 = vld [vmem:[#allocation2 + $0x20] sm:$0xff]
        %v463 = vld [vmem:[#allocation2 + $0x28] sm:$0xff]
        %v464 = vld [vmem:[#allocation2 + $0x30] sm:$0xff]
        %v465 = vld [vmem:[#allocation2 + $0x38] sm:$0xff]
        %v466 = vld [vmem:[#allocation2 + $0x40] sm:$0xff]
        %v467 = vld [vmem:[#allocation2 + $0x48] sm:$0xff]
        %v468 = vld [vmem:[#allocation2 + $0x50] sm:$0xff]
        %v469 = vld [vmem:[#allocation2 + $0x58] sm:$0xff]
        %v470 = vld [vmem:[#allocation2 + $0x60] sm:$0xff]
        %v471 = vld [vmem:[#allocation2 + $0x68] sm:$0xff]
        %v472 = vld [vmem:[#allocation2 + $0x70] sm:$0xff]
        %v473 = vld [vmem:[#allocation2 + $0x78] sm:$0xff]
        %v474 = vld [vmem:[#allocation2 + $0x80] sm:$0xff]
        %v475 = vld [vmem:[#allocation2 + $0x88] sm:$0xff]
        %v476 = vld [vmem:[#allocation2 + $0x90] sm:$0xff]
        %v477 = vld [vmem:[#allocation2 + $0x98] sm:$0xff]
        %v478 = vld [vmem:[#allocation2 + $0xa0] sm:$0xff]
        %v479 = vld [vmem:[#allocation2 + $0xa8] sm:$0xff]
        %v480 = vld [vmem:[#allocation2 + $0xb0] sm:$0xff]
        %v481 = vld [vmem:[#allocation2 + $0xb8] sm:$0xff]
        %v482 = vld [vmem:[#allocation2 + $0xc0] sm:$0xff]
        %v483 = vld [vmem:[#allocation2 + $0xc8] sm:$0xff]
        %v484 = vld [vmem:[#allocation2 + $0xd0] sm:$0xff]
        %v485 = vld [vmem:[#allocation2 + $0xd8] sm:$0xff]
        %v486 = vld [vmem:[#allocation2 + $0xe0] sm:$0xff]
        %v487 = vld [vmem:[#allocation2 + $0xe8] sm:$0xff]
        %v488 = vld [vmem:[#allocation2 + $0xf0] sm:$0xff]
        %v489 = vld [vmem:[#allocation2 + $0xf8] sm:$0xff]
        %v490 = vld [vmem:[%s355] sm:$0xff]
        %v491 = vld [vmem:[%s355 + $0x8] sm:$0xff]
        %v492 = vld [vmem:[%s355 + $0x10] sm:$0xff]
        %v493 = vld [vmem:[%s355 + $0x18] sm:$0xff]
        %v494 = vld [vmem:[%s355 + $0x20] sm:$0xff]
        %v495 = vld [vmem:[%s355 + $0x28] sm:$0xff]
        %v496 = vld [vmem:[%s355 + $0x30] sm:$0xff]
        %v497 = vld [vmem:[%s355 + $0x38] sm:$0xff]
        %v498 = vld [vmem:[%s355 + $0x40] sm:$0xff]
        %v499 = vld [vmem:[%s355 + $0x48] sm:$0xff]
        %v500 = vld [vmem:[%s355 + $0x50] sm:$0xff]
        %v501 = vld [vmem:[%s355 + $0x58] sm:$0xff]
        %v502 = vld [vmem:[%s355 + $0x60] sm:$0xff]
        %v503 = vld [vmem:[%s355 + $0x68] sm:$0xff]
        %v504 = vld [vmem:[%s355 + $0x70] sm:$0xff]
        %v505 = vld [vmem:[%s355 + $0x78] sm:$0xff]
        %v506 = vld [vmem:[%s355 + $0x80] sm:$0xff]
        %v507 = vld [vmem:[%s355 + $0x88] sm:$0xff]
        %v508 = vld [vmem:[%s355 + $0x90] sm:$0xff]
        %v509 = vld [vmem:[%s355 + $0x98] sm:$0xff]
        %v510 = vld [vmem:[%s355 + $0xa0] sm:$0xff]
        %v511 = vld [vmem:[%s355 + $0xa8] sm:$0xff]
        %v512 = vld [vmem:[%s355 + $0xb0] sm:$0xff]
        %v513 = vld [vmem:[%s355 + $0xb8] sm:$0xff]
        %v514 = vld [vmem:[%s355 + $0xc0] sm:$0xff]
        %v515 = vld [vmem:[%s355 + $0xc8] sm:$0xff]
        %v516 = vld [vmem:[%s355 + $0xd0] sm:$0xff]
        %v517 = vld [vmem:[%s355 + $0xd8] sm:$0xff]
        %v518 = vld [vmem:[%s355 + $0xe0] sm:$0xff]
        %v519 = vld [vmem:[%s355 + $0xe8] sm:$0xff]
        %v520 = vld [vmem:[%s355 + $0xf0] sm:$0xff]
        %v521 = vld [vmem:[%s355 + $0xf8] sm:$0xff]
        %v522 = vld [vmem:[%s399] sm:$0xf]
        %v523 = vld [vmem:[%s399 + $0x4] sm:$0xf]
        %v524 = vld [vmem:[%s399 + $0x8] sm:$0xf]
        %v525 = vld [vmem:[%s399 + $0xc] sm:$0xf]
        %v526 = vld [vmem:[%s399 + $0x10] sm:$0xf]
        %v527 = vld [vmem:[%s399 + $0x14] sm:$0xf]
        %v528 = vld [vmem:[%s399 + $0x18] sm:$0xf]
        %v529 = vld [vmem:[%s399 + $0x1c] sm:$0xf]
        %v530 = vld [vmem:[%s399 + $0x20] sm:$0xf]
        %v531 = vld [vmem:[%s399 + $0x24] sm:$0xf]
        %v532 = vld [vmem:[%s399 + $0x28] sm:$0xf]
        %v533 = vld [vmem:[%s399 + $0x2c] sm:$0xf]
        %v534 = vld [vmem:[%s399 + $0x30] sm:$0xf]
        %v535 = vld [vmem:[%s399 + $0x34] sm:$0xf]
        %v536 = vld [vmem:[%s399 + $0x38] sm:$0xf]
        %v537 = vld [vmem:[%s399 + $0x3c] sm:$0xf]
        %v538 = vld [vmem:[%s399 + $0x40] sm:$0xf]
        %v539 = vld [vmem:[%s399 + $0x44] sm:$0xf]
        %v540 = vld [vmem:[%s399 + $0x48] sm:$0xf]
        %v541 = vld [vmem:[%s399 + $0x4c] sm:$0xf]
        %v542 = vld [vmem:[%s399 + $0x50] sm:$0xf]
        %v543 = vld [vmem:[%s399 + $0x54] sm:$0xf]
        %v544 = vld [vmem:[%s399 + $0x58] sm:$0xf]
        %v545 = vld [vmem:[%s399 + $0x5c] sm:$0xf]
        %v546 = vld [vmem:[%s399 + $0x60] sm:$0xf]
        %v547 = vld [vmem:[%s399 + $0x64] sm:$0xf]
        %v548 = vld [vmem:[%s399 + $0x68] sm:$0xf]
        %v549 = vld [vmem:[%s399 + $0x6c] sm:$0xf]
        %v550 = vld [vmem:[%s399 + $0x70] sm:$0xf]
        %v551 = vld [vmem:[%s399 + $0x74] sm:$0xf]
        %v552 = vld [vmem:[%s399 + $0x78] sm:$0xf]
        %v553 = vld [vmem:[%s399 + $0x7c] sm:$0xf]
        %v586 = vunpack.c.l.b16 %v490
        %v587 = vunpack.c.h.b16 %v490
        %v588 = vunpack.c.l.b16 %v491
        %v589 = vunpack.c.h.b16 %v491
        %v590 = vunpack.c.l.b16 %v492
        %v591 = vunpack.c.h.b16 %v492
        %v592 = vunpack.c.l.b16 %v493
        %v593 = vunpack.c.h.b16 %v493
        %v594 = vunpack.c.l.b16 %v494
        %v595 = vunpack.c.h.b16 %v494
        %v596 = vunpack.c.l.b16 %v495
        %v597 = vunpack.c.h.b16 %v495
        %v598 = vunpack.c.l.b16 %v496
        %v599 = vunpack.c.h.b16 %v496
        %v600 = vunpack.c.l.b16 %v497
        %v601 = vunpack.c.h.b16 %v497
        %v602 = vunpack.c.l.b16 %v498
        %v603 = vunpack.c.h.b16 %v498
        %v604 = vunpack.c.l.b16 %v499
        %v605 = vunpack.c.h.b16 %v499
        %v606 = vunpack.c.l.b16 %v500
        %v607 = vunpack.c.h.b16 %v500
        %v608 = vunpack.c.l.b16 %v501
        %v609 = vunpack.c.h.b16 %v501
        %v610 = vunpack.c.l.b16 %v502
        %v611 = vunpack.c.h.b16 %v502
        %v612 = vunpack.c.l.b16 %v503
        %v613 = vunpack.c.h.b16 %v503
        %v614 = vunpack.c.l.b16 %v504
        %v615 = vunpack.c.h.b16 %v504
        %v616 = vunpack.c.l.b16 %v505
        %v617 = vunpack.c.h.b16 %v505
        %v618 = vunpack.c.l.b16 %v506
        %v619 = vunpack.c.h.b16 %v506
        %v620 = vunpack.c.l.b16 %v507
        %v621 = vunpack.c.h.b16 %v507
        %v622 = vunpack.c.l.b16 %v508
        %v623 = vunpack.c.h.b16 %v508
        %v624 = vunpack.c.l.b16 %v509
        %v625 = vunpack.c.h.b16 %v509
        %v626 = vunpack.c.l.b16 %v510
        %v627 = vunpack.c.h.b16 %v510
        %v628 = vunpack.c.l.b16 %v511
        %v629 = vunpack.c.h.b16 %v511
        %v630 = vunpack.c.l.b16 %v512
        %v631 = vunpack.c.h.b16 %v512
        %v632 = vunpack.c.l.b16 %v513
        %v633 = vunpack.c.h.b16 %v513
        %v634 = vunpack.c.l.b16 %v514
        %v635 = vunpack.c.h.b16 %v514
        %v636 = vunpack.c.l.b16 %v515
        %v637 = vunpack.c.h.b16 %v515
        %v638 = vunpack.c.l.b16 %v516
        %v639 = vunpack.c.h.b16 %v516
        %v640 = vunpack.c.l.b16 %v517
        %v641 = vunpack.c.h.b16 %v517
        %v642 = vunpack.c.l.b16 %v518
        %v643 = vunpack.c.h.b16 %v518
        %v644 = vunpack.c.l.b16 %v519
        %v645 = vunpack.c.h.b16 %v519
        %v646 = vunpack.c.l.b16 %v520
        %v647 = vunpack.c.h.b16 %v520
        %v648 = vunpack.c.l.b16 %v521
        %v649 = vunpack.c.h.b16 %v521
        %v650 = vpack.c.b16 %v588, %v586
        %v651 = vpack.c.b16 %v589, %v587
        %v652 = vpack.c.b16 %v592, %v590
        %v653 = vpack.c.b16 %v593, %v591
        %v654 = vpack.c.b16 %v596, %v594
        %v655 = vpack.c.b16 %v597, %v595
        %v656 = vpack.c.b16 %v600, %v598
        %v657 = vpack.c.b16 %v601, %v599
        %v658 = vpack.c.b16 %v604, %v602
        %v659 = vpack.c.b16 %v605, %v603
        %v660 = vpack.c.b16 %v608, %v606
        %v661 = vpack.c.b16 %v609, %v607
        %v662 = vpack.c.b16 %v612, %v610
        %v663 = vpack.c.b16 %v613, %v611
        %v664 = vpack.c.b16 %v616, %v614
        %v665 = vpack.c.b16 %v617, %v615
        %v666 = vpack.c.b16 %v620, %v618
        %v667 = vpack.c.b16 %v621, %v619
        %v668 = vpack.c.b16 %v624, %v622
        %v669 = vpack.c.b16 %v625, %v623
        %v670 = vpack.c.b16 %v628, %v626
        %v671 = vpack.c.b16 %v629, %v627
        %v672 = vpack.c.b16 %v632, %v630
        %v673 = vpack.c.b16 %v633, %v631
        %v674 = vpack.c.b16 %v636, %v634
        %v675 = vpack.c.b16 %v637, %v635
        %v676 = vpack.c.b16 %v640, %v638
        %v677 = vpack.c.b16 %v641, %v639
        %v678 = vpack.c.b16 %v644, %v642
        %v679 = vpack.c.b16 %v645, %v643
        %v680 = vpack.c.b16 %v648, %v646
        %v681 = vpack.c.b16 %v649, %v647
        %v746 = vunpack.c.l.b16 %v522
        %v747 = vunpack.c.l.b16 %v523
        %v748 = vunpack.c.l.b16 %v524
        %v749 = vunpack.c.l.b16 %v525
        %v750 = vunpack.c.l.b16 %v526
        %v751 = vunpack.c.l.b16 %v527
        %v752 = vunpack.c.l.b16 %v528
        %v753 = vunpack.c.l.b16 %v529
        %v754 = vunpack.c.l.b16 %v530
        %v755 = vunpack.c.l.b16 %v531
        %v756 = vunpack.c.l.b16 %v532
        %v757 = vunpack.c.l.b16 %v533
        %v758 = vunpack.c.l.b16 %v534
        %v759 = vunpack.c.l.b16 %v535
        %v760 = vunpack.c.l.b16 %v536
        %v761 = vunpack.c.l.b16 %v537
        %v762 = vunpack.c.l.b16 %v538
        %v763 = vunpack.c.l.b16 %v539
        %v764 = vunpack.c.l.b16 %v540
        %v765 = vunpack.c.l.b16 %v541
        %v766 = vunpack.c.l.b16 %v542
        %v767 = vunpack.c.l.b16 %v543
        %v768 = vunpack.c.l.b16 %v544
        %v769 = vunpack.c.l.b16 %v545
        %v770 = vunpack.c.l.b16 %v546
        %v771 = vunpack.c.l.b16 %v547
        %v772 = vunpack.c.l.b16 %v548
        %v773 = vunpack.c.l.b16 %v549
        %v774 = vunpack.c.l.b16 %v550
        %v775 = vunpack.c.l.b16 %v551
        %v776 = vunpack.c.l.b16 %v552
        %v777 = vunpack.c.l.b16 %v553
        %v778 = vpack.c.b16 %v747, %v746
        %v779 = vpack.c.b16 %v749, %v748
        %v780 = vpack.c.b16 %v751, %v750
        %v781 = vpack.c.b16 %v753, %v752
        %v782 = vpack.c.b16 %v755, %v754
        %v783 = vpack.c.b16 %v757, %v756
        %v784 = vpack.c.b16 %v759, %v758
        %v785 = vpack.c.b16 %v761, %v760
        %v786 = vpack.c.b16 %v763, %v762
        %v787 = vpack.c.b16 %v765, %v764
        %v788 = vpack.c.b16 %v767, %v766
        %v789 = vpack.c.b16 %v769, %v768
        %v790 = vpack.c.b16 %v771, %v770
        %v791 = vpack.c.b16 %v773, %v772
        %v792 = vpack.c.b16 %v775, %v774
        %v793 = vpack.c.b16 %v777, %v776
        %810 = vmatprep.subr.bf16.mxu0 0
        %811 = vmatpush1.bf16.msra.mxu0 %v785
        %812 = vmatprep.subr.bf16.mxu0 0
        %813 = vmatpush1.bf16.msra.mxu0 %v784
        %814 = vmatprep.subr.bf16.mxu0 0
        %815 = vmatpush1.bf16.msra.mxu0 %v783
        %816 = vmatprep.subr.bf16.mxu0 0
        %817 = vmatpush1.bf16.msra.mxu0 %v782
        %818 = vmatprep.subr.bf16.mxu0 0
        %819 = vmatpush1.bf16.msra.mxu0 %v781
        %820 = vmatprep.subr.bf16.mxu0 0
        %821 = vmatpush1.bf16.msra.mxu0 %v780
        %822 = vmatprep.subr.bf16.mxu0 0
        %823 = vmatpush1.bf16.msra.mxu0 %v779
        %824 = vmatprep.subr.bf16.mxu0 0
        %825 = vmatpush1.bf16.msra.mxu0 %v778
        %826 = vmatprep.subr.bf16.mxu0 0
        %827 = vmatpush2.bf16.msra.mxu0 %v793
        %828 = vmatprep.subr.bf16.mxu0 0
        %829 = vmatpush2.bf16.msra.mxu0 %v792
        %830 = vmatprep.subr.bf16.mxu0 0
        %831 = vmatpush2.bf16.msra.mxu0 %v791
        %832 = vmatprep.subr.bf16.mxu0 0
        %833 = vmatpush2.bf16.msra.mxu0 %v790
        %834 = vmatprep.subr.bf16.mxu0 0
        %835 = vmatpush2.bf16.msra.mxu0 %v789
        %836 = vmatprep.subr.bf16.mxu0 0
        %837 = vmatpush2.bf16.msra.mxu0 %v788
        %838 = vmatprep.subr.bf16.mxu0 0
        %839 = vmatpush2.bf16.msra.mxu0 %v787
        %840 = vmatprep.subr.bf16.mxu0 0
        %841 = vmatpush2.bf16.msra.mxu0 %v786
        %842 = vmatprep.mubr.bf16.mxu0 %v651
        %843 = vmatmul.mubr.bf16.gmra.mxu0 %v650
        %v844 = vpop.f32.mrf.mxu0
        %v845 = vadd.f32 0.0, %v844
        %v846 = vpop.f32.mrf.mxu0
        %v847 = vpop.f32.mrf.mxu0
        %v848 = vadd.f32 0.0, %v847
        %v849 = vpop.f32.mrf.mxu0
        %850 = vmatprep.mubr.bf16.mxu0 %v653
        %851 = vmatmul.mubr.bf16.gmra.mxu0 %v652
        %v852 = vpop.f32.mrf.mxu0
        %v853 = vadd.f32 0.0, %v852
        %v854 = vpop.f32.mrf.mxu0
        %v855 = vpop.f32.mrf.mxu0
        %v856 = vadd.f32 0.0, %v855
        %v857 = vpop.f32.mrf.mxu0
        %858 = vmatprep.mubr.bf16.mxu0 %v655
        %859 = vmatmul.mubr.bf16.gmra.mxu0 %v654
        %v860 = vpop.f32.mrf.mxu0
        %v861 = vadd.f32 0.0, %v860
        %v862 = vpop.f32.mrf.mxu0
        %v863 = vpop.f32.mrf.mxu0
        %v864 = vadd.f32 0.0, %v863
        %v865 = vpop.f32.mrf.mxu0
        %866 = vmatprep.mubr.bf16.mxu0 %v657
        %867 = vmatmul.mubr.bf16.gmra.mxu0 %v656
        %v868 = vpop.f32.mrf.mxu0
        %v869 = vadd.f32 0.0, %v868
        %v870 = vpop.f32.mrf.mxu0
        %v871 = vpop.f32.mrf.mxu0
        %v872 = vadd.f32 0.0, %v871
        %v873 = vpop.f32.mrf.mxu0
        %874 = vmatprep.mubr.bf16.mxu0 %v659
        %875 = vmatmul.mubr.bf16.gmra.mxu0 %v658
        %v876 = vpop.f32.mrf.mxu0
        %v877 = vadd.f32 0.0, %v876
        %v878 = vpop.f32.mrf.mxu0
        %v879 = vpop.f32.mrf.mxu0
        %v880 = vadd.f32 0.0, %v879
        %v881 = vpop.f32.mrf.mxu0
        %882 = vmatprep.mubr.bf16.mxu0 %v661
        %883 = vmatmul.mubr.bf16.gmra.mxu0 %v660
        %v884 = vpop.f32.mrf.mxu0
        %v885 = vadd.f32 0.0, %v884
        %v886 = vpop.f32.mrf.mxu0
        %v887 = vpop.f32.mrf.mxu0
        %v888 = vadd.f32 0.0, %v887
        %v889 = vpop.f32.mrf.mxu0
        %890 = vmatprep.mubr.bf16.mxu0 %v663
        %891 = vmatmul.mubr.bf16.gmra.mxu0 %v662
        %v892 = vpop.f32.mrf.mxu0
        %v893 = vadd.f32 0.0, %v892
        %v894 = vpop.f32.mrf.mxu0
        %v895 = vpop.f32.mrf.mxu0
        %v896 = vadd.f32 0.0, %v895
        %v897 = vpop.f32.mrf.mxu0
        %898 = vmatprep.mubr.bf16.mxu0 %v665
        %899 = vmatmul.mubr.bf16.gmra.mxu0 %v664
        %v900 = vpop.f32.mrf.mxu0
        %v901 = vadd.f32 0.0, %v900
        %v902 = vpop.f32.mrf.mxu0
        %v903 = vpop.f32.mrf.mxu0
        %v904 = vadd.f32 0.0, %v903
        %v905 = vpop.f32.mrf.mxu0
        %906 = vmatprep.mubr.bf16.mxu0 %v667
        %907 = vmatmul.mubr.bf16.gmra.mxu0 %v666
        %v908 = vpop.f32.mrf.mxu0
        %v909 = vadd.f32 0.0, %v908
        %v910 = vpop.f32.mrf.mxu0
        %v911 = vpop.f32.mrf.mxu0
        %v912 = vadd.f32 0.0, %v911
        %v913 = vpop.f32.mrf.mxu0
        %914 = vmatprep.mubr.bf16.mxu0 %v669
        %915 = vmatmul.mubr.bf16.gmra.mxu0 %v668
        %v916 = vpop.f32.mrf.mxu0
        %v917 = vadd.f32 0.0, %v916
        %v918 = vpop.f32.mrf.mxu0
        %v919 = vpop.f32.mrf.mxu0
        %v920 = vadd.f32 0.0, %v919
        %v921 = vpop.f32.mrf.mxu0
        %922 = vmatprep.mubr.bf16.mxu0 %v671
        %923 = vmatmul.mubr.bf16.gmra.mxu0 %v670
        %v924 = vpop.f32.mrf.mxu0
        %v925 = vadd.f32 0.0, %v924
        %v926 = vpop.f32.mrf.mxu0
        %v927 = vpop.f32.mrf.mxu0
        %v928 = vadd.f32 0.0, %v927
        %v929 = vpop.f32.mrf.mxu0
        %930 = vmatprep.mubr.bf16.mxu0 %v673
        %931 = vmatmul.mubr.bf16.gmra.mxu0 %v672
        %v932 = vpop.f32.mrf.mxu0
        %v933 = vadd.f32 0.0, %v932
        %v934 = vpop.f32.mrf.mxu0
        %v935 = vpop.f32.mrf.mxu0
        %v936 = vadd.f32 0.0, %v935
        %v937 = vpop.f32.mrf.mxu0
        %938 = vmatprep.mubr.bf16.mxu0 %v675
        %939 = vmatmul.mubr.bf16.gmra.mxu0 %v674
        %v940 = vpop.f32.mrf.mxu0
        %v941 = vadd.f32 0.0, %v940
        %v942 = vpop.f32.mrf.mxu0
        %v943 = vpop.f32.mrf.mxu0
        %v944 = vadd.f32 0.0, %v943
        %v945 = vpop.f32.mrf.mxu0
        %946 = vmatprep.mubr.bf16.mxu0 %v677
        %947 = vmatmul.mubr.bf16.gmra.mxu0 %v676
        %v948 = vpop.f32.mrf.mxu0
        %v949 = vadd.f32 0.0, %v948
        %v950 = vpop.f32.mrf.mxu0
        %v951 = vpop.f32.mrf.mxu0
        %v952 = vadd.f32 0.0, %v951
        %v953 = vpop.f32.mrf.mxu0
        %954 = vmatprep.mubr.bf16.mxu0 %v679
        %955 = vmatmul.mubr.bf16.gmra.mxu0 %v678
        %v956 = vpop.f32.mrf.mxu0
        %v957 = vadd.f32 0.0, %v956
        %v958 = vpop.f32.mrf.mxu0
        %v959 = vpop.f32.mrf.mxu0
        %v960 = vadd.f32 0.0, %v959
        %v961 = vpop.f32.mrf.mxu0
        %962 = vmatprep.mubr.bf16.mxu0 %v681
        %963 = vmatmul.mubr.bf16.gmra.mxu0 %v680
        %v964 = vpop.f32.mrf.mxu0
        %v965 = vadd.f32 0.0, %v964
        %v966 = vpop.f32.mrf.mxu0
        %v967 = vpop.f32.mrf.mxu0
        %v968 = vadd.f32 0.0, %v967
        %v969 = vpop.f32.mrf.mxu0
        %970 = vdwg.mxu0
        %v971 = vadd.f32 %v458, %v845
        %v972 = vadd.f32 %v459, %v848
        %v973 = vadd.f32 %v460, %v853
        %v974 = vadd.f32 %v461, %v856
        %v975 = vadd.f32 %v462, %v861
        %v976 = vadd.f32 %v463, %v864
        %v977 = vadd.f32 %v464, %v869
        %v978 = vadd.f32 %v465, %v872
        %v979 = vadd.f32 %v466, %v877
        %v980 = vadd.f32 %v467, %v880
        %v981 = vadd.f32 %v468, %v885
        %v982 = vadd.f32 %v469, %v888
        %v983 = vadd.f32 %v470, %v893
        %v984 = vadd.f32 %v471, %v896
        %v985 = vadd.f32 %v472, %v901
        %v986 = vadd.f32 %v473, %v904
        %v987 = vadd.f32 %v474, %v909
        %v988 = vadd.f32 %v475, %v912
        %v989 = vadd.f32 %v476, %v917
        %v990 = vadd.f32 %v477, %v920
        %v991 = vadd.f32 %v478, %v925
        %v992 = vadd.f32 %v479, %v928
        %v993 = vadd.f32 %v480, %v933
        %v994 = vadd.f32 %v481, %v936
        %v995 = vadd.f32 %v482, %v941
        %v996 = vadd.f32 %v483, %v944
        %v997 = vadd.f32 %v484, %v949
        %v998 = vadd.f32 %v485, %v952
        %v999 = vadd.f32 %v486, %v957
        %v1000 = vadd.f32 %v487, %v960
        %v1001 = vadd.f32 %v488, %v965
        %v1002 = vadd.f32 %v489, %v968
        %1003 = vst [vmem:[#allocation2] sm:$0xff] %v971
        %1004 = vst [vmem:[#allocation2 + $0x8] sm:$0xff] %v972
        %1005 = vst [vmem:[#allocation2 + $0x10] sm:$0xff] %v973
        %1006 = vst [vmem:[#allocation2 + $0x18] sm:$0xff] %v974
        %1007 = vst [vmem:[#allocation2 + $0x20] sm:$0xff] %v975
        %1008 = vst [vmem:[#allocation2 + $0x28] sm:$0xff] %v976
        %1009 = vst [vmem:[#allocation2 + $0x30] sm:$0xff] %v977
        %1010 = vst [vmem:[#allocation2 + $0x38] sm:$0xff] %v978
        %1011 = vst [vmem:[#allocation2 + $0x40] sm:$0xff] %v979
        %1012 = vst [vmem:[#allocation2 + $0x48] sm:$0xff] %v980
        %1013 = vst [vmem:[#allocation2 + $0x50] sm:$0xff] %v981
        %1014 = vst [vmem:[#allocation2 + $0x58] sm:$0xff] %v982
        %1015 = vst [vmem:[#allocation2 + $0x60] sm:$0xff] %v983
        %1016 = vst [vmem:[#allocation2 + $0x68] sm:$0xff] %v984
        %1017 = vst [vmem:[#allocation2 + $0x70] sm:$0xff] %v985
        %1018 = vst [vmem:[#allocation2 + $0x78] sm:$0xff] %v986
        %1019 = vst [vmem:[#allocation2 + $0x80] sm:$0xff] %v987
        %1020 = vst [vmem:[#allocation2 + $0x88] sm:$0xff] %v988
        %1021 = vst [vmem:[#allocation2 + $0x90] sm:$0xff] %v989
        %1022 = vst [vmem:[#allocation2 + $0x98] sm:$0xff] %v990
        %1023 = vst [vmem:[#allocation2 + $0xa0] sm:$0xff] %v991
        %1024 = vst [vmem:[#allocation2 + $0xa8] sm:$0xff] %v992
        %1025 = vst [vmem:[#allocation2 + $0xb0] sm:$0xff] %v993
        %1026 = vst [vmem:[#allocation2 + $0xb8] sm:$0xff] %v994
        %1027 = vst [vmem:[#allocation2 + $0xc0] sm:$0xff] %v995
        %1028 = vst [vmem:[#allocation2 + $0xc8] sm:$0xff] %v996
        %1029 = vst [vmem:[#allocation2 + $0xd0] sm:$0xff] %v997
        %1030 = vst [vmem:[#allocation2 + $0xd8] sm:$0xff] %v998
        %1031 = vst [vmem:[#allocation2 + $0xe0] sm:$0xff] %v999
        %1032 = vst [vmem:[#allocation2 + $0xe8] sm:$0xff] %v1000
        %1033 = vst [vmem:[#allocation2 + $0xf0] sm:$0xff] %v1001
        %1034 = vst [vmem:[#allocation2 + $0xf8] sm:$0xff] %v1002
        %p1035 = scmp.eq.s32.totalorder %s21, 2
        // Predicated region
        $region75: #{compen_rt_forward.18} parent=65 // pred_check
          %p1036 = pneg %p1035
        $region76: #{compen_rt_forward.18} parent=65 // pred_check_branch
          %1038 = sbr.rel (%p1036) target = $region78
        $region77: #{compen_rt_forward.18} parent=65 // pred_region
          %v1039 = vld [vmem:[#allocation2] sm:$0xff]
          %v1040 = vld [vmem:[#allocation2 + $0x8] sm:$0xff]
          %v1041 = vld [vmem:[#allocation2 + $0x10] sm:$0xff]
          %v1042 = vld [vmem:[#allocation2 + $0x18] sm:$0xff]
          %v1043 = vld [vmem:[#allocation2 + $0x20] sm:$0xff]
          %v1044 = vld [vmem:[#allocation2 + $0x28] sm:$0xff]
          %v1045 = vld [vmem:[#allocation2 + $0x30] sm:$0xff]
          %v1046 = vld [vmem:[#allocation2 + $0x38] sm:$0xff]
          %v1047 = vld [vmem:[#allocation2 + $0x40] sm:$0xff]
          %v1048 = vld [vmem:[#allocation2 + $0x48] sm:$0xff]
          %v1049 = vld [vmem:[#allocation2 + $0x50] sm:$0xff]
          %v1050 = vld [vmem:[#allocation2 + $0x58] sm:$0xff]
          %v1051 = vld [vmem:[#allocation2 + $0x60] sm:$0xff]
          %v1052 = vld [vmem:[#allocation2 + $0x68] sm:$0xff]
          %v1053 = vld [vmem:[#allocation2 + $0x70] sm:$0xff]
          %v1054 = vld [vmem:[#allocation2 + $0x78] sm:$0xff]
          %v1055 = vld [vmem:[#allocation2 + $0x80] sm:$0xff]
          %v1056 = vld [vmem:[#allocation2 + $0x88] sm:$0xff]
          %v1057 = vld [vmem:[#allocation2 + $0x90] sm:$0xff]
          %v1058 = vld [vmem:[#allocation2 + $0x98] sm:$0xff]
          %v1059 = vld [vmem:[#allocation2 + $0xa0] sm:$0xff]
          %v1060 = vld [vmem:[#allocation2 + $0xa8] sm:$0xff]
          %v1061 = vld [vmem:[#allocation2 + $0xb0] sm:$0xff]
          %v1062 = vld [vmem:[#allocation2 + $0xb8] sm:$0xff]
          %v1063 = vld [vmem:[#allocation2 + $0xc0] sm:$0xff]
          %v1064 = vld [vmem:[#allocation2 + $0xc8] sm:$0xff]
          %v1065 = vld [vmem:[#allocation2 + $0xd0] sm:$0xff]
          %v1066 = vld [vmem:[#allocation2 + $0xd8] sm:$0xff]
          %v1067 = vld [vmem:[#allocation2 + $0xe0] sm:$0xff]
          %v1068 = vld [vmem:[#allocation2 + $0xe8] sm:$0xff]
          %v1069 = vld [vmem:[#allocation2 + $0xf0] sm:$0xff]
          %v1070 = vld [vmem:[#allocation2 + $0xf8] sm:$0xff]
          %1071 = vst [vmem:[%s411] sm:$0xff] %v1039
          %1072 = vst [vmem:[%s411 + $0x8] sm:$0xff] %v1040
          %1073 = vst [vmem:[%s411 + $0x10] sm:$0xff] %v1041
          %1074 = vst [vmem:[%s411 + $0x18] sm:$0xff] %v1042
          %1075 = vst [vmem:[%s411 + $0x20] sm:$0xff] %v1043
          %1076 = vst [vmem:[%s411 + $0x28] sm:$0xff] %v1044
          %1077 = vst [vmem:[%s411 + $0x30] sm:$0xff] %v1045
          %1078 = vst [vmem:[%s411 + $0x38] sm:$0xff] %v1046
          %1079 = vst [vmem:[%s411 + $0x40] sm:$0xff] %v1047
          %1080 = vst [vmem:[%s411 + $0x48] sm:$0xff] %v1048
          %1081 = vst [vmem:[%s411 + $0x50] sm:$0xff] %v1049
          %1082 = vst [vmem:[%s411 + $0x58] sm:$0xff] %v1050
          %1083 = vst [vmem:[%s411 + $0x60] sm:$0xff] %v1051
          %1084 = vst [vmem:[%s411 + $0x68] sm:$0xff] %v1052
          %1085 = vst [vmem:[%s411 + $0x70] sm:$0xff] %v1053
          %1086 = vst [vmem:[%s411 + $0x78] sm:$0xff] %v1054
          %1087 = vst [vmem:[%s411 + $0x80] sm:$0xff] %v1055
          %1088 = vst [vmem:[%s411 + $0x88] sm:$0xff] %v1056
          %1089 = vst [vmem:[%s411 + $0x90] sm:$0xff] %v1057
          %1090 = vst [vmem:[%s411 + $0x98] sm:$0xff] %v1058
          %1091 = vst [vmem:[%s411 + $0xa0] sm:$0xff] %v1059
          %1092 = vst [vmem:[%s411 + $0xa8] sm:$0xff] %v1060
          %1093 = vst [vmem:[%s411 + $0xb0] sm:$0xff] %v1061
          %1094 = vst [vmem:[%s411 + $0xb8] sm:$0xff] %v1062
          %1095 = vst [vmem:[%s411 + $0xc0] sm:$0xff] %v1063
          %1096 = vst [vmem:[%s411 + $0xc8] sm:$0xff] %v1064
          %1097 = vst [vmem:[%s411 + $0xd0] sm:$0xff] %v1065
          %1098 = vst [vmem:[%s411 + $0xd8] sm:$0xff] %v1066
          %1099 = vst [vmem:[%s411 + $0xe0] sm:$0xff] %v1067
          %1100 = vst [vmem:[%s411 + $0xe8] sm:$0xff] %v1068
          %1101 = vst [vmem:[%s411 + $0xf0] sm:$0xff] %v1069
          %1102 = vst [vmem:[%s411 + $0xf8] sm:$0xff] %v1070
        $region78: #{compen_rt_forward.18} parent=65 // pred_fallthru
          _
        %s1103 = smul.u32 32, %s19
        %p1104 = scmp.lt.s32.totalorder %s1103, 63
        %s1105 = scalar_select %p1104, %s1103, 63
        %p1106 = scmp.lt.s32.totalorder %s20, 0
        %s1107 = scalar_select %p1106, %s20, 0
        %s1108 = sadd.s32 %s1107, %s1105
        %s1109 = smul.addr %s1108, 8
        %s1110 = scalar_lea.vmem %s3, %s1109
        // Predicated region
        $region79: #{compen_rt_forward.18} parent=65 // pred_check
          %p1111 = pneg %p135
        $region80: #{compen_rt_forward.18} parent=65 // pred_check_branch
          %1113 = sbr.rel (%p1111) target = $region82
        $region81: #{compen_rt_forward.18} parent=65 // pred_region
          %s1114 = smul.u32 32, %s19
        $region82: #{compen_rt_forward.18} parent=65 // pred_fallthru
          _
      $region66: #{compen_rt_forward.18} parent=5 // pred_fallthru
        _
      %p1115 = scmp.le.s32.totalorder 2, %s9
      // Predicated region
      $region83: #{compen_rt_forward.18} parent=5 // pred_check
        %p1116 = pneg %p1115
      $region84: #{compen_rt_forward.18} parent=5 // pred_check_branch
        %1118 = sbr.rel (%p1116) target = $region86
      $region85: #{compen_rt_forward.18} parent=5 // pred_region
        %s1119 = ssub.s32 %s9, 2
        // Predicated region
        $region87: #{compen_rt_forward.18} parent=85 // pred_check
          %p1120 = pneg %p141
        $region88: #{compen_rt_forward.18} parent=85 // pred_check_branch
          %1122 = sbr.rel (%p1120) target = $region90
        $region89: #{compen_rt_forward.18} parent=85 // pred_region
          %s1123 = smul.u32 32, %s22
          %p1124 = scmp.lt.s32.totalorder %s1123, 63
          %s1125 = scalar_select %p1124, %s1123, 63
          %p1126 = scmp.lt.s32.totalorder %s23, 0
          %s1127 = scalar_select %p1126, %s23, 0
          %s1128 = sadd.s32 %s1127, %s1125
          %s1129 = smul.addr %s1128, 8
          %s1130 = scalar_lea.vmem %s3, %s1129
        $region90: #{compen_rt_forward.18} parent=85 // pred_fallthru
          _
      $region86: #{compen_rt_forward.18} parent=5 // pred_fallthru
        _
    $region6: #{compen_rt_forward.18} parent=1 // loop_footer
      %s13 = sadd.s32 1, %s9
    $region7: #{compen_rt_forward.18} parent=1 // loop_footer_branch
      %8 = sbr.rel target = $region3
    $region8: #{compen_rt_forward.18} parent=1 // loop_exit
      _

// kernel: compen_rt_forward.19
$region0: #{compen_rt_forward.19}
  #allocation0 [shape = 'u32[]', space=smem, size = 0x4, offset = 0x4, fixed_abs, tag = 'smem constant byte address 0x4 - core index']
  #allocation1 [shape = 'u32[144,128]{1,0:T(1,128)}', space=vmem, size = 0x12000, scoped, tag = 'internal scratch']
  %s0 = inlined_call_operand.vmem [shape: bf16[2048,256], index: 0, kind: input, shape index: {}]
  %s1 = inlined_call_operand.vmem [shape: bf16[256,128], index: 1, kind: input, shape index: {}]
  %s2 = inlined_call_operand.vmem [shape: f32[1,128], index: 2, kind: input, shape index: {}]
  %s3 = inlined_call_operand.vmem [shape: f32[2048,128], index: 3, kind: output, shape index: {}]
  %s4 = sld [smem:[#allocation0]]
  $region45: #{compen_rt_forward.19} parent=0
    _
  %s6 = ssub.s32 1, %s4
  %s7 = scalar_select 0, %s6, %s4
  loop: start=0, step=1, limit=6
  $region2: #{compen_rt_forward.19} parent=0 // loop_pre_header
    _
  $region3: #{compen_rt_forward.19} parent=0 // loop_header
    %s9 = sphi 0, %s13
    %p10 = scmp.ge.s32.totalorder %s9, 6
    %s16 = sphi 0, %s28
    %s17 = sphi 0, %s24
    %s18 = sphi 0, %s16
    %s19 = sphi 0, %s17
    %s20 = sphi 0, %s18
    %s21 = sphi 0, %s19
    %s31 = sphi 0, %s33
    %s34 = sphi 0, %s31
    %s35 = sphi 0, %s34
    %s51 = sphi 0, %s35
    %s57 = sphi 0, %s59
    %s60 = sphi 0, %s57
    %s61 = sphi 0, %s60
    %s77 = sphi 0, %s61
    %s83 = sphi 0, %s85
    %s86 = sphi 0, %s83
    %s87 = sphi 0, %s86
    %s103 = sphi 0, %s87
    %s111 = sphi 0, %s113
    %s114 = sphi 0, %s111
    %s115 = sphi 0, %s114
    %s131 = sphi 0, %s115
  $region4: #{compen_rt_forward.19} parent=0 // loop_header_branch
    %12 = sbr.rel (%p10) target = $region8
  $region5: #{compen_rt_forward.19} parent=0 // loop_body
    %s14 = ssub.s32 %s9, 1
    %s15 = ssub.s32 %s9, 2
    %s22 = sadd.s32 1, %s17
    %p23 = scmp.ge.s32.totalorder %s22, 1
    %s24 = scalar_select %p23, 0, %s22
    %s25 = sadd.s32 1, %s16
    %s26 = scalar_select %p23, %s25, %s16
    %p27 = scmp.ge.s32.totalorder %s26, 4
    %s28 = scalar_select %p27, 0, %s26
    %s29 = ssub.s32 %s16, %s28
    %p30 = scmp.eq.s32.totalorder %s29, 0
    %s32 = sadd.s32 %s31, 1
    %s33 = scalar_select %p30, %s31, %s32
    %p36 = pneg %p30
    %p37 = scmp.eq.s32.totalorder %s9, 3
    %p38 = por %p36, %p37
    %p39 = scmp.ne.s32.totalorder %s31, %s34
    %p40 = scmp.eq.s32.totalorder %s9, 0
    %p41 = por %p39, %p40
    %p42 = scmp.ne.s32.totalorder %s31, %s34
    %p43 = scmp.eq.s32.totalorder %s14, 3
    %p44 = por %p42, %p43
    %p45 = scmp.ne.s32.totalorder %s34, %s35
    %p46 = scmp.eq.s32.totalorder %s14, 0
    %p47 = por %p45, %p46
    %p48 = scmp.ne.s32.totalorder %s34, %s35
    %p49 = scmp.eq.s32.totalorder %s15, 3
    %p50 = por %p48, %p49
    %p52 = scmp.ne.s32.totalorder %s35, %s51
    %p53 = scmp.eq.s32.totalorder %s15, 0
    %p54 = por %p52, %p53
    %s55 = ssub.s32 %s17, %s24
    %p56 = scmp.eq.s32.totalorder %s55, 0
    %s58 = sadd.s32 %s57, 1
    %s59 = scalar_select %p56, %s57, %s58
    %p62 = pneg %p56
    %p63 = scmp.eq.s32.totalorder %s9, 3
    %p64 = por %p62, %p63
    %p65 = scmp.ne.s32.totalorder %s57, %s60
    %p66 = scmp.eq.s32.totalorder %s9, 0
    %p67 = por %p65, %p66
    %p68 = scmp.ne.s32.totalorder %s57, %s60
    %p69 = scmp.eq.s32.totalorder %s14, 3
    %p70 = por %p68, %p69
    %p71 = scmp.ne.s32.totalorder %s60, %s61
    %p72 = scmp.eq.s32.totalorder %s14, 0
    %p73 = por %p71, %p72
    %p74 = scmp.ne.s32.totalorder %s60, %s61
    %p75 = scmp.eq.s32.totalorder %s15, 3
    %p76 = por %p74, %p75
    %p78 = scmp.ne.s32.totalorder %s61, %s77
    %p79 = scmp.eq.s32.totalorder %s15, 0
    %p80 = por %p78, %p79
    %s81 = ssub.s32 %s17, %s24
    %p82 = scmp.eq.s32.totalorder %s81, 0
    %s84 = sadd.s32 %s83, 1
    %s85 = scalar_select %p82, %s83, %s84
    %p88 = pneg %p82
    %p89 = scmp.eq.s32.totalorder %s9, 3
    %p90 = por %p88, %p89
    %p91 = scmp.ne.s32.totalorder %s83, %s86
    %p92 = scmp.eq.s32.totalorder %s9, 0
    %p93 = por %p91, %p92
    %p94 = scmp.ne.s32.totalorder %s83, %s86
    %p95 = scmp.eq.s32.totalorder %s14, 3
    %p96 = por %p94, %p95
    %p97 = scmp.ne.s32.totalorder %s86, %s87
    %p98 = scmp.eq.s32.totalorder %s14, 0
    %p99 = por %p97, %p98
    %p100 = scmp.ne.s32.totalorder %s86, %s87
    %p101 = scmp.eq.s32.totalorder %s15, 3
    %p102 = por %p100, %p101
    %p104 = scmp.ne.s32.totalorder %s87, %s103
    %p105 = scmp.eq.s32.totalorder %s15, 0
    %p106 = por %p104, %p105
    %s107 = ssub.s32 %s16, %s28
    %s108 = ssub.s32 %s17, %s24
    %s109 = sor.u32 %s107, %s108
    %p110 = scmp.eq.s32.totalorder %s109, 0
    %s112 = sadd.s32 %s111, 1
    %s113 = scalar_select %p110, %s111, %s112
    %p116 = pneg %p110
    %p117 = scmp.eq.s32.totalorder %s9, 3
    %p118 = por %p116, %p117
    %p119 = scmp.ne.s32.totalorder %s111, %s114
    %p120 = scmp.eq.s32.totalorder %s9, 0
    %p121 = por %p119, %p120
    %p122 = scmp.ne.s32.totalorder %s111, %s114
    %p123 = scmp.eq.s32.totalorder %s14, 3
    %p124 = por %p122, %p123
    %p125 = scmp.ne.s32.totalorder %s114, %s115
    %p126 = scmp.eq.s32.totalorder %s14, 0
    %p127 = por %p125, %p126
    %p128 = scmp.ne.s32.totalorder %s114, %s115
    %p129 = scmp.eq.s32.totalorder %s15, 3
    %p130 = por %p128, %p129
    %p132 = scmp.ne.s32.totalorder %s115, %s131
    %p133 = scmp.eq.s32.totalorder %s15, 0
    %p134 = por %p132, %p133
    %p135 = scmp.le.s32.totalorder 1, %s9
    %p136 = scmp.lt.s32.totalorder %s9, 5
    %p137 = pnand %p135, %p136
    %p138 = pneg %p137
    // Predicated region
    $region9: #{compen_rt_forward.19} parent=5 // pred_check
      _
    $region10: #{compen_rt_forward.19} parent=5 // pred_check_branch
      %140 = sbr.rel (%p137) target = $region12
    $region11: #{compen_rt_forward.19} parent=5 // pred_region
      %s141 = ssub.s32 %s9, 1
      // Predicated region
      $region13: #{compen_rt_forward.19} parent=11 // pred_check
        %p142 = pneg %p73
      $region14: #{compen_rt_forward.19} parent=11 // pred_check_branch
        %144 = sbr.rel (%p142) target = $region16
      $region15: #{compen_rt_forward.19} parent=11 // pred_region
        %p145 = scmp.lt.s32.totalorder %s19, 0
        %s146 = scalar_select %p145, %s19, 0
        %s147 = smul.addr %s146, 4
        %s148 = scalar_lea.vmem %s1, %s147
      $region16: #{compen_rt_forward.19} parent=11 // pred_fallthru
        _
      // Predicated region
      $region17: #{compen_rt_forward.19} parent=11 // pred_check
        %p149 = pneg %p99
      $region18: #{compen_rt_forward.19} parent=11 // pred_check_branch
        %151 = sbr.rel (%p149) target = $region20
      $region19: #{compen_rt_forward.19} parent=11 // pred_region
        %p152 = scmp.lt.s32.totalorder %s19, 0
        %s153 = scalar_select %p152, %s19, 0
        %s154 = scalar_lea.vmem %s2, %s153
      $region20: #{compen_rt_forward.19} parent=11 // pred_fallthru
        _
    $region12: #{compen_rt_forward.19} parent=5 // pred_fallthru
      _
    %p155 = scmp.lt.s32.totalorder %s9, 4
    // Predicated region
    $region21: #{compen_rt_forward.19} parent=5 // pred_check
      %p156 = pneg %p155
    $region22: #{compen_rt_forward.19} parent=5 // pred_check_branch
      %158 = sbr.rel (%p156) target = $region24
    $region23: #{compen_rt_forward.19} parent=5 // pred_region
      // Predicated region
      $region25: #{compen_rt_forward.19} parent=23 // pred_check
        %p159 = pneg %p41
      $region26: #{compen_rt_forward.19} parent=23 // pred_check_branch
        %161 = sbr.rel (%p159) target = $region28
      $region27: #{compen_rt_forward.19} parent=23 // pred_region
        %s162 = smul.u32 64, %s16
        %p163 = scmp.lt.s32.totalorder %s162, 255
        %s164 = scalar_select %p163, %s162, 255
        %s165 = smul.addr %s164, 2
        %s166 = smul.addr %s165, 4
        %s167 = scalar_lea.vmem %s0, %s166
        %s168 = smul.u32 64, %s16
      $region28: #{compen_rt_forward.19} parent=23 // pred_fallthru
        _
    $region24: #{compen_rt_forward.19} parent=5 // pred_fallthru
      _
    %p169 = scmp.le.s32.totalorder 1, %s9
    %p170 = scmp.lt.s32.totalorder %s9, 5
    %p171 = pnand %p169, %p170
    %p172 = pneg %p171
    // Predicated region
    $region29: #{compen_rt_forward.19} parent=5 // pred_check
      _
    $region30: #{compen_rt_forward.19} parent=5 // pred_check_branch
      %174 = sbr.rel (%p171) target = $region32
    $region31: #{compen_rt_forward.19} parent=5 // pred_region
      %s175 = ssub.s32 %s9, 1
      %s176 = smul.u32 64, %s18
      %p177 = scmp.lt.s32.totalorder %s176, 255
      %s178 = scalar_select %p177, %s176, 255
      %s179 = smul.addr %s178, 2
      %s180 = smul.addr %s179, 4
      %s181 = scalar_lea.vmem %s0, %s180
      %p182 = pneg %p47
      %p183 = pneg %p44
      %p184 = scmp.lt.s32.totalorder %s19, 0
      %s185 = scalar_select %p184, %s19, 0
      %s186 = smul.addr %s185, 4
      %s187 = scalar_lea.vmem %s1, %s186
      %p188 = pneg %p73
      %p189 = pneg %p70
      %p190 = scmp.lt.s32.totalorder %s19, 0
      %s191 = scalar_select %p190, %s19, 0
      %s192 = scalar_lea.vmem %s2, %s191
      %p193 = pneg %p99
      %p194 = pneg %p96
      %p195 = pneg %p127
      %p196 = pneg %p124
      %s197 = smul.u32 64, %s18
      %p198 = scmp.lt.s32.totalorder %s197, 255
      %s199 = scalar_select %p198, %s197, 255
      %p200 = scmp.lt.s32.totalorder %s19, 0
      %s201 = scalar_select %p200, %s19, 0
      %s202 = sadd.s32 %s201, %s199
      %s203 = smul.addr %s202, 8
      %s204 = scalar_lea.vmem %s3, %s203
      %s205 = smul.u32 64, %s18
      %p206 = scmp.lt.s32.totalorder %s205, 255
      %s207 = scalar_select %p206, %s205, 255
      %s208 = smul.addr %s207, 2
      %s209 = smul.addr %s208, 4
      %s210 = scalar_lea.vmem %s0, %s209
      %s211 = smul.u32 64, %s18
      %p212 = scmp.lt.s32.totalorder %s19, 0
      %s213 = scalar_select %p212, %s19, 0
      %s214 = smul.addr %s213, 4
      %s215 = scalar_lea.vmem %s1, %s214
      %p216 = scmp.lt.s32.totalorder %s19, 0
      %s217 = scalar_select %p216, %s19, 0
      %s218 = scalar_lea.vmem %s2, %s217
      %s219 = smul.u32 64, %s18
      %p220 = scmp.lt.s32.totalorder %s219, 255
      %s221 = scalar_select %p220, %s219, 255
      %p222 = scmp.lt.s32.totalorder %s19, 0
      %s223 = scalar_select %p222, %s19, 0
      %s224 = sadd.s32 %s223, %s221
      %s225 = smul.addr %s224, 8
      %s226 = scalar_lea.vmem %s3, %s225
      %s227 = smul.u32 64, %s18
      %v229 = vld [vmem:[%s210] sm:$0xff]
      %v230 = vld [vmem:[%s210 + $0x8] sm:$0xff]
      %v231 = vld [vmem:[%s210 + $0x10] sm:$0xff]
      %v232 = vld [vmem:[%s210 + $0x18] sm:$0xff]
      %v233 = vld [vmem:[%s210 + $0x20] sm:$0xff]
      %v234 = vld [vmem:[%s210 + $0x28] sm:$0xff]
      %v235 = vld [vmem:[%s210 + $0x30] sm:$0xff]
      %v236 = vld [vmem:[%s210 + $0x38] sm:$0xff]
      %v237 = vld [vmem:[%s210 + $0x40] sm:$0xff]
      %v238 = vld [vmem:[%s210 + $0x48] sm:$0xff]
      %v239 = vld [vmem:[%s210 + $0x50] sm:$0xff]
      %v240 = vld [vmem:[%s210 + $0x58] sm:$0xff]
      %v241 = vld [vmem:[%s210 + $0x60] sm:$0xff]
      %v242 = vld [vmem:[%s210 + $0x68] sm:$0xff]
      %v243 = vld [vmem:[%s210 + $0x70] sm:$0xff]
      %v244 = vld [vmem:[%s210 + $0x78] sm:$0xff]
      %v245 = vld [vmem:[%s210 + $0x80] sm:$0xff]
      %v246 = vld [vmem:[%s210 + $0x88] sm:$0xff]
      %v247 = vld [vmem:[%s210 + $0x90] sm:$0xff]
      %v248 = vld [vmem:[%s210 + $0x98] sm:$0xff]
      %v249 = vld [vmem:[%s210 + $0xa0] sm:$0xff]
      %v250 = vld [vmem:[%s210 + $0xa8] sm:$0xff]
      %v251 = vld [vmem:[%s210 + $0xb0] sm:$0xff]
      %v252 = vld [vmem:[%s210 + $0xb8] sm:$0xff]
      %v253 = vld [vmem:[%s210 + $0xc0] sm:$0xff]
      %v254 = vld [vmem:[%s210 + $0xc8] sm:$0xff]
      %v255 = vld [vmem:[%s210 + $0xd0] sm:$0xff]
      %v256 = vld [vmem:[%s210 + $0xd8] sm:$0xff]
      %v257 = vld [vmem:[%s210 + $0xe0] sm:$0xff]
      %v258 = vld [vmem:[%s210 + $0xe8] sm:$0xff]
      %v259 = vld [vmem:[%s210 + $0xf0] sm:$0xff]
      %v260 = vld [vmem:[%s210 + $0xf8] sm:$0xff]
      %v261 = vld [vmem:[%s210 + $0x100] sm:$0xff]
      %v262 = vld [vmem:[%s210 + $0x108] sm:$0xff]
      %v263 = vld [vmem:[%s210 + $0x110] sm:$0xff]
      %v264 = vld [vmem:[%s210 + $0x118] sm:$0xff]
      %v265 = vld [vmem:[%s210 + $0x120] sm:$0xff]
      %v266 = vld [vmem:[%s210 + $0x128] sm:$0xff]
      %v267 = vld [vmem:[%s210 + $0x130] sm:$0xff]
      %v268 = vld [vmem:[%s210 + $0x138] sm:$0xff]
      %v269 = vld [vmem:[%s210 + $0x140] sm:$0xff]
      %v270 = vld [vmem:[%s210 + $0x148] sm:$0xff]
      %v271 = vld [vmem:[%s210 + $0x150] sm:$0xff]
      %v272 = vld [vmem:[%s210 + $0x158] sm:$0xff]
      %v273 = vld [vmem:[%s210 + $0x160] sm:$0xff]
      %v274 = vld [vmem:[%s210 + $0x168] sm:$0xff]
      %v275 = vld [vmem:[%s210 + $0x170] sm:$0xff]
      %v276 = vld [vmem:[%s210 + $0x178] sm:$0xff]
      %v277 = vld [vmem:[%s210 + $0x180] sm:$0xff]
      %v278 = vld [vmem:[%s210 + $0x188] sm:$0xff]
      %v279 = vld [vmem:[%s210 + $0x190] sm:$0xff]
      %v280 = vld [vmem:[%s210 + $0x198] sm:$0xff]
      %v281 = vld [vmem:[%s210 + $0x1a0] sm:$0xff]
      %v282 = vld [vmem:[%s210 + $0x1a8] sm:$0xff]
      %v283 = vld [vmem:[%s210 + $0x1b0] sm:$0xff]
      %v284 = vld [vmem:[%s210 + $0x1b8] sm:$0xff]
      %v285 = vld [vmem:[%s210 + $0x1c0] sm:$0xff]
      %v286 = vld [vmem:[%s210 + $0x1c8] sm:$0xff]
      %v287 = vld [vmem:[%s210 + $0x1d0] sm:$0xff]
      %v288 = vld [vmem:[%s210 + $0x1d8] sm:$0xff]
      %v289 = vld [vmem:[%s210 + $0x1e0] sm:$0xff]
      %v290 = vld [vmem:[%s210 + $0x1e8] sm:$0xff]
      %v291 = vld [vmem:[%s210 + $0x1f0] sm:$0xff]
      %v292 = vld [vmem:[%s210 + $0x1f8] sm:$0xff]
      %v293 = vld [vmem:[%s215] sm:$0xf]
      %v294 = vld [vmem:[%s215 + $0x4] sm:$0xf]
      %v295 = vld [vmem:[%s215 + $0x8] sm:$0xf]
      %v296 = vld [vmem:[%s215 + $0xc] sm:$0xf]
      %v297 = vld [vmem:[%s215 + $0x10] sm:$0xf]
      %v298 = vld [vmem:[%s215 + $0x14] sm:$0xf]
      %v299 = vld [vmem:[%s215 + $0x18] sm:$0xf]
      %v300 = vld [vmem:[%s215 + $0x1c] sm:$0xf]
      %v301 = vld [vmem:[%s215 + $0x20] sm:$0xf]
      %v302 = vld [vmem:[%s215 + $0x24] sm:$0xf]
      %v303 = vld [vmem:[%s215 + $0x28] sm:$0xf]
      %v304 = vld [vmem:[%s215 + $0x2c] sm:$0xf]
      %v305 = vld [vmem:[%s215 + $0x30] sm:$0xf]
      %v306 = vld [vmem:[%s215 + $0x34] sm:$0xf]
      %v307 = vld [vmem:[%s215 + $0x38] sm:$0xf]
      %v308 = vld [vmem:[%s215 + $0x3c] sm:$0xf]
      %v309 = vld [vmem:[%s215 + $0x40] sm:$0xf]
      %v310 = vld [vmem:[%s215 + $0x44] sm:$0xf]
      %v311 = vld [vmem:[%s215 + $0x48] sm:$0xf]
      %v312 = vld [vmem:[%s215 + $0x4c] sm:$0xf]
      %v313 = vld [vmem:[%s215 + $0x50] sm:$0xf]
      %v314 = vld [vmem:[%s215 + $0x54] sm:$0xf]
      %v315 = vld [vmem:[%s215 + $0x58] sm:$0xf]
      %v316 = vld [vmem:[%s215 + $0x5c] sm:$0xf]
      %v317 = vld [vmem:[%s215 + $0x60] sm:$0xf]
      %v318 = vld [vmem:[%s215 + $0x64] sm:$0xf]
      %v319 = vld [vmem:[%s215 + $0x68] sm:$0xf]
      %v320 = vld [vmem:[%s215 + $0x6c] sm:$0xf]
      %v321 = vld [vmem:[%s215 + $0x70] sm:$0xf]
      %v322 = vld [vmem:[%s215 + $0x74] sm:$0xf]
      %v323 = vld [vmem:[%s215 + $0x78] sm:$0xf]
      %v324 = vld [vmem:[%s215 + $0x7c] sm:$0xf]
      %v325 = vld [vmem:[%s218] sm:$0x1]
      %v327 = vlaneseq
      %v328 = vshrl.u32 %v327, 7
      %v329 = vsub.s32 0, %v328
      %v330 = vrot.slane %v325, %v329
      %v396 = vunpack.c.l.b16 %v229
      %v397 = vunpack.c.h.b16 %v229
      %v398 = vunpack.c.l.b16 %v230
      %v399 = vunpack.c.h.b16 %v230
      %v400 = vunpack.c.l.b16 %v231
      %v401 = vunpack.c.h.b16 %v231
      %v402 = vunpack.c.l.b16 %v232
      %v403 = vunpack.c.h.b16 %v232
      %v404 = vunpack.c.l.b16 %v233
      %v405 = vunpack.c.h.b16 %v233
      %v406 = vunpack.c.l.b16 %v234
      %v407 = vunpack.c.h.b16 %v234
      %v408 = vunpack.c.l.b16 %v235
      %v409 = vunpack.c.h.b16 %v235
      %v410 = vunpack.c.l.b16 %v236
      %v411 = vunpack.c.h.b16 %v236
      %v412 = vunpack.c.l.b16 %v237
      %v413 = vunpack.c.h.b16 %v237
      %v414 = vunpack.c.l.b16 %v238
      %v415 = vunpack.c.h.b16 %v238
      %v416 = vunpack.c.l.b16 %v239
      %v417 = vunpack.c.h.b16 %v239
      %v418 = vunpack.c.l.b16 %v240
      %v419 = vunpack.c.h.b16 %v240
      %v420 = vunpack.c.l.b16 %v241
      %v421 = vunpack.c.h.b16 %v241
      %v422 = vunpack.c.l.b16 %v242
      %v423 = vunpack.c.h.b16 %v242
      %v424 = vunpack.c.l.b16 %v243
      %v425 = vunpack.c.h.b16 %v243
      %v426 = vunpack.c.l.b16 %v244
      %v427 = vunpack.c.h.b16 %v244
      %v428 = vunpack.c.l.b16 %v245
      %v429 = vunpack.c.h.b16 %v245
      %v430 = vunpack.c.l.b16 %v246
      %v431 = vunpack.c.h.b16 %v246
      %v432 = vunpack.c.l.b16 %v247
      %v433 = vunpack.c.h.b16 %v247
      %v434 = vunpack.c.l.b16 %v248
      %v435 = vunpack.c.h.b16 %v248
      %v436 = vunpack.c.l.b16 %v249
      %v437 = vunpack.c.h.b16 %v249
      %v438 = vunpack.c.l.b16 %v250
      %v439 = vunpack.c.h.b16 %v250
      %v440 = vunpack.c.l.b16 %v251
      %v441 = vunpack.c.h.b16 %v251
      %v442 = vunpack.c.l.b16 %v252
      %v443 = vunpack.c.h.b16 %v252
      %v444 = vunpack.c.l.b16 %v253
      %v445 = vunpack.c.h.b16 %v253
      %v446 = vunpack.c.l.b16 %v254
      %v447 = vunpack.c.h.b16 %v254
      %v448 = vunpack.c.l.b16 %v255
      %v449 = vunpack.c.h.b16 %v255
      %v450 = vunpack.c.l.b16 %v256
      %v451 = vunpack.c.h.b16 %v256
      %v452 = vunpack.c.l.b16 %v257
      %v453 = vunpack.c.h.b16 %v257
      %v454 = vunpack.c.l.b16 %v258
      %v455 = vunpack.c.h.b16 %v258
      %v456 = vunpack.c.l.b16 %v259
      %v457 = vunpack.c.h.b16 %v259
      %v458 = vunpack.c.l.b16 %v260
      %v459 = vunpack.c.h.b16 %v260
      %v460 = vunpack.c.l.b16 %v261
      %v461 = vunpack.c.h.b16 %v261
      %v462 = vunpack.c.l.b16 %v262
      %v463 = vunpack.c.h.b16 %v262
      %v464 = vunpack.c.l.b16 %v263
      %v465 = vunpack.c.h.b16 %v263
      %v466 = vunpack.c.l.b16 %v264
      %v467 = vunpack.c.h.b16 %v264
      %v468 = vunpack.c.l.b16 %v265
      %v469 = vunpack.c.h.b16 %v265
      %v470 = vunpack.c.l.b16 %v266
      %v471 = vunpack.c.h.b16 %v266
      %v472 = vunpack.c.l.b16 %v267
      %v473 = vunpack.c.h.b16 %v267
      %v474 = vunpack.c.l.b16 %v268
      %v475 = vunpack.c.h.b16 %v268
      %v476 = vunpack.c.l.b16 %v269
      %v477 = vunpack.c.h.b16 %v269
      %v478 = vunpack.c.l.b16 %v270
      %v479 = vunpack.c.h.b16 %v270
      %v480 = vunpack.c.l.b16 %v271
      %v481 = vunpack.c.h.b16 %v271
      %v482 = vunpack.c.l.b16 %v272
      %v483 = vunpack.c.h.b16 %v272
      %v484 = vunpack.c.l.b16 %v273
      %v485 = vunpack.c.h.b16 %v273
      %v486 = vunpack.c.l.b16 %v274
      %v487 = vunpack.c.h.b16 %v274
      %v488 = vunpack.c.l.b16 %v275
      %v489 = vunpack.c.h.b16 %v275
      %v490 = vunpack.c.l.b16 %v276
      %v491 = vunpack.c.h.b16 %v276
      %v492 = vunpack.c.l.b16 %v277
      %v493 = vunpack.c.h.b16 %v277
      %v494 = vunpack.c.l.b16 %v278
      %v495 = vunpack.c.h.b16 %v278
      %v496 = vunpack.c.l.b16 %v279
      %v497 = vunpack.c.h.b16 %v279
      %v498 = vunpack.c.l.b16 %v280
      %v499 = vunpack.c.h.b16 %v280
      %v500 = vunpack.c.l.b16 %v281
      %v501 = vunpack.c.h.b16 %v281
      %v502 = vunpack.c.l.b16 %v282
      %v503 = vunpack.c.h.b16 %v282
      %v504 = vunpack.c.l.b16 %v283
      %v505 = vunpack.c.h.b16 %v283
      %v506 = vunpack.c.l.b16 %v284
      %v507 = vunpack.c.h.b16 %v284
      %v508 = vunpack.c.l.b16 %v285
      %v509 = vunpack.c.h.b16 %v285
      %v510 = vunpack.c.l.b16 %v286
      %v511 = vunpack.c.h.b16 %v286
      %v512 = vunpack.c.l.b16 %v287
      %v513 = vunpack.c.h.b16 %v287
      %v514 = vunpack.c.l.b16 %v288
      %v515 = vunpack.c.h.b16 %v288
      %v516 = vunpack.c.l.b16 %v289
      %v517 = vunpack.c.h.b16 %v289
      %v518 = vunpack.c.l.b16 %v290
      %v519 = vunpack.c.h.b16 %v290
      %v520 = vunpack.c.l.b16 %v291
      %v521 = vunpack.c.h.b16 %v291
      %v522 = vunpack.c.l.b16 %v292
      %v523 = vunpack.c.h.b16 %v292
      %v524 = vpack.c.b16 %v398, %v396
      %v525 = vpack.c.b16 %v399, %v397
      %v526 = vpack.c.b16 %v402, %v400
      %v527 = vpack.c.b16 %v403, %v401
      %v528 = vpack.c.b16 %v406, %v404
      %v529 = vpack.c.b16 %v407, %v405
      %v530 = vpack.c.b16 %v410, %v408
      %v531 = vpack.c.b16 %v411, %v409
      %v532 = vpack.c.b16 %v414, %v412
      %v533 = vpack.c.b16 %v415, %v413
      %v534 = vpack.c.b16 %v418, %v416
      %v535 = vpack.c.b16 %v419, %v417
      %v536 = vpack.c.b16 %v422, %v420
      %v537 = vpack.c.b16 %v423, %v421
      %v538 = vpack.c.b16 %v426, %v424
      %v539 = vpack.c.b16 %v427, %v425
      %v540 = vpack.c.b16 %v430, %v428
      %v541 = vpack.c.b16 %v431, %v429
      %v542 = vpack.c.b16 %v434, %v432
      %v543 = vpack.c.b16 %v435, %v433
      %v544 = vpack.c.b16 %v438, %v436
      %v545 = vpack.c.b16 %v439, %v437
      %v546 = vpack.c.b16 %v442, %v440
      %v547 = vpack.c.b16 %v443, %v441
      %v548 = vpack.c.b16 %v446, %v444
      %v549 = vpack.c.b16 %v447, %v445
      %v550 = vpack.c.b16 %v450, %v448
      %v551 = vpack.c.b16 %v451, %v449
      %v552 = vpack.c.b16 %v454, %v452
      %v553 = vpack.c.b16 %v455, %v453
      %v554 = vpack.c.b16 %v458, %v456
      %v555 = vpack.c.b16 %v459, %v457
      %v556 = vpack.c.b16 %v462, %v460
      %v557 = vpack.c.b16 %v463, %v461
      %v558 = vpack.c.b16 %v466, %v464
      %v559 = vpack.c.b16 %v467, %v465
      %v560 = vpack.c.b16 %v470, %v468
      %v561 = vpack.c.b16 %v471, %v469
      %v562 = vpack.c.b16 %v474, %v472
      %v563 = vpack.c.b16 %v475, %v473
      %v564 = vpack.c.b16 %v478, %v476
      %v565 = vpack.c.b16 %v479, %v477
      %v566 = vpack.c.b16 %v482, %v480
      %v567 = vpack.c.b16 %v483, %v481
      %v568 = vpack.c.b16 %v486, %v484
      %v569 = vpack.c.b16 %v487, %v485
      %v570 = vpack.c.b16 %v490, %v488
      %v571 = vpack.c.b16 %v491, %v489
      %v572 = vpack.c.b16 %v494, %v492
      %v573 = vpack.c.b16 %v495, %v493
      %v574 = vpack.c.b16 %v498, %v496
      %v575 = vpack.c.b16 %v499, %v497
      %v576 = vpack.c.b16 %v502, %v500
      %v577 = vpack.c.b16 %v503, %v501
      %v578 = vpack.c.b16 %v506, %v504
      %v579 = vpack.c.b16 %v507, %v505
      %v580 = vpack.c.b16 %v510, %v508
      %v581 = vpack.c.b16 %v511, %v509
      %v582 = vpack.c.b16 %v514, %v512
      %v583 = vpack.c.b16 %v515, %v513
      %v584 = vpack.c.b16 %v518, %v516
      %v585 = vpack.c.b16 %v519, %v517
      %v586 = vpack.c.b16 %v522, %v520
      %v587 = vpack.c.b16 %v523, %v521
      %v684 = vunpack.c.l.b16 %v293
      %v685 = vunpack.c.l.b16 %v294
      %v686 = vunpack.c.l.b16 %v295
      %v687 = vunpack.c.l.b16 %v296
      %v688 = vunpack.c.l.b16 %v297
      %v689 = vunpack.c.l.b16 %v298
      %v690 = vunpack.c.l.b16 %v299
      %v691 = vunpack.c.l.b16 %v300
      %v692 = vunpack.c.l.b16 %v301
      %v693 = vunpack.c.l.b16 %v302
      %v694 = vunpack.c.l.b16 %v303
      %v695 = vunpack.c.l.b16 %v304
      %v696 = vunpack.c.l.b16 %v305
      %v697 = vunpack.c.l.b16 %v306
      %v698 = vunpack.c.l.b16 %v307
      %v699 = vunpack.c.l.b16 %v308
      %v700 = vunpack.c.l.b16 %v309
      %v701 = vunpack.c.l.b16 %v310
      %v702 = vunpack.c.l.b16 %v311
      %v703 = vunpack.c.l.b16 %v312
      %v704 = vunpack.c.l.b16 %v313
      %v705 = vunpack.c.l.b16 %v314
      %v706 = vunpack.c.l.b16 %v315
      %v707 = vunpack.c.l.b16 %v316
      %v708 = vunpack.c.l.b16 %v317
      %v709 = vunpack.c.l.b16 %v318
      %v710 = vunpack.c.l.b16 %v319
      %v711 = vunpack.c.l.b16 %v320
      %v712 = vunpack.c.l.b16 %v321
      %v713 = vunpack.c.l.b16 %v322
      %v714 = vunpack.c.l.b16 %v323
      %v715 = vunpack.c.l.b16 %v324
      %v716 = vpack.c.b16 %v685, %v684
      %v717 = vpack.c.b16 %v687, %v686
      %v718 = vpack.c.b16 %v689, %v688
      %v719 = vpack.c.b16 %v691, %v690
      %v720 = vpack.c.b16 %v693, %v692
      %v721 = vpack.c.b16 %v695, %v694
      %v722 = vpack.c.b16 %v697, %v696
      %v723 = vpack.c.b16 %v699, %v698
      %v724 = vpack.c.b16 %v701, %v700
      %v725 = vpack.c.b16 %v703, %v702
      %v726 = vpack.c.b16 %v705, %v704
      %v727 = vpack.c.b16 %v707, %v706
      %v728 = vpack.c.b16 %v709, %v708
      %v729 = vpack.c.b16 %v711, %v710
      %v730 = vpack.c.b16 %v713, %v712
      %v731 = vpack.c.b16 %v715, %v714
      %748 = vmatprep.subr.bf16.mxu0 0
      %749 = vmatpush1.bf16.msra.mxu0 %v723
      %750 = vmatprep.subr.bf16.mxu0 0
      %751 = vmatpush1.bf16.msra.mxu0 %v722
      %752 = vmatprep.subr.bf16.mxu0 0
      %753 = vmatpush1.bf16.msra.mxu0 %v721
      %754 = vmatprep.subr.bf16.mxu0 0
      %755 = vmatpush1.bf16.msra.mxu0 %v720
      %756 = vmatprep.subr.bf16.mxu0 0
      %757 = vmatpush1.bf16.msra.mxu0 %v719
      %758 = vmatprep.subr.bf16.mxu0 0
      %759 = vmatpush1.bf16.msra.mxu0 %v718
      %760 = vmatprep.subr.bf16.mxu0 0
      %761 = vmatpush1.bf16.msra.mxu0 %v717
      %762 = vmatprep.subr.bf16.mxu0 0
      %763 = vmatpush1.bf16.msra.mxu0 %v716
      %764 = vmatprep.subr.bf16.mxu0 0
      %765 = vmatpush2.bf16.msra.mxu0 %v731
      %766 = vmatprep.subr.bf16.mxu0 0
      %767 = vmatpush2.bf16.msra.mxu0 %v730
      %768 = vmatprep.subr.bf16.mxu0 0
      %769 = vmatpush2.bf16.msra.mxu0 %v729
      %770 = vmatprep.subr.bf16.mxu0 0
      %771 = vmatpush2.bf16.msra.mxu0 %v728
      %772 = vmatprep.subr.bf16.mxu0 0
      %773 = vmatpush2.bf16.msra.mxu0 %v727
      %774 = vmatprep.subr.bf16.mxu0 0
      %775 = vmatpush2.bf16.msra.mxu0 %v726
      %776 = vmatprep.subr.bf16.mxu0 0
      %777 = vmatpush2.bf16.msra.mxu0 %v725
      %778 = vmatprep.subr.bf16.mxu0 0
      %779 = vmatpush2.bf16.msra.mxu0 %v724
      %780 = vmatprep.mubr.bf16.mxu0 %v525
      %781 = vmatmul.mubr.bf16.gmra.mxu0 %v524
      %v782 = vpop.f32.mrf.mxu0
      %v783 = vadd.f32 %v330, %v782
      %v784 = vpop.f32.mrf.mxu0
      %v785 = vpop.f32.mrf.mxu0
      %v786 = vadd.f32 %v330, %v785
      %v787 = vpop.f32.mrf.mxu0
      %788 = vmatprep.mubr.bf16.mxu0 %v527
      %789 = vmatmul.mubr.bf16.gmra.mxu0 %v526
      %v790 = vpop.f32.mrf.mxu0
      %v791 = vadd.f32 %v330, %v790
      %v792 = vpop.f32.mrf.mxu0
      %v793 = vpop.f32.mrf.mxu0
      %v794 = vadd.f32 %v330, %v793
      %v795 = vpop.f32.mrf.mxu0
      %796 = vmatprep.mubr.bf16.mxu0 %v529
      %797 = vmatmul.mubr.bf16.gmra.mxu0 %v528
      %v798 = vpop.f32.mrf.mxu0
      %v799 = vadd.f32 %v330, %v798
      %v800 = vpop.f32.mrf.mxu0
      %v801 = vpop.f32.mrf.mxu0
      %v802 = vadd.f32 %v330, %v801
      %v803 = vpop.f32.mrf.mxu0
      %804 = vmatprep.mubr.bf16.mxu0 %v531
      %805 = vmatmul.mubr.bf16.gmra.mxu0 %v530
      %v806 = vpop.f32.mrf.mxu0
      %v807 = vadd.f32 %v330, %v806
      %v808 = vpop.f32.mrf.mxu0
      %v809 = vpop.f32.mrf.mxu0
      %v810 = vadd.f32 %v330, %v809
      %v811 = vpop.f32.mrf.mxu0
      %812 = vmatprep.mubr.bf16.mxu0 %v533
      %813 = vmatmul.mubr.bf16.gmra.mxu0 %v532
      %v814 = vpop.f32.mrf.mxu0
      %v815 = vadd.f32 %v330, %v814
      %v816 = vpop.f32.mrf.mxu0
      %v817 = vpop.f32.mrf.mxu0
      %v818 = vadd.f32 %v330, %v817
      %v819 = vpop.f32.mrf.mxu0
      %820 = vmatprep.mubr.bf16.mxu0 %v535
      %821 = vmatmul.mubr.bf16.gmra.mxu0 %v534
      %v822 = vpop.f32.mrf.mxu0
      %v823 = vadd.f32 %v330, %v822
      %v824 = vpop.f32.mrf.mxu0
      %v825 = vpop.f32.mrf.mxu0
      %v826 = vadd.f32 %v330, %v825
      %v827 = vpop.f32.mrf.mxu0
      %828 = vmatprep.mubr.bf16.mxu0 %v537
      %829 = vmatmul.mubr.bf16.gmra.mxu0 %v536
      %v830 = vpop.f32.mrf.mxu0
      %v831 = vadd.f32 %v330, %v830
      %v832 = vpop.f32.mrf.mxu0
      %v833 = vpop.f32.mrf.mxu0
      %v834 = vadd.f32 %v330, %v833
      %v835 = vpop.f32.mrf.mxu0
      %836 = vmatprep.mubr.bf16.mxu0 %v539
      %837 = vmatmul.mubr.bf16.gmra.mxu0 %v538
      %v838 = vpop.f32.mrf.mxu0
      %v839 = vadd.f32 %v330, %v838
      %v840 = vpop.f32.mrf.mxu0
      %v841 = vpop.f32.mrf.mxu0
      %v842 = vadd.f32 %v330, %v841
      %v843 = vpop.f32.mrf.mxu0
      %844 = vmatprep.mubr.bf16.mxu0 %v541
      %845 = vmatmul.mubr.bf16.gmra.mxu0 %v540
      %v846 = vpop.f32.mrf.mxu0
      %v847 = vadd.f32 %v330, %v846
      %v848 = vpop.f32.mrf.mxu0
      %v849 = vpop.f32.mrf.mxu0
      %v850 = vadd.f32 %v330, %v849
      %v851 = vpop.f32.mrf.mxu0
      %852 = vmatprep.mubr.bf16.mxu0 %v543
      %853 = vmatmul.mubr.bf16.gmra.mxu0 %v542
      %v854 = vpop.f32.mrf.mxu0
      %v855 = vadd.f32 %v330, %v854
      %v856 = vpop.f32.mrf.mxu0
      %v857 = vpop.f32.mrf.mxu0
      %v858 = vadd.f32 %v330, %v857
      %v859 = vpop.f32.mrf.mxu0
      %860 = vmatprep.mubr.bf16.mxu0 %v545
      %861 = vmatmul.mubr.bf16.gmra.mxu0 %v544
      %v862 = vpop.f32.mrf.mxu0
      %v863 = vadd.f32 %v330, %v862
      %v864 = vpop.f32.mrf.mxu0
      %v865 = vpop.f32.mrf.mxu0
      %v866 = vadd.f32 %v330, %v865
      %v867 = vpop.f32.mrf.mxu0
      %868 = vmatprep.mubr.bf16.mxu0 %v547
      %869 = vmatmul.mubr.bf16.gmra.mxu0 %v546
      %v870 = vpop.f32.mrf.mxu0
      %v871 = vadd.f32 %v330, %v870
      %v872 = vpop.f32.mrf.mxu0
      %v873 = vpop.f32.mrf.mxu0
      %v874 = vadd.f32 %v330, %v873
      %v875 = vpop.f32.mrf.mxu0
      %876 = vmatprep.mubr.bf16.mxu0 %v549
      %877 = vmatmul.mubr.bf16.gmra.mxu0 %v548
      %v878 = vpop.f32.mrf.mxu0
      %v879 = vadd.f32 %v330, %v878
      %v880 = vpop.f32.mrf.mxu0
      %v881 = vpop.f32.mrf.mxu0
      %v882 = vadd.f32 %v330, %v881
      %v883 = vpop.f32.mrf.mxu0
      %884 = vmatprep.mubr.bf16.mxu0 %v551
      %885 = vmatmul.mubr.bf16.gmra.mxu0 %v550
      %v886 = vpop.f32.mrf.mxu0
      %v887 = vadd.f32 %v330, %v886
      %v888 = vpop.f32.mrf.mxu0
      %v889 = vpop.f32.mrf.mxu0
      %v890 = vadd.f32 %v330, %v889
      %v891 = vpop.f32.mrf.mxu0
      %892 = vmatprep.mubr.bf16.mxu0 %v553
      %893 = vmatmul.mubr.bf16.gmra.mxu0 %v552
      %v894 = vpop.f32.mrf.mxu0
      %v895 = vadd.f32 %v330, %v894
      %v896 = vpop.f32.mrf.mxu0
      %v897 = vpop.f32.mrf.mxu0
      %v898 = vadd.f32 %v330, %v897
      %v899 = vpop.f32.mrf.mxu0
      %900 = vmatprep.mubr.bf16.mxu0 %v555
      %901 = vmatmul.mubr.bf16.gmra.mxu0 %v554
      %v902 = vpop.f32.mrf.mxu0
      %v903 = vadd.f32 %v330, %v902
      %v904 = vpop.f32.mrf.mxu0
      %v905 = vpop.f32.mrf.mxu0
      %v906 = vadd.f32 %v330, %v905
      %v907 = vpop.f32.mrf.mxu0
      %908 = vmatprep.mubr.bf16.mxu0 %v557
      %909 = vmatmul.mubr.bf16.gmra.mxu0 %v556
      %v910 = vpop.f32.mrf.mxu0
      %v911 = vadd.f32 %v330, %v910
      %v912 = vpop.f32.mrf.mxu0
      %v913 = vpop.f32.mrf.mxu0
      %v914 = vadd.f32 %v330, %v913
      %v915 = vpop.f32.mrf.mxu0
      %916 = vmatprep.mubr.bf16.mxu0 %v559
      %917 = vmatmul.mubr.bf16.gmra.mxu0 %v558
      %v918 = vpop.f32.mrf.mxu0
      %v919 = vadd.f32 %v330, %v918
      %v920 = vpop.f32.mrf.mxu0
      %v921 = vpop.f32.mrf.mxu0
      %v922 = vadd.f32 %v330, %v921
      %v923 = vpop.f32.mrf.mxu0
      %924 = vmatprep.mubr.bf16.mxu0 %v561
      %925 = vmatmul.mubr.bf16.gmra.mxu0 %v560
      %v926 = vpop.f32.mrf.mxu0
      %v927 = vadd.f32 %v330, %v926
      %v928 = vpop.f32.mrf.mxu0
      %v929 = vpop.f32.mrf.mxu0
      %v930 = vadd.f32 %v330, %v929
      %v931 = vpop.f32.mrf.mxu0
      %932 = vmatprep.mubr.bf16.mxu0 %v563
      %933 = vmatmul.mubr.bf16.gmra.mxu0 %v562
      %v934 = vpop.f32.mrf.mxu0
      %v935 = vadd.f32 %v330, %v934
      %v936 = vpop.f32.mrf.mxu0
      %v937 = vpop.f32.mrf.mxu0
      %v938 = vadd.f32 %v330, %v937
      %v939 = vpop.f32.mrf.mxu0
      %940 = vmatprep.mubr.bf16.mxu0 %v565
      %941 = vmatmul.mubr.bf16.gmra.mxu0 %v564
      %v942 = vpop.f32.mrf.mxu0
      %v943 = vadd.f32 %v330, %v942
      %v944 = vpop.f32.mrf.mxu0
      %v945 = vpop.f32.mrf.mxu0
      %v946 = vadd.f32 %v330, %v945
      %v947 = vpop.f32.mrf.mxu0
      %948 = vmatprep.mubr.bf16.mxu0 %v567
      %949 = vmatmul.mubr.bf16.gmra.mxu0 %v566
      %v950 = vpop.f32.mrf.mxu0
      %v951 = vadd.f32 %v330, %v950
      %v952 = vpop.f32.mrf.mxu0
      %v953 = vpop.f32.mrf.mxu0
      %v954 = vadd.f32 %v330, %v953
      %v955 = vpop.f32.mrf.mxu0
      %956 = vmatprep.mubr.bf16.mxu0 %v569
      %957 = vmatmul.mubr.bf16.gmra.mxu0 %v568
      %v958 = vpop.f32.mrf.mxu0
      %v959 = vadd.f32 %v330, %v958
      %v960 = vpop.f32.mrf.mxu0
      %v961 = vpop.f32.mrf.mxu0
      %v962 = vadd.f32 %v330, %v961
      %v963 = vpop.f32.mrf.mxu0
      %964 = vmatprep.mubr.bf16.mxu0 %v571
      %965 = vmatmul.mubr.bf16.gmra.mxu0 %v570
      %v966 = vpop.f32.mrf.mxu0
      %v967 = vadd.f32 %v330, %v966
      %v968 = vpop.f32.mrf.mxu0
      %v969 = vpop.f32.mrf.mxu0
      %v970 = vadd.f32 %v330, %v969
      %v971 = vpop.f32.mrf.mxu0
      %972 = vmatprep.mubr.bf16.mxu0 %v573
      %973 = vmatmul.mubr.bf16.gmra.mxu0 %v572
      %v974 = vpop.f32.mrf.mxu0
      %v975 = vadd.f32 %v330, %v974
      %v976 = vpop.f32.mrf.mxu0
      %v977 = vpop.f32.mrf.mxu0
      %v978 = vadd.f32 %v330, %v977
      %v979 = vpop.f32.mrf.mxu0
      %980 = vmatprep.mubr.bf16.mxu0 %v575
      %981 = vmatmul.mubr.bf16.gmra.mxu0 %v574
      %v982 = vpop.f32.mrf.mxu0
      %v983 = vadd.f32 %v330, %v982
      %v984 = vpop.f32.mrf.mxu0
      %v985 = vpop.f32.mrf.mxu0
      %v986 = vadd.f32 %v330, %v985
      %v987 = vpop.f32.mrf.mxu0
      %988 = vmatprep.mubr.bf16.mxu0 %v577
      %989 = vmatmul.mubr.bf16.gmra.mxu0 %v576
      %v990 = vpop.f32.mrf.mxu0
      %v991 = vadd.f32 %v330, %v990
      %v992 = vpop.f32.mrf.mxu0
      %v993 = vpop.f32.mrf.mxu0
      %v994 = vadd.f32 %v330, %v993
      %v995 = vpop.f32.mrf.mxu0
      %996 = vmatprep.mubr.bf16.mxu0 %v579
      %997 = vmatmul.mubr.bf16.gmra.mxu0 %v578
      %v998 = vpop.f32.mrf.mxu0
      %v999 = vadd.f32 %v330, %v998
      %v1000 = vpop.f32.mrf.mxu0
      %v1001 = vpop.f32.mrf.mxu0
      %v1002 = vadd.f32 %v330, %v1001
      %v1003 = vpop.f32.mrf.mxu0
      %1004 = vmatprep.mubr.bf16.mxu0 %v581
      %1005 = vmatmul.mubr.bf16.gmra.mxu0 %v580
      %v1006 = vpop.f32.mrf.mxu0
      %v1007 = vadd.f32 %v330, %v1006
      %v1008 = vpop.f32.mrf.mxu0
      %v1009 = vpop.f32.mrf.mxu0
      %v1010 = vadd.f32 %v330, %v1009
      %v1011 = vpop.f32.mrf.mxu0
      %1012 = vmatprep.mubr.bf16.mxu0 %v583
      %1013 = vmatmul.mubr.bf16.gmra.mxu0 %v582
      %v1014 = vpop.f32.mrf.mxu0
      %v1015 = vadd.f32 %v330, %v1014
      %v1016 = vpop.f32.mrf.mxu0
      %v1017 = vpop.f32.mrf.mxu0
      %v1018 = vadd.f32 %v330, %v1017
      %v1019 = vpop.f32.mrf.mxu0
      %1020 = vmatprep.mubr.bf16.mxu0 %v585
      %1021 = vmatmul.mubr.bf16.gmra.mxu0 %v584
      %v1022 = vpop.f32.mrf.mxu0
      %v1023 = vadd.f32 %v330, %v1022
      %v1024 = vpop.f32.mrf.mxu0
      %v1025 = vpop.f32.mrf.mxu0
      %v1026 = vadd.f32 %v330, %v1025
      %v1027 = vpop.f32.mrf.mxu0
      %1028 = vmatprep.mubr.bf16.mxu0 %v587
      %1029 = vmatmul.mubr.bf16.gmra.mxu0 %v586
      %v1030 = vpop.f32.mrf.mxu0
      %v1031 = vadd.f32 %v330, %v1030
      %v1032 = vpop.f32.mrf.mxu0
      %v1033 = vpop.f32.mrf.mxu0
      %v1034 = vadd.f32 %v330, %v1033
      %v1035 = vpop.f32.mrf.mxu0
      %1036 = vdwg.mxu0
      %1037 = vst [vmem:[%s226] sm:$0xff] %v783
      %1038 = vst [vmem:[%s226 + $0x8] sm:$0xff] %v786
      %1039 = vst [vmem:[%s226 + $0x10] sm:$0xff] %v791
      %1040 = vst [vmem:[%s226 + $0x18] sm:$0xff] %v794
      %1041 = vst [vmem:[%s226 + $0x20] sm:$0xff] %v799
      %1042 = vst [vmem:[%s226 + $0x28] sm:$0xff] %v802
      %1043 = vst [vmem:[%s226 + $0x30] sm:$0xff] %v807
      %1044 = vst [vmem:[%s226 + $0x38] sm:$0xff] %v810
      %1045 = vst [vmem:[%s226 + $0x40] sm:$0xff] %v815
      %1046 = vst [vmem:[%s226 + $0x48] sm:$0xff] %v818
      %1047 = vst [vmem:[%s226 + $0x50] sm:$0xff] %v823
      %1048 = vst [vmem:[%s226 + $0x58] sm:$0xff] %v826
      %1049 = vst [vmem:[%s226 + $0x60] sm:$0xff] %v831
      %1050 = vst [vmem:[%s226 + $0x68] sm:$0xff] %v834
      %1051 = vst [vmem:[%s226 + $0x70] sm:$0xff] %v839
      %1052 = vst [vmem:[%s226 + $0x78] sm:$0xff] %v842
      %1053 = vst [vmem:[%s226 + $0x80] sm:$0xff] %v847
      %1054 = vst [vmem:[%s226 + $0x88] sm:$0xff] %v850
      %1055 = vst [vmem:[%s226 + $0x90] sm:$0xff] %v855
      %1056 = vst [vmem:[%s226 + $0x98] sm:$0xff] %v858
      %1057 = vst [vmem:[%s226 + $0xa0] sm:$0xff] %v863
      %1058 = vst [vmem:[%s226 + $0xa8] sm:$0xff] %v866
      %1059 = vst [vmem:[%s226 + $0xb0] sm:$0xff] %v871
      %1060 = vst [vmem:[%s226 + $0xb8] sm:$0xff] %v874
      %1061 = vst [vmem:[%s226 + $0xc0] sm:$0xff] %v879
      %1062 = vst [vmem:[%s226 + $0xc8] sm:$0xff] %v882
      %1063 = vst [vmem:[%s226 + $0xd0] sm:$0xff] %v887
      %1064 = vst [vmem:[%s226 + $0xd8] sm:$0xff] %v890
      %1065 = vst [vmem:[%s226 + $0xe0] sm:$0xff] %v895
      %1066 = vst [vmem:[%s226 + $0xe8] sm:$0xff] %v898
      %1067 = vst [vmem:[%s226 + $0xf0] sm:$0xff] %v903
      %1068 = vst [vmem:[%s226 + $0xf8] sm:$0xff] %v906
      %1069 = vst [vmem:[%s226 + $0x100] sm:$0xff] %v911
      %1070 = vst [vmem:[%s226 + $0x108] sm:$0xff] %v914
      %1071 = vst [vmem:[%s226 + $0x110] sm:$0xff] %v919
      %1072 = vst [vmem:[%s226 + $0x118] sm:$0xff] %v922
      %1073 = vst [vmem:[%s226 + $0x120] sm:$0xff] %v927
      %1074 = vst [vmem:[%s226 + $0x128] sm:$0xff] %v930
      %1075 = vst [vmem:[%s226 + $0x130] sm:$0xff] %v935
      %1076 = vst [vmem:[%s226 + $0x138] sm:$0xff] %v938
      %1077 = vst [vmem:[%s226 + $0x140] sm:$0xff] %v943
      %1078 = vst [vmem:[%s226 + $0x148] sm:$0xff] %v946
      %1079 = vst [vmem:[%s226 + $0x150] sm:$0xff] %v951
      %1080 = vst [vmem:[%s226 + $0x158] sm:$0xff] %v954
      %1081 = vst [vmem:[%s226 + $0x160] sm:$0xff] %v959
      %1082 = vst [vmem:[%s226 + $0x168] sm:$0xff] %v962
      %1083 = vst [vmem:[%s226 + $0x170] sm:$0xff] %v967
      %1084 = vst [vmem:[%s226 + $0x178] sm:$0xff] %v970
      %1085 = vst [vmem:[%s226 + $0x180] sm:$0xff] %v975
      %1086 = vst [vmem:[%s226 + $0x188] sm:$0xff] %v978
      %1087 = vst [vmem:[%s226 + $0x190] sm:$0xff] %v983
      %1088 = vst [vmem:[%s226 + $0x198] sm:$0xff] %v986
      %1089 = vst [vmem:[%s226 + $0x1a0] sm:$0xff] %v991
      %1090 = vst [vmem:[%s226 + $0x1a8] sm:$0xff] %v994
      %1091 = vst [vmem:[%s226 + $0x1b0] sm:$0xff] %v999
      %1092 = vst [vmem:[%s226 + $0x1b8] sm:$0xff] %v1002
      %1093 = vst [vmem:[%s226 + $0x1c0] sm:$0xff] %v1007
      %1094 = vst [vmem:[%s226 + $0x1c8] sm:$0xff] %v1010
      %1095 = vst [vmem:[%s226 + $0x1d0] sm:$0xff] %v1015
      %1096 = vst [vmem:[%s226 + $0x1d8] sm:$0xff] %v1018
      %1097 = vst [vmem:[%s226 + $0x1e0] sm:$0xff] %v1023
      %1098 = vst [vmem:[%s226 + $0x1e8] sm:$0xff] %v1026
      %1099 = vst [vmem:[%s226 + $0x1f0] sm:$0xff] %v1031
      %1100 = vst [vmem:[%s226 + $0x1f8] sm:$0xff] %v1034
      %s1101 = smul.u32 64, %s18
      %p1102 = scmp.lt.s32.totalorder %s1101, 255
      %s1103 = scalar_select %p1102, %s1101, 255
      %p1104 = scmp.lt.s32.totalorder %s19, 0
      %s1105 = scalar_select %p1104, %s19, 0
      %s1106 = sadd.s32 %s1105, %s1103
      %s1107 = smul.addr %s1106, 8
      %s1108 = scalar_lea.vmem %s3, %s1107
      // Predicated region
      $region33: #{compen_rt_forward.19} parent=31 // pred_check
        %p1109 = pneg %p124
      $region34: #{compen_rt_forward.19} parent=31 // pred_check_branch
        %1111 = sbr.rel (%p1109) target = $region36
      $region35: #{compen_rt_forward.19} parent=31 // pred_region
        %s1112 = smul.u32 64, %s18
      $region36: #{compen_rt_forward.19} parent=31 // pred_fallthru
        _
    $region32: #{compen_rt_forward.19} parent=5 // pred_fallthru
      _
    %p1113 = scmp.le.s32.totalorder 2, %s9
    // Predicated region
    $region37: #{compen_rt_forward.19} parent=5 // pred_check
      %p1114 = pneg %p1113
    $region38: #{compen_rt_forward.19} parent=5 // pred_check_branch
      %1116 = sbr.rel (%p1114) target = $region40
    $region39: #{compen_rt_forward.19} parent=5 // pred_region
      %s1117 = ssub.s32 %s9, 2
      // Predicated region
      $region41: #{compen_rt_forward.19} parent=39 // pred_check
        %p1118 = pneg %p130
      $region42: #{compen_rt_forward.19} parent=39 // pred_check_branch
        %1120 = sbr.rel (%p1118) target = $region44
      $region43: #{compen_rt_forward.19} parent=39 // pred_region
        %s1121 = smul.u32 64, %s20
        %p1122 = scmp.lt.s32.totalorder %s1121, 255
        %s1123 = scalar_select %p1122, %s1121, 255
        %p1124 = scmp.lt.s32.totalorder %s21, 0
        %s1125 = scalar_select %p1124, %s21, 0
        %s1126 = sadd.s32 %s1125, %s1123
        %s1127 = smul.addr %s1126, 8
        %s1128 = scalar_lea.vmem %s3, %s1127
      $region44: #{compen_rt_forward.19} parent=39 // pred_fallthru
        _
    $region40: #{compen_rt_forward.19} parent=5 // pred_fallthru
      _
  $region6: #{compen_rt_forward.19} parent=0 // loop_footer
    %s13 = sadd.s32 1, %s9
  $region7: #{compen_rt_forward.19} parent=0 // loop_footer_branch
    %8 = sbr.rel target = $region3
  $region8: #{compen_rt_forward.19} parent=0 // loop_exit
    _

</llo_original>
